<compile_context>
chip_gen: v7x
topology: tpu7x:2x2x1
jax: 0.10.0
libtpu: 0.0.40
codegen_flags: <defaults>
</compile_context>

<pallas_src>
import functools
import math

import jax
import jax.numpy as jnp
from jax import lax
from jax.experimental import pallas as pl
from jax.experimental.pallas import tpu as pltpu

# "minus infinity" border for the max-pool half.  NOTE: this is a sentinel,
# not a true -inf; values below -3e38 (pathological in f32) would be
# mis-ranked.  The 3x3 window always contains at least one real value
# (the center tap), so the sentinel never reaches the output.
_NEG = -3.0e38


def _silu(v):
    # v * sigmoid(v); divide goes to the EUP via an approximate reciprocal.
    return v * pl.reciprocal(1.0 + jnp.exp(-v), approx=True)


def _adown_kernel(xm_ref, xt_ref, xb_ref, w1_ref, b1_ref, w2_ref, b2_ref,
                  out_ref, sc_ref, sm_ref, *, TH, Wo, c1, ch, c):
    """One (batch, row-tile) per grid step.

    xm_ref : (1, TH, Wo, 4*c1)  bf16  main space-to-depth tile (lane = (pi,pj,chan))
    xt_ref : (1, 1,  Wo, 4*c1)  bf16  1-row halo above the tile (clamped at t=0)
    xb_ref : (1, 1,  Wo, 4*c1)  bf16  1-row halo below the tile (clamped at last t)
    w1_ref : (9*ch, c)          bf16  3x3/s2 conv weights, BN scale * 0.25 folded
    b1_ref : (1, c)             f32   folded BN bias, branch 1
    w2_ref : (ch, c)            bf16  1x1 conv weights, BN scale * 0.25 folded
    b2_ref : (1, c)             f32   folded BN bias, branch 2
    out_ref: (1, 2*c, TH*Wo)    f32   channel-major (lane-dense) output tile
    sc_ref : (TH+1, Wo+1, 4*ch) f32   parity-layout avg-pool SUMS, conv half (0 border)
    sm_ref : (TH+1, Wo+1, 4*ch) f32   parity-layout avg-pool SUMS, max half (-big border)
    """
    t = pl.program_id(1)
    nt = pl.num_programs(1)
    f32 = jnp.float32

    xs = xm_ref[...].reshape(TH, Wo, 4 * c1).astype(f32)

    def par(x, p, q):
        g = 2 * p + q
        return x[..., g * c1:(g + 1) * c1]

    p00, p01, p10, p11 = par(xs, 0, 0), par(xs, 0, 1), par(xs, 1, 0), par(xs, 1, 1)

    # ---- thin column-border strips (only part of the scratch not overwritten) ----
    sc_ref[:, 0:1, :] = jnp.zeros((TH + 1, 1, 4 * ch), f32)
    sc_ref[:, Wo:Wo + 1, :] = jnp.zeros((TH + 1, 1, 4 * ch), f32)
    sm_ref[:, 0:1, :] = jnp.full((TH + 1, 1, 4 * ch), _NEG, f32)
    sm_ref[:, Wo:Wo + 1, :] = jnp.full((TH + 1, 1, 4 * ch), _NEG, f32)

    def put(r0, q0, g, val):
        """val: (rows, cols, c1) avg-pool SUM; split into conv half / max half."""
        r, w = val.shape[0], val.shape[1]
        sc_ref[r0:r0 + r, q0:q0 + w, g * ch:(g + 1) * ch] = val[..., :ch]
        sm_ref[r0:r0 + r, q0:q0 + w, g * ch:(g + 1) * ch] = val[..., ch:]

    # ---- 2x2/s1 average-pool SUMS (0.25 folded into the weights) ----
    # Scratch row r / parity p holds parity-p avg-pool index (tile_start + r - p).
    s00 = p00 + p01 + p10 + p11                                     # rows [0,TH)
    put(0, 0, 0, s00)
    if Wo > 1:
        s01 = p01[:, :Wo - 1] + p11[:, :Wo - 1] + p00[:, 1:] + p10[:, 1:]
        put(0, 1, 1, s01)
    if TH > 1:
        s10 = p10[:TH - 1] + p11[:TH - 1] + p00[1:] + p01[1:]       # rows [1,TH)
        put(1, 0, 2, s10)
        if Wo > 1:
            s11 = (p11[:TH - 1, :Wo - 1] + p10[:TH - 1, 1:]
                   + p01[1:, :Wo - 1] + p00[1:, 1:])
            put(1, 1, 3, s11)

    # ---- top edge (scratch row 0, parity-1 slots): data if t>0 else border ----
    @pl.when(t > 0)
    def _top_edge():
        xt = xt_ref[...].reshape(Wo, 4 * c1).astype(f32)
        h10, h11 = par(xt, 1, 0), par(xt, 1, 1)
        e10 = (h10 + h11 + p00[0] + p01[0]).reshape(1, Wo, c1)
        put(0, 0, 2, e10)
        if Wo > 1:
            e11 = (h11[:Wo - 1] + h10[1:]
                   + p01[0, :Wo - 1] + p00[0, 1:]).reshape(1, Wo - 1, c1)
            put(0, 1, 3, e11)

    @pl.when(t == 0)
    def _top_border():
        sc_ref[0:1, :, 2 * ch:4 * ch] = jnp.zeros((1, Wo + 1, 2 * ch), f32)
        sm_ref[0:1, :, 2 * ch:4 * ch] = jnp.full((1, Wo + 1, 2 * ch), _NEG, f32)

    # ---- bottom edge (scratch row TH, parity-1 slots): data if not last tile ----
    @pl.when(t < nt - 1)
    def _bottom_edge():
        xb = xb_ref[...].reshape(Wo, 4 * c1).astype(f32)
        h00, h01 = par(xb, 0, 0), par(xb, 0, 1)
        e10 = (p10[TH - 1] + p11[TH - 1] + h00 + h01).reshape(1, Wo, c1)
        put(TH, 0, 2, e10)
        if Wo > 1:
            e11 = (p11[TH - 1, :Wo - 1] + p10[TH - 1, 1:]
                   + h01[:Wo - 1] + h00[1:]).reshape(1, Wo - 1, c1)
            put(TH, 1, 3, e11)

    @pl.when(t == nt - 1)
    def _bottom_border():
        sc_ref[TH:TH + 1, :, 2 * ch:4 * ch] = jnp.zeros((1, Wo + 1, 2 * ch), f32)
        sm_ref[TH:TH + 1, :, 2 * ch:4 * ch] = jnp.full((1, Wo + 1, 2 * ch), _NEG, f32)

    # ---- branch 1: 3x3/s2 conv accumulated over the 9 taps (no im2col patch);
    #      branch 2: 3x3/s2 max pool fused in the same tap walk ----
    w1 = w1_ref[...]                                # (9*ch, c) bf16
    y1 = jnp.zeros((TH * Wo, c), f32)
    mx = None
    for ky in range(3):
        p = 0 if ky == 1 else 1
        r0 = 1 if ky == 2 else 0
        for kx in range(3):
            q = 0 if kx == 1 else 1
            c0 = 1 if kx == 2 else 0
            g = 2 * p + q
            lo = g * ch
            k = ky * 3 + kx
            tap = sc_ref[r0:r0 + TH, c0:c0 + Wo, lo:lo + ch]
            tap = tap.reshape(TH * Wo, ch).astype(jnp.bfloat16)
            y1 = y1 + jnp.dot(tap, w1[k * ch:(k + 1) * ch, :],
                              preferred_element_type=f32)
            m = sm_ref[r0:r0 + TH, c0:c0 + Wo, lo:lo + ch]
            mx = m if mx is None else jnp.maximum(mx, m)
    y1 = _silu(y1 + b1_ref[...])

    xmax = mx.reshape(TH * Wo, ch).astype(jnp.bfloat16)
    y2 = _silu(jnp.dot(xmax, w2_ref[...], preferred_element_type=f32) + b2_ref[...])

    # ---- split, channel-major (lane-dense) store; no concat temp ----
    out_ref[:, 0:c, :] = jnp.transpose(y1).reshape(1, c, TH * Wo).astype(out_ref.dtype)
    out_ref[:, c:2 * c, :] = jnp.transpose(y2).reshape(1, c, TH * Wo).astype(out_ref.dtype)


def _choose_tile_rows(Ho, Wo, c1, tile_rows=None, target_bytes=2 << 20):
    """Largest row-tile <= budget that divides Ho and keeps the flattened
    output tile lane-aligned (TH*Wo % 128 == 0), else fall back to Ho."""
    if tile_rows is None:
        row_bytes = max(Wo * 4 * c1 * 2, 1)          # bf16 s2d bytes per row
        tile_rows = max(1, target_bytes // row_bytes)
    th = int(min(tile_rows, Ho))
    for cand in range(th, 0, -1):
        if Ho % cand == 0 and ((cand * Wo) % 128 == 0 or cand == Ho):
            return cand
    return Ho


def _vmem_limit_bytes(TH, Wo, c1, ch, c, c2):
    in_tile = (TH + 2) * Wo * 4 * c1 * 2                       # main + halos, bf16
    out_tile = c2 * TH * Wo * 4
    weights = (9 * ch + ch) * c * 2 + 2 * c * 4
    scratch = 2 * (TH + 1) * (Wo + 1) * 4 * ch * 4
    temps = 3 * TH * Wo * 4 * c1 * 4 + 4 * TH * Wo * c * 4     # f32 casts / sums / y1,y2
    est = 2 * (in_tile + out_tile + weights) + scratch + temps
    return int(min(max(32 << 20, 2 * est), 56 << 20))          # v7x headroom cap


def adown_forward(x_nchw, params, *, eps=1e-5, tile_rows=None):
    """x_nchw: (B, c1, H, W) -> (B, c2, H//2, W//2), matching torch ADown (eval-mode BN)."""
    w1, g1, be1, m1, v1, w2, g2, be2, m2, v2 = params
    B, c1, H, W = x_nchw.shape
    assert c1 % 2 == 0 and H % 2 == 0 and W % 2 == 0
    ch = c1 // 2
    c = w1.shape[-1]
    c2 = 2 * c
    Ho, Wo = H // 2, W // 2

    # Fold eval-mode BatchNorm AND the avg-pool 0.25 into the bias-free convs.
    s1 = g1 / jnp.sqrt(v1 + eps)
    s2 = g2 / jnp.sqrt(v2 + eps)
    w1_mat = (w1 * s1 * 0.25).reshape(9 * ch, c).astype(jnp.bfloat16)
    w2_mat = (w2 * s2 * 0.25).reshape(ch, c).astype(jnp.bfloat16)
    b1_row = (be1 - m1 * s1).reshape(1, c).astype(jnp.float32)
    b2_row = (be2 - m2 * s2).reshape(1, c).astype(jnp.float32)

    # Space-to-depth (pure layout, bf16 to halve HBM traffic):
    # (B, c1, H, W) -> (B, Ho, Wo, 4*c1), lane order = (row par, col par, channel).
    xs = x_nchw.astype(jnp.bfloat16).reshape(B, c1, Ho, 2, Wo, 2)
    xs = jnp.transpose(xs, (0, 2, 4, 3, 5, 1)).reshape(B, Ho, Wo, 4 * c1)

    TH = _choose_tile_rows(Ho, Wo, c1, tile_rows)
    T = Ho // TH
    kernel = functools.partial(_adown_kernel, TH=TH, Wo=Wo, c1=c1, ch=ch, c=c)

    cost = pl.CostEstimate(
        flops=B * Ho * Wo * (2 * c * 10 * ch + 12 * c1 + 9 * ch),
        transcendentals=B * Ho * Wo * c2,
        bytes_accessed=(B * Ho * Wo * 4 * c1 * 2 + B * c2 * Ho * Wo * 4
                        + (9 * ch + ch) * c * 2 + 2 * c * 4),
    )

    out_flat = pl.pallas_call(
        kernel,
        out_shape=jax.ShapeDtypeStruct((B, c2, Ho * Wo), jnp.float32),
        grid=(B, T),
        in_specs=[
            pl.BlockSpec((1, TH, Wo, 4 * c1), lambda b, t: (b, t, 0, 0)),
            pl.BlockSpec((1, 1, Wo, 4 * c1),
                         lambda b, t: (b, jnp.maximum(t * TH - 1, 0), 0, 0)),
            pl.BlockSpec((1, 1, Wo, 4 * c1),
                         lambda b, t: (b, jnp.minimum((t + 1) * TH, Ho - 1), 0, 0)),
            pl.BlockSpec((9 * ch, c), lambda b, t: (0, 0)),
            pl.BlockSpec((1, c), lambda b, t: (0, 0)),
            pl.BlockSpec((ch, c), lambda b, t: (0, 0)),
            pl.BlockSpec((1, c), lambda b, t: (0, 0)),
        ],
        out_specs=pl.BlockSpec((1, c2, TH * Wo), lambda b, t: (b, 0, t)),
        scratch_shapes=[
            pltpu.VMEM((TH + 1, Wo + 1, 4 * ch), jnp.float32),
            pltpu.VMEM((TH + 1, Wo + 1, 4 * ch), jnp.float32),
        ],
        compiler_params=pltpu.CompilerParams(
            dimension_semantics=("parallel", "parallel"),
            vmem_limit_bytes=_vmem_limit_bytes(TH, Wo, c1, ch, c, c2),
        ),
        cost_estimate=cost,
    )(xs, xs, xs, w1_mat, b1_row, w2_mat, b2_row)

    return out_flat.reshape(B, c2, Ho, Wo)          # already NCHW, free reshape


def init_params(key, c1, c2):
    """Random conv weights (HWIO) + non-trivial eval-mode BatchNorm statistics."""
    ch, c = c1 // 2, c2 // 2
    ks = jax.random.split(key, 10)
    w1 = jax.random.normal(ks[0], (3, 3, ch, c), jnp.float32) / math.sqrt(9 * ch)
    w2 = jax.random.normal(ks[1], (1, 1, ch, c), jnp.float32) / math.sqrt(ch)
    g1 = 1.0 + 0.1 * jax.random.normal(ks[2], (c,), jnp.float32)
    be1 = 0.1 * jax.random.normal(ks[3], (c,), jnp.float32)
    m1 = 0.1 * jax.random.normal(ks[4], (c,), jnp.float32)
    v1 = 1.0 + 0.1 * jnp.abs(jax.random.normal(ks[5], (c,), jnp.float32))
    g2 = 1.0 + 0.1 * jax.random.normal(ks[6], (c,), jnp.float32)
    be2 = 0.1 * jax.random.normal(ks[7], (c,), jnp.float32)
    m2 = 0.1 * jax.random.normal(ks[8], (c,), jnp.float32)
    v2 = 1.0 + 0.1 * jnp.abs(jax.random.normal(ks[9], (c,), jnp.float32))
    return (w1, g1, be1, m1, v1, w2, g2, be2, m2, v2)


def adown_reference(x_nchw, params, *, eps=1e-5):
    """Pure-JAX (XLA) reference with identical semantics, for verification."""
    w1, g1, be1, m1, v1, w2, g2, be2, m2, v2 = params
    x = jnp.transpose(x_nchw, (0, 2, 3, 1)).astype(jnp.float32)   # NHWC
    ch = x.shape[-1] // 2
    dn = ('NHWC', 'HWIO', 'NHWC')

    a = lax.reduce_window(x, 0.0, lax.add, (1, 2, 2, 1), (1, 1, 1, 1), 'VALID') * 0.25
    a1, a2 = a[..., :ch], a[..., ch:]

    y1 = lax.conv_general_dilated(a1, w1, (2, 2), [(1, 1), (1, 1)],
                                  dimension_numbers=dn, precision=lax.Precision.HIGHEST)
    y1 = (y1 - m1) / jnp.sqrt(v1 + eps) * g1 + be1
    y1 = y1 * jax.nn.sigmoid(y1)

    a2m = lax.reduce_window(a2, -jnp.inf, lax.max, (1, 3, 3, 1), (1, 2, 2, 1),
                            [(0, 0), (1, 1), (1, 1), (0, 0)])
    y2 = lax.conv_general_dilated(a2m, w2, (1, 1), [(0, 0), (0, 0)],
                                  dimension_numbers=dn, precision=lax.Precision.HIGHEST)
    y2 = (y2 - m2) / jnp.sqrt(v2 + eps) * g2 + be2
    y2 = y2 * jax.nn.sigmoid(y2)

    out = jnp.concatenate([y1, y2], axis=-1)
    return jnp.transpose(out, (0, 3, 1, 2))


if __name__ == "__main__":
    key = jax.random.PRNGKey(0)
    kx, kp = jax.random.split(key)
    B, C1, C2, H, W = 2, 8, 16, 32, 32

    x = jax.random.normal(kx, (B, C1, H, W), jnp.float32)
    params = init_params(kp, C1, C2)

    out = adown_forward(x, params)                      # auto tiling (single tile here)
    jax.block_until_ready(out)
    assert out.shape == (B, C2, H // 2, W // 2), out.shape

    out_tiled = adown_forward(x, params, tile_rows=8)   # exercises the multi-tile halo path
    jax.block_until_ready(out_tiled)

    # Reference on the same bf16-quantized input the kernel consumes.
    x_q = x.astype(jnp.bfloat16).astype(jnp.float32)
    ref = adown_reference(x_q, params)

    for got, name in ((out, "auto"), (out_tiled, "tiled")):
        err = float(jnp.max(jnp.abs(got - ref)))
        assert jnp.allclose(got, ref, atol=2e-2, rtol=2e-2), (
            "mismatch vs XLA reference (%s), max abs diff = %g" % (name, err))

    print("KERNEL_OK")
</pallas_src>

<mosaic_0001>
module attributes {stable_mosaic.version = 11 : i64} {
  func.func @_adown_kernel(%arg0: i32, %arg1: i32, %arg2: memref<1x16x16x32xbf16, #tpu.memory_space<vmem>>, %arg3: memref<1x1x16x32xbf16, #tpu.memory_space<vmem>>, %arg4: memref<1x1x16x32xbf16, #tpu.memory_space<vmem>>, %arg5: memref<36x8xbf16, #tpu.memory_space<vmem>>, %arg6: memref<1x8xf32, #tpu.memory_space<vmem>>, %arg7: memref<4x8xbf16, #tpu.memory_space<vmem>>, %arg8: memref<1x8xf32, #tpu.memory_space<vmem>>, %arg9: memref<1x16x256xf32, #tpu.memory_space<vmem>>, %arg10: memref<17x17x16xf32, #tpu.memory_space<vmem>>, %arg11: memref<17x17x16xf32, #tpu.memory_space<vmem>>) attributes {dimension_semantics = [#tpu.dimension_semantics<parallel>, #tpu.dimension_semantics<parallel>], iteration_bounds = array<i64: 2, 1>, scalar_prefetch = 0 : i64, scratch_operands = 2 : i64, tpu.core_type = #tpu.core_type<tc>, window_params = [{transform_indices = @transform_0, window_bounds = array<i64: 1, 16, 16, 32>}, {transform_indices = @transform_1, window_bounds = array<i64: 1, 1, 16, 32>}, {transform_indices = @transform_2, window_bounds = array<i64: 1, 1, 16, 32>}, {pipeline_mode = #tpu.pipeline_mode<synchronous>, transform_indices = @transform_3, window_bounds = array<i64: 36, 8>}, {pipeline_mode = #tpu.pipeline_mode<synchronous>, transform_indices = @transform_4, window_bounds = array<i64: 1, 8>}, {pipeline_mode = #tpu.pipeline_mode<synchronous>, transform_indices = @transform_5, window_bounds = array<i64: 4, 8>}, {pipeline_mode = #tpu.pipeline_mode<synchronous>, transform_indices = @transform_6, window_bounds = array<i64: 1, 8>}, {transform_indices = @transform_7, window_bounds = array<i64: 1, 16, 256>}]} {
    %c0 = arith.constant 0 : index
    %c0_0 = arith.constant 0 : index
    %c0_1 = arith.constant 0 : index
    %c0_2 = arith.constant 0 : index
    %0 = vector.load %arg2[%c0, %c0_0, %c0_1, %c0_2] : memref<1x16x16x32xbf16, #tpu.memory_space<vmem>>, vector<1x16x16x32xbf16>
    %1 = vector.shape_cast %0 : vector<1x16x16x32xbf16> to vector<16x16x32xbf16>
    %2 = arith.extf %1 : vector<16x16x32xbf16> to vector<16x16x32xf32>
    %3 = vector.extract_strided_slice %2 {offsets = [0, 0, 0], sizes = [16, 16, 8], strides = [1, 1, 1]} : vector<16x16x32xf32> to vector<16x16x8xf32>
    %4 = vector.extract_strided_slice %2 {offsets = [0, 0, 8], sizes = [16, 16, 8], strides = [1, 1, 1]} : vector<16x16x32xf32> to vector<16x16x8xf32>
    %5 = vector.extract_strided_slice %2 {offsets = [0, 0, 16], sizes = [16, 16, 8], strides = [1, 1, 1]} : vector<16x16x32xf32> to vector<16x16x8xf32>
    %6 = vector.extract_strided_slice %2 {offsets = [0, 0, 24], sizes = [16, 16, 8], strides = [1, 1, 1]} : vector<16x16x32xf32> to vector<16x16x8xf32>
    %cst = arith.constant 0.000000e+00 : f32
    %7 = vector.broadcast %cst : f32 to vector<17x1x16xf32>
    %c0_3 = arith.constant 0 : index
    %c0_4 = arith.constant 0 : index
    %c0_5 = arith.constant 0 : index
    %8 = vector.load %arg10[%c0_3, %c0_4, %c0_5] : memref<17x17x16xf32, #tpu.memory_space<vmem>>, vector<17x1x16xf32>
    tpu.vector_store %arg10[%c0_3, %c0_4, %c0_5], %7 {strides = array<i32>} : memref<17x17x16xf32, #tpu.memory_space<vmem>>, vector<17x1x16xf32>,
    %cst_6 = arith.constant 0.000000e+00 : f32
    %9 = vector.broadcast %cst_6 : f32 to vector<17x1x16xf32>
    %c0_7 = arith.constant 0 : index
    %c16 = arith.constant 16 : index
    %c0_8 = arith.constant 0 : index
    %10 = vector.load %arg10[%c0_7, %c16, %c0_8] : memref<17x17x16xf32, #tpu.memory_space<vmem>>, vector<17x1x16xf32>
    tpu.vector_store %arg10[%c0_7, %c16, %c0_8], %9 {strides = array<i32>} : memref<17x17x16xf32, #tpu.memory_space<vmem>>, vector<17x1x16xf32>,
    %cst_9 = arith.constant -3.000000e+38 : f32
    %11 = vector.broadcast %cst_9 : f32 to vector<17x1x16xf32>
    %c0_10 = arith.constant 0 : index
    %c0_11 = arith.constant 0 : index
    %c0_12 = arith.constant 0 : index
    %12 = vector.load %arg11[%c0_10, %c0_11, %c0_12] : memref<17x17x16xf32, #tpu.memory_space<vmem>>, vector<17x1x16xf32>
    tpu.vector_store %arg11[%c0_10, %c0_11, %c0_12], %11 {strides = array<i32>} : memref<17x17x16xf32, #tpu.memory_space<vmem>>, vector<17x1x16xf32>,
    %cst_13 = arith.constant -3.000000e+38 : f32
    %13 = vector.broadcast %cst_13 : f32 to vector<17x1x16xf32>
    %c0_14 = arith.constant 0 : index
    %c16_15 = arith.constant 16 : index
    %c0_16 = arith.constant 0 : index
    %14 = vector.load %arg11[%c0_14, %c16_15, %c0_16] : memref<17x17x16xf32, #tpu.memory_space<vmem>>, vector<17x1x16xf32>
    tpu.vector_store %arg11[%c0_14, %c16_15, %c0_16], %13 {strides = array<i32>} : memref<17x17x16xf32, #tpu.memory_space<vmem>>, vector<17x1x16xf32>,
    %15 = arith.addf %3, %4 : vector<16x16x8xf32>
    %16 = arith.addf %15, %5 : vector<16x16x8xf32>
    %17 = arith.addf %16, %6 : vector<16x16x8xf32>
    %18 = vector.extract_strided_slice %17 {offsets = [0, 0, 0], sizes = [16, 16, 4], strides = [1, 1, 1]} : vector<16x16x8xf32> to vector<16x16x4xf32>
    %c0_17 = arith.constant 0 : index
    %c0_18 = arith.constant 0 : index
    %c0_19 = arith.constant 0 : index
    %19 = vector.load %arg10[%c0_17, %c0_18, %c0_19] : memref<17x17x16xf32, #tpu.memory_space<vmem>>, vector<16x16x4xf32>
    tpu.vector_store %arg10[%c0_17, %c0_18, %c0_19], %18 {strides = array<i32>} : memref<17x17x16xf32, #tpu.memory_space<vmem>>, vector<16x16x4xf32>,
    %20 = vector.extract_strided_slice %17 {offsets = [0, 0, 4], sizes = [16, 16, 4], strides = [1, 1, 1]} : vector<16x16x8xf32> to vector<16x16x4xf32>
    %c0_20 = arith.constant 0 : index
    %c0_21 = arith.constant 0 : index
    %c0_22 = arith.constant 0 : index
    %21 = vector.load %arg11[%c0_20, %c0_21, %c0_22] : memref<17x17x16xf32, #tpu.memory_space<vmem>>, vector<16x16x4xf32>
    tpu.vector_store %arg11[%c0_20, %c0_21, %c0_22], %20 {strides = array<i32>} : memref<17x17x16xf32, #tpu.memory_space<vmem>>, vector<16x16x4xf32>,
    %22 = vector.extract_strided_slice %4 {offsets = [0, 0, 0], sizes = [16, 15, 8], strides = [1, 1, 1]} : vector<16x16x8xf32> to vector<16x15x8xf32>
    %23 = vector.extract_strided_slice %6 {offsets = [0, 0, 0], sizes = [16, 15, 8], strides = [1, 1, 1]} : vector<16x16x8xf32> to vector<16x15x8xf32>
    %24 = arith.addf %22, %23 : vector<16x15x8xf32>
    %25 = vector.extract_strided_slice %3 {offsets = [0, 1, 0], sizes = [16, 15, 8], strides = [1, 1, 1]} : vector<16x16x8xf32> to vector<16x15x8xf32>
    %26 = arith.addf %24, %25 : vector<16x15x8xf32>
    %27 = vector.extract_strided_slice %5 {offsets = [0, 1, 0], sizes = [16, 15, 8], strides = [1, 1, 1]} : vector<16x16x8xf32> to vector<16x15x8xf32>
    %28 = arith.addf %26, %27 : vector<16x15x8xf32>
    %29 = vector.extract_strided_slice %28 {offsets = [0, 0, 0], sizes = [16, 15, 4], strides = [1, 1, 1]} : vector<16x15x8xf32> to vector<16x15x4xf32>
    %c0_23 = arith.constant 0 : index
    %c1 = arith.constant 1 : index
    %c4 = arith.constant 4 : index
    %30 = vector.load %arg10[%c0_23, %c1, %c4] : memref<17x17x16xf32, #tpu.memory_space<vmem>>, vector<16x15x4xf32>
    tpu.vector_store %arg10[%c0_23, %c1, %c4], %29 {strides = array<i32>} : memref<17x17x16xf32, #tpu.memory_space<vmem>>, vector<16x15x4xf32>,
    %31 = vector.extract_strided_slice %28 {offsets = [0, 0, 4], sizes = [16, 15, 4], strides = [1, 1, 1]} : vector<16x15x8xf32> to vector<16x15x4xf32>
    %c0_24 = arith.constant 0 : index
    %c1_25 = arith.constant 1 : index
    %c4_26 = arith.constant 4 : index
    %32 = vector.load %arg11[%c0_24, %c1_25, %c4_26] : memref<17x17x16xf32, #tpu.memory_space<vmem>>, vector<16x15x4xf32>
    tpu.vector_store %arg11[%c0_24, %c1_25, %c4_26], %31 {strides = array<i32>} : memref<17x17x16xf32, #tpu.memory_space<vmem>>, vector<16x15x4xf32>,
    %33 = vector.extract_strided_slice %5 {offsets = [0, 0, 0], sizes = [15, 16, 8], strides = [1, 1, 1]} : vector<16x16x8xf32> to vector<15x16x8xf32>
    %34 = vector.extract_strided_slice %6 {offsets = [0, 0, 0], sizes = [15, 16, 8], strides = [1, 1, 1]} : vector<16x16x8xf32> to vector<15x16x8xf32>
    %35 = arith.addf %33, %34 : vector<15x16x8xf32>
    %36 = vector.extract_strided_slice %3 {offsets = [1, 0, 0], sizes = [15, 16, 8], strides = [1, 1, 1]} : vector<16x16x8xf32> to vector<15x16x8xf32>
    %37 = arith.addf %35, %36 : vector<15x16x8xf32>
    %38 = vector.extract_strided_slice %4 {offsets = [1, 0, 0], sizes = [15, 16, 8], strides = [1, 1, 1]} : vector<16x16x8xf32> to vector<15x16x8xf32>
    %39 = arith.addf %37, %38 : vector<15x16x8xf32>
    %40 = vector.extract_strided_slice %39 {offsets = [0, 0, 0], sizes = [15, 16, 4], strides = [1, 1, 1]} : vector<15x16x8xf32> to vector<15x16x4xf32>
    %c1_27 = arith.constant 1 : index
    %c0_28 = arith.constant 0 : index
    %c8 = arith.constant 8 : index
    %41 = vector.load %arg10[%c1_27, %c0_28, %c8] : memref<17x17x16xf32, #tpu.memory_space<vmem>>, vector<15x16x4xf32>
    tpu.vector_store %arg10[%c1_27, %c0_28, %c8], %40 {strides = array<i32>} : memref<17x17x16xf32, #tpu.memory_space<vmem>>, vector<15x16x4xf32>,
    %42 = vector.extract_strided_slice %39 {offsets = [0, 0, 4], sizes = [15, 16, 4], strides = [1, 1, 1]} : vector<15x16x8xf32> to vector<15x16x4xf32>
    %c1_29 = arith.constant 1 : index
    %c0_30 = arith.constant 0 : index
    %c8_31 = arith.constant 8 : index
    %43 = vector.load %arg11[%c1_29, %c0_30, %c8_31] : memref<17x17x16xf32, #tpu.memory_space<vmem>>, vector<15x16x4xf32>
    tpu.vector_store %arg11[%c1_29, %c0_30, %c8_31], %42 {strides = array<i32>} : memref<17x17x16xf32, #tpu.memory_space<vmem>>, vector<15x16x4xf32>,
    %44 = vector.extract_strided_slice %6 {offsets = [0, 0, 0], sizes = [15, 15, 8], strides = [1, 1, 1]} : vector<16x16x8xf32> to vector<15x15x8xf32>
    %45 = vector.extract_strided_slice %5 {offsets = [0, 1, 0], sizes = [15, 15, 8], strides = [1, 1, 1]} : vector<16x16x8xf32> to vector<15x15x8xf32>
    %46 = arith.addf %44, %45 : vector<15x15x8xf32>
    %47 = vector.extract_strided_slice %4 {offsets = [1, 0, 0], sizes = [15, 15, 8], strides = [1, 1, 1]} : vector<16x16x8xf32> to vector<15x15x8xf32>
    %48 = arith.addf %46, %47 : vector<15x15x8xf32>
    %49 = vector.extract_strided_slice %3 {offsets = [1, 1, 0], sizes = [15, 15, 8], strides = [1, 1, 1]} : vector<16x16x8xf32> to vector<15x15x8xf32>
    %50 = arith.addf %48, %49 : vector<15x15x8xf32>
    %51 = vector.extract_strided_slice %50 {offsets = [0, 0, 0], sizes = [15, 15, 4], strides = [1, 1, 1]} : vector<15x15x8xf32> to vector<15x15x4xf32>
    %c1_32 = arith.constant 1 : index
    %c1_33 = arith.constant 1 : index
    %c12 = arith.constant 12 : index
    %52 = vector.load %arg10[%c1_32, %c1_33, %c12] : memref<17x17x16xf32, #tpu.memory_space<vmem>>, vector<15x15x4xf32>
    tpu.vector_store %arg10[%c1_32, %c1_33, %c12], %51 {strides = array<i32>} : memref<17x17x16xf32, #tpu.memory_space<vmem>>, vector<15x15x4xf32>,
    %53 = vector.extract_strided_slice %50 {offsets = [0, 0, 4], sizes = [15, 15, 4], strides = [1, 1, 1]} : vector<15x15x8xf32> to vector<15x15x4xf32>
    %c1_34 = arith.constant 1 : index
    %c1_35 = arith.constant 1 : index
    %c12_36 = arith.constant 12 : index
    %54 = vector.load %arg11[%c1_34, %c1_35, %c12_36] : memref<17x17x16xf32, #tpu.memory_space<vmem>>, vector<15x15x4xf32>
    tpu.vector_store %arg11[%c1_34, %c1_35, %c12_36], %53 {strides = array<i32>} : memref<17x17x16xf32, #tpu.memory_space<vmem>>, vector<15x15x4xf32>,
    %c0_i32 = arith.constant 0 : i32
    %55 = arith.cmpi sgt, %arg1, %c0_i32 : i32
    %56 = arith.extui %55 : i1 to i32
    %c0_i32_37 = arith.constant 0 : i32
    %57 = arith.cmpi ne, %56, %c0_i32_37 : i32
    scf.if %57 {
      %c0_127 = arith.constant 0 : index
      %c0_128 = arith.constant 0 : index
      %c0_129 = arith.constant 0 : index
      %c0_130 = arith.constant 0 : index
      %170 = vector.load %arg3[%c0_127, %c0_128, %c0_129, %c0_130] : memref<1x1x16x32xbf16, #tpu.memory_space<vmem>>, vector<1x1x16x32xbf16>
      %171 = vector.shape_cast %170 : vector<1x1x16x32xbf16> to vector<16x32xbf16>
      %172 = arith.extf %171 : vector<16x32xbf16> to vector<16x32xf32>
      %173 = vector.extract_strided_slice %172 {offsets = [0, 16], sizes = [16, 8], strides = [1, 1]} : vector<16x32xf32> to vector<16x8xf32>
      %174 = vector.extract_strided_slice %172 {offsets = [0, 24], sizes = [16, 8], strides = [1, 1]} : vector<16x32xf32> to vector<16x8xf32>
      %175 = arith.addf %173, %174 : vector<16x8xf32>
      %176 = vector.extract_strided_slice %3 {offsets = [0, 0, 0], sizes = [1, 16, 8], strides = [1, 1, 1]} : vector<16x16x8xf32> to vector<1x16x8xf32>
      %177 = vector.shape_cast %176 : vector<1x16x8xf32> to vector<16x8xf32>
      %178 = arith.addf %175, %177 : vector<16x8xf32>
      %179 = vector.extract_strided_slice %4 {offsets = [0, 0, 0], sizes = [1, 16, 8], strides = [1, 1, 1]} : vector<16x16x8xf32> to vector<1x16x8xf32>
      %180 = vector.shape_cast %179 : vector<1x16x8xf32> to vector<16x8xf32>
      %181 = arith.addf %178, %180 : vector<16x8xf32>
      %182 = vector.shape_cast %181 : vector<16x8xf32> to vector<1x16x8xf32>
      %183 = vector.extract_strided_slice %182 {offsets = [0, 0, 0], sizes = [1, 16, 4], strides = [1, 1, 1]} : vector<1x16x8xf32> to vector<1x16x4xf32>
      %c0_131 = arith.constant 0 : index
      %c0_132 = arith.constant 0 : index
      %c8_133 = arith.constant 8 : index
      %184 = vector.load %arg10[%c0_131, %c0_132, %c8_133] : memref<17x17x16xf32, #tpu.memory_space<vmem>>, vector<1x16x4xf32>
      tpu.vector_store %arg10[%c0_131, %c0_132, %c8_133], %183 {strides = array<i32>} : memref<17x17x16xf32, #tpu.memory_space<vmem>>, vector<1x16x4xf32>,
      %185 = vector.extract_strided_slice %182 {offsets = [0, 0, 4], sizes = [1, 16, 4], strides = [1, 1, 1]} : vector<1x16x8xf32> to vector<1x16x4xf32>
      %c0_134 = arith.constant 0 : index
      %c0_135 = arith.constant 0 : index
      %c8_136 = arith.constant 8 : index
      %186 = vector.load %arg11[%c0_134, %c0_135, %c8_136] : memref<17x17x16xf32, #tpu.memory_space<vmem>>, vector<1x16x4xf32>
      tpu.vector_store %arg11[%c0_134, %c0_135, %c8_136], %185 {strides = array<i32>} : memref<17x17x16xf32, #tpu.memory_space<vmem>>, vector<1x16x4xf32>,
      %187 = vector.extract_strided_slice %174 {offsets = [0, 0], sizes = [15, 8], strides = [1, 1]} : vector<16x8xf32> to vector<15x8xf32>
      %188 = vector.extract_strided_slice %173 {offsets = [1, 0], sizes = [15, 8], strides = [1, 1]} : vector<16x8xf32> to vector<15x8xf32>
      %189 = arith.addf %187, %188 : vector<15x8xf32>
      %190 = vector.extract_strided_slice %4 {offsets = [0, 0, 0], sizes = [1, 15, 8], strides = [1, 1, 1]} : vector<16x16x8xf32> to vector<1x15x8xf32>
      %191 = vector.shape_cast %190 : vector<1x15x8xf32> to vector<15x8xf32>
      %192 = arith.addf %189, %191 : vector<15x8xf32>
      %193 = vector.extract_strided_slice %3 {offsets = [0, 1, 0], sizes = [1, 15, 8], strides = [1, 1, 1]} : vector<16x16x8xf32> to vector<1x15x8xf32>
      %194 = vector.shape_cast %193 : vector<1x15x8xf32> to vector<15x8xf32>
      %195 = arith.addf %192, %194 : vector<15x8xf32>
      %196 = vector.shape_cast %195 : vector<15x8xf32> to vector<1x15x8xf32>
      %197 = vector.extract_strided_slice %196 {offsets = [0, 0, 0], sizes = [1, 15, 4], strides = [1, 1, 1]} : vector<1x15x8xf32> to vector<1x15x4xf32>
      %c0_137 = arith.constant 0 : index
      %c1_138 = arith.constant 1 : index
      %c12_139 = arith.constant 12 : index
      %198 = vector.load %arg10[%c0_137, %c1_138, %c12_139] : memref<17x17x16xf32, #tpu.memory_space<vmem>>, vector<1x15x4xf32>
      tpu.vector_store %arg10[%c0_137, %c1_138, %c12_139], %197 {strides = array<i32>} : memref<17x17x16xf32, #tpu.memory_space<vmem>>, vector<1x15x4xf32>,
      %199 = vector.extract_strided_slice %196 {offsets = [0, 0, 4], sizes = [1, 15, 4], strides = [1, 1, 1]} : vector<1x15x8xf32> to vector<1x15x4xf32>
      %c0_140 = arith.constant 0 : index
      %c1_141 = arith.constant 1 : index
      %c12_142 = arith.constant 12 : index
      %200 = vector.load %arg11[%c0_140, %c1_141, %c12_142] : memref<17x17x16xf32, #tpu.memory_space<vmem>>, vector<1x15x4xf32>
      tpu.vector_store %arg11[%c0_140, %c1_141, %c12_142], %199 {strides = array<i32>} : memref<17x17x16xf32, #tpu.memory_space<vmem>>, vector<1x15x4xf32>,
    } else {
    }
    %c0_i32_38 = arith.constant 0 : i32
    %58 = arith.cmpi eq, %arg1, %c0_i32_38 : i32
    %59 = arith.extui %58 : i1 to i32
    %c0_i32_39 = arith.constant 0 : i32
    %60 = arith.cmpi ne, %59, %c0_i32_39 : i32
    scf.if %60 {
      %cst_127 = arith.constant 0.000000e+00 : f32
      %170 = vector.broadcast %cst_127 : f32 to vector<1x17x8xf32>
      %c0_128 = arith.constant 0 : index
      %c0_129 = arith.constant 0 : index
      %c8_130 = arith.constant 8 : index
      %171 = vector.load %arg10[%c0_128, %c0_129, %c8_130] : memref<17x17x16xf32, #tpu.memory_space<vmem>>, vector<1x17x8xf32>
      tpu.vector_store %arg10[%c0_128, %c0_129, %c8_130], %170 {strides = array<i32>} : memref<17x17x16xf32, #tpu.memory_space<vmem>>, vector<1x17x8xf32>,
      %cst_131 = arith.constant -3.000000e+38 : f32
      %172 = vector.broadcast %cst_131 : f32 to vector<1x17x8xf32>
      %c0_132 = arith.constant 0 : index
      %c0_133 = arith.constant 0 : index
      %c8_134 = arith.constant 8 : index
      %173 = vector.load %arg11[%c0_132, %c0_133, %c8_134] : memref<17x17x16xf32, #tpu.memory_space<vmem>>, vector<1x17x8xf32>
      tpu.vector_store %arg11[%c0_132, %c0_133, %c8_134], %172 {strides = array<i32>} : memref<17x17x16xf32, #tpu.memory_space<vmem>>, vector<1x17x8xf32>,
    } else {
    }
    %c0_i32_40 = arith.constant 0 : i32
    %61 = arith.cmpi slt, %arg1, %c0_i32_40 : i32
    %62 = arith.extui %61 : i1 to i32
    %c0_i32_41 = arith.constant 0 : i32
    %63 = arith.cmpi ne, %62, %c0_i32_41 : i32
    scf.if %63 {
      %c0_127 = arith.constant 0 : index
      %c0_128 = arith.constant 0 : index
      %c0_129 = arith.constant 0 : index
      %c0_130 = arith.constant 0 : index
      %170 = vector.load %arg4[%c0_127, %c0_128, %c0_129, %c0_130] : memref<1x1x16x32xbf16, #tpu.memory_space<vmem>>, vector<1x1x16x32xbf16>
      %171 = vector.shape_cast %170 : vector<1x1x16x32xbf16> to vector<16x32xbf16>
      %172 = arith.extf %171 : vector<16x32xbf16> to vector<16x32xf32>
      %173 = vector.extract_strided_slice %172 {offsets = [0, 0], sizes = [16, 8], strides = [1, 1]} : vector<16x32xf32> to vector<16x8xf32>
      %174 = vector.extract_strided_slice %172 {offsets = [0, 8], sizes = [16, 8], strides = [1, 1]} : vector<16x32xf32> to vector<16x8xf32>
      %175 = vector.extract_strided_slice %5 {offsets = [15, 0, 0], sizes = [1, 16, 8], strides = [1, 1, 1]} : vector<16x16x8xf32> to vector<1x16x8xf32>
      %176 = vector.shape_cast %175 : vector<1x16x8xf32> to vector<16x8xf32>
      %177 = vector.extract_strided_slice %6 {offsets = [15, 0, 0], sizes = [1, 16, 8], strides = [1, 1, 1]} : vector<16x16x8xf32> to vector<1x16x8xf32>
      %178 = vector.shape_cast %177 : vector<1x16x8xf32> to vector<16x8xf32>
      %179 = arith.addf %176, %178 : vector<16x8xf32>
      %180 = arith.addf %179, %173 : vector<16x8xf32>
      %181 = arith.addf %180, %174 : vector<16x8xf32>
      %182 = vector.shape_cast %181 : vector<16x8xf32> to vector<1x16x8xf32>
      %183 = vector.extract_strided_slice %182 {offsets = [0, 0, 0], sizes = [1, 16, 4], strides = [1, 1, 1]} : vector<1x16x8xf32> to vector<1x16x4xf32>
      %c16_131 = arith.constant 16 : index
      %c0_132 = arith.constant 0 : index
      %c8_133 = arith.constant 8 : index
      %184 = vector.load %arg10[%c16_131, %c0_132, %c8_133] : memref<17x17x16xf32, #tpu.memory_space<vmem>>, vector<1x16x4xf32>
      tpu.vector_store %arg10[%c16_131, %c0_132, %c8_133], %183 {strides = array<i32>} : memref<17x17x16xf32, #tpu.memory_space<vmem>>, vector<1x16x4xf32>,
      %185 = vector.extract_strided_slice %182 {offsets = [0, 0, 4], sizes = [1, 16, 4], strides = [1, 1, 1]} : vector<1x16x8xf32> to vector<1x16x4xf32>
      %c16_134 = arith.constant 16 : index
      %c0_135 = arith.constant 0 : index
      %c8_136 = arith.constant 8 : index
      %186 = vector.load %arg11[%c16_134, %c0_135, %c8_136] : memref<17x17x16xf32, #tpu.memory_space<vmem>>, vector<1x16x4xf32>
      tpu.vector_store %arg11[%c16_134, %c0_135, %c8_136], %185 {strides = array<i32>} : memref<17x17x16xf32, #tpu.memory_space<vmem>>, vector<1x16x4xf32>,
      %187 = vector.extract_strided_slice %6 {offsets = [15, 0, 0], sizes = [1, 15, 8], strides = [1, 1, 1]} : vector<16x16x8xf32> to vector<1x15x8xf32>
      %188 = vector.shape_cast %187 : vector<1x15x8xf32> to vector<15x8xf32>
      %189 = vector.extract_strided_slice %5 {offsets = [15, 1, 0], sizes = [1, 15, 8], strides = [1, 1, 1]} : vector<16x16x8xf32> to vector<1x15x8xf32>
      %190 = vector.shape_cast %189 : vector<1x15x8xf32> to vector<15x8xf32>
      %191 = arith.addf %188, %190 : vector<15x8xf32>
      %192 = vector.extract_strided_slice %174 {offsets = [0, 0], sizes = [15, 8], strides = [1, 1]} : vector<16x8xf32> to vector<15x8xf32>
      %193 = arith.addf %191, %192 : vector<15x8xf32>
      %194 = vector.extract_strided_slice %173 {offsets = [1, 0], sizes = [15, 8], strides = [1, 1]} : vector<16x8xf32> to vector<15x8xf32>
      %195 = arith.addf %193, %194 : vector<15x8xf32>
      %196 = vector.shape_cast %195 : vector<15x8xf32> to vector<1x15x8xf32>
      %197 = vector.extract_strided_slice %196 {offsets = [0, 0, 0], sizes = [1, 15, 4], strides = [1, 1, 1]} : vector<1x15x8xf32> to vector<1x15x4xf32>
      %c16_137 = arith.constant 16 : index
      %c1_138 = arith.constant 1 : index
      %c12_139 = arith.constant 12 : index
      %198 = vector.load %arg10[%c16_137, %c1_138, %c12_139] : memref<17x17x16xf32, #tpu.memory_space<vmem>>, vector<1x15x4xf32>
      tpu.vector_store %arg10[%c16_137, %c1_138, %c12_139], %197 {strides = array<i32>} : memref<17x17x16xf32, #tpu.memory_space<vmem>>, vector<1x15x4xf32>,
      %199 = vector.extract_strided_slice %196 {offsets = [0, 0, 4], sizes = [1, 15, 4], strides = [1, 1, 1]} : vector<1x15x8xf32> to vector<1x15x4xf32>
      %c16_140 = arith.constant 16 : index
      %c1_141 = arith.constant 1 : index
      %c12_142 = arith.constant 12 : index
      %200 = vector.load %arg11[%c16_140, %c1_141, %c12_142] : memref<17x17x16xf32, #tpu.memory_space<vmem>>, vector<1x15x4xf32>
      tpu.vector_store %arg11[%c16_140, %c1_141, %c12_142], %199 {strides = array<i32>} : memref<17x17x16xf32, #tpu.memory_space<vmem>>, vector<1x15x4xf32>,
    } else {
    }
    %c0_i32_42 = arith.constant 0 : i32
    %64 = arith.cmpi eq, %arg1, %c0_i32_42 : i32
    %65 = arith.extui %64 : i1 to i32
    %c0_i32_43 = arith.constant 0 : i32
    %66 = arith.cmpi ne, %65, %c0_i32_43 : i32
    scf.if %66 {
      %cst_127 = arith.constant 0.000000e+00 : f32
      %170 = vector.broadcast %cst_127 : f32 to vector<1x17x8xf32>
      %c16_128 = arith.constant 16 : index
      %c0_129 = arith.constant 0 : index
      %c8_130 = arith.constant 8 : index
      %171 = vector.load %arg10[%c16_128, %c0_129, %c8_130] : memref<17x17x16xf32, #tpu.memory_space<vmem>>, vector<1x17x8xf32>
      tpu.vector_store %arg10[%c16_128, %c0_129, %c8_130], %170 {strides = array<i32>} : memref<17x17x16xf32, #tpu.memory_space<vmem>>, vector<1x17x8xf32>,
      %cst_131 = arith.constant -3.000000e+38 : f32
      %172 = vector.broadcast %cst_131 : f32 to vector<1x17x8xf32>
      %c16_132 = arith.constant 16 : index
      %c0_133 = arith.constant 0 : index
      %c8_134 = arith.constant 8 : index
      %173 = vector.load %arg11[%c16_132, %c0_133, %c8_134] : memref<17x17x16xf32, #tpu.memory_space<vmem>>, vector<1x17x8xf32>
      tpu.vector_store %arg11[%c16_132, %c0_133, %c8_134], %172 {strides = array<i32>} : memref<17x17x16xf32, #tpu.memory_space<vmem>>, vector<1x17x8xf32>,
    } else {
    }
    %c0_44 = arith.constant 0 : index
    %c0_45 = arith.constant 0 : index
    %67 = vector.load %arg5[%c0_44, %c0_45] : memref<36x8xbf16, #tpu.memory_space<vmem>>, vector<36x8xbf16>
    %cst_46 = arith.constant 0.000000e+00 : f32
    %68 = vector.broadcast %cst_46 : f32 to vector<256x8xf32>
    %c0_47 = arith.constant 0 : index
    %c0_48 = arith.constant 0 : index
    %c12_49 = arith.constant 12 : index
    %69 = vector.load %arg10[%c0_47, %c0_48, %c12_49] : memref<17x17x16xf32, #tpu.memory_space<vmem>>, vector<16x16x4xf32>
    %70 = vector.shape_cast %69 : vector<16x16x4xf32> to vector<256x4xf32>
    %71 = arith.truncf %70 : vector<256x4xf32> to vector<256x4xbf16>
    %72 = vector.extract_strided_slice %67 {offsets = [0, 0], sizes = [4, 8], strides = [1, 1]} : vector<36x8xbf16> to vector<4x8xbf16>
    %cst_50 = arith.constant dense<0.000000e+00> : vector<256x8xf32>
    %73 = tpu.matmul %71, %72, %cst_50 {dimension_numbers = #tpu.dot_dimension_numbers<[1], [0], [0], [1], [0, 0, 1, 1], [], []>} : vector<256x4xbf16>, vector<4x8xbf16>, vector<256x8xf32> -> vector<256x8xf32>
    %74 = arith.addf %68, %73 : vector<256x8xf32>
    %c0_51 = arith.constant 0 : index
    %c0_52 = arith.constant 0 : index
    %c12_53 = arith.constant 12 : index
    %75 = vector.load %arg11[%c0_51, %c0_52, %c12_53] : memref<17x17x16xf32, #tpu.memory_space<vmem>>, vector<16x16x4xf32>
    %c0_54 = arith.constant 0 : index
    %c0_55 = arith.constant 0 : index
    %c8_56 = arith.constant 8 : index
    %76 = vector.load %arg10[%c0_54, %c0_55, %c8_56] : memref<17x17x16xf32, #tpu.memory_space<vmem>>, vector<16x16x4xf32>
    %77 = vector.shape_cast %76 : vector<16x16x4xf32> to vector<256x4xf32>
    %78 = arith.truncf %77 : vector<256x4xf32> to vector<256x4xbf16>
    %79 = vector.extract_strided_slice %67 {offsets = [4, 0], sizes = [4, 8], strides = [1, 1]} : vector<36x8xbf16> to vector<4x8xbf16>
    %cst_57 = arith.constant dense<0.000000e+00> : vector<256x8xf32>
    %80 = tpu.matmul %78, %79, %cst_57 {dimension_numbers = #tpu.dot_dimension_numbers<[1], [0], [0], [1], [0, 0, 1, 1], [], []>} : vector<256x4xbf16>, vector<4x8xbf16>, vector<256x8xf32> -> vector<256x8xf32>
    %81 = arith.addf %74, %80 : vector<256x8xf32>
    %c0_58 = arith.constant 0 : index
    %c0_59 = arith.constant 0 : index
    %c8_60 = arith.constant 8 : index
    %82 = vector.load %arg11[%c0_58, %c0_59, %c8_60] : memref<17x17x16xf32, #tpu.memory_space<vmem>>, vector<16x16x4xf32>
    %83 = arith.maximumf %75, %82 : vector<16x16x4xf32>
    %c0_61 = arith.constant 0 : index
    %c1_62 = arith.constant 1 : index
    %c12_63 = arith.constant 12 : index
    %84 = vector.load %arg10[%c0_61, %c1_62, %c12_63] : memref<17x17x16xf32, #tpu.memory_space<vmem>>, vector<16x16x4xf32>
    %85 = vector.shape_cast %84 : vector<16x16x4xf32> to vector<256x4xf32>
    %86 = arith.truncf %85 : vector<256x4xf32> to vector<256x4xbf16>
    %87 = vector.extract_strided_slice %67 {offsets = [8, 0], sizes = [4, 8], strides = [1, 1]} : vector<36x8xbf16> to vector<4x8xbf16>
    %cst_64 = arith.constant dense<0.000000e+00> : vector<256x8xf32>
    %88 = tpu.matmul %86, %87, %cst_64 {dimension_numbers = #tpu.dot_dimension_numbers<[1], [0], [0], [1], [0, 0, 1, 1], [], []>} : vector<256x4xbf16>, vector<4x8xbf16>, vector<256x8xf32> -> vector<256x8xf32>
    %89 = arith.addf %81, %88 : vector<256x8xf32>
    %c0_65 = arith.constant 0 : index
    %c1_66 = arith.constant 1 : index
    %c12_67 = arith.constant 12 : index
    %90 = vector.load %arg11[%c0_65, %c1_66, %c12_67] : memref<17x17x16xf32, #tpu.memory_space<vmem>>, vector<16x16x4xf32>
    %91 = arith.maximumf %83, %90 : vector<16x16x4xf32>
    %c0_68 = arith.constant 0 : index
    %c0_69 = arith.constant 0 : index
    %c4_70 = arith.constant 4 : index
    %92 = vector.load %arg10[%c0_68, %c0_69, %c4_70] : memref<17x17x16xf32, #tpu.memory_space<vmem>>, vector<16x16x4xf32>
    %93 = vector.shape_cast %92 : vector<16x16x4xf32> to vector<256x4xf32>
    %94 = arith.truncf %93 : vector<256x4xf32> to vector<256x4xbf16>
    %95 = vector.extract_strided_slice %67 {offsets = [12, 0], sizes = [4, 8], strides = [1, 1]} : vector<36x8xbf16> to vector<4x8xbf16>
    %cst_71 = arith.constant dense<0.000000e+00> : vector<256x8xf32>
    %96 = tpu.matmul %94, %95, %cst_71 {dimension_numbers = #tpu.dot_dimension_numbers<[1], [0], [0], [1], [0, 0, 1, 1], [], []>} : vector<256x4xbf16>, vector<4x8xbf16>, vector<256x8xf32> -> vector<256x8xf32>
    %97 = arith.addf %89, %96 : vector<256x8xf32>
    %c0_72 = arith.constant 0 : index
    %c0_73 = arith.constant 0 : index
    %c4_74 = arith.constant 4 : index
    %98 = vector.load %arg11[%c0_72, %c0_73, %c4_74] : memref<17x17x16xf32, #tpu.memory_space<vmem>>, vector<16x16x4xf32>
    %99 = arith.maximumf %91, %98 : vector<16x16x4xf32>
    %c0_75 = arith.constant 0 : index
    %c0_76 = arith.constant 0 : index
    %c0_77 = arith.constant 0 : index
    %100 = vector.load %arg10[%c0_75, %c0_76, %c0_77] : memref<17x17x16xf32, #tpu.memory_space<vmem>>, vector<16x16x4xf32>
    %101 = vector.shape_cast %100 : vector<16x16x4xf32> to vector<256x4xf32>
    %102 = arith.truncf %101 : vector<256x4xf32> to vector<256x4xbf16>
    %103 = vector.extract_strided_slice %67 {offsets = [16, 0], sizes = [4, 8], strides = [1, 1]} : vector<36x8xbf16> to vector<4x8xbf16>
    %cst_78 = arith.constant dense<0.000000e+00> : vector<256x8xf32>
    %104 = tpu.matmul %102, %103, %cst_78 {dimension_numbers = #tpu.dot_dimension_numbers<[1], [0], [0], [1], [0, 0, 1, 1], [], []>} : vector<256x4xbf16>, vector<4x8xbf16>, vector<256x8xf32> -> vector<256x8xf32>
    %105 = arith.addf %97, %104 : vector<256x8xf32>
    %c0_79 = arith.constant 0 : index
    %c0_80 = arith.constant 0 : index
    %c0_81 = arith.constant 0 : index
    %106 = vector.load %arg11[%c0_79, %c0_80, %c0_81] : memref<17x17x16xf32, #tpu.memory_space<vmem>>, vector<16x16x4xf32>
    %107 = arith.maximumf %99, %106 : vector<16x16x4xf32>
    %c0_82 = arith.constant 0 : index
    %c1_83 = arith.constant 1 : index
    %c4_84 = arith.constant 4 : index
    %108 = vector.load %arg10[%c0_82, %c1_83, %c4_84] : memref<17x17x16xf32, #tpu.memory_space<vmem>>, vector<16x16x4xf32>
    %109 = vector.shape_cast %108 : vector<16x16x4xf32> to vector<256x4xf32>
    %110 = arith.truncf %109 : vector<256x4xf32> to vector<256x4xbf16>
    %111 = vector.extract_strided_slice %67 {offsets = [20, 0], sizes = [4, 8], strides = [1, 1]} : vector<36x8xbf16> to vector<4x8xbf16>
    %cst_85 = arith.constant dense<0.000000e+00> : vector<256x8xf32>
    %112 = tpu.matmul %110, %111, %cst_85 {dimension_numbers = #tpu.dot_dimension_numbers<[1], [0], [0], [1], [0, 0, 1, 1], [], []>} : vector<256x4xbf16>, vector<4x8xbf16>, vector<256x8xf32> -> vector<256x8xf32>
    %113 = arith.addf %105, %112 : vector<256x8xf32>
    %c0_86 = arith.constant 0 : index
    %c1_87 = arith.constant 1 : index
    %c4_88 = arith.constant 4 : index
    %114 = vector.load %arg11[%c0_86, %c1_87, %c4_88] : memref<17x17x16xf32, #tpu.memory_space<vmem>>, vector<16x16x4xf32>
    %115 = arith.maximumf %107, %114 : vector<16x16x4xf32>
    %c1_89 = arith.constant 1 : index
    %c0_90 = arith.constant 0 : index
    %c12_91 = arith.constant 12 : index
    %116 = vector.load %arg10[%c1_89, %c0_90, %c12_91] : memref<17x17x16xf32, #tpu.memory_space<vmem>>, vector<16x16x4xf32>
    %117 = vector.shape_cast %116 : vector<16x16x4xf32> to vector<256x4xf32>
    %118 = arith.truncf %117 : vector<256x4xf32> to vector<256x4xbf16>
    %119 = vector.extract_strided_slice %67 {offsets = [24, 0], sizes = [4, 8], strides = [1, 1]} : vector<36x8xbf16> to vector<4x8xbf16>
    %cst_92 = arith.constant dense<0.000000e+00> : vector<256x8xf32>
    %120 = tpu.matmul %118, %119, %cst_92 {dimension_numbers = #tpu.dot_dimension_numbers<[1], [0], [0], [1], [0, 0, 1, 1], [], []>} : vector<256x4xbf16>, vector<4x8xbf16>, vector<256x8xf32> -> vector<256x8xf32>
    %121 = arith.addf %113, %120 : vector<256x8xf32>
    %c1_93 = arith.constant 1 : index
    %c0_94 = arith.constant 0 : index
    %c12_95 = arith.constant 12 : index
    %122 = vector.load %arg11[%c1_93, %c0_94, %c12_95] : memref<17x17x16xf32, #tpu.memory_space<vmem>>, vector<16x16x4xf32>
    %123 = arith.maximumf %115, %122 : vector<16x16x4xf32>
    %c1_96 = arith.constant 1 : index
    %c0_97 = arith.constant 0 : index
    %c8_98 = arith.constant 8 : index
    %124 = vector.load %arg10[%c1_96, %c0_97, %c8_98] : memref<17x17x16xf32, #tpu.memory_space<vmem>>, vector<16x16x4xf32>
    %125 = vector.shape_cast %124 : vector<16x16x4xf32> to vector<256x4xf32>
    %126 = arith.truncf %125 : vector<256x4xf32> to vector<256x4xbf16>
    %127 = vector.extract_strided_slice %67 {offsets = [28, 0], sizes = [4, 8], strides = [1, 1]} : vector<36x8xbf16> to vector<4x8xbf16>
    %cst_99 = arith.constant dense<0.000000e+00> : vector<256x8xf32>
    %128 = tpu.matmul %126, %127, %cst_99 {dimension_numbers = #tpu.dot_dimension_numbers<[1], [0], [0], [1], [0, 0, 1, 1], [], []>} : vector<256x4xbf16>, vector<4x8xbf16>, vector<256x8xf32> -> vector<256x8xf32>
    %129 = arith.addf %121, %128 : vector<256x8xf32>
    %c1_100 = arith.constant 1 : index
    %c0_101 = arith.constant 0 : index
    %c8_102 = arith.constant 8 : index
    %130 = vector.load %arg11[%c1_100, %c0_101, %c8_102] : memref<17x17x16xf32, #tpu.memory_space<vmem>>, vector<16x16x4xf32>
    %131 = arith.maximumf %123, %130 : vector<16x16x4xf32>
    %c1_103 = arith.constant 1 : index
    %c1_104 = arith.constant 1 : index
    %c12_105 = arith.constant 12 : index
    %132 = vector.load %arg10[%c1_103, %c1_104, %c12_105] : memref<17x17x16xf32, #tpu.memory_space<vmem>>, vector<16x16x4xf32>
    %133 = vector.shape_cast %132 : vector<16x16x4xf32> to vector<256x4xf32>
    %134 = arith.truncf %133 : vector<256x4xf32> to vector<256x4xbf16>
    %135 = vector.extract_strided_slice %67 {offsets = [32, 0], sizes = [4, 8], strides = [1, 1]} : vector<36x8xbf16> to vector<4x8xbf16>
    %cst_106 = arith.constant dense<0.000000e+00> : vector<256x8xf32>
    %136 = tpu.matmul %134, %135, %cst_106 {dimension_numbers = #tpu.dot_dimension_numbers<[1], [0], [0], [1], [0, 0, 1, 1], [], []>} : vector<256x4xbf16>, vector<4x8xbf16>, vector<256x8xf32> -> vector<256x8xf32>
    %137 = arith.addf %129, %136 : vector<256x8xf32>
    %c1_107 = arith.constant 1 : index
    %c1_108 = arith.constant 1 : index
    %c12_109 = arith.constant 12 : index
    %138 = vector.load %arg11[%c1_107, %c1_108, %c12_109] : memref<17x17x16xf32, #tpu.memory_space<vmem>>, vector<16x16x4xf32>
    %139 = arith.maximumf %131, %138 : vector<16x16x4xf32>
    %c0_110 = arith.constant 0 : index
    %c0_111 = arith.constant 0 : index
    %140 = vector.load %arg6[%c0_110, %c0_111] : memref<1x8xf32, #tpu.memory_space<vmem>>, vector<1x8xf32>
    %141 = vector.broadcast %140 : vector<1x8xf32> to vector<256x8xf32>
    %142 = arith.addf %137, %141 : vector<256x8xf32>
    %cst_112 = arith.constant 0.000000e+00 : f32
    %143 = vector.broadcast %cst_112 : f32 to vector<256x8xf32>
    %144 = arith.subf %143, %142 : vector<256x8xf32>
    %145 = math.exp %144 : vector<256x8xf32>
    %cst_113 = arith.constant 1.000000e+00 : f32
    %146 = vector.broadcast %cst_113 : f32 to vector<256x8xf32>
    %147 = arith.addf %146, %145 : vector<256x8xf32>
    %148 = tpu.reciprocal %147 {approx = true} : vector<256x8xf32> -> vector<256x8xf32>
    %149 = arith.mulf %142, %148 : vector<256x8xf32>
    %150 = vector.shape_cast %139 : vector<16x16x4xf32> to vector<256x4xf32>
    %151 = arith.truncf %150 : vector<256x4xf32> to vector<256x4xbf16>
    %c0_114 = arith.constant 0 : index
    %c0_115 = arith.constant 0 : index
    %152 = vector.load %arg7[%c0_114, %c0_115] : memref<4x8xbf16, #tpu.memory_space<vmem>>, vector<4x8xbf16>
    %cst_116 = arith.constant dense<0.000000e+00> : vector<256x8xf32>
    %153 = tpu.matmul %151, %152, %cst_116 {dimension_numbers = #tpu.dot_dimension_numbers<[1], [0], [0], [1], [0, 0, 1, 1], [], []>} : vector<256x4xbf16>, vector<4x8xbf16>, vector<256x8xf32> -> vector<256x8xf32>
    %c0_117 = arith.constant 0 : index
    %c0_118 = arith.constant 0 : index
    %154 = vector.load %arg8[%c0_117, %c0_118] : memref<1x8xf32, #tpu.memory_space<vmem>>, vector<1x8xf32>
    %155 = vector.broadcast %154 : vector<1x8xf32> to vector<256x8xf32>
    %156 = arith.addf %153, %155 : vector<256x8xf32>
    %cst_119 = arith.constant 0.000000e+00 : f32
    %157 = vector.broadcast %cst_119 : f32 to vector<256x8xf32>
    %158 = arith.subf %157, %156 : vector<256x8xf32>
    %159 = math.exp %158 : vector<256x8xf32>
    %cst_120 = arith.constant 1.000000e+00 : f32
    %160 = vector.broadcast %cst_120 : f32 to vector<256x8xf32>
    %161 = arith.addf %160, %159 : vector<256x8xf32>
    %162 = tpu.reciprocal %161 {approx = true} : vector<256x8xf32> -> vector<256x8xf32>
    %163 = arith.mulf %156, %162 : vector<256x8xf32>
    %164 = tpu.transpose %149, [1, 0] : vector<256x8xf32> -> vector<8x256xf32>
    %165 = vector.shape_cast %164 : vector<8x256xf32> to vector<1x8x256xf32>
    %c0_121 = arith.constant 0 : index
    %c0_122 = arith.constant 0 : index
    %c0_123 = arith.constant 0 : index
    %166 = vector.load %arg9[%c0_121, %c0_122, %c0_123] : memref<1x16x256xf32, #tpu.memory_space<vmem>>, vector<1x8x256xf32>
    tpu.vector_store %arg9[%c0_121, %c0_122, %c0_123], %165 {strides = array<i32>} : memref<1x16x256xf32, #tpu.memory_space<vmem>>, vector<1x8x256xf32>,
    %167 = tpu.transpose %163, [1, 0] : vector<256x8xf32> -> vector<8x256xf32>
    %168 = vector.shape_cast %167 : vector<8x256xf32> to vector<1x8x256xf32>
    %c0_124 = arith.constant 0 : index
    %c8_125 = arith.constant 8 : index
    %c0_126 = arith.constant 0 : index
    %169 = vector.load %arg9[%c0_124, %c8_125, %c0_126] : memref<1x16x256xf32, #tpu.memory_space<vmem>>, vector<1x8x256xf32>
    tpu.vector_store %arg9[%c0_124, %c8_125, %c0_126], %168 {strides = array<i32>} : memref<1x16x256xf32, #tpu.memory_space<vmem>>, vector<1x8x256xf32>,
    return
  }
  func.func @transform_0(%arg0: i32, %arg1: i32) -> (i32, i32, i32, i32) {
    %c0_i32 = arith.constant 0 : i32
    %c0_i32_0 = arith.constant 0 : i32
    %c0_i32_1 = arith.constant 0 : i32
    return %arg0, %arg1, %c0_i32, %c0_i32_0 : i32, i32, i32, i32
  }
  func.func @transform_1(%arg0: i32, %arg1: i32) -> (i32, i32, i32, i32) {
    %c16_i32 = arith.constant 16 : i32
    %0 = arith.muli %arg1, %c16_i32 : i32
    %c1_i32 = arith.constant 1 : i32
    %1 = arith.subi %0, %c1_i32 : i32
    %c0_i32 = arith.constant 0 : i32
    %2 = arith.maxsi %1, %c0_i32 : i32
    %c0_i32_0 = arith.constant 0 : i32
    %c0_i32_1 = arith.constant 0 : i32
    %c0_i32_2 = arith.constant 0 : i32
    return %arg0, %2, %c0_i32_0, %c0_i32_1 : i32, i32, i32, i32
  }
  func.func @transform_2(%arg0: i32, %arg1: i32) -> (i32, i32, i32, i32) {
    %c1_i32 = arith.constant 1 : i32
    %0 = arith.addi %arg1, %c1_i32 : i32
    %c16_i32 = arith.constant 16 : i32
    %1 = arith.muli %0, %c16_i32 : i32
    %c15_i32 = arith.constant 15 : i32
    %2 = arith.minsi %1, %c15_i32 : i32
    %c0_i32 = arith.constant 0 : i32
    %c0_i32_0 = arith.constant 0 : i32
    %c0_i32_1 = arith.constant 0 : i32
    return %arg0, %2, %c0_i32, %c0_i32_0 : i32, i32, i32, i32
  }
  func.func @transform_3(%arg0: i32, %arg1: i32) -> (i32, i32) {
    %c0_i32 = arith.constant 0 : i32
    %c0_i32_0 = arith.constant 0 : i32
    %c0_i32_1 = arith.constant 0 : i32
    return %c0_i32, %c0_i32_0 : i32, i32
  }
  func.func @transform_4(%arg0: i32, %arg1: i32) -> (i32, i32) {
    %c0_i32 = arith.constant 0 : i32
    %c0_i32_0 = arith.constant 0 : i32
    %c0_i32_1 = arith.constant 0 : i32
    return %c0_i32, %c0_i32_0 : i32, i32
  }
  func.func @transform_5(%arg0: i32, %arg1: i32) -> (i32, i32) {
    %c0_i32 = arith.constant 0 : i32
    %c0_i32_0 = arith.constant 0 : i32
    %c0_i32_1 = arith.constant 0 : i32
    return %c0_i32, %c0_i32_0 : i32, i32
  }
  func.func @transform_6(%arg0: i32, %arg1: i32) -> (i32, i32) {
    %c0_i32 = arith.constant 0 : i32
    %c0_i32_0 = arith.constant 0 : i32
    %c0_i32_1 = arith.constant 0 : i32
    return %c0_i32, %c0_i32_0 : i32, i32
  }
  func.func @transform_7(%arg0: i32, %arg1: i32) -> (i32, i32, i32) {
    %c0_i32 = arith.constant 0 : i32
    %c0_i32_0 = arith.constant 0 : i32
    return %arg0, %c0_i32, %arg1 : i32, i32, i32
  }
}

</mosaic_0001>

<llo_original>
// kernel: tpu_custom_call.1
$region0: #{tpu_custom_call.1}
  #allocation0 [shape = 'u32[]', space=smem, size = 0x4, offset = 0x4, fixed_abs, tag = 'smem constant byte address 0x4 - core index']
  #allocation1 [shape = 'u32[144,128]{1,0:T(1,128)}', space=vmem, size = 0x12000, scoped, tag = 'internal scratch']
  #allocation2 [shape = 'f32[17,17,16]{2,1,0:T(8,128)}', space=vmem, size = 0x33000, scoped, tag = 'scratch operand']
  #allocation3 [shape = 'f32[17,17,16]{2,1,0:T(8,128)}', space=vmem, size = 0x33000, scoped, tag = 'scratch operand']
  %s0 = inlined_call_operand.hbm [shape: bf16[2,16,16,32], index: 0, kind: input, shape index: {}]
  %s1 = inlined_call_operand.hbm [shape: bf16[2,16,16,32], index: 1, kind: input, shape index: {}]
  %s2 = inlined_call_operand.hbm [shape: bf16[2,16,16,32], index: 2, kind: input, shape index: {}]
  %s3 = inlined_call_operand.vmem [shape: bf16[36,8], index: 3, kind: input, shape index: {}]
  %s4 = inlined_call_operand.vmem [shape: f32[1,8], index: 4, kind: input, shape index: {}]
  %s5 = inlined_call_operand.vmem [shape: bf16[4,8], index: 5, kind: input, shape index: {}]
  %s6 = inlined_call_operand.vmem [shape: f32[1,8], index: 6, kind: input, shape index: {}]
  %s7 = inlined_call_operand.hbm [shape: f32[2,16,256], index: 7, kind: output, shape index: {}]
  %s8 = sld [smem:[#allocation0]]
  $region89: #{tpu_custom_call.1} parent=0
    _
  %s10 = ssub.s32 1, %s8
  %s11 = scalar_select 0, %s10, %s8
  $region1: #{tpu_custom_call.1} parent=0
    #allocation4 [shape = 'u8[131072]{0}', space=vmem, size = 0x20000, scoped, tag = 'input window, operand 0']
    #allocation5 [shape = 's32[2]{0}', space=sflag, size = 0x8, scoped, tag = 'scoped memory for tpu_custom_call.1']
    #allocation6 [shape = 's32[2]{0}', space=sflag, size = 0x8, scoped, tag = 'scoped memory for tpu_custom_call.1']
    #allocation7 [shape = 'u8[8192]{0}', space=vmem, size = 0x2000, scoped, tag = 'input window, operand 1']
    #allocation8 [shape = 's32[2]{0}', space=sflag, size = 0x8, scoped, tag = 'scoped memory for tpu_custom_call.1']
    #allocation9 [shape = 'u8[8192]{0}', space=vmem, size = 0x2000, scoped, tag = 'input window, operand 2']
    #allocation10 [shape = 'u8[32768]{0}', space=vmem, size = 0x8000, scoped, tag = 'output window, operand 0']
    %12 = vsyncpa [#allocation5], 0
    %s13 = scalar_lea.sflag [#allocation5], 1
    %14 = vsyncpa %s13, 0
    %15 = vsyncpa [#allocation8], 0
    %s16 = scalar_lea.sflag [#allocation8], 1
    %17 = vsyncpa %s16, 0
    %18 = vsyncpa [#allocation6], 0
    %s19 = scalar_lea.sflag [#allocation6], 1
    %20 = vsyncpa %s19, 0
    loop: start=0, step=1, limit=4
    $region2: #{tpu_custom_call.1} parent=1 // loop_pre_header
      _
    $region3: #{tpu_custom_call.1} parent=1 // loop_header
      %s22 = sphi 0, %s26
      %p23 = scmp.ge.s32.totalorder %s22, 4
      %s29 = sphi 0, %s41
      %s30 = sphi 0, %s37
      %s31 = sphi 0, %s29
      %s32 = sphi 0, %s30
      %s33 = sphi 0, %s31
      %s34 = sphi 0, %s32
      %s46 = sphi 0, %s48
      %s49 = sphi 0, %s46
      %s50 = sphi 0, %s49
      %s66 = sphi 0, %s50
      %s82 = sphi 0, %s84
      %s85 = sphi 0, %s82
      %s86 = sphi 0, %s85
      %s102 = sphi 0, %s86
      %s118 = sphi 0, %s120
      %s121 = sphi 0, %s118
      %s122 = sphi 0, %s121
      %s138 = sphi 0, %s122
      %s142 = sphi 0, %s142
      %s144 = sphi 0, %s142
      %s145 = sphi 0, %s144
      %s159 = sphi 0, %s145
      %s163 = sphi 0, %s163
      %s165 = sphi 0, %s163
      %s166 = sphi 0, %s165
      %s180 = sphi 0, %s166
      %s184 = sphi 0, %s184
      %s186 = sphi 0, %s184
      %s187 = sphi 0, %s186
      %s201 = sphi 0, %s187
      %s205 = sphi 0, %s205
      %s207 = sphi 0, %s205
      %s208 = sphi 0, %s207
      %s222 = sphi 0, %s208
      %s230 = sphi 0, %s232
      %s233 = sphi 0, %s230
      %s234 = sphi 0, %s233
      %s250 = sphi 0, %s234
    $region4: #{tpu_custom_call.1} parent=1 // loop_header_branch
      %25 = sbr.rel (%p23) target = $region8
    $region5: #{tpu_custom_call.1} parent=1 // loop_body
      %s27 = ssub.s32 %s22, 1
      %s28 = ssub.s32 %s22, 2
      %s35 = sadd.s32 1, %s30
      %p36 = scmp.ge.s32.totalorder %s35, 1
      %s37 = scalar_select %p36, 0, %s35
      %s38 = sadd.s32 1, %s29
      %s39 = scalar_select %p36, %s38, %s29
      %p40 = scmp.ge.s32.totalorder %s39, 2
      %s41 = scalar_select %p40, 0, %s39
      %s42 = ssub.s32 %s29, %s41
      %s43 = ssub.s32 %s30, %s37
      %s44 = sor.u32 %s42, %s43
      %p45 = scmp.eq.s32.totalorder %s44, 0
      %s47 = sadd.s32 %s46, 1
      %s48 = scalar_select %p45, %s46, %s47
      %p51 = pneg %p45
      %p52 = scmp.eq.s32.totalorder %s22, 1
      %p53 = por %p51, %p52
      %p54 = scmp.ne.s32.totalorder %s46, %s49
      %p55 = scmp.eq.s32.totalorder %s22, 0
      %p56 = por %p54, %p55
      %p57 = scmp.ne.s32.totalorder %s46, %s49
      %p58 = scmp.eq.s32.totalorder %s27, 1
      %p59 = por %p57, %p58
      %p60 = scmp.ne.s32.totalorder %s49, %s50
      %p61 = scmp.eq.s32.totalorder %s27, 0
      %p62 = por %p60, %p61
      %p63 = scmp.ne.s32.totalorder %s49, %s50
      %p64 = scmp.eq.s32.totalorder %s28, 1
      %p65 = por %p63, %p64
      %p67 = scmp.ne.s32.totalorder %s50, %s66
      %p68 = scmp.eq.s32.totalorder %s28, 0
      %p69 = por %p67, %p68
      %s70 = smul.u32 %s30, 16
      %s71 = ssub.s32 %s70, 1
      %p72 = scmp.gt.s32.totalorder %s71, 0
      %s73 = scalar_select %p72, %s71, 0
      %s74 = smul.u32 %s37, 16
      %s75 = ssub.s32 %s74, 1
      %p76 = scmp.gt.s32.totalorder %s75, 0
      %s77 = scalar_select %p76, %s75, 0
      %s78 = ssub.s32 %s29, %s41
      %s79 = ssub.s32 %s73, %s77
      %s80 = sor.u32 %s78, %s79
      %p81 = scmp.eq.s32.totalorder %s80, 0
      %s83 = sadd.s32 %s82, 1
      %s84 = scalar_select %p81, %s82, %s83
      %p87 = pneg %p81
      %p88 = scmp.eq.s32.totalorder %s22, 1
      %p89 = por %p87, %p88
      %p90 = scmp.ne.s32.totalorder %s82, %s85
      %p91 = scmp.eq.s32.totalorder %s22, 0
      %p92 = por %p90, %p91
      %p93 = scmp.ne.s32.totalorder %s82, %s85
      %p94 = scmp.eq.s32.totalorder %s27, 1
      %p95 = por %p93, %p94
      %p96 = scmp.ne.s32.totalorder %s85, %s86
      %p97 = scmp.eq.s32.totalorder %s27, 0
      %p98 = por %p96, %p97
      %p99 = scmp.ne.s32.totalorder %s85, %s86
      %p100 = scmp.eq.s32.totalorder %s28, 1
      %p101 = por %p99, %p100
      %p103 = scmp.ne.s32.totalorder %s86, %s102
      %p104 = scmp.eq.s32.totalorder %s28, 0
      %p105 = por %p103, %p104
      %s106 = sadd.s32 %s30, 1
      %s107 = smul.u32 %s106, 16
      %p108 = scmp.lt.s32.totalorder %s107, 15
      %s109 = scalar_select %p108, %s107, 15
      %s110 = sadd.s32 %s37, 1
      %s111 = smul.u32 %s110, 16
      %p112 = scmp.lt.s32.totalorder %s111, 15
      %s113 = scalar_select %p112, %s111, 15
      %s114 = ssub.s32 %s29, %s41
      %s115 = ssub.s32 %s109, %s113
      %s116 = sor.u32 %s114, %s115
      %p117 = scmp.eq.s32.totalorder %s116, 0
      %s119 = sadd.s32 %s118, 1
      %s120 = scalar_select %p117, %s118, %s119
      %p123 = pneg %p117
      %p124 = scmp.eq.s32.totalorder %s22, 1
      %p125 = por %p123, %p124
      %p126 = scmp.ne.s32.totalorder %s118, %s121
      %p127 = scmp.eq.s32.totalorder %s22, 0
      %p128 = por %p126, %p127
      %p129 = scmp.ne.s32.totalorder %s118, %s121
      %p130 = scmp.eq.s32.totalorder %s27, 1
      %p131 = por %p129, %p130
      %p132 = scmp.ne.s32.totalorder %s121, %s122
      %p133 = scmp.eq.s32.totalorder %s27, 0
      %p134 = por %p132, %p133
      %p135 = scmp.ne.s32.totalorder %s121, %s122
      %p136 = scmp.eq.s32.totalorder %s28, 1
      %p137 = por %p135, %p136
      %p139 = scmp.ne.s32.totalorder %s122, %s138
      %p140 = scmp.eq.s32.totalorder %s28, 0
      %p141 = por %p139, %p140
      %s143 = sadd.s32 %s142, 1
      %p146 = scmp.eq.s32.totalorder %s22, 1
      %p147 = scmp.ne.s32.totalorder %s142, %s144
      %p148 = scmp.eq.s32.totalorder %s22, 0
      %p149 = por %p147, %p148
      %p150 = scmp.ne.s32.totalorder %s142, %s144
      %p151 = scmp.eq.s32.totalorder %s27, 1
      %p152 = por %p150, %p151
      %p153 = scmp.ne.s32.totalorder %s144, %s145
      %p154 = scmp.eq.s32.totalorder %s27, 0
      %p155 = por %p153, %p154
      %p156 = scmp.ne.s32.totalorder %s144, %s145
      %p157 = scmp.eq.s32.totalorder %s28, 1
      %p158 = por %p156, %p157
      %p160 = scmp.ne.s32.totalorder %s145, %s159
      %p161 = scmp.eq.s32.totalorder %s28, 0
      %p162 = por %p160, %p161
      %s164 = sadd.s32 %s163, 1
      %p167 = scmp.eq.s32.totalorder %s22, 1
      %p168 = scmp.ne.s32.totalorder %s163, %s165
      %p169 = scmp.eq.s32.totalorder %s22, 0
      %p170 = por %p168, %p169
      %p171 = scmp.ne.s32.totalorder %s163, %s165
      %p172 = scmp.eq.s32.totalorder %s27, 1
      %p173 = por %p171, %p172
      %p174 = scmp.ne.s32.totalorder %s165, %s166
      %p175 = scmp.eq.s32.totalorder %s27, 0
      %p176 = por %p174, %p175
      %p177 = scmp.ne.s32.totalorder %s165, %s166
      %p178 = scmp.eq.s32.totalorder %s28, 1
      %p179 = por %p177, %p178
      %p181 = scmp.ne.s32.totalorder %s166, %s180
      %p182 = scmp.eq.s32.totalorder %s28, 0
      %p183 = por %p181, %p182
      %s185 = sadd.s32 %s184, 1
      %p188 = scmp.eq.s32.totalorder %s22, 1
      %p189 = scmp.ne.s32.totalorder %s184, %s186
      %p190 = scmp.eq.s32.totalorder %s22, 0
      %p191 = por %p189, %p190
      %p192 = scmp.ne.s32.totalorder %s184, %s186
      %p193 = scmp.eq.s32.totalorder %s27, 1
      %p194 = por %p192, %p193
      %p195 = scmp.ne.s32.totalorder %s186, %s187
      %p196 = scmp.eq.s32.totalorder %s27, 0
      %p197 = por %p195, %p196
      %p198 = scmp.ne.s32.totalorder %s186, %s187
      %p199 = scmp.eq.s32.totalorder %s28, 1
      %p200 = por %p198, %p199
      %p202 = scmp.ne.s32.totalorder %s187, %s201
      %p203 = scmp.eq.s32.totalorder %s28, 0
      %p204 = por %p202, %p203
      %s206 = sadd.s32 %s205, 1
      %p209 = scmp.eq.s32.totalorder %s22, 1
      %p210 = scmp.ne.s32.totalorder %s205, %s207
      %p211 = scmp.eq.s32.totalorder %s22, 0
      %p212 = por %p210, %p211
      %p213 = scmp.ne.s32.totalorder %s205, %s207
      %p214 = scmp.eq.s32.totalorder %s27, 1
      %p215 = por %p213, %p214
      %p216 = scmp.ne.s32.totalorder %s207, %s208
      %p217 = scmp.eq.s32.totalorder %s27, 0
      %p218 = por %p216, %p217
      %p219 = scmp.ne.s32.totalorder %s207, %s208
      %p220 = scmp.eq.s32.totalorder %s28, 1
      %p221 = por %p219, %p220
      %p223 = scmp.ne.s32.totalorder %s208, %s222
      %p224 = scmp.eq.s32.totalorder %s28, 0
      %p225 = por %p223, %p224
      %s226 = ssub.s32 %s29, %s41
      %s227 = ssub.s32 %s30, %s37
      %s228 = sor.u32 %s226, %s227
      %p229 = scmp.eq.s32.totalorder %s228, 0
      %s231 = sadd.s32 %s230, 1
      %s232 = scalar_select %p229, %s230, %s231
      %p235 = pneg %p229
      %p236 = scmp.eq.s32.totalorder %s22, 1
      %p237 = por %p235, %p236
      %p238 = scmp.ne.s32.totalorder %s230, %s233
      %p239 = scmp.eq.s32.totalorder %s22, 0
      %p240 = por %p238, %p239
      %p241 = scmp.ne.s32.totalorder %s230, %s233
      %p242 = scmp.eq.s32.totalorder %s27, 1
      %p243 = por %p241, %p242
      %p244 = scmp.ne.s32.totalorder %s233, %s234
      %p245 = scmp.eq.s32.totalorder %s27, 0
      %p246 = por %p244, %p245
      %p247 = scmp.ne.s32.totalorder %s233, %s234
      %p248 = scmp.eq.s32.totalorder %s28, 1
      %p249 = por %p247, %p248
      %p251 = scmp.ne.s32.totalorder %s234, %s250
      %p252 = scmp.eq.s32.totalorder %s28, 0
      %p253 = por %p251, %p252
      %p254 = scmp.le.s32.totalorder 1, %s22
      %p255 = scmp.lt.s32.totalorder %s22, 3
      %p256 = pnand %p254, %p255
      %p257 = pneg %p256
      // Predicated region
      $region9: #{tpu_custom_call.1} parent=5 // pred_check
        _
      $region10: #{tpu_custom_call.1} parent=5 // pred_check_branch
        %259 = sbr.rel (%p256) target = $region12
      $region11: #{tpu_custom_call.1} parent=5 // pred_region
        %s260 = ssub.s32 %s22, 1
        // Predicated region
        $region13: #{tpu_custom_call.1} parent=11 // pred_check
          %p261 = pneg %p155
        $region14: #{tpu_custom_call.1} parent=11 // pred_check_branch
          %263 = sbr.rel (%p261) target = $region16
        $region15: #{tpu_custom_call.1} parent=11 // pred_region
          _
        $region16: #{tpu_custom_call.1} parent=11 // pred_fallthru
          _
        // Predicated region
        $region17: #{tpu_custom_call.1} parent=11 // pred_check
          %p264 = pneg %p176
        $region18: #{tpu_custom_call.1} parent=11 // pred_check_branch
          %266 = sbr.rel (%p264) target = $region20
        $region19: #{tpu_custom_call.1} parent=11 // pred_region
          _
        $region20: #{tpu_custom_call.1} parent=11 // pred_fallthru
          _
        // Predicated region
        $region21: #{tpu_custom_call.1} parent=11 // pred_check
          %p267 = pneg %p197
        $region22: #{tpu_custom_call.1} parent=11 // pred_check_branch
          %269 = sbr.rel (%p267) target = $region24
        $region23: #{tpu_custom_call.1} parent=11 // pred_region
          _
        $region24: #{tpu_custom_call.1} parent=11 // pred_fallthru
          _
        // Predicated region
        $region25: #{tpu_custom_call.1} parent=11 // pred_check
          %p270 = pneg %p218
        $region26: #{tpu_custom_call.1} parent=11 // pred_check_branch
          %272 = sbr.rel (%p270) target = $region28
        $region27: #{tpu_custom_call.1} parent=11 // pred_region
          _
        $region28: #{tpu_custom_call.1} parent=11 // pred_fallthru
          _
      $region12: #{tpu_custom_call.1} parent=5 // pred_fallthru
        _
      %p273 = scmp.lt.s32.totalorder %s22, 2
      // Predicated region
      $region29: #{tpu_custom_call.1} parent=5 // pred_check
        %p274 = pneg %p273
      $region30: #{tpu_custom_call.1} parent=5 // pred_check_branch
        %276 = sbr.rel (%p274) target = $region32
      $region31: #{tpu_custom_call.1} parent=5 // pred_region
        // Predicated region
        $region33: #{tpu_custom_call.1} parent=31 // pred_check
          %p277 = pneg %p56
        $region34: #{tpu_custom_call.1} parent=31 // pred_check_branch
          %279 = sbr.rel (%p277) target = $region36
        $region35: #{tpu_custom_call.1} parent=31 // pred_region
          %s280 = sand.u32 %s46, 1
          %s281 = scalar_lea.sflag [#allocation5], %s280
          %s282 = sand.u32 %s46, 1
          %s283 = smul.addr %s282, 128
          %s284 = scalar_lea.vmem [#allocation4], %s283
          %s285 = smul.u32 16, %s30
          %s287 = ssub.s32 2048, 2048
          %288 = vsyncadd %s281, %s287
          %s289 = smul.addr %s285, 2
          %s290 = smul.addr %s29, 32
          %s291 = sadd.s32 %s289, %s290
          %s292 = smul.addr %s291, 64
          %s293 = scalar_lea.hbm %s0, %s292
          %s294 = sshll.u32 %s284, 4
          %s295 = int_to_ptr.vmem [resolvable:$true] %s294
          %300 = dma.hbm_to_vmem [thread:$0]  %s293, 2048, %s295, %s281, 64, 64, 4
        $region36: #{tpu_custom_call.1} parent=31 // pred_fallthru
          _
        // Predicated region
        $region37: #{tpu_custom_call.1} parent=31 // pred_check
          %p301 = pneg %p92
        $region38: #{tpu_custom_call.1} parent=31 // pred_check_branch
          %303 = sbr.rel (%p301) target = $region40
        $region39: #{tpu_custom_call.1} parent=31 // pred_region
          %s304 = sand.u32 %s22, 1
          %s305 = scalar_lea.sflag [#allocation8], %s304
          %s306 = sand.u32 %s82, 1
          %s307 = smul.addr %s306, 8
          %s308 = scalar_lea.vmem [#allocation7], %s307
          %s309 = smul.u32 %s30, 16
          %s310 = ssub.s32 %s309, 1
          %p311 = scmp.gt.s32.totalorder %s310, 0
          %s312 = scalar_select %p311, %s310, 0
          %s314 = ssub.s32 128, 128
          %315 = vsyncadd %s305, %s314
          %s316 = smul.addr %s312, 2
          %s317 = smul.addr %s29, 32
          %s318 = sadd.s32 %s316, %s317
          %s319 = smul.addr %s318, 64
          %s320 = scalar_lea.hbm %s1, %s319
          %s321 = sshll.u32 %s308, 4
          %s322 = int_to_ptr.vmem [resolvable:$true] %s321
          %327 = dma.hbm_to_vmem [thread:$0]  %s320, 128, %s322, %s305, 64, 64, 4
        $region40: #{tpu_custom_call.1} parent=31 // pred_fallthru
          _
        // Predicated region
        $region41: #{tpu_custom_call.1} parent=31 // pred_check
          %p328 = pneg %p128
        $region42: #{tpu_custom_call.1} parent=31 // pred_check_branch
          %330 = sbr.rel (%p328) target = $region44
        $region43: #{tpu_custom_call.1} parent=31 // pred_region
          %s331 = sand.u32 %s22, 1
          %s332 = scalar_lea.sflag [#allocation8], %s331
          %s333 = sand.u32 %s118, 1
          %s334 = smul.addr %s333, 8
          %s335 = scalar_lea.vmem [#allocation9], %s334
          %s336 = sadd.s32 %s30, 1
          %s337 = smul.u32 %s336, 16
          %p338 = scmp.lt.s32.totalorder %s337, 15
          %s339 = scalar_select %p338, %s337, 15
          %s341 = ssub.s32 128, 128
          %342 = vsyncadd %s332, %s341
          %s343 = smul.addr %s339, 2
          %s344 = smul.addr %s29, 32
          %s345 = sadd.s32 %s343, %s344
          %s346 = smul.addr %s345, 64
          %s347 = scalar_lea.hbm %s2, %s346
          %s348 = sshll.u32 %s335, 4
          %s349 = int_to_ptr.vmem [resolvable:$true] %s348
          %354 = dma.hbm_to_vmem [thread:$0]  %s347, 128, %s349, %s332, 64, 64, 4
        $region44: #{tpu_custom_call.1} parent=31 // pred_fallthru
          _
      $region32: #{tpu_custom_call.1} parent=5 // pred_fallthru
        _
      %p355 = scmp.le.s32.totalorder 1, %s22
      %p356 = scmp.lt.s32.totalorder %s22, 3
      %p357 = pnand %p355, %p356
      %p358 = pneg %p357
      // Predicated region
      $region45: #{tpu_custom_call.1} parent=5 // pred_check
        _
      $region46: #{tpu_custom_call.1} parent=5 // pred_check_branch
        %360 = sbr.rel (%p357) target = $region48
      $region47: #{tpu_custom_call.1} parent=5 // pred_region
        %s361 = ssub.s32 %s22, 1
        %s362 = sand.u32 %s49, 1
        %s363 = scalar_lea.sflag [#allocation5], %s362
        %s364 = sand.u32 %s49, 1
        %s365 = smul.addr %s364, 128
        %s366 = scalar_lea.vmem [#allocation4], %s365
        // Predicated region
        $region49: #{tpu_custom_call.1} parent=47 // pred_check
          %p367 = pneg %p62
        $region50: #{tpu_custom_call.1} parent=47 // pred_check_branch
          %369 = sbr.rel (%p367) target = $region52
        $region51: #{tpu_custom_call.1} parent=47 // pred_region
          %370 = dma.done %s363, 2048
        $region52: #{tpu_custom_call.1} parent=47 // pred_fallthru
          _
        %s371 = sand.u32 %s27, 1
        %s372 = scalar_lea.sflag [#allocation8], %s371
        %s373 = sand.u32 %s85, 1
        %s374 = smul.addr %s373, 8
        %s375 = scalar_lea.vmem [#allocation7], %s374
        // Predicated region
        $region53: #{tpu_custom_call.1} parent=47 // pred_check
          %p376 = pneg %p98
        $region54: #{tpu_custom_call.1} parent=47 // pred_check_branch
          %378 = sbr.rel (%p376) target = $region56
        $region55: #{tpu_custom_call.1} parent=47 // pred_region
          %379 = dma.done %s372, 128
        $region56: #{tpu_custom_call.1} parent=47 // pred_fallthru
          _
        %s380 = sand.u32 %s27, 1
        %s381 = scalar_lea.sflag [#allocation8], %s380
        %s382 = sand.u32 %s121, 1
        %s383 = smul.addr %s382, 8
        %s384 = scalar_lea.vmem [#allocation9], %s383
        // Predicated region
        $region57: #{tpu_custom_call.1} parent=47 // pred_check
          %p385 = pneg %p134
        $region58: #{tpu_custom_call.1} parent=47 // pred_check_branch
          %387 = sbr.rel (%p385) target = $region60
        $region59: #{tpu_custom_call.1} parent=47 // pred_region
          %388 = dma.done %s381, 128
        $region60: #{tpu_custom_call.1} parent=47 // pred_fallthru
          _
        %s389 = sand.u32 %s49, 1
        %s390 = scalar_lea.sflag [#allocation5], %s389
        %s391 = sand.u32 %s49, 1
        %s392 = smul.addr %s391, 128
        %s393 = scalar_lea.vmem [#allocation4], %s392
        %p394 = pneg %p62
        %p395 = pneg %p59
        %s396 = sand.u32 %s27, 1
        %s397 = scalar_lea.sflag [#allocation8], %s396
        %s398 = sand.u32 %s85, 1
        %s399 = smul.addr %s398, 8
        %s400 = scalar_lea.vmem [#allocation7], %s399
        %p401 = pneg %p98
        %p402 = pneg %p95
        %s403 = sand.u32 %s27, 1
        %s404 = scalar_lea.sflag [#allocation8], %s403
        %s405 = sand.u32 %s121, 1
        %s406 = smul.addr %s405, 8
        %s407 = scalar_lea.vmem [#allocation9], %s406
        %p408 = pneg %p134
        %p409 = pneg %p131
        %p410 = pneg %p155
        %p411 = pneg %p152
        %p412 = pneg %p176
        %p413 = pneg %p173
        %p414 = pneg %p197
        %p415 = pneg %p194
        %p416 = pneg %p218
        %p417 = pneg %p215
        %p418 = pneg %p246
        %p419 = pneg %p243
        %s420 = sand.u32 %s233, 1
        %s421 = scalar_lea.sflag [#allocation6], %s420
        %s422 = sand.u32 %s233, 1
        %s423 = smul.addr %s422, 32
        %s424 = scalar_lea.vmem [#allocation10], %s423
        %s425 = smul.u32 16, %s32
        %s426 = smul.u32 %s32, 16
        %s427 = ssub.s32 %s426, 1
        %p428 = scmp.gt.s32.totalorder %s427, 0
        %s429 = scalar_select %p428, %s427, 0
        %s430 = sadd.s32 %s32, 1
        %s431 = smul.u32 %s430, 16
        %p432 = scmp.lt.s32.totalorder %s431, 15
        %s433 = scalar_select %p432, %s431, 15
        %s434 = smul.u32 2, %s32
        %v436 = vld [vmem:[%s366] sm:$0xf]
        %v437 = vld [vmem:[%s366 + $0x4] sm:$0xf]
        %v438 = vld [vmem:[%s366 + $0x8] sm:$0xf]
        %v439 = vld [vmem:[%s366 + $0xc] sm:$0xf]
        %v440 = vld [vmem:[%s366 + $0x10] sm:$0xf]
        %v441 = vld [vmem:[%s366 + $0x14] sm:$0xf]
        %v442 = vld [vmem:[%s366 + $0x18] sm:$0xf]
        %v443 = vld [vmem:[%s366 + $0x1c] sm:$0xf]
        %v444 = vld [vmem:[%s366 + $0x20] sm:$0xf]
        %v445 = vld [vmem:[%s366 + $0x24] sm:$0xf]
        %v446 = vld [vmem:[%s366 + $0x28] sm:$0xf]
        %v447 = vld [vmem:[%s366 + $0x2c] sm:$0xf]
        %v448 = vld [vmem:[%s366 + $0x30] sm:$0xf]
        %v449 = vld [vmem:[%s366 + $0x34] sm:$0xf]
        %v450 = vld [vmem:[%s366 + $0x38] sm:$0xf]
        %v451 = vld [vmem:[%s366 + $0x3c] sm:$0xf]
        %v452 = vld [vmem:[%s366 + $0x40] sm:$0xf]
        %v453 = vld [vmem:[%s366 + $0x44] sm:$0xf]
        %v454 = vld [vmem:[%s366 + $0x48] sm:$0xf]
        %v455 = vld [vmem:[%s366 + $0x4c] sm:$0xf]
        %v456 = vld [vmem:[%s366 + $0x50] sm:$0xf]
        %v457 = vld [vmem:[%s366 + $0x54] sm:$0xf]
        %v458 = vld [vmem:[%s366 + $0x58] sm:$0xf]
        %v459 = vld [vmem:[%s366 + $0x5c] sm:$0xf]
        %v460 = vld [vmem:[%s366 + $0x60] sm:$0xf]
        %v461 = vld [vmem:[%s366 + $0x64] sm:$0xf]
        %v462 = vld [vmem:[%s366 + $0x68] sm:$0xf]
        %v463 = vld [vmem:[%s366 + $0x6c] sm:$0xf]
        %v464 = vld [vmem:[%s366 + $0x70] sm:$0xf]
        %v465 = vld [vmem:[%s366 + $0x74] sm:$0xf]
        %v466 = vld [vmem:[%s366 + $0x78] sm:$0xf]
        %v467 = vld [vmem:[%s366 + $0x7c] sm:$0xf]
        %v468 = vunpack.c.l.bf16 %v436
        %v469 = vunpack.c.l.bf16 %v437
        %v470 = vunpack.c.l.bf16 %v438
        %v471 = vunpack.c.l.bf16 %v439
        %v472 = vunpack.c.l.bf16 %v440
        %v473 = vunpack.c.l.bf16 %v441
        %v474 = vunpack.c.l.bf16 %v442
        %v475 = vunpack.c.l.bf16 %v443
        %v476 = vunpack.c.l.bf16 %v444
        %v477 = vunpack.c.l.bf16 %v445
        %v478 = vunpack.c.l.bf16 %v446
        %v479 = vunpack.c.l.bf16 %v447
        %v480 = vunpack.c.l.bf16 %v448
        %v481 = vunpack.c.l.bf16 %v449
        %v482 = vunpack.c.l.bf16 %v450
        %v483 = vunpack.c.l.bf16 %v451
        %v484 = vunpack.c.l.bf16 %v452
        %v485 = vunpack.c.l.bf16 %v453
        %v486 = vunpack.c.l.bf16 %v454
        %v487 = vunpack.c.l.bf16 %v455
        %v488 = vunpack.c.l.bf16 %v456
        %v489 = vunpack.c.l.bf16 %v457
        %v490 = vunpack.c.l.bf16 %v458
        %v491 = vunpack.c.l.bf16 %v459
        %v492 = vunpack.c.l.bf16 %v460
        %v493 = vunpack.c.l.bf16 %v461
        %v494 = vunpack.c.l.bf16 %v462
        %v495 = vunpack.c.l.bf16 %v463
        %v496 = vunpack.c.l.bf16 %v464
        %v497 = vunpack.c.l.bf16 %v465
        %v498 = vunpack.c.l.bf16 %v466
        %v499 = vunpack.c.l.bf16 %v467
        %vm500 = vcmask 122880
        %501 = vst.msk [vmem:[#allocation2] sm:$0x1] %vm500, 0.0
        %502 = vst.msk [vmem:[#allocation2 + $0x18] sm:$0x1] %vm500, 0.0
        %503 = vst.msk [vmem:[#allocation2 + $0x30] sm:$0x1] %vm500, 0.0
        %504 = vst.msk [vmem:[#allocation2 + $0x48] sm:$0x1] %vm500, 0.0
        %505 = vst.msk [vmem:[#allocation2 + $0x60] sm:$0x1] %vm500, 0.0
        %506 = vst.msk [vmem:[#allocation2 + $0x78] sm:$0x1] %vm500, 0.0
        %507 = vst.msk [vmem:[#allocation2 + $0x90] sm:$0x1] %vm500, 0.0
        %508 = vst.msk [vmem:[#allocation2 + $0xa8] sm:$0x1] %vm500, 0.0
        %509 = vst.msk [vmem:[#allocation2 + $0xc0] sm:$0x1] %vm500, 0.0
        %510 = vst.msk [vmem:[#allocation2 + $0xd8] sm:$0x1] %vm500, 0.0
        %511 = vst.msk [vmem:[#allocation2 + $0xf0] sm:$0x1] %vm500, 0.0
        %512 = vst.msk [vmem:[#allocation2 + $0x108] sm:$0x1] %vm500, 0.0
        %513 = vst.msk [vmem:[#allocation2 + $0x120] sm:$0x1] %vm500, 0.0
        %514 = vst.msk [vmem:[#allocation2 + $0x138] sm:$0x1] %vm500, 0.0
        %515 = vst.msk [vmem:[#allocation2 + $0x150] sm:$0x1] %vm500, 0.0
        %516 = vst.msk [vmem:[#allocation2 + $0x168] sm:$0x1] %vm500, 0.0
        %517 = vst.msk [vmem:[#allocation2 + $0x180] sm:$0x1] %vm500, 0.0
        %518 = vst.msk [vmem:[#allocation2 + $0x10] sm:$0x1] %vm500, 0.0
        %519 = vst.msk [vmem:[#allocation2 + $0x28] sm:$0x1] %vm500, 0.0
        %520 = vst.msk [vmem:[#allocation2 + $0x40] sm:$0x1] %vm500, 0.0
        %521 = vst.msk [vmem:[#allocation2 + $0x58] sm:$0x1] %vm500, 0.0
        %522 = vst.msk [vmem:[#allocation2 + $0x70] sm:$0x1] %vm500, 0.0
        %523 = vst.msk [vmem:[#allocation2 + $0x88] sm:$0x1] %vm500, 0.0
        %524 = vst.msk [vmem:[#allocation2 + $0xa0] sm:$0x1] %vm500, 0.0
        %525 = vst.msk [vmem:[#allocation2 + $0xb8] sm:$0x1] %vm500, 0.0
        %526 = vst.msk [vmem:[#allocation2 + $0xd0] sm:$0x1] %vm500, 0.0
        %527 = vst.msk [vmem:[#allocation2 + $0xe8] sm:$0x1] %vm500, 0.0
        %528 = vst.msk [vmem:[#allocation2 + $0x100] sm:$0x1] %vm500, 0.0
        %529 = vst.msk [vmem:[#allocation2 + $0x118] sm:$0x1] %vm500, 0.0
        %530 = vst.msk [vmem:[#allocation2 + $0x130] sm:$0x1] %vm500, 0.0
        %531 = vst.msk [vmem:[#allocation2 + $0x148] sm:$0x1] %vm500, 0.0
        %532 = vst.msk [vmem:[#allocation2 + $0x160] sm:$0x1] %vm500, 0.0
        %533 = vst.msk [vmem:[#allocation2 + $0x178] sm:$0x1] %vm500, 0.0
        %534 = vst.msk [vmem:[#allocation2 + $0x190] sm:$0x1] %vm500, 0.0
        %535 = vst.msk [vmem:[#allocation3] sm:$0x1] %vm500, -3e+38
        %536 = vst.msk [vmem:[#allocation3 + $0x18] sm:$0x1] %vm500, -3e+38
        %537 = vst.msk [vmem:[#allocation3 + $0x30] sm:$0x1] %vm500, -3e+38
        %538 = vst.msk [vmem:[#allocation3 + $0x48] sm:$0x1] %vm500, -3e+38
        %539 = vst.msk [vmem:[#allocation3 + $0x60] sm:$0x1] %vm500, -3e+38
        %540 = vst.msk [vmem:[#allocation3 + $0x78] sm:$0x1] %vm500, -3e+38
        %541 = vst.msk [vmem:[#allocation3 + $0x90] sm:$0x1] %vm500, -3e+38
        %542 = vst.msk [vmem:[#allocation3 + $0xa8] sm:$0x1] %vm500, -3e+38
        %543 = vst.msk [vmem:[#allocation3 + $0xc0] sm:$0x1] %vm500, -3e+38
        %544 = vst.msk [vmem:[#allocation3 + $0xd8] sm:$0x1] %vm500, -3e+38
        %545 = vst.msk [vmem:[#allocation3 + $0xf0] sm:$0x1] %vm500, -3e+38
        %546 = vst.msk [vmem:[#allocation3 + $0x108] sm:$0x1] %vm500, -3e+38
        %547 = vst.msk [vmem:[#allocation3 + $0x120] sm:$0x1] %vm500, -3e+38
        %548 = vst.msk [vmem:[#allocation3 + $0x138] sm:$0x1] %vm500, -3e+38
        %549 = vst.msk [vmem:[#allocation3 + $0x150] sm:$0x1] %vm500, -3e+38
        %550 = vst.msk [vmem:[#allocation3 + $0x168] sm:$0x1] %vm500, -3e+38
        %551 = vst.msk [vmem:[#allocation3 + $0x180] sm:$0x1] %vm500, -3e+38
        %552 = vst.msk [vmem:[#allocation3 + $0x10] sm:$0x1] %vm500, -3e+38
        %553 = vst.msk [vmem:[#allocation3 + $0x28] sm:$0x1] %vm500, -3e+38
        %554 = vst.msk [vmem:[#allocation3 + $0x40] sm:$0x1] %vm500, -3e+38
        %555 = vst.msk [vmem:[#allocation3 + $0x58] sm:$0x1] %vm500, -3e+38
        %556 = vst.msk [vmem:[#allocation3 + $0x70] sm:$0x1] %vm500, -3e+38
        %557 = vst.msk [vmem:[#allocation3 + $0x88] sm:$0x1] %vm500, -3e+38
        %558 = vst.msk [vmem:[#allocation3 + $0xa0] sm:$0x1] %vm500, -3e+38
        %559 = vst.msk [vmem:[#allocation3 + $0xb8] sm:$0x1] %vm500, -3e+38
        %560 = vst.msk [vmem:[#allocation3 + $0xd0] sm:$0x1] %vm500, -3e+38
        %561 = vst.msk [vmem:[#allocation3 + $0xe8] sm:$0x1] %vm500, -3e+38
        %562 = vst.msk [vmem:[#allocation3 + $0x100] sm:$0x1] %vm500, -3e+38
        %563 = vst.msk [vmem:[#allocation3 + $0x118] sm:$0x1] %vm500, -3e+38
        %564 = vst.msk [vmem:[#allocation3 + $0x130] sm:$0x1] %vm500, -3e+38
        %565 = vst.msk [vmem:[#allocation3 + $0x148] sm:$0x1] %vm500, -3e+38
        %566 = vst.msk [vmem:[#allocation3 + $0x160] sm:$0x1] %vm500, -3e+38
        %567 = vst.msk [vmem:[#allocation3 + $0x178] sm:$0x1] %vm500, -3e+38
        %568 = vst.msk [vmem:[#allocation3 + $0x190] sm:$0x1] %vm500, -3e+38
        %601 = vrot.lane.b32.xlu0 %v468, 120
        %v602 = vpop.permute.xlu0 %601
        %603 = vrot.lane.b32.xlu0 %v469, 120
        %v604 = vpop.permute.xlu0 %603
        %605 = vrot.lane.b32.xlu0 %v470, 120
        %v606 = vpop.permute.xlu0 %605
        %607 = vrot.lane.b32.xlu0 %v471, 120
        %v608 = vpop.permute.xlu0 %607
        %609 = vrot.lane.b32.xlu0 %v472, 120
        %v610 = vpop.permute.xlu0 %609
        %611 = vrot.lane.b32.xlu0 %v473, 120
        %v612 = vpop.permute.xlu0 %611
        %613 = vrot.lane.b32.xlu0 %v474, 120
        %v614 = vpop.permute.xlu0 %613
        %615 = vrot.lane.b32.xlu0 %v475, 120
        %v616 = vpop.permute.xlu0 %615
        %617 = vrot.lane.b32.xlu0 %v476, 120
        %v618 = vpop.permute.xlu0 %617
        %619 = vrot.lane.b32.xlu0 %v477, 120
        %v620 = vpop.permute.xlu0 %619
        %621 = vrot.lane.b32.xlu0 %v478, 120
        %v622 = vpop.permute.xlu0 %621
        %623 = vrot.lane.b32.xlu0 %v479, 120
        %v624 = vpop.permute.xlu0 %623
        %625 = vrot.lane.b32.xlu0 %v480, 120
        %v626 = vpop.permute.xlu0 %625
        %627 = vrot.lane.b32.xlu0 %v481, 120
        %v628 = vpop.permute.xlu0 %627
        %629 = vrot.lane.b32.xlu0 %v482, 120
        %v630 = vpop.permute.xlu0 %629
        %631 = vrot.lane.b32.xlu0 %v483, 120
        %v632 = vpop.permute.xlu0 %631
        %633 = vrot.lane.b32.xlu0 %v484, 120
        %v634 = vpop.permute.xlu0 %633
        %635 = vrot.lane.b32.xlu0 %v485, 120
        %v636 = vpop.permute.xlu0 %635
        %637 = vrot.lane.b32.xlu0 %v486, 120
        %v638 = vpop.permute.xlu0 %637
        %639 = vrot.lane.b32.xlu0 %v487, 120
        %v640 = vpop.permute.xlu0 %639
        %641 = vrot.lane.b32.xlu0 %v488, 120
        %v642 = vpop.permute.xlu0 %641
        %643 = vrot.lane.b32.xlu0 %v489, 120
        %v644 = vpop.permute.xlu0 %643
        %645 = vrot.lane.b32.xlu0 %v490, 120
        %v646 = vpop.permute.xlu0 %645
        %647 = vrot.lane.b32.xlu0 %v491, 120
        %v648 = vpop.permute.xlu0 %647
        %649 = vrot.lane.b32.xlu0 %v492, 120
        %v650 = vpop.permute.xlu0 %649
        %651 = vrot.lane.b32.xlu0 %v493, 120
        %v652 = vpop.permute.xlu0 %651
        %653 = vrot.lane.b32.xlu0 %v494, 120
        %v654 = vpop.permute.xlu0 %653
        %655 = vrot.lane.b32.xlu0 %v495, 120
        %v656 = vpop.permute.xlu0 %655
        %657 = vrot.lane.b32.xlu0 %v496, 120
        %v658 = vpop.permute.xlu0 %657
        %659 = vrot.lane.b32.xlu0 %v497, 120
        %v660 = vpop.permute.xlu0 %659
        %661 = vrot.lane.b32.xlu0 %v498, 120
        %v662 = vpop.permute.xlu0 %661
        %663 = vrot.lane.b32.xlu0 %v499, 120
        %v664 = vpop.permute.xlu0 %663
        %v697 = vadd.f32 %v468, %v602
        %v698 = vadd.f32 %v469, %v604
        %v699 = vadd.f32 %v470, %v606
        %v700 = vadd.f32 %v471, %v608
        %v701 = vadd.f32 %v472, %v610
        %v702 = vadd.f32 %v473, %v612
        %v703 = vadd.f32 %v474, %v614
        %v704 = vadd.f32 %v475, %v616
        %v705 = vadd.f32 %v476, %v618
        %v706 = vadd.f32 %v477, %v620
        %v707 = vadd.f32 %v478, %v622
        %v708 = vadd.f32 %v479, %v624
        %v709 = vadd.f32 %v480, %v626
        %v710 = vadd.f32 %v481, %v628
        %v711 = vadd.f32 %v482, %v630
        %v712 = vadd.f32 %v483, %v632
        %v713 = vadd.f32 %v484, %v634
        %v714 = vadd.f32 %v485, %v636
        %v715 = vadd.f32 %v486, %v638
        %v716 = vadd.f32 %v487, %v640
        %v717 = vadd.f32 %v488, %v642
        %v718 = vadd.f32 %v489, %v644
        %v719 = vadd.f32 %v490, %v646
        %v720 = vadd.f32 %v491, %v648
        %v721 = vadd.f32 %v492, %v650
        %v722 = vadd.f32 %v493, %v652
        %v723 = vadd.f32 %v494, %v654
        %v724 = vadd.f32 %v495, %v656
        %v725 = vadd.f32 %v496, %v658
        %v726 = vadd.f32 %v497, %v660
        %v727 = vadd.f32 %v498, %v662
        %v728 = vadd.f32 %v499, %v664
        %729 = vrot.lane.b32.xlu0 %v468, 112
        %v730 = vpop.permute.xlu0 %729
        %731 = vrot.lane.b32.xlu0 %v469, 112
        %v732 = vpop.permute.xlu0 %731
        %733 = vrot.lane.b32.xlu0 %v470, 112
        %v734 = vpop.permute.xlu0 %733
        %735 = vrot.lane.b32.xlu0 %v471, 112
        %v736 = vpop.permute.xlu0 %735
        %737 = vrot.lane.b32.xlu0 %v472, 112
        %v738 = vpop.permute.xlu0 %737
        %739 = vrot.lane.b32.xlu0 %v473, 112
        %v740 = vpop.permute.xlu0 %739
        %741 = vrot.lane.b32.xlu0 %v474, 112
        %v742 = vpop.permute.xlu0 %741
        %743 = vrot.lane.b32.xlu0 %v475, 112
        %v744 = vpop.permute.xlu0 %743
        %745 = vrot.lane.b32.xlu0 %v476, 112
        %v746 = vpop.permute.xlu0 %745
        %747 = vrot.lane.b32.xlu0 %v477, 112
        %v748 = vpop.permute.xlu0 %747
        %749 = vrot.lane.b32.xlu0 %v478, 112
        %v750 = vpop.permute.xlu0 %749
        %751 = vrot.lane.b32.xlu0 %v479, 112
        %v752 = vpop.permute.xlu0 %751
        %753 = vrot.lane.b32.xlu0 %v480, 112
        %v754 = vpop.permute.xlu0 %753
        %755 = vrot.lane.b32.xlu0 %v481, 112
        %v756 = vpop.permute.xlu0 %755
        %757 = vrot.lane.b32.xlu0 %v482, 112
        %v758 = vpop.permute.xlu0 %757
        %759 = vrot.lane.b32.xlu0 %v483, 112
        %v760 = vpop.permute.xlu0 %759
        %761 = vrot.lane.b32.xlu0 %v484, 112
        %v762 = vpop.permute.xlu0 %761
        %763 = vrot.lane.b32.xlu0 %v485, 112
        %v764 = vpop.permute.xlu0 %763
        %765 = vrot.lane.b32.xlu0 %v486, 112
        %v766 = vpop.permute.xlu0 %765
        %767 = vrot.lane.b32.xlu0 %v487, 112
        %v768 = vpop.permute.xlu0 %767
        %769 = vrot.lane.b32.xlu0 %v488, 112
        %v770 = vpop.permute.xlu0 %769
        %771 = vrot.lane.b32.xlu0 %v489, 112
        %v772 = vpop.permute.xlu0 %771
        %773 = vrot.lane.b32.xlu0 %v490, 112
        %v774 = vpop.permute.xlu0 %773
        %775 = vrot.lane.b32.xlu0 %v491, 112
        %v776 = vpop.permute.xlu0 %775
        %777 = vrot.lane.b32.xlu0 %v492, 112
        %v778 = vpop.permute.xlu0 %777
        %779 = vrot.lane.b32.xlu0 %v493, 112
        %v780 = vpop.permute.xlu0 %779
        %781 = vrot.lane.b32.xlu0 %v494, 112
        %v782 = vpop.permute.xlu0 %781
        %783 = vrot.lane.b32.xlu0 %v495, 112
        %v784 = vpop.permute.xlu0 %783
        %785 = vrot.lane.b32.xlu0 %v496, 112
        %v786 = vpop.permute.xlu0 %785
        %787 = vrot.lane.b32.xlu0 %v497, 112
        %v788 = vpop.permute.xlu0 %787
        %789 = vrot.lane.b32.xlu0 %v498, 112
        %v790 = vpop.permute.xlu0 %789
        %791 = vrot.lane.b32.xlu0 %v499, 112
        %v792 = vpop.permute.xlu0 %791
        %v825 = vadd.f32 %v697, %v730
        %v826 = vadd.f32 %v698, %v732
        %v827 = vadd.f32 %v699, %v734
        %v828 = vadd.f32 %v700, %v736
        %v829 = vadd.f32 %v701, %v738
        %v830 = vadd.f32 %v702, %v740
        %v831 = vadd.f32 %v703, %v742
        %v832 = vadd.f32 %v704, %v744
        %v833 = vadd.f32 %v705, %v746
        %v834 = vadd.f32 %v706, %v748
        %v835 = vadd.f32 %v707, %v750
        %v836 = vadd.f32 %v708, %v752
        %v837 = vadd.f32 %v709, %v754
        %v838 = vadd.f32 %v710, %v756
        %v839 = vadd.f32 %v711, %v758
        %v840 = vadd.f32 %v712, %v760
        %v841 = vadd.f32 %v713, %v762
        %v842 = vadd.f32 %v714, %v764
        %v843 = vadd.f32 %v715, %v766
        %v844 = vadd.f32 %v716, %v768
        %v845 = vadd.f32 %v717, %v770
        %v846 = vadd.f32 %v718, %v772
        %v847 = vadd.f32 %v719, %v774
        %v848 = vadd.f32 %v720, %v776
        %v849 = vadd.f32 %v721, %v778
        %v850 = vadd.f32 %v722, %v780
        %v851 = vadd.f32 %v723, %v782
        %v852 = vadd.f32 %v724, %v784
        %v853 = vadd.f32 %v725, %v786
        %v854 = vadd.f32 %v726, %v788
        %v855 = vadd.f32 %v727, %v790
        %v856 = vadd.f32 %v728, %v792
        %857 = vrot.lane.b32.xlu0 %v468, 104
        %v858 = vpop.permute.xlu0 %857
        %859 = vrot.lane.b32.xlu0 %v469, 104
        %v860 = vpop.permute.xlu0 %859
        %861 = vrot.lane.b32.xlu0 %v470, 104
        %v862 = vpop.permute.xlu0 %861
        %863 = vrot.lane.b32.xlu0 %v471, 104
        %v864 = vpop.permute.xlu0 %863
        %865 = vrot.lane.b32.xlu0 %v472, 104
        %v866 = vpop.permute.xlu0 %865
        %867 = vrot.lane.b32.xlu0 %v473, 104
        %v868 = vpop.permute.xlu0 %867
        %869 = vrot.lane.b32.xlu0 %v474, 104
        %v870 = vpop.permute.xlu0 %869
        %871 = vrot.lane.b32.xlu0 %v475, 104
        %v872 = vpop.permute.xlu0 %871
        %873 = vrot.lane.b32.xlu0 %v476, 104
        %v874 = vpop.permute.xlu0 %873
        %875 = vrot.lane.b32.xlu0 %v477, 104
        %v876 = vpop.permute.xlu0 %875
        %877 = vrot.lane.b32.xlu0 %v478, 104
        %v878 = vpop.permute.xlu0 %877
        %879 = vrot.lane.b32.xlu0 %v479, 104
        %v880 = vpop.permute.xlu0 %879
        %881 = vrot.lane.b32.xlu0 %v480, 104
        %v882 = vpop.permute.xlu0 %881
        %883 = vrot.lane.b32.xlu0 %v481, 104
        %v884 = vpop.permute.xlu0 %883
        %885 = vrot.lane.b32.xlu0 %v482, 104
        %v886 = vpop.permute.xlu0 %885
        %887 = vrot.lane.b32.xlu0 %v483, 104
        %v888 = vpop.permute.xlu0 %887
        %889 = vrot.lane.b32.xlu0 %v484, 104
        %v890 = vpop.permute.xlu0 %889
        %891 = vrot.lane.b32.xlu0 %v485, 104
        %v892 = vpop.permute.xlu0 %891
        %893 = vrot.lane.b32.xlu0 %v486, 104
        %v894 = vpop.permute.xlu0 %893
        %895 = vrot.lane.b32.xlu0 %v487, 104
        %v896 = vpop.permute.xlu0 %895
        %897 = vrot.lane.b32.xlu0 %v488, 104
        %v898 = vpop.permute.xlu0 %897
        %899 = vrot.lane.b32.xlu0 %v489, 104
        %v900 = vpop.permute.xlu0 %899
        %901 = vrot.lane.b32.xlu0 %v490, 104
        %v902 = vpop.permute.xlu0 %901
        %903 = vrot.lane.b32.xlu0 %v491, 104
        %v904 = vpop.permute.xlu0 %903
        %905 = vrot.lane.b32.xlu0 %v492, 104
        %v906 = vpop.permute.xlu0 %905
        %907 = vrot.lane.b32.xlu0 %v493, 104
        %v908 = vpop.permute.xlu0 %907
        %909 = vrot.lane.b32.xlu0 %v494, 104
        %v910 = vpop.permute.xlu0 %909
        %911 = vrot.lane.b32.xlu0 %v495, 104
        %v912 = vpop.permute.xlu0 %911
        %913 = vrot.lane.b32.xlu0 %v496, 104
        %v914 = vpop.permute.xlu0 %913
        %915 = vrot.lane.b32.xlu0 %v497, 104
        %v916 = vpop.permute.xlu0 %915
        %917 = vrot.lane.b32.xlu0 %v498, 104
        %v918 = vpop.permute.xlu0 %917
        %919 = vrot.lane.b32.xlu0 %v499, 104
        %v920 = vpop.permute.xlu0 %919
        %v953 = vadd.f32 %v825, %v858
        %v954 = vadd.f32 %v826, %v860
        %v955 = vadd.f32 %v827, %v862
        %v956 = vadd.f32 %v828, %v864
        %v957 = vadd.f32 %v829, %v866
        %v958 = vadd.f32 %v830, %v868
        %v959 = vadd.f32 %v831, %v870
        %v960 = vadd.f32 %v832, %v872
        %v961 = vadd.f32 %v833, %v874
        %v962 = vadd.f32 %v834, %v876
        %v963 = vadd.f32 %v835, %v878
        %v964 = vadd.f32 %v836, %v880
        %v965 = vadd.f32 %v837, %v882
        %v966 = vadd.f32 %v838, %v884
        %v967 = vadd.f32 %v839, %v886
        %v968 = vadd.f32 %v840, %v888
        %v969 = vadd.f32 %v841, %v890
        %v970 = vadd.f32 %v842, %v892
        %v971 = vadd.f32 %v843, %v894
        %v972 = vadd.f32 %v844, %v896
        %v973 = vadd.f32 %v845, %v898
        %v974 = vadd.f32 %v846, %v900
        %v975 = vadd.f32 %v847, %v902
        %v976 = vadd.f32 %v848, %v904
        %v977 = vadd.f32 %v849, %v906
        %v978 = vadd.f32 %v850, %v908
        %v979 = vadd.f32 %v851, %v910
        %v980 = vadd.f32 %v852, %v912
        %v981 = vadd.f32 %v853, %v914
        %v982 = vadd.f32 %v854, %v916
        %v983 = vadd.f32 %v855, %v918
        %v984 = vadd.f32 %v856, %v920
        %vm985 = vcmask 31744
        %986 = vst.msk [vmem:[#allocation2] sm:$0xff] %vm985, %v953
        %987 = vst.msk [vmem:[#allocation2 + $0x8] sm:$0xff] %vm985, %v954
        %988 = vst.msk [vmem:[#allocation2 + $0x18] sm:$0xff] %vm985, %v955
        %989 = vst.msk [vmem:[#allocation2 + $0x20] sm:$0xff] %vm985, %v956
        %990 = vst.msk [vmem:[#allocation2 + $0x30] sm:$0xff] %vm985, %v957
        %991 = vst.msk [vmem:[#allocation2 + $0x38] sm:$0xff] %vm985, %v958
        %992 = vst.msk [vmem:[#allocation2 + $0x48] sm:$0xff] %vm985, %v959
        %993 = vst.msk [vmem:[#allocation2 + $0x50] sm:$0xff] %vm985, %v960
        %994 = vst.msk [vmem:[#allocation2 + $0x60] sm:$0xff] %vm985, %v961
        %995 = vst.msk [vmem:[#allocation2 + $0x68] sm:$0xff] %vm985, %v962
        %996 = vst.msk [vmem:[#allocation2 + $0x78] sm:$0xff] %vm985, %v963
        %997 = vst.msk [vmem:[#allocation2 + $0x80] sm:$0xff] %vm985, %v964
        %998 = vst.msk [vmem:[#allocation2 + $0x90] sm:$0xff] %vm985, %v965
        %999 = vst.msk [vmem:[#allocation2 + $0x98] sm:$0xff] %vm985, %v966
        %1000 = vst.msk [vmem:[#allocation2 + $0xa8] sm:$0xff] %vm985, %v967
        %1001 = vst.msk [vmem:[#allocation2 + $0xb0] sm:$0xff] %vm985, %v968
        %1002 = vst.msk [vmem:[#allocation2 + $0xc0] sm:$0xff] %vm985, %v969
        %1003 = vst.msk [vmem:[#allocation2 + $0xc8] sm:$0xff] %vm985, %v970
        %1004 = vst.msk [vmem:[#allocation2 + $0xd8] sm:$0xff] %vm985, %v971
        %1005 = vst.msk [vmem:[#allocation2 + $0xe0] sm:$0xff] %vm985, %v972
        %1006 = vst.msk [vmem:[#allocation2 + $0xf0] sm:$0xff] %vm985, %v973
        %1007 = vst.msk [vmem:[#allocation2 + $0xf8] sm:$0xff] %vm985, %v974
        %1008 = vst.msk [vmem:[#allocation2 + $0x108] sm:$0xff] %vm985, %v975
        %1009 = vst.msk [vmem:[#allocation2 + $0x110] sm:$0xff] %vm985, %v976
        %1010 = vst.msk [vmem:[#allocation2 + $0x120] sm:$0xff] %vm985, %v977
        %1011 = vst.msk [vmem:[#allocation2 + $0x128] sm:$0xff] %vm985, %v978
        %1012 = vst.msk [vmem:[#allocation2 + $0x138] sm:$0xff] %vm985, %v979
        %1013 = vst.msk [vmem:[#allocation2 + $0x140] sm:$0xff] %vm985, %v980
        %1014 = vst.msk [vmem:[#allocation2 + $0x150] sm:$0xff] %vm985, %v981
        %1015 = vst.msk [vmem:[#allocation2 + $0x158] sm:$0xff] %vm985, %v982
        %1016 = vst.msk [vmem:[#allocation2 + $0x168] sm:$0xff] %vm985, %v983
        %1017 = vst.msk [vmem:[#allocation2 + $0x170] sm:$0xff] %vm985, %v984
        %1050 = vrot.lane.b32.xlu0 %v953, 124
        %v1051 = vpop.permute.xlu0 %1050
        %1052 = vrot.lane.b32.xlu0 %v954, 124
        %v1053 = vpop.permute.xlu0 %1052
        %1054 = vrot.lane.b32.xlu0 %v955, 124
        %v1055 = vpop.permute.xlu0 %1054
        %1056 = vrot.lane.b32.xlu0 %v956, 124
        %v1057 = vpop.permute.xlu0 %1056
        %1058 = vrot.lane.b32.xlu0 %v957, 124
        %v1059 = vpop.permute.xlu0 %1058
        %1060 = vrot.lane.b32.xlu0 %v958, 124
        %v1061 = vpop.permute.xlu0 %1060
        %1062 = vrot.lane.b32.xlu0 %v959, 124
        %v1063 = vpop.permute.xlu0 %1062
        %1064 = vrot.lane.b32.xlu0 %v960, 124
        %v1065 = vpop.permute.xlu0 %1064
        %1066 = vrot.lane.b32.xlu0 %v961, 124
        %v1067 = vpop.permute.xlu0 %1066
        %1068 = vrot.lane.b32.xlu0 %v962, 124
        %v1069 = vpop.permute.xlu0 %1068
        %1070 = vrot.lane.b32.xlu0 %v963, 124
        %v1071 = vpop.permute.xlu0 %1070
        %1072 = vrot.lane.b32.xlu0 %v964, 124
        %v1073 = vpop.permute.xlu0 %1072
        %1074 = vrot.lane.b32.xlu0 %v965, 124
        %v1075 = vpop.permute.xlu0 %1074
        %1076 = vrot.lane.b32.xlu0 %v966, 124
        %v1077 = vpop.permute.xlu0 %1076
        %1078 = vrot.lane.b32.xlu0 %v967, 124
        %v1079 = vpop.permute.xlu0 %1078
        %1080 = vrot.lane.b32.xlu0 %v968, 124
        %v1081 = vpop.permute.xlu0 %1080
        %1082 = vrot.lane.b32.xlu0 %v969, 124
        %v1083 = vpop.permute.xlu0 %1082
        %1084 = vrot.lane.b32.xlu0 %v970, 124
        %v1085 = vpop.permute.xlu0 %1084
        %1086 = vrot.lane.b32.xlu0 %v971, 124
        %v1087 = vpop.permute.xlu0 %1086
        %1088 = vrot.lane.b32.xlu0 %v972, 124
        %v1089 = vpop.permute.xlu0 %1088
        %1090 = vrot.lane.b32.xlu0 %v973, 124
        %v1091 = vpop.permute.xlu0 %1090
        %1092 = vrot.lane.b32.xlu0 %v974, 124
        %v1093 = vpop.permute.xlu0 %1092
        %1094 = vrot.lane.b32.xlu0 %v975, 124
        %v1095 = vpop.permute.xlu0 %1094
        %1096 = vrot.lane.b32.xlu0 %v976, 124
        %v1097 = vpop.permute.xlu0 %1096
        %1098 = vrot.lane.b32.xlu0 %v977, 124
        %v1099 = vpop.permute.xlu0 %1098
        %1100 = vrot.lane.b32.xlu0 %v978, 124
        %v1101 = vpop.permute.xlu0 %1100
        %1102 = vrot.lane.b32.xlu0 %v979, 124
        %v1103 = vpop.permute.xlu0 %1102
        %1104 = vrot.lane.b32.xlu0 %v980, 124
        %v1105 = vpop.permute.xlu0 %1104
        %1106 = vrot.lane.b32.xlu0 %v981, 124
        %v1107 = vpop.permute.xlu0 %1106
        %1108 = vrot.lane.b32.xlu0 %v982, 124
        %v1109 = vpop.permute.xlu0 %1108
        %1110 = vrot.lane.b32.xlu0 %v983, 124
        %v1111 = vpop.permute.xlu0 %1110
        %1112 = vrot.lane.b32.xlu0 %v984, 124
        %v1113 = vpop.permute.xlu0 %1112
        %1146 = vst.msk [vmem:[#allocation3] sm:$0xff] %vm985, %v1051
        %1147 = vst.msk [vmem:[#allocation3 + $0x8] sm:$0xff] %vm985, %v1053
        %1148 = vst.msk [vmem:[#allocation3 + $0x18] sm:$0xff] %vm985, %v1055
        %1149 = vst.msk [vmem:[#allocation3 + $0x20] sm:$0xff] %vm985, %v1057
        %1150 = vst.msk [vmem:[#allocation3 + $0x30] sm:$0xff] %vm985, %v1059
        %1151 = vst.msk [vmem:[#allocation3 + $0x38] sm:$0xff] %vm985, %v1061
        %1152 = vst.msk [vmem:[#allocation3 + $0x48] sm:$0xff] %vm985, %v1063
        %1153 = vst.msk [vmem:[#allocation3 + $0x50] sm:$0xff] %vm985, %v1065
        %1154 = vst.msk [vmem:[#allocation3 + $0x60] sm:$0xff] %vm985, %v1067
        %1155 = vst.msk [vmem:[#allocation3 + $0x68] sm:$0xff] %vm985, %v1069
        %1156 = vst.msk [vmem:[#allocation3 + $0x78] sm:$0xff] %vm985, %v1071
        %1157 = vst.msk [vmem:[#allocation3 + $0x80] sm:$0xff] %vm985, %v1073
        %1158 = vst.msk [vmem:[#allocation3 + $0x90] sm:$0xff] %vm985, %v1075
        %1159 = vst.msk [vmem:[#allocation3 + $0x98] sm:$0xff] %vm985, %v1077
        %1160 = vst.msk [vmem:[#allocation3 + $0xa8] sm:$0xff] %vm985, %v1079
        %1161 = vst.msk [vmem:[#allocation3 + $0xb0] sm:$0xff] %vm985, %v1081
        %1162 = vst.msk [vmem:[#allocation3 + $0xc0] sm:$0xff] %vm985, %v1083
        %1163 = vst.msk [vmem:[#allocation3 + $0xc8] sm:$0xff] %vm985, %v1085
        %1164 = vst.msk [vmem:[#allocation3 + $0xd8] sm:$0xff] %vm985, %v1087
        %1165 = vst.msk [vmem:[#allocation3 + $0xe0] sm:$0xff] %vm985, %v1089
        %1166 = vst.msk [vmem:[#allocation3 + $0xf0] sm:$0xff] %vm985, %v1091
        %1167 = vst.msk [vmem:[#allocation3 + $0xf8] sm:$0xff] %vm985, %v1093
        %1168 = vst.msk [vmem:[#allocation3 + $0x108] sm:$0xff] %vm985, %v1095
        %1169 = vst.msk [vmem:[#allocation3 + $0x110] sm:$0xff] %vm985, %v1097
        %1170 = vst.msk [vmem:[#allocation3 + $0x120] sm:$0xff] %vm985, %v1099
        %1171 = vst.msk [vmem:[#allocation3 + $0x128] sm:$0xff] %vm985, %v1101
        %1172 = vst.msk [vmem:[#allocation3 + $0x138] sm:$0xff] %vm985, %v1103
        %1173 = vst.msk [vmem:[#allocation3 + $0x140] sm:$0xff] %vm985, %v1105
        %1174 = vst.msk [vmem:[#allocation3 + $0x150] sm:$0xff] %vm985, %v1107
        %1175 = vst.msk [vmem:[#allocation3 + $0x158] sm:$0xff] %vm985, %v1109
        %1176 = vst.msk [vmem:[#allocation3 + $0x168] sm:$0xff] %vm985, %v1111
        %1177 = vst.msk [vmem:[#allocation3 + $0x170] sm:$0xff] %vm985, %v1113
        %v1178 = vadd.f32 %v468, %v730
        %v1179 = vadd.f32 %v469, %v732
        %v1180 = vadd.f32 %v470, %v734
        %v1181 = vadd.f32 %v471, %v736
        %v1182 = vadd.f32 %v472, %v738
        %v1183 = vadd.f32 %v473, %v740
        %v1184 = vadd.f32 %v474, %v742
        %v1185 = vadd.f32 %v475, %v744
        %v1186 = vadd.f32 %v476, %v746
        %v1187 = vadd.f32 %v477, %v748
        %v1188 = vadd.f32 %v478, %v750
        %v1189 = vadd.f32 %v479, %v752
        %v1190 = vadd.f32 %v480, %v754
        %v1191 = vadd.f32 %v481, %v756
        %v1192 = vadd.f32 %v482, %v758
        %v1193 = vadd.f32 %v483, %v760
        %v1194 = vadd.f32 %v484, %v762
        %v1195 = vadd.f32 %v485, %v764
        %v1196 = vadd.f32 %v486, %v766
        %v1197 = vadd.f32 %v487, %v768
        %v1198 = vadd.f32 %v488, %v770
        %v1199 = vadd.f32 %v489, %v772
        %v1200 = vadd.f32 %v490, %v774
        %v1201 = vadd.f32 %v491, %v776
        %v1202 = vadd.f32 %v492, %v778
        %v1203 = vadd.f32 %v493, %v780
        %v1204 = vadd.f32 %v494, %v782
        %v1205 = vadd.f32 %v495, %v784
        %v1206 = vadd.f32 %v496, %v786
        %v1207 = vadd.f32 %v497, %v788
        %v1208 = vadd.f32 %v498, %v790
        %v1209 = vadd.f32 %v499, %v792
        %vm1210 = vcmask 1046528
        %v1211 = vrot.slane %v468, 1
        %v1212 = vrot.slane %v469, 1
        %v1213 = vsel %vm1210, %v1211, %v1212
        %v1214 = vrot.slane %v470, 1
        %v1215 = vrot.slane %v471, 1
        %v1216 = vsel %vm1210, %v1214, %v1215
        %v1217 = vrot.slane %v472, 1
        %v1218 = vrot.slane %v473, 1
        %v1219 = vsel %vm1210, %v1217, %v1218
        %v1220 = vrot.slane %v474, 1
        %v1221 = vrot.slane %v475, 1
        %v1222 = vsel %vm1210, %v1220, %v1221
        %v1223 = vrot.slane %v476, 1
        %v1224 = vrot.slane %v477, 1
        %v1225 = vsel %vm1210, %v1223, %v1224
        %v1226 = vrot.slane %v478, 1
        %v1227 = vrot.slane %v479, 1
        %v1228 = vsel %vm1210, %v1226, %v1227
        %v1229 = vrot.slane %v480, 1
        %v1230 = vrot.slane %v481, 1
        %v1231 = vsel %vm1210, %v1229, %v1230
        %v1232 = vrot.slane %v482, 1
        %v1233 = vrot.slane %v483, 1
        %v1234 = vsel %vm1210, %v1232, %v1233
        %v1235 = vrot.slane %v484, 1
        %v1236 = vrot.slane %v485, 1
        %v1237 = vsel %vm1210, %v1235, %v1236
        %v1238 = vrot.slane %v486, 1
        %v1239 = vrot.slane %v487, 1
        %v1240 = vsel %vm1210, %v1238, %v1239
        %v1241 = vrot.slane %v488, 1
        %v1242 = vrot.slane %v489, 1
        %v1243 = vsel %vm1210, %v1241, %v1242
        %v1244 = vrot.slane %v490, 1
        %v1245 = vrot.slane %v491, 1
        %v1246 = vsel %vm1210, %v1244, %v1245
        %v1247 = vrot.slane %v492, 1
        %v1248 = vrot.slane %v493, 1
        %v1249 = vsel %vm1210, %v1247, %v1248
        %v1250 = vrot.slane %v494, 1
        %v1251 = vrot.slane %v495, 1
        %v1252 = vsel %vm1210, %v1250, %v1251
        %v1253 = vrot.slane %v496, 1
        %v1254 = vrot.slane %v497, 1
        %v1255 = vsel %vm1210, %v1253, %v1254
        %v1256 = vrot.slane %v498, 1
        %v1257 = vrot.slane %v499, 1
        %v1258 = vsel %vm1210, %v1256, %v1257
        %1259 = vrot.lane.b32.xlu0 %v1213, 8
        %v1260 = vpop.permute.xlu0 %1259
        %1261 = vrot.lane.b32.xlu0 %v1212, 8
        %v1262 = vpop.permute.xlu0 %1261
        %1263 = vrot.lane.b32.xlu0 %v1216, 8
        %v1264 = vpop.permute.xlu0 %1263
        %1265 = vrot.lane.b32.xlu0 %v1215, 8
        %v1266 = vpop.permute.xlu0 %1265
        %1267 = vrot.lane.b32.xlu0 %v1219, 8
        %v1268 = vpop.permute.xlu0 %1267
        %1269 = vrot.lane.b32.xlu0 %v1218, 8
        %v1270 = vpop.permute.xlu0 %1269
        %1271 = vrot.lane.b32.xlu0 %v1222, 8
        %v1272 = vpop.permute.xlu0 %1271
        %1273 = vrot.lane.b32.xlu0 %v1221, 8
        %v1274 = vpop.permute.xlu0 %1273
        %1275 = vrot.lane.b32.xlu0 %v1225, 8
        %v1276 = vpop.permute.xlu0 %1275
        %1277 = vrot.lane.b32.xlu0 %v1224, 8
        %v1278 = vpop.permute.xlu0 %1277
        %1279 = vrot.lane.b32.xlu0 %v1228, 8
        %v1280 = vpop.permute.xlu0 %1279
        %1281 = vrot.lane.b32.xlu0 %v1227, 8
        %v1282 = vpop.permute.xlu0 %1281
        %1283 = vrot.lane.b32.xlu0 %v1231, 8
        %v1284 = vpop.permute.xlu0 %1283
        %1285 = vrot.lane.b32.xlu0 %v1230, 8
        %v1286 = vpop.permute.xlu0 %1285
        %1287 = vrot.lane.b32.xlu0 %v1234, 8
        %v1288 = vpop.permute.xlu0 %1287
        %1289 = vrot.lane.b32.xlu0 %v1233, 8
        %v1290 = vpop.permute.xlu0 %1289
        %1291 = vrot.lane.b32.xlu0 %v1237, 8
        %v1292 = vpop.permute.xlu0 %1291
        %1293 = vrot.lane.b32.xlu0 %v1236, 8
        %v1294 = vpop.permute.xlu0 %1293
        %1295 = vrot.lane.b32.xlu0 %v1240, 8
        %v1296 = vpop.permute.xlu0 %1295
        %1297 = vrot.lane.b32.xlu0 %v1239, 8
        %v1298 = vpop.permute.xlu0 %1297
        %1299 = vrot.lane.b32.xlu0 %v1243, 8
        %v1300 = vpop.permute.xlu0 %1299
        %1301 = vrot.lane.b32.xlu0 %v1242, 8
        %v1302 = vpop.permute.xlu0 %1301
        %1303 = vrot.lane.b32.xlu0 %v1246, 8
        %v1304 = vpop.permute.xlu0 %1303
        %1305 = vrot.lane.b32.xlu0 %v1245, 8
        %v1306 = vpop.permute.xlu0 %1305
        %1307 = vrot.lane.b32.xlu0 %v1249, 8
        %v1308 = vpop.permute.xlu0 %1307
        %1309 = vrot.lane.b32.xlu0 %v1248, 8
        %v1310 = vpop.permute.xlu0 %1309
        %1311 = vrot.lane.b32.xlu0 %v1252, 8
        %v1312 = vpop.permute.xlu0 %1311
        %1313 = vrot.lane.b32.xlu0 %v1251, 8
        %v1314 = vpop.permute.xlu0 %1313
        %1315 = vrot.lane.b32.xlu0 %v1255, 8
        %v1316 = vpop.permute.xlu0 %1315
        %1317 = vrot.lane.b32.xlu0 %v1254, 8
        %v1318 = vpop.permute.xlu0 %1317
        %1319 = vrot.lane.b32.xlu0 %v1258, 8
        %v1320 = vpop.permute.xlu0 %1319
        %1321 = vrot.lane.b32.xlu0 %v1257, 8
        %v1322 = vpop.permute.xlu0 %1321
        %v1355 = vadd.f32 %v1178, %v1260
        %v1356 = vadd.f32 %v1179, %v1262
        %v1357 = vadd.f32 %v1180, %v1264
        %v1358 = vadd.f32 %v1181, %v1266
        %v1359 = vadd.f32 %v1182, %v1268
        %v1360 = vadd.f32 %v1183, %v1270
        %v1361 = vadd.f32 %v1184, %v1272
        %v1362 = vadd.f32 %v1185, %v1274
        %v1363 = vadd.f32 %v1186, %v1276
        %v1364 = vadd.f32 %v1187, %v1278
        %v1365 = vadd.f32 %v1188, %v1280
        %v1366 = vadd.f32 %v1189, %v1282
        %v1367 = vadd.f32 %v1190, %v1284
        %v1368 = vadd.f32 %v1191, %v1286
        %v1369 = vadd.f32 %v1192, %v1288
        %v1370 = vadd.f32 %v1193, %v1290
        %v1371 = vadd.f32 %v1194, %v1292
        %v1372 = vadd.f32 %v1195, %v1294
        %v1373 = vadd.f32 %v1196, %v1296
        %v1374 = vadd.f32 %v1197, %v1298
        %v1375 = vadd.f32 %v1198, %v1300
        %v1376 = vadd.f32 %v1199, %v1302
        %v1377 = vadd.f32 %v1200, %v1304
        %v1378 = vadd.f32 %v1201, %v1306
        %v1379 = vadd.f32 %v1202, %v1308
        %v1380 = vadd.f32 %v1203, %v1310
        %v1381 = vadd.f32 %v1204, %v1312
        %v1382 = vadd.f32 %v1205, %v1314
        %v1383 = vadd.f32 %v1206, %v1316
        %v1384 = vadd.f32 %v1207, %v1318
        %v1385 = vadd.f32 %v1208, %v1320
        %v1386 = vadd.f32 %v1209, %v1322
        %1387 = vrot.lane.b32.xlu0 %v1213, 120
        %v1388 = vpop.permute.xlu0 %1387
        %1389 = vrot.lane.b32.xlu0 %v1212, 120
        %v1390 = vpop.permute.xlu0 %1389
        %1391 = vrot.lane.b32.xlu0 %v1216, 120
        %v1392 = vpop.permute.xlu0 %1391
        %1393 = vrot.lane.b32.xlu0 %v1215, 120
        %v1394 = vpop.permute.xlu0 %1393
        %1395 = vrot.lane.b32.xlu0 %v1219, 120
        %v1396 = vpop.permute.xlu0 %1395
        %1397 = vrot.lane.b32.xlu0 %v1218, 120
        %v1398 = vpop.permute.xlu0 %1397
        %1399 = vrot.lane.b32.xlu0 %v1222, 120
        %v1400 = vpop.permute.xlu0 %1399
        %1401 = vrot.lane.b32.xlu0 %v1221, 120
        %v1402 = vpop.permute.xlu0 %1401
        %1403 = vrot.lane.b32.xlu0 %v1225, 120
        %v1404 = vpop.permute.xlu0 %1403
        %1405 = vrot.lane.b32.xlu0 %v1224, 120
        %v1406 = vpop.permute.xlu0 %1405
        %1407 = vrot.lane.b32.xlu0 %v1228, 120
        %v1408 = vpop.permute.xlu0 %1407
        %1409 = vrot.lane.b32.xlu0 %v1227, 120
        %v1410 = vpop.permute.xlu0 %1409
        %1411 = vrot.lane.b32.xlu0 %v1231, 120
        %v1412 = vpop.permute.xlu0 %1411
        %1413 = vrot.lane.b32.xlu0 %v1230, 120
        %v1414 = vpop.permute.xlu0 %1413
        %1415 = vrot.lane.b32.xlu0 %v1234, 120
        %v1416 = vpop.permute.xlu0 %1415
        %1417 = vrot.lane.b32.xlu0 %v1233, 120
        %v1418 = vpop.permute.xlu0 %1417
        %1419 = vrot.lane.b32.xlu0 %v1237, 120
        %v1420 = vpop.permute.xlu0 %1419
        %1421 = vrot.lane.b32.xlu0 %v1236, 120
        %v1422 = vpop.permute.xlu0 %1421
        %1423 = vrot.lane.b32.xlu0 %v1240, 120
        %v1424 = vpop.permute.xlu0 %1423
        %1425 = vrot.lane.b32.xlu0 %v1239, 120
        %v1426 = vpop.permute.xlu0 %1425
        %1427 = vrot.lane.b32.xlu0 %v1243, 120
        %v1428 = vpop.permute.xlu0 %1427
        %1429 = vrot.lane.b32.xlu0 %v1242, 120
        %v1430 = vpop.permute.xlu0 %1429
        %1431 = vrot.lane.b32.xlu0 %v1246, 120
        %v1432 = vpop.permute.xlu0 %1431
        %1433 = vrot.lane.b32.xlu0 %v1245, 120
        %v1434 = vpop.permute.xlu0 %1433
        %1435 = vrot.lane.b32.xlu0 %v1249, 120
        %v1436 = vpop.permute.xlu0 %1435
        %1437 = vrot.lane.b32.xlu0 %v1248, 120
        %v1438 = vpop.permute.xlu0 %1437
        %1439 = vrot.lane.b32.xlu0 %v1252, 120
        %v1440 = vpop.permute.xlu0 %1439
        %1441 = vrot.lane.b32.xlu0 %v1251, 120
        %v1442 = vpop.permute.xlu0 %1441
        %1443 = vrot.lane.b32.xlu0 %v1255, 120
        %v1444 = vpop.permute.xlu0 %1443
        %1445 = vrot.lane.b32.xlu0 %v1254, 120
        %v1446 = vpop.permute.xlu0 %1445
        %1447 = vrot.lane.b32.xlu0 %v1258, 120
        %v1448 = vpop.permute.xlu0 %1447
        %1449 = vrot.lane.b32.xlu0 %v1257, 120
        %v1450 = vpop.permute.xlu0 %1449
        %v1483 = vadd.f32 %v1355, %v1388
        %v1484 = vadd.f32 %v1356, %v1390
        %v1485 = vadd.f32 %v1357, %v1392
        %v1486 = vadd.f32 %v1358, %v1394
        %v1487 = vadd.f32 %v1359, %v1396
        %v1488 = vadd.f32 %v1360, %v1398
        %v1489 = vadd.f32 %v1361, %v1400
        %v1490 = vadd.f32 %v1362, %v1402
        %v1491 = vadd.f32 %v1363, %v1404
        %v1492 = vadd.f32 %v1364, %v1406
        %v1493 = vadd.f32 %v1365, %v1408
        %v1494 = vadd.f32 %v1366, %v1410
        %v1495 = vadd.f32 %v1367, %v1412
        %v1496 = vadd.f32 %v1368, %v1414
        %v1497 = vadd.f32 %v1369, %v1416
        %v1498 = vadd.f32 %v1370, %v1418
        %v1499 = vadd.f32 %v1371, %v1420
        %v1500 = vadd.f32 %v1372, %v1422
        %v1501 = vadd.f32 %v1373, %v1424
        %v1502 = vadd.f32 %v1374, %v1426
        %v1503 = vadd.f32 %v1375, %v1428
        %v1504 = vadd.f32 %v1376, %v1430
        %v1505 = vadd.f32 %v1377, %v1432
        %v1506 = vadd.f32 %v1378, %v1434
        %v1507 = vadd.f32 %v1379, %v1436
        %v1508 = vadd.f32 %v1380, %v1438
        %v1509 = vadd.f32 %v1381, %v1440
        %v1510 = vadd.f32 %v1382, %v1442
        %v1511 = vadd.f32 %v1383, %v1444
        %v1512 = vadd.f32 %v1384, %v1446
        %v1513 = vadd.f32 %v1385, %v1448
        %v1514 = vadd.f32 %v1386, %v1450
        %1547 = vrot.lane.b32.xlu0 %v1483, 124
        %v1548 = vpop.permute.xlu0 %1547
        %1549 = vrot.lane.b32.xlu0 %v1484, 124
        %v1550 = vpop.permute.xlu0 %1549
        %1551 = vrot.lane.b32.xlu0 %v1485, 124
        %v1552 = vpop.permute.xlu0 %1551
        %1553 = vrot.lane.b32.xlu0 %v1486, 124
        %v1554 = vpop.permute.xlu0 %1553
        %1555 = vrot.lane.b32.xlu0 %v1487, 124
        %v1556 = vpop.permute.xlu0 %1555
        %1557 = vrot.lane.b32.xlu0 %v1488, 124
        %v1558 = vpop.permute.xlu0 %1557
        %1559 = vrot.lane.b32.xlu0 %v1489, 124
        %v1560 = vpop.permute.xlu0 %1559
        %1561 = vrot.lane.b32.xlu0 %v1490, 124
        %v1562 = vpop.permute.xlu0 %1561
        %1563 = vrot.lane.b32.xlu0 %v1491, 124
        %v1564 = vpop.permute.xlu0 %1563
        %1565 = vrot.lane.b32.xlu0 %v1492, 124
        %v1566 = vpop.permute.xlu0 %1565
        %1567 = vrot.lane.b32.xlu0 %v1493, 124
        %v1568 = vpop.permute.xlu0 %1567
        %1569 = vrot.lane.b32.xlu0 %v1494, 124
        %v1570 = vpop.permute.xlu0 %1569
        %1571 = vrot.lane.b32.xlu0 %v1495, 124
        %v1572 = vpop.permute.xlu0 %1571
        %1573 = vrot.lane.b32.xlu0 %v1496, 124
        %v1574 = vpop.permute.xlu0 %1573
        %1575 = vrot.lane.b32.xlu0 %v1497, 124
        %v1576 = vpop.permute.xlu0 %1575
        %1577 = vrot.lane.b32.xlu0 %v1498, 124
        %v1578 = vpop.permute.xlu0 %1577
        %1579 = vrot.lane.b32.xlu0 %v1499, 124
        %v1580 = vpop.permute.xlu0 %1579
        %1581 = vrot.lane.b32.xlu0 %v1500, 124
        %v1582 = vpop.permute.xlu0 %1581
        %1583 = vrot.lane.b32.xlu0 %v1501, 124
        %v1584 = vpop.permute.xlu0 %1583
        %1585 = vrot.lane.b32.xlu0 %v1502, 124
        %v1586 = vpop.permute.xlu0 %1585
        %1587 = vrot.lane.b32.xlu0 %v1503, 124
        %v1588 = vpop.permute.xlu0 %1587
        %1589 = vrot.lane.b32.xlu0 %v1504, 124
        %v1590 = vpop.permute.xlu0 %1589
        %1591 = vrot.lane.b32.xlu0 %v1505, 124
        %v1592 = vpop.permute.xlu0 %1591
        %1593 = vrot.lane.b32.xlu0 %v1506, 124
        %v1594 = vpop.permute.xlu0 %1593
        %1595 = vrot.lane.b32.xlu0 %v1507, 124
        %v1596 = vpop.permute.xlu0 %1595
        %1597 = vrot.lane.b32.xlu0 %v1508, 124
        %v1598 = vpop.permute.xlu0 %1597
        %1599 = vrot.lane.b32.xlu0 %v1509, 124
        %v1600 = vpop.permute.xlu0 %1599
        %1601 = vrot.lane.b32.xlu0 %v1510, 124
        %v1602 = vpop.permute.xlu0 %1601
        %1603 = vrot.lane.b32.xlu0 %v1511, 124
        %v1604 = vpop.permute.xlu0 %1603
        %1605 = vrot.lane.b32.xlu0 %v1512, 124
        %v1606 = vpop.permute.xlu0 %1605
        %1607 = vrot.lane.b32.xlu0 %v1513, 124
        %v1608 = vpop.permute.xlu0 %1607
        %1609 = vrot.lane.b32.xlu0 %v1514, 124
        %v1610 = vpop.permute.xlu0 %1609
        %vm1643 = vcmask 64544
        %1644 = vst.msk [vmem:[#allocation2 + $0x1] sm:$0xff] %vm1643, %v1548
        %vm1645 = vcmask 63520
        %1646 = vst.msk [vmem:[#allocation2 + $0x9] sm:$0x7f] %vm1645, %v1550
        %1647 = vst.msk [vmem:[#allocation2 + $0x19] sm:$0xff] %vm1643, %v1552
        %1648 = vst.msk [vmem:[#allocation2 + $0x21] sm:$0x7f] %vm1645, %v1554
        %1649 = vst.msk [vmem:[#allocation2 + $0x31] sm:$0xff] %vm1643, %v1556
        %1650 = vst.msk [vmem:[#allocation2 + $0x39] sm:$0x7f] %vm1645, %v1558
        %1651 = vst.msk [vmem:[#allocation2 + $0x49] sm:$0xff] %vm1643, %v1560
        %1652 = vst.msk [vmem:[#allocation2 + $0x51] sm:$0x7f] %vm1645, %v1562
        %1653 = vst.msk [vmem:[#allocation2 + $0x61] sm:$0xff] %vm1643, %v1564
        %1654 = vst.msk [vmem:[#allocation2 + $0x69] sm:$0x7f] %vm1645, %v1566
        %1655 = vst.msk [vmem:[#allocation2 + $0x79] sm:$0xff] %vm1643, %v1568
        %1656 = vst.msk [vmem:[#allocation2 + $0x81] sm:$0x7f] %vm1645, %v1570
        %1657 = vst.msk [vmem:[#allocation2 + $0x91] sm:$0xff] %vm1643, %v1572
        %1658 = vst.msk [vmem:[#allocation2 + $0x99] sm:$0x7f] %vm1645, %v1574
        %1659 = vst.msk [vmem:[#allocation2 + $0xa9] sm:$0xff] %vm1643, %v1576
        %1660 = vst.msk [vmem:[#allocation2 + $0xb1] sm:$0x7f] %vm1645, %v1578
        %1661 = vst.msk [vmem:[#allocation2 + $0xc1] sm:$0xff] %vm1643, %v1580
        %1662 = vst.msk [vmem:[#allocation2 + $0xc9] sm:$0x7f] %vm1645, %v1582
        %1663 = vst.msk [vmem:[#allocation2 + $0xd9] sm:$0xff] %vm1643, %v1584
        %1664 = vst.msk [vmem:[#allocation2 + $0xe1] sm:$0x7f] %vm1645, %v1586
        %1665 = vst.msk [vmem:[#allocation2 + $0xf1] sm:$0xff] %vm1643, %v1588
        %1666 = vst.msk [vmem:[#allocation2 + $0xf9] sm:$0x7f] %vm1645, %v1590
        %1667 = vst.msk [vmem:[#allocation2 + $0x109] sm:$0xff] %vm1643, %v1592
        %1668 = vst.msk [vmem:[#allocation2 + $0x111] sm:$0x7f] %vm1645, %v1594
        %1669 = vst.msk [vmem:[#allocation2 + $0x121] sm:$0xff] %vm1643, %v1596
        %1670 = vst.msk [vmem:[#allocation2 + $0x129] sm:$0x7f] %vm1645, %v1598
        %1671 = vst.msk [vmem:[#allocation2 + $0x139] sm:$0xff] %vm1643, %v1600
        %1672 = vst.msk [vmem:[#allocation2 + $0x141] sm:$0x7f] %vm1645, %v1602
        %1673 = vst.msk [vmem:[#allocation2 + $0x151] sm:$0xff] %vm1643, %v1604
        %1674 = vst.msk [vmem:[#allocation2 + $0x159] sm:$0x7f] %vm1645, %v1606
        %1675 = vst.msk [vmem:[#allocation2 + $0x169] sm:$0xff] %vm1643, %v1608
        %1676 = vst.msk [vmem:[#allocation2 + $0x171] sm:$0x7f] %vm1645, %v1610
        %1677 = vrot.lane.b32.xlu0 %v1483, 120
        %v1678 = vpop.permute.xlu0 %1677
        %1679 = vrot.lane.b32.xlu0 %v1484, 120
        %v1680 = vpop.permute.xlu0 %1679
        %1681 = vrot.lane.b32.xlu0 %v1485, 120
        %v1682 = vpop.permute.xlu0 %1681
        %1683 = vrot.lane.b32.xlu0 %v1486, 120
        %v1684 = vpop.permute.xlu0 %1683
        %1685 = vrot.lane.b32.xlu0 %v1487, 120
        %v1686 = vpop.permute.xlu0 %1685
        %1687 = vrot.lane.b32.xlu0 %v1488, 120
        %v1688 = vpop.permute.xlu0 %1687
        %1689 = vrot.lane.b32.xlu0 %v1489, 120
        %v1690 = vpop.permute.xlu0 %1689
        %1691 = vrot.lane.b32.xlu0 %v1490, 120
        %v1692 = vpop.permute.xlu0 %1691
        %1693 = vrot.lane.b32.xlu0 %v1491, 120
        %v1694 = vpop.permute.xlu0 %1693
        %1695 = vrot.lane.b32.xlu0 %v1492, 120
        %v1696 = vpop.permute.xlu0 %1695
        %1697 = vrot.lane.b32.xlu0 %v1493, 120
        %v1698 = vpop.permute.xlu0 %1697
        %1699 = vrot.lane.b32.xlu0 %v1494, 120
        %v1700 = vpop.permute.xlu0 %1699
        %1701 = vrot.lane.b32.xlu0 %v1495, 120
        %v1702 = vpop.permute.xlu0 %1701
        %1703 = vrot.lane.b32.xlu0 %v1496, 120
        %v1704 = vpop.permute.xlu0 %1703
        %1705 = vrot.lane.b32.xlu0 %v1497, 120
        %v1706 = vpop.permute.xlu0 %1705
        %1707 = vrot.lane.b32.xlu0 %v1498, 120
        %v1708 = vpop.permute.xlu0 %1707
        %1709 = vrot.lane.b32.xlu0 %v1499, 120
        %v1710 = vpop.permute.xlu0 %1709
        %1711 = vrot.lane.b32.xlu0 %v1500, 120
        %v1712 = vpop.permute.xlu0 %1711
        %1713 = vrot.lane.b32.xlu0 %v1501, 120
        %v1714 = vpop.permute.xlu0 %1713
        %1715 = vrot.lane.b32.xlu0 %v1502, 120
        %v1716 = vpop.permute.xlu0 %1715
        %1717 = vrot.lane.b32.xlu0 %v1503, 120
        %v1718 = vpop.permute.xlu0 %1717
        %1719 = vrot.lane.b32.xlu0 %v1504, 120
        %v1720 = vpop.permute.xlu0 %1719
        %1721 = vrot.lane.b32.xlu0 %v1505, 120
        %v1722 = vpop.permute.xlu0 %1721
        %1723 = vrot.lane.b32.xlu0 %v1506, 120
        %v1724 = vpop.permute.xlu0 %1723
        %1725 = vrot.lane.b32.xlu0 %v1507, 120
        %v1726 = vpop.permute.xlu0 %1725
        %1727 = vrot.lane.b32.xlu0 %v1508, 120
        %v1728 = vpop.permute.xlu0 %1727
        %1729 = vrot.lane.b32.xlu0 %v1509, 120
        %v1730 = vpop.permute.xlu0 %1729
        %1731 = vrot.lane.b32.xlu0 %v1510, 120
        %v1732 = vpop.permute.xlu0 %1731
        %1733 = vrot.lane.b32.xlu0 %v1511, 120
        %v1734 = vpop.permute.xlu0 %1733
        %1735 = vrot.lane.b32.xlu0 %v1512, 120
        %v1736 = vpop.permute.xlu0 %1735
        %1737 = vrot.lane.b32.xlu0 %v1513, 120
        %v1738 = vpop.permute.xlu0 %1737
        %1739 = vrot.lane.b32.xlu0 %v1514, 120
        %v1740 = vpop.permute.xlu0 %1739
        %1773 = vst.msk [vmem:[#allocation3 + $0x1] sm:$0xff] %vm1643, %v1678
        %1774 = vst.msk [vmem:[#allocation3 + $0x9] sm:$0x7f] %vm1645, %v1680
        %1775 = vst.msk [vmem:[#allocation3 + $0x19] sm:$0xff] %vm1643, %v1682
        %1776 = vst.msk [vmem:[#allocation3 + $0x21] sm:$0x7f] %vm1645, %v1684
        %1777 = vst.msk [vmem:[#allocation3 + $0x31] sm:$0xff] %vm1643, %v1686
        %1778 = vst.msk [vmem:[#allocation3 + $0x39] sm:$0x7f] %vm1645, %v1688
        %1779 = vst.msk [vmem:[#allocation3 + $0x49] sm:$0xff] %vm1643, %v1690
        %1780 = vst.msk [vmem:[#allocation3 + $0x51] sm:$0x7f] %vm1645, %v1692
        %1781 = vst.msk [vmem:[#allocation3 + $0x61] sm:$0xff] %vm1643, %v1694
        %1782 = vst.msk [vmem:[#allocation3 + $0x69] sm:$0x7f] %vm1645, %v1696
        %1783 = vst.msk [vmem:[#allocation3 + $0x79] sm:$0xff] %vm1643, %v1698
        %1784 = vst.msk [vmem:[#allocation3 + $0x81] sm:$0x7f] %vm1645, %v1700
        %1785 = vst.msk [vmem:[#allocation3 + $0x91] sm:$0xff] %vm1643, %v1702
        %1786 = vst.msk [vmem:[#allocation3 + $0x99] sm:$0x7f] %vm1645, %v1704
        %1787 = vst.msk [vmem:[#allocation3 + $0xa9] sm:$0xff] %vm1643, %v1706
        %1788 = vst.msk [vmem:[#allocation3 + $0xb1] sm:$0x7f] %vm1645, %v1708
        %1789 = vst.msk [vmem:[#allocation3 + $0xc1] sm:$0xff] %vm1643, %v1710
        %1790 = vst.msk [vmem:[#allocation3 + $0xc9] sm:$0x7f] %vm1645, %v1712
        %1791 = vst.msk [vmem:[#allocation3 + $0xd9] sm:$0xff] %vm1643, %v1714
        %1792 = vst.msk [vmem:[#allocation3 + $0xe1] sm:$0x7f] %vm1645, %v1716
        %1793 = vst.msk [vmem:[#allocation3 + $0xf1] sm:$0xff] %vm1643, %v1718
        %1794 = vst.msk [vmem:[#allocation3 + $0xf9] sm:$0x7f] %vm1645, %v1720
        %1795 = vst.msk [vmem:[#allocation3 + $0x109] sm:$0xff] %vm1643, %v1722
        %1796 = vst.msk [vmem:[#allocation3 + $0x111] sm:$0x7f] %vm1645, %v1724
        %1797 = vst.msk [vmem:[#allocation3 + $0x121] sm:$0xff] %vm1643, %v1726
        %1798 = vst.msk [vmem:[#allocation3 + $0x129] sm:$0x7f] %vm1645, %v1728
        %1799 = vst.msk [vmem:[#allocation3 + $0x139] sm:$0xff] %vm1643, %v1730
        %1800 = vst.msk [vmem:[#allocation3 + $0x141] sm:$0x7f] %vm1645, %v1732
        %1801 = vst.msk [vmem:[#allocation3 + $0x151] sm:$0xff] %vm1643, %v1734
        %1802 = vst.msk [vmem:[#allocation3 + $0x159] sm:$0x7f] %vm1645, %v1736
        %1803 = vst.msk [vmem:[#allocation3 + $0x169] sm:$0xff] %vm1643, %v1738
        %1804 = vst.msk [vmem:[#allocation3 + $0x171] sm:$0x7f] %vm1645, %v1740
        %1805 = vrot.lane.b32.xlu0 %v470, 16
        %v1806 = vpop.permute.xlu0 %1805
        %1807 = vrot.lane.b32.xlu0 %v471, 16
        %v1808 = vpop.permute.xlu0 %1807
        %1809 = vrot.lane.b32.xlu0 %v472, 16
        %v1810 = vpop.permute.xlu0 %1809
        %1811 = vrot.lane.b32.xlu0 %v473, 16
        %v1812 = vpop.permute.xlu0 %1811
        %1813 = vrot.lane.b32.xlu0 %v474, 16
        %v1814 = vpop.permute.xlu0 %1813
        %1815 = vrot.lane.b32.xlu0 %v475, 16
        %v1816 = vpop.permute.xlu0 %1815
        %1817 = vrot.lane.b32.xlu0 %v476, 16
        %v1818 = vpop.permute.xlu0 %1817
        %1819 = vrot.lane.b32.xlu0 %v477, 16
        %v1820 = vpop.permute.xlu0 %1819
        %1821 = vrot.lane.b32.xlu0 %v478, 16
        %v1822 = vpop.permute.xlu0 %1821
        %1823 = vrot.lane.b32.xlu0 %v479, 16
        %v1824 = vpop.permute.xlu0 %1823
        %1825 = vrot.lane.b32.xlu0 %v480, 16
        %v1826 = vpop.permute.xlu0 %1825
        %1827 = vrot.lane.b32.xlu0 %v481, 16
        %v1828 = vpop.permute.xlu0 %1827
        %1829 = vrot.lane.b32.xlu0 %v482, 16
        %v1830 = vpop.permute.xlu0 %1829
        %1831 = vrot.lane.b32.xlu0 %v483, 16
        %v1832 = vpop.permute.xlu0 %1831
        %1833 = vrot.lane.b32.xlu0 %v484, 16
        %v1834 = vpop.permute.xlu0 %1833
        %1835 = vrot.lane.b32.xlu0 %v485, 16
        %v1836 = vpop.permute.xlu0 %1835
        %1837 = vrot.lane.b32.xlu0 %v486, 16
        %v1838 = vpop.permute.xlu0 %1837
        %1839 = vrot.lane.b32.xlu0 %v487, 16
        %v1840 = vpop.permute.xlu0 %1839
        %1841 = vrot.lane.b32.xlu0 %v488, 16
        %v1842 = vpop.permute.xlu0 %1841
        %1843 = vrot.lane.b32.xlu0 %v489, 16
        %v1844 = vpop.permute.xlu0 %1843
        %1845 = vrot.lane.b32.xlu0 %v490, 16
        %v1846 = vpop.permute.xlu0 %1845
        %1847 = vrot.lane.b32.xlu0 %v491, 16
        %v1848 = vpop.permute.xlu0 %1847
        %1849 = vrot.lane.b32.xlu0 %v492, 16
        %v1850 = vpop.permute.xlu0 %1849
        %1851 = vrot.lane.b32.xlu0 %v493, 16
        %v1852 = vpop.permute.xlu0 %1851
        %1853 = vrot.lane.b32.xlu0 %v494, 16
        %v1854 = vpop.permute.xlu0 %1853
        %1855 = vrot.lane.b32.xlu0 %v495, 16
        %v1856 = vpop.permute.xlu0 %1855
        %1857 = vrot.lane.b32.xlu0 %v496, 16
        %v1858 = vpop.permute.xlu0 %1857
        %1859 = vrot.lane.b32.xlu0 %v497, 16
        %v1860 = vpop.permute.xlu0 %1859
        %1861 = vrot.lane.b32.xlu0 %v498, 16
        %v1862 = vpop.permute.xlu0 %1861
        %1863 = vrot.lane.b32.xlu0 %v499, 16
        %v1864 = vpop.permute.xlu0 %1863
        %v1895 = vadd.f32 %v697, %v1806
        %v1896 = vadd.f32 %v698, %v1808
        %v1897 = vadd.f32 %v699, %v1810
        %v1898 = vadd.f32 %v700, %v1812
        %v1899 = vadd.f32 %v701, %v1814
        %v1900 = vadd.f32 %v702, %v1816
        %v1901 = vadd.f32 %v703, %v1818
        %v1902 = vadd.f32 %v704, %v1820
        %v1903 = vadd.f32 %v705, %v1822
        %v1904 = vadd.f32 %v706, %v1824
        %v1905 = vadd.f32 %v707, %v1826
        %v1906 = vadd.f32 %v708, %v1828
        %v1907 = vadd.f32 %v709, %v1830
        %v1908 = vadd.f32 %v710, %v1832
        %v1909 = vadd.f32 %v711, %v1834
        %v1910 = vadd.f32 %v712, %v1836
        %v1911 = vadd.f32 %v713, %v1838
        %v1912 = vadd.f32 %v714, %v1840
        %v1913 = vadd.f32 %v715, %v1842
        %v1914 = vadd.f32 %v716, %v1844
        %v1915 = vadd.f32 %v717, %v1846
        %v1916 = vadd.f32 %v718, %v1848
        %v1917 = vadd.f32 %v719, %v1850
        %v1918 = vadd.f32 %v720, %v1852
        %v1919 = vadd.f32 %v721, %v1854
        %v1920 = vadd.f32 %v722, %v1856
        %v1921 = vadd.f32 %v723, %v1858
        %v1922 = vadd.f32 %v724, %v1860
        %v1923 = vadd.f32 %v725, %v1862
        %v1924 = vadd.f32 %v726, %v1864
        %1925 = vrot.lane.b32.xlu0 %v470, 8
        %v1926 = vpop.permute.xlu0 %1925
        %1927 = vrot.lane.b32.xlu0 %v471, 8
        %v1928 = vpop.permute.xlu0 %1927
        %1929 = vrot.lane.b32.xlu0 %v472, 8
        %v1930 = vpop.permute.xlu0 %1929
        %1931 = vrot.lane.b32.xlu0 %v473, 8
        %v1932 = vpop.permute.xlu0 %1931
        %1933 = vrot.lane.b32.xlu0 %v474, 8
        %v1934 = vpop.permute.xlu0 %1933
        %1935 = vrot.lane.b32.xlu0 %v475, 8
        %v1936 = vpop.permute.xlu0 %1935
        %1937 = vrot.lane.b32.xlu0 %v476, 8
        %v1938 = vpop.permute.xlu0 %1937
        %1939 = vrot.lane.b32.xlu0 %v477, 8
        %v1940 = vpop.permute.xlu0 %1939
        %1941 = vrot.lane.b32.xlu0 %v478, 8
        %v1942 = vpop.permute.xlu0 %1941
        %1943 = vrot.lane.b32.xlu0 %v479, 8
        %v1944 = vpop.permute.xlu0 %1943
        %1945 = vrot.lane.b32.xlu0 %v480, 8
        %v1946 = vpop.permute.xlu0 %1945
        %1947 = vrot.lane.b32.xlu0 %v481, 8
        %v1948 = vpop.permute.xlu0 %1947
        %1949 = vrot.lane.b32.xlu0 %v482, 8
        %v1950 = vpop.permute.xlu0 %1949
        %1951 = vrot.lane.b32.xlu0 %v483, 8
        %v1952 = vpop.permute.xlu0 %1951
        %1953 = vrot.lane.b32.xlu0 %v484, 8
        %v1954 = vpop.permute.xlu0 %1953
        %1955 = vrot.lane.b32.xlu0 %v485, 8
        %v1956 = vpop.permute.xlu0 %1955
        %1957 = vrot.lane.b32.xlu0 %v486, 8
        %v1958 = vpop.permute.xlu0 %1957
        %1959 = vrot.lane.b32.xlu0 %v487, 8
        %v1960 = vpop.permute.xlu0 %1959
        %1961 = vrot.lane.b32.xlu0 %v488, 8
        %v1962 = vpop.permute.xlu0 %1961
        %1963 = vrot.lane.b32.xlu0 %v489, 8
        %v1964 = vpop.permute.xlu0 %1963
        %1965 = vrot.lane.b32.xlu0 %v490, 8
        %v1966 = vpop.permute.xlu0 %1965
        %1967 = vrot.lane.b32.xlu0 %v491, 8
        %v1968 = vpop.permute.xlu0 %1967
        %1969 = vrot.lane.b32.xlu0 %v492, 8
        %v1970 = vpop.permute.xlu0 %1969
        %1971 = vrot.lane.b32.xlu0 %v493, 8
        %v1972 = vpop.permute.xlu0 %1971
        %1973 = vrot.lane.b32.xlu0 %v494, 8
        %v1974 = vpop.permute.xlu0 %1973
        %1975 = vrot.lane.b32.xlu0 %v495, 8
        %v1976 = vpop.permute.xlu0 %1975
        %1977 = vrot.lane.b32.xlu0 %v496, 8
        %v1978 = vpop.permute.xlu0 %1977
        %1979 = vrot.lane.b32.xlu0 %v497, 8
        %v1980 = vpop.permute.xlu0 %1979
        %1981 = vrot.lane.b32.xlu0 %v498, 8
        %v1982 = vpop.permute.xlu0 %1981
        %1983 = vrot.lane.b32.xlu0 %v499, 8
        %v1984 = vpop.permute.xlu0 %1983
        %v2015 = vadd.f32 %v1895, %v1926
        %v2016 = vadd.f32 %v1896, %v1928
        %v2017 = vadd.f32 %v1897, %v1930
        %v2018 = vadd.f32 %v1898, %v1932
        %v2019 = vadd.f32 %v1899, %v1934
        %v2020 = vadd.f32 %v1900, %v1936
        %v2021 = vadd.f32 %v1901, %v1938
        %v2022 = vadd.f32 %v1902, %v1940
        %v2023 = vadd.f32 %v1903, %v1942
        %v2024 = vadd.f32 %v1904, %v1944
        %v2025 = vadd.f32 %v1905, %v1946
        %v2026 = vadd.f32 %v1906, %v1948
        %v2027 = vadd.f32 %v1907, %v1950
        %v2028 = vadd.f32 %v1908, %v1952
        %v2029 = vadd.f32 %v1909, %v1954
        %v2030 = vadd.f32 %v1910, %v1956
        %v2031 = vadd.f32 %v1911, %v1958
        %v2032 = vadd.f32 %v1912, %v1960
        %v2033 = vadd.f32 %v1913, %v1962
        %v2034 = vadd.f32 %v1914, %v1964
        %v2035 = vadd.f32 %v1915, %v1966
        %v2036 = vadd.f32 %v1916, %v1968
        %v2037 = vadd.f32 %v1917, %v1970
        %v2038 = vadd.f32 %v1918, %v1972
        %v2039 = vadd.f32 %v1919, %v1974
        %v2040 = vadd.f32 %v1920, %v1976
        %v2041 = vadd.f32 %v1921, %v1978
        %v2042 = vadd.f32 %v1922, %v1980
        %v2043 = vadd.f32 %v1923, %v1982
        %v2044 = vadd.f32 %v1924, %v1984
        %2075 = vrot.lane.b32.xlu0 %v2015, 120
        %v2076 = vpop.permute.xlu0 %2075
        %2077 = vrot.lane.b32.xlu0 %v2016, 120
        %v2078 = vpop.permute.xlu0 %2077
        %2079 = vrot.lane.b32.xlu0 %v2017, 120
        %v2080 = vpop.permute.xlu0 %2079
        %2081 = vrot.lane.b32.xlu0 %v2018, 120
        %v2082 = vpop.permute.xlu0 %2081
        %2083 = vrot.lane.b32.xlu0 %v2019, 120
        %v2084 = vpop.permute.xlu0 %2083
        %2085 = vrot.lane.b32.xlu0 %v2020, 120
        %v2086 = vpop.permute.xlu0 %2085
        %2087 = vrot.lane.b32.xlu0 %v2021, 120
        %v2088 = vpop.permute.xlu0 %2087
        %2089 = vrot.lane.b32.xlu0 %v2022, 120
        %v2090 = vpop.permute.xlu0 %2089
        %2091 = vrot.lane.b32.xlu0 %v2023, 120
        %v2092 = vpop.permute.xlu0 %2091
        %2093 = vrot.lane.b32.xlu0 %v2024, 120
        %v2094 = vpop.permute.xlu0 %2093
        %2095 = vrot.lane.b32.xlu0 %v2025, 120
        %v2096 = vpop.permute.xlu0 %2095
        %2097 = vrot.lane.b32.xlu0 %v2026, 120
        %v2098 = vpop.permute.xlu0 %2097
        %2099 = vrot.lane.b32.xlu0 %v2027, 120
        %v2100 = vpop.permute.xlu0 %2099
        %2101 = vrot.lane.b32.xlu0 %v2028, 120
        %v2102 = vpop.permute.xlu0 %2101
        %2103 = vrot.lane.b32.xlu0 %v2029, 120
        %v2104 = vpop.permute.xlu0 %2103
        %2105 = vrot.lane.b32.xlu0 %v2030, 120
        %v2106 = vpop.permute.xlu0 %2105
        %2107 = vrot.lane.b32.xlu0 %v2031, 120
        %v2108 = vpop.permute.xlu0 %2107
        %2109 = vrot.lane.b32.xlu0 %v2032, 120
        %v2110 = vpop.permute.xlu0 %2109
        %2111 = vrot.lane.b32.xlu0 %v2033, 120
        %v2112 = vpop.permute.xlu0 %2111
        %2113 = vrot.lane.b32.xlu0 %v2034, 120
        %v2114 = vpop.permute.xlu0 %2113
        %2115 = vrot.lane.b32.xlu0 %v2035, 120
        %v2116 = vpop.permute.xlu0 %2115
        %2117 = vrot.lane.b32.xlu0 %v2036, 120
        %v2118 = vpop.permute.xlu0 %2117
        %2119 = vrot.lane.b32.xlu0 %v2037, 120
        %v2120 = vpop.permute.xlu0 %2119
        %2121 = vrot.lane.b32.xlu0 %v2038, 120
        %v2122 = vpop.permute.xlu0 %2121
        %2123 = vrot.lane.b32.xlu0 %v2039, 120
        %v2124 = vpop.permute.xlu0 %2123
        %2125 = vrot.lane.b32.xlu0 %v2040, 120
        %v2126 = vpop.permute.xlu0 %2125
        %2127 = vrot.lane.b32.xlu0 %v2041, 120
        %v2128 = vpop.permute.xlu0 %2127
        %2129 = vrot.lane.b32.xlu0 %v2042, 120
        %v2130 = vpop.permute.xlu0 %2129
        %2131 = vrot.lane.b32.xlu0 %v2043, 120
        %v2132 = vpop.permute.xlu0 %2131
        %2133 = vrot.lane.b32.xlu0 %v2044, 120
        %v2134 = vpop.permute.xlu0 %2133
        %s2165 = scalar_lea.vmem [#allocation2], 24
        %vm2166 = vcmask 97344
        %2167 = vst.msk [vmem:[%s2165] sm:$0xff] %vm2166, %v2076
        %2168 = vst.msk [vmem:[%s2165 + $0x8] sm:$0xff] %vm2166, %v2078
        %2169 = vst.msk [vmem:[%s2165 + $0x18] sm:$0xff] %vm2166, %v2080
        %2170 = vst.msk [vmem:[%s2165 + $0x20] sm:$0xff] %vm2166, %v2082
        %2171 = vst.msk [vmem:[%s2165 + $0x30] sm:$0xff] %vm2166, %v2084
        %2172 = vst.msk [vmem:[%s2165 + $0x38] sm:$0xff] %vm2166, %v2086
        %2173 = vst.msk [vmem:[%s2165 + $0x48] sm:$0xff] %vm2166, %v2088
        %2174 = vst.msk [vmem:[%s2165 + $0x50] sm:$0xff] %vm2166, %v2090
        %2175 = vst.msk [vmem:[%s2165 + $0x60] sm:$0xff] %vm2166, %v2092
        %2176 = vst.msk [vmem:[%s2165 + $0x68] sm:$0xff] %vm2166, %v2094
        %2177 = vst.msk [vmem:[%s2165 + $0x78] sm:$0xff] %vm2166, %v2096
        %2178 = vst.msk [vmem:[%s2165 + $0x80] sm:$0xff] %vm2166, %v2098
        %2179 = vst.msk [vmem:[%s2165 + $0x90] sm:$0xff] %vm2166, %v2100
        %2180 = vst.msk [vmem:[%s2165 + $0x98] sm:$0xff] %vm2166, %v2102
        %2181 = vst.msk [vmem:[%s2165 + $0xa8] sm:$0xff] %vm2166, %v2104
        %2182 = vst.msk [vmem:[%s2165 + $0xb0] sm:$0xff] %vm2166, %v2106
        %2183 = vst.msk [vmem:[%s2165 + $0xc0] sm:$0xff] %vm2166, %v2108
        %2184 = vst.msk [vmem:[%s2165 + $0xc8] sm:$0xff] %vm2166, %v2110
        %2185 = vst.msk [vmem:[%s2165 + $0xd8] sm:$0xff] %vm2166, %v2112
        %2186 = vst.msk [vmem:[%s2165 + $0xe0] sm:$0xff] %vm2166, %v2114
        %2187 = vst.msk [vmem:[%s2165 + $0xf0] sm:$0xff] %vm2166, %v2116
        %2188 = vst.msk [vmem:[%s2165 + $0xf8] sm:$0xff] %vm2166, %v2118
        %2189 = vst.msk [vmem:[%s2165 + $0x108] sm:$0xff] %vm2166, %v2120
        %2190 = vst.msk [vmem:[%s2165 + $0x110] sm:$0xff] %vm2166, %v2122
        %2191 = vst.msk [vmem:[%s2165 + $0x120] sm:$0xff] %vm2166, %v2124
        %2192 = vst.msk [vmem:[%s2165 + $0x128] sm:$0xff] %vm2166, %v2126
        %2193 = vst.msk [vmem:[%s2165 + $0x138] sm:$0xff] %vm2166, %v2128
        %2194 = vst.msk [vmem:[%s2165 + $0x140] sm:$0xff] %vm2166, %v2130
        %2195 = vst.msk [vmem:[%s2165 + $0x150] sm:$0xff] %vm2166, %v2132
        %2196 = vst.msk [vmem:[%s2165 + $0x158] sm:$0xff] %vm2166, %v2134
        %2197 = vrot.lane.b32.xlu0 %v2015, 116
        %v2198 = vpop.permute.xlu0 %2197
        %2199 = vrot.lane.b32.xlu0 %v2016, 116
        %v2200 = vpop.permute.xlu0 %2199
        %2201 = vrot.lane.b32.xlu0 %v2017, 116
        %v2202 = vpop.permute.xlu0 %2201
        %2203 = vrot.lane.b32.xlu0 %v2018, 116
        %v2204 = vpop.permute.xlu0 %2203
        %2205 = vrot.lane.b32.xlu0 %v2019, 116
        %v2206 = vpop.permute.xlu0 %2205
        %2207 = vrot.lane.b32.xlu0 %v2020, 116
        %v2208 = vpop.permute.xlu0 %2207
        %2209 = vrot.lane.b32.xlu0 %v2021, 116
        %v2210 = vpop.permute.xlu0 %2209
        %2211 = vrot.lane.b32.xlu0 %v2022, 116
        %v2212 = vpop.permute.xlu0 %2211
        %2213 = vrot.lane.b32.xlu0 %v2023, 116
        %v2214 = vpop.permute.xlu0 %2213
        %2215 = vrot.lane.b32.xlu0 %v2024, 116
        %v2216 = vpop.permute.xlu0 %2215
        %2217 = vrot.lane.b32.xlu0 %v2025, 116
        %v2218 = vpop.permute.xlu0 %2217
        %2219 = vrot.lane.b32.xlu0 %v2026, 116
        %v2220 = vpop.permute.xlu0 %2219
        %2221 = vrot.lane.b32.xlu0 %v2027, 116
        %v2222 = vpop.permute.xlu0 %2221
        %2223 = vrot.lane.b32.xlu0 %v2028, 116
        %v2224 = vpop.permute.xlu0 %2223
        %2225 = vrot.lane.b32.xlu0 %v2029, 116
        %v2226 = vpop.permute.xlu0 %2225
        %2227 = vrot.lane.b32.xlu0 %v2030, 116
        %v2228 = vpop.permute.xlu0 %2227
        %2229 = vrot.lane.b32.xlu0 %v2031, 116
        %v2230 = vpop.permute.xlu0 %2229
        %2231 = vrot.lane.b32.xlu0 %v2032, 116
        %v2232 = vpop.permute.xlu0 %2231
        %2233 = vrot.lane.b32.xlu0 %v2033, 116
        %v2234 = vpop.permute.xlu0 %2233
        %2235 = vrot.lane.b32.xlu0 %v2034, 116
        %v2236 = vpop.permute.xlu0 %2235
        %2237 = vrot.lane.b32.xlu0 %v2035, 116
        %v2238 = vpop.permute.xlu0 %2237
        %2239 = vrot.lane.b32.xlu0 %v2036, 116
        %v2240 = vpop.permute.xlu0 %2239
        %2241 = vrot.lane.b32.xlu0 %v2037, 116
        %v2242 = vpop.permute.xlu0 %2241
        %2243 = vrot.lane.b32.xlu0 %v2038, 116
        %v2244 = vpop.permute.xlu0 %2243
        %2245 = vrot.lane.b32.xlu0 %v2039, 116
        %v2246 = vpop.permute.xlu0 %2245
        %2247 = vrot.lane.b32.xlu0 %v2040, 116
        %v2248 = vpop.permute.xlu0 %2247
        %2249 = vrot.lane.b32.xlu0 %v2041, 116
        %v2250 = vpop.permute.xlu0 %2249
        %2251 = vrot.lane.b32.xlu0 %v2042, 116
        %v2252 = vpop.permute.xlu0 %2251
        %2253 = vrot.lane.b32.xlu0 %v2043, 116
        %v2254 = vpop.permute.xlu0 %2253
        %2255 = vrot.lane.b32.xlu0 %v2044, 116
        %v2256 = vpop.permute.xlu0 %2255
        %s2287 = scalar_lea.vmem [#allocation3], 24
        %2288 = vst.msk [vmem:[%s2287] sm:$0xff] %vm2166, %v2198
        %2289 = vst.msk [vmem:[%s2287 + $0x8] sm:$0xff] %vm2166, %v2200
        %2290 = vst.msk [vmem:[%s2287 + $0x18] sm:$0xff] %vm2166, %v2202
        %2291 = vst.msk [vmem:[%s2287 + $0x20] sm:$0xff] %vm2166, %v2204
        %2292 = vst.msk [vmem:[%s2287 + $0x30] sm:$0xff] %vm2166, %v2206
        %2293 = vst.msk [vmem:[%s2287 + $0x38] sm:$0xff] %vm2166, %v2208
        %2294 = vst.msk [vmem:[%s2287 + $0x48] sm:$0xff] %vm2166, %v2210
        %2295 = vst.msk [vmem:[%s2287 + $0x50] sm:$0xff] %vm2166, %v2212
        %2296 = vst.msk [vmem:[%s2287 + $0x60] sm:$0xff] %vm2166, %v2214
        %2297 = vst.msk [vmem:[%s2287 + $0x68] sm:$0xff] %vm2166, %v2216
        %2298 = vst.msk [vmem:[%s2287 + $0x78] sm:$0xff] %vm2166, %v2218
        %2299 = vst.msk [vmem:[%s2287 + $0x80] sm:$0xff] %vm2166, %v2220
        %2300 = vst.msk [vmem:[%s2287 + $0x90] sm:$0xff] %vm2166, %v2222
        %2301 = vst.msk [vmem:[%s2287 + $0x98] sm:$0xff] %vm2166, %v2224
        %2302 = vst.msk [vmem:[%s2287 + $0xa8] sm:$0xff] %vm2166, %v2226
        %2303 = vst.msk [vmem:[%s2287 + $0xb0] sm:$0xff] %vm2166, %v2228
        %2304 = vst.msk [vmem:[%s2287 + $0xc0] sm:$0xff] %vm2166, %v2230
        %2305 = vst.msk [vmem:[%s2287 + $0xc8] sm:$0xff] %vm2166, %v2232
        %2306 = vst.msk [vmem:[%s2287 + $0xd8] sm:$0xff] %vm2166, %v2234
        %2307 = vst.msk [vmem:[%s2287 + $0xe0] sm:$0xff] %vm2166, %v2236
        %2308 = vst.msk [vmem:[%s2287 + $0xf0] sm:$0xff] %vm2166, %v2238
        %2309 = vst.msk [vmem:[%s2287 + $0xf8] sm:$0xff] %vm2166, %v2240
        %2310 = vst.msk [vmem:[%s2287 + $0x108] sm:$0xff] %vm2166, %v2242
        %2311 = vst.msk [vmem:[%s2287 + $0x110] sm:$0xff] %vm2166, %v2244
        %2312 = vst.msk [vmem:[%s2287 + $0x120] sm:$0xff] %vm2166, %v2246
        %2313 = vst.msk [vmem:[%s2287 + $0x128] sm:$0xff] %vm2166, %v2248
        %2314 = vst.msk [vmem:[%s2287 + $0x138] sm:$0xff] %vm2166, %v2250
        %2315 = vst.msk [vmem:[%s2287 + $0x140] sm:$0xff] %vm2166, %v2252
        %2316 = vst.msk [vmem:[%s2287 + $0x150] sm:$0xff] %vm2166, %v2254
        %2317 = vst.msk [vmem:[%s2287 + $0x158] sm:$0xff] %vm2166, %v2256
        %v2318 = vadd.f32 %v468, %v1260
        %v2319 = vadd.f32 %v469, %v1262
        %v2320 = vadd.f32 %v470, %v1264
        %v2321 = vadd.f32 %v471, %v1266
        %v2322 = vadd.f32 %v472, %v1268
        %v2323 = vadd.f32 %v473, %v1270
        %v2324 = vadd.f32 %v474, %v1272
        %v2325 = vadd.f32 %v475, %v1274
        %v2326 = vadd.f32 %v476, %v1276
        %v2327 = vadd.f32 %v477, %v1278
        %v2328 = vadd.f32 %v478, %v1280
        %v2329 = vadd.f32 %v479, %v1282
        %v2330 = vadd.f32 %v480, %v1284
        %v2331 = vadd.f32 %v481, %v1286
        %v2332 = vadd.f32 %v482, %v1288
        %v2333 = vadd.f32 %v483, %v1290
        %v2334 = vadd.f32 %v484, %v1292
        %v2335 = vadd.f32 %v485, %v1294
        %v2336 = vadd.f32 %v486, %v1296
        %v2337 = vadd.f32 %v487, %v1298
        %v2338 = vadd.f32 %v488, %v1300
        %v2339 = vadd.f32 %v489, %v1302
        %v2340 = vadd.f32 %v490, %v1304
        %v2341 = vadd.f32 %v491, %v1306
        %v2342 = vadd.f32 %v492, %v1308
        %v2343 = vadd.f32 %v493, %v1310
        %v2344 = vadd.f32 %v494, %v1312
        %v2345 = vadd.f32 %v495, %v1314
        %v2346 = vadd.f32 %v496, %v1316
        %v2347 = vadd.f32 %v497, %v1318
        %v2348 = vadd.f32 %v2318, %v1806
        %v2349 = vadd.f32 %v2319, %v1808
        %v2350 = vadd.f32 %v2320, %v1810
        %v2351 = vadd.f32 %v2321, %v1812
        %v2352 = vadd.f32 %v2322, %v1814
        %v2353 = vadd.f32 %v2323, %v1816
        %v2354 = vadd.f32 %v2324, %v1818
        %v2355 = vadd.f32 %v2325, %v1820
        %v2356 = vadd.f32 %v2326, %v1822
        %v2357 = vadd.f32 %v2327, %v1824
        %v2358 = vadd.f32 %v2328, %v1826
        %v2359 = vadd.f32 %v2329, %v1828
        %v2360 = vadd.f32 %v2330, %v1830
        %v2361 = vadd.f32 %v2331, %v1832
        %v2362 = vadd.f32 %v2332, %v1834
        %v2363 = vadd.f32 %v2333, %v1836
        %v2364 = vadd.f32 %v2334, %v1838
        %v2365 = vadd.f32 %v2335, %v1840
        %v2366 = vadd.f32 %v2336, %v1842
        %v2367 = vadd.f32 %v2337, %v1844
        %v2368 = vadd.f32 %v2338, %v1846
        %v2369 = vadd.f32 %v2339, %v1848
        %v2370 = vadd.f32 %v2340, %v1850
        %v2371 = vadd.f32 %v2341, %v1852
        %v2372 = vadd.f32 %v2342, %v1854
        %v2373 = vadd.f32 %v2343, %v1856
        %v2374 = vadd.f32 %v2344, %v1858
        %v2375 = vadd.f32 %v2345, %v1860
        %v2376 = vadd.f32 %v2346, %v1862
        %v2377 = vadd.f32 %v2347, %v1864
        %2378 = vrot.lane.b32.xlu0 %v1216, 24
        %v2379 = vpop.permute.xlu0 %2378
        %2380 = vrot.lane.b32.xlu0 %v1215, 24
        %v2381 = vpop.permute.xlu0 %2380
        %2382 = vrot.lane.b32.xlu0 %v1219, 24
        %v2383 = vpop.permute.xlu0 %2382
        %2384 = vrot.lane.b32.xlu0 %v1218, 24
        %v2385 = vpop.permute.xlu0 %2384
        %2386 = vrot.lane.b32.xlu0 %v1222, 24
        %v2387 = vpop.permute.xlu0 %2386
        %2388 = vrot.lane.b32.xlu0 %v1221, 24
        %v2389 = vpop.permute.xlu0 %2388
        %2390 = vrot.lane.b32.xlu0 %v1225, 24
        %v2391 = vpop.permute.xlu0 %2390
        %2392 = vrot.lane.b32.xlu0 %v1224, 24
        %v2393 = vpop.permute.xlu0 %2392
        %2394 = vrot.lane.b32.xlu0 %v1228, 24
        %v2395 = vpop.permute.xlu0 %2394
        %2396 = vrot.lane.b32.xlu0 %v1227, 24
        %v2397 = vpop.permute.xlu0 %2396
        %2398 = vrot.lane.b32.xlu0 %v1231, 24
        %v2399 = vpop.permute.xlu0 %2398
        %2400 = vrot.lane.b32.xlu0 %v1230, 24
        %v2401 = vpop.permute.xlu0 %2400
        %2402 = vrot.lane.b32.xlu0 %v1234, 24
        %v2403 = vpop.permute.xlu0 %2402
        %2404 = vrot.lane.b32.xlu0 %v1233, 24
        %v2405 = vpop.permute.xlu0 %2404
        %2406 = vrot.lane.b32.xlu0 %v1237, 24
        %v2407 = vpop.permute.xlu0 %2406
        %2408 = vrot.lane.b32.xlu0 %v1236, 24
        %v2409 = vpop.permute.xlu0 %2408
        %2410 = vrot.lane.b32.xlu0 %v1240, 24
        %v2411 = vpop.permute.xlu0 %2410
        %2412 = vrot.lane.b32.xlu0 %v1239, 24
        %v2413 = vpop.permute.xlu0 %2412
        %2414 = vrot.lane.b32.xlu0 %v1243, 24
        %v2415 = vpop.permute.xlu0 %2414
        %2416 = vrot.lane.b32.xlu0 %v1242, 24
        %v2417 = vpop.permute.xlu0 %2416
        %2418 = vrot.lane.b32.xlu0 %v1246, 24
        %v2419 = vpop.permute.xlu0 %2418
        %2420 = vrot.lane.b32.xlu0 %v1245, 24
        %v2421 = vpop.permute.xlu0 %2420
        %2422 = vrot.lane.b32.xlu0 %v1249, 24
        %v2423 = vpop.permute.xlu0 %2422
        %2424 = vrot.lane.b32.xlu0 %v1248, 24
        %v2425 = vpop.permute.xlu0 %2424
        %2426 = vrot.lane.b32.xlu0 %v1252, 24
        %v2427 = vpop.permute.xlu0 %2426
        %2428 = vrot.lane.b32.xlu0 %v1251, 24
        %v2429 = vpop.permute.xlu0 %2428
        %2430 = vrot.lane.b32.xlu0 %v1255, 24
        %v2431 = vpop.permute.xlu0 %2430
        %2432 = vrot.lane.b32.xlu0 %v1254, 24
        %v2433 = vpop.permute.xlu0 %2432
        %2434 = vrot.lane.b32.xlu0 %v1258, 24
        %v2435 = vpop.permute.xlu0 %2434
        %2436 = vrot.lane.b32.xlu0 %v1257, 24
        %v2437 = vpop.permute.xlu0 %2436
        %v2468 = vadd.f32 %v2348, %v2379
        %v2469 = vadd.f32 %v2349, %v2381
        %v2470 = vadd.f32 %v2350, %v2383
        %v2471 = vadd.f32 %v2351, %v2385
        %v2472 = vadd.f32 %v2352, %v2387
        %v2473 = vadd.f32 %v2353, %v2389
        %v2474 = vadd.f32 %v2354, %v2391
        %v2475 = vadd.f32 %v2355, %v2393
        %v2476 = vadd.f32 %v2356, %v2395
        %v2477 = vadd.f32 %v2357, %v2397
        %v2478 = vadd.f32 %v2358, %v2399
        %v2479 = vadd.f32 %v2359, %v2401
        %v2480 = vadd.f32 %v2360, %v2403
        %v2481 = vadd.f32 %v2361, %v2405
        %v2482 = vadd.f32 %v2362, %v2407
        %v2483 = vadd.f32 %v2363, %v2409
        %v2484 = vadd.f32 %v2364, %v2411
        %v2485 = vadd.f32 %v2365, %v2413
        %v2486 = vadd.f32 %v2366, %v2415
        %v2487 = vadd.f32 %v2367, %v2417
        %v2488 = vadd.f32 %v2368, %v2419
        %v2489 = vadd.f32 %v2369, %v2421
        %v2490 = vadd.f32 %v2370, %v2423
        %v2491 = vadd.f32 %v2371, %v2425
        %v2492 = vadd.f32 %v2372, %v2427
        %v2493 = vadd.f32 %v2373, %v2429
        %v2494 = vadd.f32 %v2374, %v2431
        %v2495 = vadd.f32 %v2375, %v2433
        %v2496 = vadd.f32 %v2376, %v2435
        %v2497 = vadd.f32 %v2377, %v2437
        %2528 = vrot.lane.b32.xlu0 %v2468, 116
        %v2529 = vpop.permute.xlu0 %2528
        %2530 = vrot.lane.b32.xlu0 %v2469, 116
        %v2531 = vpop.permute.xlu0 %2530
        %2532 = vrot.lane.b32.xlu0 %v2470, 116
        %v2533 = vpop.permute.xlu0 %2532
        %2534 = vrot.lane.b32.xlu0 %v2471, 116
        %v2535 = vpop.permute.xlu0 %2534
        %2536 = vrot.lane.b32.xlu0 %v2472, 116
        %v2537 = vpop.permute.xlu0 %2536
        %2538 = vrot.lane.b32.xlu0 %v2473, 116
        %v2539 = vpop.permute.xlu0 %2538
        %2540 = vrot.lane.b32.xlu0 %v2474, 116
        %v2541 = vpop.permute.xlu0 %2540
        %2542 = vrot.lane.b32.xlu0 %v2475, 116
        %v2543 = vpop.permute.xlu0 %2542
        %2544 = vrot.lane.b32.xlu0 %v2476, 116
        %v2545 = vpop.permute.xlu0 %2544
        %2546 = vrot.lane.b32.xlu0 %v2477, 116
        %v2547 = vpop.permute.xlu0 %2546
        %2548 = vrot.lane.b32.xlu0 %v2478, 116
        %v2549 = vpop.permute.xlu0 %2548
        %2550 = vrot.lane.b32.xlu0 %v2479, 116
        %v2551 = vpop.permute.xlu0 %2550
        %2552 = vrot.lane.b32.xlu0 %v2480, 116
        %v2553 = vpop.permute.xlu0 %2552
        %2554 = vrot.lane.b32.xlu0 %v2481, 116
        %v2555 = vpop.permute.xlu0 %2554
        %2556 = vrot.lane.b32.xlu0 %v2482, 116
        %v2557 = vpop.permute.xlu0 %2556
        %2558 = vrot.lane.b32.xlu0 %v2483, 116
        %v2559 = vpop.permute.xlu0 %2558
        %2560 = vrot.lane.b32.xlu0 %v2484, 116
        %v2561 = vpop.permute.xlu0 %2560
        %2562 = vrot.lane.b32.xlu0 %v2485, 116
        %v2563 = vpop.permute.xlu0 %2562
        %2564 = vrot.lane.b32.xlu0 %v2486, 116
        %v2565 = vpop.permute.xlu0 %2564
        %2566 = vrot.lane.b32.xlu0 %v2487, 116
        %v2567 = vpop.permute.xlu0 %2566
        %2568 = vrot.lane.b32.xlu0 %v2488, 116
        %v2569 = vpop.permute.xlu0 %2568
        %2570 = vrot.lane.b32.xlu0 %v2489, 116
        %v2571 = vpop.permute.xlu0 %2570
        %2572 = vrot.lane.b32.xlu0 %v2490, 116
        %v2573 = vpop.permute.xlu0 %2572
        %2574 = vrot.lane.b32.xlu0 %v2491, 116
        %v2575 = vpop.permute.xlu0 %2574
        %2576 = vrot.lane.b32.xlu0 %v2492, 116
        %v2577 = vpop.permute.xlu0 %2576
        %2578 = vrot.lane.b32.xlu0 %v2493, 116
        %v2579 = vpop.permute.xlu0 %2578
        %2580 = vrot.lane.b32.xlu0 %v2494, 116
        %v2581 = vpop.permute.xlu0 %2580
        %2582 = vrot.lane.b32.xlu0 %v2495, 116
        %v2583 = vpop.permute.xlu0 %2582
        %2584 = vrot.lane.b32.xlu0 %v2496, 116
        %v2585 = vpop.permute.xlu0 %2584
        %2586 = vrot.lane.b32.xlu0 %v2497, 116
        %v2587 = vpop.permute.xlu0 %2586
        %vm2618 = vcmask 130144
        %2619 = vst.msk [vmem:[%s2165 + $0x1] sm:$0xff] %vm2618, %v2529
        %vm2620 = vcmask 129120
        %2621 = vst.msk [vmem:[%s2165 + $0x9] sm:$0x7f] %vm2620, %v2531
        %2622 = vst.msk [vmem:[%s2165 + $0x19] sm:$0xff] %vm2618, %v2533
        %2623 = vst.msk [vmem:[%s2165 + $0x21] sm:$0x7f] %vm2620, %v2535
        %2624 = vst.msk [vmem:[%s2165 + $0x31] sm:$0xff] %vm2618, %v2537
        %2625 = vst.msk [vmem:[%s2165 + $0x39] sm:$0x7f] %vm2620, %v2539
        %2626 = vst.msk [vmem:[%s2165 + $0x49] sm:$0xff] %vm2618, %v2541
        %2627 = vst.msk [vmem:[%s2165 + $0x51] sm:$0x7f] %vm2620, %v2543
        %2628 = vst.msk [vmem:[%s2165 + $0x61] sm:$0xff] %vm2618, %v2545
        %2629 = vst.msk [vmem:[%s2165 + $0x69] sm:$0x7f] %vm2620, %v2547
        %2630 = vst.msk [vmem:[%s2165 + $0x79] sm:$0xff] %vm2618, %v2549
        %2631 = vst.msk [vmem:[%s2165 + $0x81] sm:$0x7f] %vm2620, %v2551
        %2632 = vst.msk [vmem:[%s2165 + $0x91] sm:$0xff] %vm2618, %v2553
        %2633 = vst.msk [vmem:[%s2165 + $0x99] sm:$0x7f] %vm2620, %v2555
        %2634 = vst.msk [vmem:[%s2165 + $0xa9] sm:$0xff] %vm2618, %v2557
        %2635 = vst.msk [vmem:[%s2165 + $0xb1] sm:$0x7f] %vm2620, %v2559
        %2636 = vst.msk [vmem:[%s2165 + $0xc1] sm:$0xff] %vm2618, %v2561
        %2637 = vst.msk [vmem:[%s2165 + $0xc9] sm:$0x7f] %vm2620, %v2563
        %2638 = vst.msk [vmem:[%s2165 + $0xd9] sm:$0xff] %vm2618, %v2565
        %2639 = vst.msk [vmem:[%s2165 + $0xe1] sm:$0x7f] %vm2620, %v2567
        %2640 = vst.msk [vmem:[%s2165 + $0xf1] sm:$0xff] %vm2618, %v2569
        %2641 = vst.msk [vmem:[%s2165 + $0xf9] sm:$0x7f] %vm2620, %v2571
        %2642 = vst.msk [vmem:[%s2165 + $0x109] sm:$0xff] %vm2618, %v2573
        %2643 = vst.msk [vmem:[%s2165 + $0x111] sm:$0x7f] %vm2620, %v2575
        %2644 = vst.msk [vmem:[%s2165 + $0x121] sm:$0xff] %vm2618, %v2577
        %2645 = vst.msk [vmem:[%s2165 + $0x129] sm:$0x7f] %vm2620, %v2579
        %2646 = vst.msk [vmem:[%s2165 + $0x139] sm:$0xff] %vm2618, %v2581
        %2647 = vst.msk [vmem:[%s2165 + $0x141] sm:$0x7f] %vm2620, %v2583
        %2648 = vst.msk [vmem:[%s2165 + $0x151] sm:$0xff] %vm2618, %v2585
        %2649 = vst.msk [vmem:[%s2165 + $0x159] sm:$0x7f] %vm2620, %v2587
        %2650 = vrot.lane.b32.xlu0 %v2468, 112
        %v2651 = vpop.permute.xlu0 %2650
        %2652 = vrot.lane.b32.xlu0 %v2469, 112
        %v2653 = vpop.permute.xlu0 %2652
        %2654 = vrot.lane.b32.xlu0 %v2470, 112
        %v2655 = vpop.permute.xlu0 %2654
        %2656 = vrot.lane.b32.xlu0 %v2471, 112
        %v2657 = vpop.permute.xlu0 %2656
        %2658 = vrot.lane.b32.xlu0 %v2472, 112
        %v2659 = vpop.permute.xlu0 %2658
        %2660 = vrot.lane.b32.xlu0 %v2473, 112
        %v2661 = vpop.permute.xlu0 %2660
        %2662 = vrot.lane.b32.xlu0 %v2474, 112
        %v2663 = vpop.permute.xlu0 %2662
        %2664 = vrot.lane.b32.xlu0 %v2475, 112
        %v2665 = vpop.permute.xlu0 %2664
        %2666 = vrot.lane.b32.xlu0 %v2476, 112
        %v2667 = vpop.permute.xlu0 %2666
        %2668 = vrot.lane.b32.xlu0 %v2477, 112
        %v2669 = vpop.permute.xlu0 %2668
        %2670 = vrot.lane.b32.xlu0 %v2478, 112
        %v2671 = vpop.permute.xlu0 %2670
        %2672 = vrot.lane.b32.xlu0 %v2479, 112
        %v2673 = vpop.permute.xlu0 %2672
        %2674 = vrot.lane.b32.xlu0 %v2480, 112
        %v2675 = vpop.permute.xlu0 %2674
        %2676 = vrot.lane.b32.xlu0 %v2481, 112
        %v2677 = vpop.permute.xlu0 %2676
        %2678 = vrot.lane.b32.xlu0 %v2482, 112
        %v2679 = vpop.permute.xlu0 %2678
        %2680 = vrot.lane.b32.xlu0 %v2483, 112
        %v2681 = vpop.permute.xlu0 %2680
        %2682 = vrot.lane.b32.xlu0 %v2484, 112
        %v2683 = vpop.permute.xlu0 %2682
        %2684 = vrot.lane.b32.xlu0 %v2485, 112
        %v2685 = vpop.permute.xlu0 %2684
        %2686 = vrot.lane.b32.xlu0 %v2486, 112
        %v2687 = vpop.permute.xlu0 %2686
        %2688 = vrot.lane.b32.xlu0 %v2487, 112
        %v2689 = vpop.permute.xlu0 %2688
        %2690 = vrot.lane.b32.xlu0 %v2488, 112
        %v2691 = vpop.permute.xlu0 %2690
        %2692 = vrot.lane.b32.xlu0 %v2489, 112
        %v2693 = vpop.permute.xlu0 %2692
        %2694 = vrot.lane.b32.xlu0 %v2490, 112
        %v2695 = vpop.permute.xlu0 %2694
        %2696 = vrot.lane.b32.xlu0 %v2491, 112
        %v2697 = vpop.permute.xlu0 %2696
        %2698 = vrot.lane.b32.xlu0 %v2492, 112
        %v2699 = vpop.permute.xlu0 %2698
        %2700 = vrot.lane.b32.xlu0 %v2493, 112
        %v2701 = vpop.permute.xlu0 %2700
        %2702 = vrot.lane.b32.xlu0 %v2494, 112
        %v2703 = vpop.permute.xlu0 %2702
        %2704 = vrot.lane.b32.xlu0 %v2495, 112
        %v2705 = vpop.permute.xlu0 %2704
        %2706 = vrot.lane.b32.xlu0 %v2496, 112
        %v2707 = vpop.permute.xlu0 %2706
        %2708 = vrot.lane.b32.xlu0 %v2497, 112
        %v2709 = vpop.permute.xlu0 %2708
        %2740 = vst.msk [vmem:[%s2287 + $0x1] sm:$0xff] %vm2618, %v2651
        %2741 = vst.msk [vmem:[%s2287 + $0x9] sm:$0x7f] %vm2620, %v2653
        %2742 = vst.msk [vmem:[%s2287 + $0x19] sm:$0xff] %vm2618, %v2655
        %2743 = vst.msk [vmem:[%s2287 + $0x21] sm:$0x7f] %vm2620, %v2657
        %2744 = vst.msk [vmem:[%s2287 + $0x31] sm:$0xff] %vm2618, %v2659
        %2745 = vst.msk [vmem:[%s2287 + $0x39] sm:$0x7f] %vm2620, %v2661
        %2746 = vst.msk [vmem:[%s2287 + $0x49] sm:$0xff] %vm2618, %v2663
        %2747 = vst.msk [vmem:[%s2287 + $0x51] sm:$0x7f] %vm2620, %v2665
        %2748 = vst.msk [vmem:[%s2287 + $0x61] sm:$0xff] %vm2618, %v2667
        %2749 = vst.msk [vmem:[%s2287 + $0x69] sm:$0x7f] %vm2620, %v2669
        %2750 = vst.msk [vmem:[%s2287 + $0x79] sm:$0xff] %vm2618, %v2671
        %2751 = vst.msk [vmem:[%s2287 + $0x81] sm:$0x7f] %vm2620, %v2673
        %2752 = vst.msk [vmem:[%s2287 + $0x91] sm:$0xff] %vm2618, %v2675
        %2753 = vst.msk [vmem:[%s2287 + $0x99] sm:$0x7f] %vm2620, %v2677
        %2754 = vst.msk [vmem:[%s2287 + $0xa9] sm:$0xff] %vm2618, %v2679
        %2755 = vst.msk [vmem:[%s2287 + $0xb1] sm:$0x7f] %vm2620, %v2681
        %2756 = vst.msk [vmem:[%s2287 + $0xc1] sm:$0xff] %vm2618, %v2683
        %2757 = vst.msk [vmem:[%s2287 + $0xc9] sm:$0x7f] %vm2620, %v2685
        %2758 = vst.msk [vmem:[%s2287 + $0xd9] sm:$0xff] %vm2618, %v2687
        %2759 = vst.msk [vmem:[%s2287 + $0xe1] sm:$0x7f] %vm2620, %v2689
        %2760 = vst.msk [vmem:[%s2287 + $0xf1] sm:$0xff] %vm2618, %v2691
        %2761 = vst.msk [vmem:[%s2287 + $0xf9] sm:$0x7f] %vm2620, %v2693
        %2762 = vst.msk [vmem:[%s2287 + $0x109] sm:$0xff] %vm2618, %v2695
        %2763 = vst.msk [vmem:[%s2287 + $0x111] sm:$0x7f] %vm2620, %v2697
        %2764 = vst.msk [vmem:[%s2287 + $0x121] sm:$0xff] %vm2618, %v2699
        %2765 = vst.msk [vmem:[%s2287 + $0x129] sm:$0x7f] %vm2620, %v2701
        %2766 = vst.msk [vmem:[%s2287 + $0x139] sm:$0xff] %vm2618, %v2703
        %2767 = vst.msk [vmem:[%s2287 + $0x141] sm:$0x7f] %vm2620, %v2705
        %2768 = vst.msk [vmem:[%s2287 + $0x151] sm:$0xff] %vm2618, %v2707
        %2769 = vst.msk [vmem:[%s2287 + $0x159] sm:$0x7f] %vm2620, %v2709
        %p2770 = scmp.gt.s32.totalorder %s32, 0
        // Predicated region
        $region61: #{tpu_custom_call.1} parent=47 // pred_check
          %p2771 = pneg %p2770
        $region62: #{tpu_custom_call.1} parent=47 // pred_check_branch
          %2773 = sbr.rel (%p2771) target = $region64
        $region63: #{tpu_custom_call.1} parent=47 // pred_region
          %v2774 = vld [vmem:[%s375] sm:$0xf]
          %v2775 = vld [vmem:[%s375 + $0x4] sm:$0xf]
          %v2776 = vunpack.c.l.bf16 %v2774
          %v2777 = vunpack.c.l.bf16 %v2775
          %2780 = vrot.lane.b32.xlu0 %v2776, 120
          %v2781 = vpop.permute.xlu0 %2780
          %2782 = vrot.lane.b32.xlu0 %v2777, 120
          %v2783 = vpop.permute.xlu0 %2782
          %v2786 = vadd.f32 %v2776, %v2781
          %v2787 = vadd.f32 %v2777, %v2783
          %2788 = vrot.lane.b32.xlu0 %v468, 16
          %v2789 = vpop.permute.xlu0 %2788
          %2790 = vrot.lane.b32.xlu0 %v469, 16
          %v2791 = vpop.permute.xlu0 %2790
          %v2794 = vadd.f32 %v2786, %v2789
          %v2795 = vadd.f32 %v2787, %v2791
          %2796 = vrot.lane.b32.xlu0 %v468, 8
          %v2797 = vpop.permute.xlu0 %2796
          %2798 = vrot.lane.b32.xlu0 %v469, 8
          %v2799 = vpop.permute.xlu0 %2798
          %v2802 = vadd.f32 %v2794, %v2797
          %v2803 = vadd.f32 %v2795, %v2799
          %2806 = vrot.lane.b32.xlu0 %v2802, 120
          %v2807 = vpop.permute.xlu0 %2806
          %2808 = vrot.lane.b32.xlu0 %v2803, 120
          %v2809 = vpop.permute.xlu0 %2808
          %2812 = vst.msk [vmem:[#allocation2] sm:$0xff] %vm2166, %v2807
          %2813 = vst.msk [vmem:[#allocation2 + $0x8] sm:$0xff] %vm2166, %v2809
          %2814 = vrot.lane.b32.xlu0 %v2802, 116
          %v2815 = vpop.permute.xlu0 %2814
          %2816 = vrot.lane.b32.xlu0 %v2803, 116
          %v2817 = vpop.permute.xlu0 %2816
          %2820 = vst.msk [vmem:[#allocation3] sm:$0xff] %vm2166, %v2815
          %2821 = vst.msk [vmem:[#allocation3 + $0x8] sm:$0xff] %vm2166, %v2817
          %v2822 = vrot.slane %v2776, 1
          %v2823 = vrot.slane %v2777, 1
          %v2824 = vsel %vm1210, %v2822, %v2823
          %2825 = vrot.lane.b32.xlu0 %v2824, 8
          %v2826 = vpop.permute.xlu0 %2825
          %2827 = vrot.lane.b32.xlu0 %v2823, 8
          %v2828 = vpop.permute.xlu0 %2827
          %v2831 = vadd.f32 %v2776, %v2826
          %v2832 = vadd.f32 %v2777, %v2828
          %v2833 = vadd.f32 %v2831, %v2789
          %v2834 = vadd.f32 %v2832, %v2791
          %2835 = vrot.lane.b32.xlu0 %v1213, 24
          %v2836 = vpop.permute.xlu0 %2835
          %2837 = vrot.lane.b32.xlu0 %v1212, 24
          %v2838 = vpop.permute.xlu0 %2837
          %v2841 = vadd.f32 %v2833, %v2836
          %v2842 = vadd.f32 %v2834, %v2838
          %2845 = vrot.lane.b32.xlu0 %v2841, 116
          %v2846 = vpop.permute.xlu0 %2845
          %2847 = vrot.lane.b32.xlu0 %v2842, 116
          %v2848 = vpop.permute.xlu0 %2847
          %2851 = vst.msk [vmem:[#allocation2 + $0x1] sm:$0xff] %vm2618, %v2846
          %2852 = vst.msk [vmem:[#allocation2 + $0x9] sm:$0x7f] %vm2620, %v2848
          %2853 = vrot.lane.b32.xlu0 %v2841, 112
          %v2854 = vpop.permute.xlu0 %2853
          %2855 = vrot.lane.b32.xlu0 %v2842, 112
          %v2856 = vpop.permute.xlu0 %2855
          %2859 = vst.msk [vmem:[#allocation3 + $0x1] sm:$0xff] %vm2618, %v2854
          %2860 = vst.msk [vmem:[#allocation3 + $0x9] sm:$0x7f] %vm2620, %v2856
        $region64: #{tpu_custom_call.1} parent=47 // pred_fallthru
          _
        %p2861 = scmp.eq.s32.totalorder %s32, 0
        // Predicated region
        $region65: #{tpu_custom_call.1} parent=47 // pred_check
          %p2862 = pneg %p2861
        $region66: #{tpu_custom_call.1} parent=47 // pred_check_branch
          %2864 = sbr.rel (%p2862) target = $region68
        $region67: #{tpu_custom_call.1} parent=47 // pred_region
          %vm2865 = vcmask 130112
          %2866 = vst.msk [vmem:[#allocation2] sm:$0xff] %vm2865, 0.0
          %2867 = vst.msk [vmem:[#allocation2 + $0x8] sm:$0xff] %vm2865, 0.0
          %vm2868 = vcmask 122944
          %2869 = vst.msk [vmem:[#allocation2 + $0x10] sm:$0x1] %vm2868, 0.0
          %2870 = vst.msk [vmem:[#allocation3] sm:$0xff] %vm2865, -3e+38
          %2871 = vst.msk [vmem:[#allocation3 + $0x8] sm:$0xff] %vm2865, -3e+38
          %2872 = vst.msk [vmem:[#allocation3 + $0x10] sm:$0x1] %vm2868, -3e+38
        $region68: #{tpu_custom_call.1} parent=47 // pred_fallthru
          _
        %p2873 = scmp.lt.s32.totalorder %s32, 0
        // Predicated region
        $region69: #{tpu_custom_call.1} parent=47 // pred_check
          %p2874 = pneg %p2873
        $region70: #{tpu_custom_call.1} parent=47 // pred_check_branch
          %2876 = sbr.rel (%p2874) target = $region72
        $region71: #{tpu_custom_call.1} parent=47 // pred_region
          %v2877 = vld [vmem:[%s384] sm:$0xf]
          %v2878 = vld [vmem:[%s384 + $0x4] sm:$0xf]
          %v2879 = vunpack.c.l.bf16 %v2877
          %v2880 = vunpack.c.l.bf16 %v2878
          %2883 = vrot.lane.b32.xlu0 %v2879, 16
          %v2884 = vpop.permute.xlu0 %2883
          %2885 = vrot.lane.b32.xlu0 %v2880, 16
          %v2886 = vpop.permute.xlu0 %2885
          %v2889 = vadd.f32 %v727, %v2884
          %v2890 = vadd.f32 %v728, %v2886
          %2891 = vrot.lane.b32.xlu0 %v2879, 8
          %v2892 = vpop.permute.xlu0 %2891
          %2893 = vrot.lane.b32.xlu0 %v2880, 8
          %v2894 = vpop.permute.xlu0 %2893
          %v2897 = vadd.f32 %v2889, %v2892
          %v2898 = vadd.f32 %v2890, %v2894
          %2901 = vrot.lane.b32.xlu0 %v2897, 120
          %v2902 = vpop.permute.xlu0 %2901
          %2903 = vrot.lane.b32.xlu0 %v2898, 120
          %v2904 = vpop.permute.xlu0 %2903
          %s2907 = scalar_lea.vmem [#allocation2], 384
          %2908 = vst.msk [vmem:[%s2907] sm:$0xff] %vm2166, %v2902
          %2909 = vst.msk [vmem:[%s2907 + $0x8] sm:$0xff] %vm2166, %v2904
          %2910 = vrot.lane.b32.xlu0 %v2897, 116
          %v2911 = vpop.permute.xlu0 %2910
          %2912 = vrot.lane.b32.xlu0 %v2898, 116
          %v2913 = vpop.permute.xlu0 %2912
          %s2916 = scalar_lea.vmem [#allocation3], 384
          %2917 = vst.msk [vmem:[%s2916] sm:$0xff] %vm2166, %v2911
          %2918 = vst.msk [vmem:[%s2916 + $0x8] sm:$0xff] %vm2166, %v2913
          %v2919 = vadd.f32 %v498, %v1320
          %v2920 = vadd.f32 %v499, %v1322
          %v2921 = vadd.f32 %v2919, %v2884
          %v2922 = vadd.f32 %v2920, %v2886
          %v2923 = vrot.slane %v2879, 1
          %v2924 = vrot.slane %v2880, 1
          %v2925 = vsel %vm1210, %v2923, %v2924
          %2926 = vrot.lane.b32.xlu0 %v2925, 24
          %v2927 = vpop.permute.xlu0 %2926
          %2928 = vrot.lane.b32.xlu0 %v2924, 24
          %v2929 = vpop.permute.xlu0 %2928
          %v2932 = vadd.f32 %v2921, %v2927
          %v2933 = vadd.f32 %v2922, %v2929
          %2936 = vrot.lane.b32.xlu0 %v2932, 116
          %v2937 = vpop.permute.xlu0 %2936
          %2938 = vrot.lane.b32.xlu0 %v2933, 116
          %v2939 = vpop.permute.xlu0 %2938
          %2942 = vst.msk [vmem:[%s2907 + $0x1] sm:$0xff] %vm2618, %v2937
          %2943 = vst.msk [vmem:[%s2907 + $0x9] sm:$0x7f] %vm2620, %v2939
          %2944 = vrot.lane.b32.xlu0 %v2932, 112
          %v2945 = vpop.permute.xlu0 %2944
          %2946 = vrot.lane.b32.xlu0 %v2933, 112
          %v2947 = vpop.permute.xlu0 %2946
          %2950 = vst.msk [vmem:[%s2916 + $0x1] sm:$0xff] %vm2618, %v2945
          %2951 = vst.msk [vmem:[%s2916 + $0x9] sm:$0x7f] %vm2620, %v2947
        $region72: #{tpu_custom_call.1} parent=47 // pred_fallthru
          _
        // Predicated region
        $region73: #{tpu_custom_call.1} parent=47 // pred_check
          %p2952 = pneg %p2861
        $region74: #{tpu_custom_call.1} parent=47 // pred_check_branch
          %2954 = sbr.rel (%p2952) target = $region76
        $region75: #{tpu_custom_call.1} parent=47 // pred_region
          %s2955 = scalar_lea.vmem [#allocation2], 384
          %vm2956 = vcmask 130112
          %2957 = vst.msk [vmem:[%s2955] sm:$0xff] %vm2956, 0.0
          %2958 = vst.msk [vmem:[%s2955 + $0x8] sm:$0xff] %vm2956, 0.0
          %vm2959 = vcmask 122944
          %2960 = vst.msk [vmem:[%s2955 + $0x10] sm:$0x1] %vm2959, 0.0
          %s2961 = scalar_lea.vmem [#allocation3], 384
          %2962 = vst.msk [vmem:[%s2961] sm:$0xff] %vm2956, -3e+38
          %2963 = vst.msk [vmem:[%s2961 + $0x8] sm:$0xff] %vm2956, -3e+38
          %2964 = vst.msk [vmem:[%s2961 + $0x10] sm:$0x1] %vm2959, -3e+38
        $region76: #{tpu_custom_call.1} parent=47 // pred_fallthru
          _
        %v2965 = vld [vmem:[%s3] sm:$0xf]
        %v2966 = vld [vmem:[%s3 + $0x4] sm:$0xf]
        %v2967 = vld [vmem:[%s3 + $0x8] sm:$0xf]
        %v2968 = vld [vmem:[%s3 + $0xc] sm:$0xf]
        %v2969 = vld [vmem:[%s3 + $0x10] sm:$0x3]
        %v2970 = vld [vmem:[#allocation2] sm:$0xff]
        %v2971 = vld [vmem:[#allocation2 + $0x8] sm:$0xff]
        %v2972 = vld [vmem:[#allocation2 + $0x18] sm:$0xff]
        %v2973 = vld [vmem:[#allocation2 + $0x20] sm:$0xff]
        %v2974 = vld [vmem:[#allocation2 + $0x30] sm:$0xff]
        %v2975 = vld [vmem:[#allocation2 + $0x38] sm:$0xff]
        %v2976 = vld [vmem:[#allocation2 + $0x48] sm:$0xff]
        %v2977 = vld [vmem:[#allocation2 + $0x50] sm:$0xff]
        %v2978 = vld [vmem:[#allocation2 + $0x60] sm:$0xff]
        %v2979 = vld [vmem:[#allocation2 + $0x68] sm:$0xff]
        %v2980 = vld [vmem:[#allocation2 + $0x78] sm:$0xff]
        %v2981 = vld [vmem:[#allocation2 + $0x80] sm:$0xff]
        %v2982 = vld [vmem:[#allocation2 + $0x90] sm:$0xff]
        %v2983 = vld [vmem:[#allocation2 + $0x98] sm:$0xff]
        %v2984 = vld [vmem:[#allocation2 + $0xa8] sm:$0xff]
        %v2985 = vld [vmem:[#allocation2 + $0xb0] sm:$0xff]
        %v2986 = vld [vmem:[#allocation2 + $0xc0] sm:$0xff]
        %v2987 = vld [vmem:[#allocation2 + $0xc8] sm:$0xff]
        %v2988 = vld [vmem:[#allocation2 + $0xd8] sm:$0xff]
        %v2989 = vld [vmem:[#allocation2 + $0xe0] sm:$0xff]
        %v2990 = vld [vmem:[#allocation2 + $0xf0] sm:$0xff]
        %v2991 = vld [vmem:[#allocation2 + $0xf8] sm:$0xff]
        %v2992 = vld [vmem:[#allocation2 + $0x108] sm:$0xff]
        %v2993 = vld [vmem:[#allocation2 + $0x110] sm:$0xff]
        %v2994 = vld [vmem:[#allocation2 + $0x120] sm:$0xff]
        %v2995 = vld [vmem:[#allocation2 + $0x128] sm:$0xff]
        %v2996 = vld [vmem:[#allocation2 + $0x138] sm:$0xff]
        %v2997 = vld [vmem:[#allocation2 + $0x140] sm:$0xff]
        %v2998 = vld [vmem:[#allocation2 + $0x150] sm:$0xff]
        %v2999 = vld [vmem:[#allocation2 + $0x158] sm:$0xff]
        %v3000 = vld [vmem:[#allocation2 + $0x168] sm:$0xff]
        %v3001 = vld [vmem:[#allocation2 + $0x170] sm:$0xff]
        %v3002 = vpack.c.bf16 %v2971, %v2970
        %v3003 = vpack.c.bf16 %v2973, %v2972
        %v3004 = vpack.c.bf16 %v2975, %v2974
        %v3005 = vpack.c.bf16 %v2977, %v2976
        %v3006 = vpack.c.bf16 %v2979, %v2978
        %v3007 = vpack.c.bf16 %v2981, %v2980
        %v3008 = vpack.c.bf16 %v2983, %v2982
        %v3009 = vpack.c.bf16 %v2985, %v2984
        %v3010 = vpack.c.bf16 %v2987, %v2986
        %v3011 = vpack.c.bf16 %v2989, %v2988
        %v3012 = vpack.c.bf16 %v2991, %v2990
        %v3013 = vpack.c.bf16 %v2993, %v2992
        %v3014 = vpack.c.bf16 %v2995, %v2994
        %v3015 = vpack.c.bf16 %v2997, %v2996
        %v3016 = vpack.c.bf16 %v2999, %v2998
        %v3017 = vpack.c.bf16 %v3001, %v3000
        %v3018 = vld [vmem:[#allocation3] sm:$0xff]
        %v3019 = vld [vmem:[#allocation3 + $0x8] sm:$0xff]
        %v3020 = vld [vmem:[#allocation3 + $0x18] sm:$0xff]
        %v3021 = vld [vmem:[#allocation3 + $0x20] sm:$0xff]
        %v3022 = vld [vmem:[#allocation3 + $0x30] sm:$0xff]
        %v3023 = vld [vmem:[#allocation3 + $0x38] sm:$0xff]
        %v3024 = vld [vmem:[#allocation3 + $0x48] sm:$0xff]
        %v3025 = vld [vmem:[#allocation3 + $0x50] sm:$0xff]
        %v3026 = vld [vmem:[#allocation3 + $0x60] sm:$0xff]
        %v3027 = vld [vmem:[#allocation3 + $0x68] sm:$0xff]
        %v3028 = vld [vmem:[#allocation3 + $0x78] sm:$0xff]
        %v3029 = vld [vmem:[#allocation3 + $0x80] sm:$0xff]
        %v3030 = vld [vmem:[#allocation3 + $0x90] sm:$0xff]
        %v3031 = vld [vmem:[#allocation3 + $0x98] sm:$0xff]
        %v3032 = vld [vmem:[#allocation3 + $0xa8] sm:$0xff]
        %v3033 = vld [vmem:[#allocation3 + $0xb0] sm:$0xff]
        %v3034 = vld [vmem:[#allocation3 + $0xc0] sm:$0xff]
        %v3035 = vld [vmem:[#allocation3 + $0xc8] sm:$0xff]
        %v3036 = vld [vmem:[#allocation3 + $0xd8] sm:$0xff]
        %v3037 = vld [vmem:[#allocation3 + $0xe0] sm:$0xff]
        %v3038 = vld [vmem:[#allocation3 + $0xf0] sm:$0xff]
        %v3039 = vld [vmem:[#allocation3 + $0xf8] sm:$0xff]
        %v3040 = vld [vmem:[#allocation3 + $0x108] sm:$0xff]
        %v3041 = vld [vmem:[#allocation3 + $0x110] sm:$0xff]
        %v3042 = vld [vmem:[#allocation3 + $0x120] sm:$0xff]
        %v3043 = vld [vmem:[#allocation3 + $0x128] sm:$0xff]
        %v3044 = vld [vmem:[#allocation3 + $0x138] sm:$0xff]
        %v3045 = vld [vmem:[#allocation3 + $0x140] sm:$0xff]
        %v3046 = vld [vmem:[#allocation3 + $0x150] sm:$0xff]
        %v3047 = vld [vmem:[#allocation3 + $0x158] sm:$0xff]
        %v3048 = vld [vmem:[#allocation3 + $0x168] sm:$0xff]
        %v3049 = vld [vmem:[#allocation3 + $0x170] sm:$0xff]
        %3066 = vrot.lane.b32.xlu0 %v3002, 120
        %v3067 = vpop.permute.xlu0 %3066
        %3068 = vrot.lane.b32.xlu0 %v3003, 120
        %v3069 = vpop.permute.xlu0 %3068
        %3070 = vrot.lane.b32.xlu0 %v3004, 120
        %v3071 = vpop.permute.xlu0 %3070
        %3072 = vrot.lane.b32.xlu0 %v3005, 120
        %v3073 = vpop.permute.xlu0 %3072
        %3074 = vrot.lane.b32.xlu0 %v3006, 120
        %v3075 = vpop.permute.xlu0 %3074
        %3076 = vrot.lane.b32.xlu0 %v3007, 120
        %v3077 = vpop.permute.xlu0 %3076
        %3078 = vrot.lane.b32.xlu0 %v3008, 120
        %v3079 = vpop.permute.xlu0 %3078
        %3080 = vrot.lane.b32.xlu0 %v3009, 120
        %v3081 = vpop.permute.xlu0 %3080
        %3082 = vrot.lane.b32.xlu0 %v3010, 120
        %v3083 = vpop.permute.xlu0 %3082
        %3084 = vrot.lane.b32.xlu0 %v3011, 120
        %v3085 = vpop.permute.xlu0 %3084
        %3086 = vrot.lane.b32.xlu0 %v3012, 120
        %v3087 = vpop.permute.xlu0 %3086
        %3088 = vrot.lane.b32.xlu0 %v3013, 120
        %v3089 = vpop.permute.xlu0 %3088
        %3090 = vrot.lane.b32.xlu0 %v3014, 120
        %v3091 = vpop.permute.xlu0 %3090
        %3092 = vrot.lane.b32.xlu0 %v3015, 120
        %v3093 = vpop.permute.xlu0 %3092
        %3094 = vrot.lane.b32.xlu0 %v3016, 120
        %v3095 = vpop.permute.xlu0 %3094
        %3096 = vrot.lane.b32.xlu0 %v3017, 120
        %v3097 = vpop.permute.xlu0 %3096
        %v3099 = vunpack.c.l.b16 %v2965
        %v3100 = vpack.c.b16 %v3099, %v3099
        %v3101 = vrot.slane %v3100, 2
        %v3103 = vsel %vm985, %v3067, 0
        %v3106 = vsel %vm985, %v3069, 0
        %v3109 = vsel %vm985, %v3071, 0
        %v3112 = vsel %vm985, %v3073, 0
        %v3115 = vsel %vm985, %v3075, 0
        %v3118 = vsel %vm985, %v3077, 0
        %v3121 = vsel %vm985, %v3079, 0
        %v3124 = vsel %vm985, %v3081, 0
        %v3127 = vsel %vm985, %v3083, 0
        %v3130 = vsel %vm985, %v3085, 0
        %v3133 = vsel %vm985, %v3087, 0
        %v3136 = vsel %vm985, %v3089, 0
        %v3139 = vsel %vm985, %v3091, 0
        %v3142 = vsel %vm985, %v3093, 0
        %v3145 = vsel %vm985, %v3095, 0
        %v3148 = vsel %vm985, %v3097, 0
        %vm3150 = vcmask 1041408
        %v3152 = vsel %vm3150, %v3101, 0
        %3154 = vmatprep.subr.bf16.mxu0 0
        %3155 = vmatpush1.bf16.msra.mxu0 %v3152
        %3156 = vmatprep.subr.bf16.mxu0 0
        %3157 = vmatpush1.bf16.msra.mxu0 0
        %3158 = vmatprep.subr.bf16.mxu0 0
        %3159 = vmatpush1.bf16.msra.mxu0 0
        %3160 = vmatprep.subr.bf16.mxu0 0
        %3161 = vmatpush1.bf16.msra.mxu0 0
        %3162 = vmatprep.subr.bf16.mxu0 0
        %3163 = vmatpush1.bf16.msra.mxu0 0
        %3164 = vmatprep.subr.bf16.mxu0 0
        %3165 = vmatpush1.bf16.msra.mxu0 0
        %3166 = vmatprep.subr.bf16.mxu0 0
        %3167 = vmatpush1.bf16.msra.mxu0 0
        %3168 = vmatprep.subr.bf16.mxu0 0
        %3169 = vmatpush1.bf16.msra.mxu0 0
        %3170 = vmatprep.subr.bf16.mxu0 0
        %3171 = vmatpush1.bf16.msra.mxu0 0
        %3172 = vmatprep.subr.bf16.mxu0 0
        %3173 = vmatpush1.bf16.msra.mxu0 0
        %3174 = vmatprep.subr.bf16.mxu0 0
        %3175 = vmatpush1.bf16.msra.mxu0 0
        %3176 = vmatprep.subr.bf16.mxu0 0
        %3177 = vmatpush1.bf16.msra.mxu0 0
        %3178 = vmatprep.subr.bf16.mxu0 0
        %3179 = vmatpush1.bf16.msra.mxu0 0
        %3180 = vmatprep.subr.bf16.mxu0 0
        %3181 = vmatpush1.bf16.msra.mxu0 0
        %3182 = vmatprep.subr.bf16.mxu0 0
        %3183 = vmatpush1.bf16.msra.mxu0 0
        %3184 = vmatprep.subr.bf16.mxu0 0
        %3185 = vmatpush1.bf16.msra.mxu0 0
        %3186 = vmatprep.mubr.bf16.mxu0 0
        %3187 = vmatmul.mubr.bf16.gmra.mrb[0].mxu0 %v3103
        %v3188 = vpop.f32.mrb[0].mxu0
        %v3189 = vadd.f32 0.0, %v3188
        %v3190 = vpop.f32.mrb[0].mxu0
        %v3191 = vpop.f32.mrb[0].mxu0
        %v3192 = vadd.f32 0.0, %v3191
        %v3193 = vpop.f32.mrb[0].mxu0
        %3194 = vmatprep.mubr.bf16.mxu0 0
        %3195 = vmatmul.mubr.bf16.gmra.mrb[0].mxu0 %v3106
        %v3196 = vpop.f32.mrb[0].mxu0
        %v3197 = vadd.f32 0.0, %v3196
        %v3198 = vpop.f32.mrb[0].mxu0
        %v3199 = vpop.f32.mrb[0].mxu0
        %v3200 = vadd.f32 0.0, %v3199
        %v3201 = vpop.f32.mrb[0].mxu0
        %3202 = vmatprep.mubr.bf16.mxu0 0
        %3203 = vmatmul.mubr.bf16.gmra.mrb[0].mxu0 %v3109
        %v3204 = vpop.f32.mrb[0].mxu0
        %v3205 = vadd.f32 0.0, %v3204
        %v3206 = vpop.f32.mrb[0].mxu0
        %v3207 = vpop.f32.mrb[0].mxu0
        %v3208 = vadd.f32 0.0, %v3207
        %v3209 = vpop.f32.mrb[0].mxu0
        %3210 = vmatprep.mubr.bf16.mxu0 0
        %3211 = vmatmul.mubr.bf16.gmra.mrb[0].mxu0 %v3112
        %v3212 = vpop.f32.mrb[0].mxu0
        %v3213 = vadd.f32 0.0, %v3212
        %v3214 = vpop.f32.mrb[0].mxu0
        %v3215 = vpop.f32.mrb[0].mxu0
        %v3216 = vadd.f32 0.0, %v3215
        %v3217 = vpop.f32.mrb[0].mxu0
        %3218 = vmatprep.mubr.bf16.mxu0 0
        %3219 = vmatmul.mubr.bf16.gmra.mrb[0].mxu0 %v3115
        %v3220 = vpop.f32.mrb[0].mxu0
        %v3221 = vadd.f32 0.0, %v3220
        %v3222 = vpop.f32.mrb[0].mxu0
        %v3223 = vpop.f32.mrb[0].mxu0
        %v3224 = vadd.f32 0.0, %v3223
        %v3225 = vpop.f32.mrb[0].mxu0
        %3226 = vmatprep.mubr.bf16.mxu0 0
        %3227 = vmatmul.mubr.bf16.gmra.mrb[0].mxu0 %v3118
        %v3228 = vpop.f32.mrb[0].mxu0
        %v3229 = vadd.f32 0.0, %v3228
        %v3230 = vpop.f32.mrb[0].mxu0
        %v3231 = vpop.f32.mrb[0].mxu0
        %v3232 = vadd.f32 0.0, %v3231
        %v3233 = vpop.f32.mrb[0].mxu0
        %3234 = vmatprep.mubr.bf16.mxu0 0
        %3235 = vmatmul.mubr.bf16.gmra.mrb[0].mxu0 %v3121
        %v3236 = vpop.f32.mrb[0].mxu0
        %v3237 = vadd.f32 0.0, %v3236
        %v3238 = vpop.f32.mrb[0].mxu0
        %v3239 = vpop.f32.mrb[0].mxu0
        %v3240 = vadd.f32 0.0, %v3239
        %v3241 = vpop.f32.mrb[0].mxu0
        %3242 = vmatprep.mubr.bf16.mxu0 0
        %3243 = vmatmul.mubr.bf16.gmra.mrb[0].mxu0 %v3124
        %v3244 = vpop.f32.mrb[0].mxu0
        %v3245 = vadd.f32 0.0, %v3244
        %v3246 = vpop.f32.mrb[0].mxu0
        %v3247 = vpop.f32.mrb[0].mxu0
        %v3248 = vadd.f32 0.0, %v3247
        %v3249 = vpop.f32.mrb[0].mxu0
        %3250 = vmatprep.mubr.bf16.mxu0 0
        %3251 = vmatmul.mubr.bf16.gmra.mrb[0].mxu0 %v3127
        %v3252 = vpop.f32.mrb[0].mxu0
        %v3253 = vadd.f32 0.0, %v3252
        %v3254 = vpop.f32.mrb[0].mxu0
        %v3255 = vpop.f32.mrb[0].mxu0
        %v3256 = vadd.f32 0.0, %v3255
        %v3257 = vpop.f32.mrb[0].mxu0
        %3258 = vmatprep.mubr.bf16.mxu0 0
        %3259 = vmatmul.mubr.bf16.gmra.mrb[0].mxu0 %v3130
        %v3260 = vpop.f32.mrb[0].mxu0
        %v3261 = vadd.f32 0.0, %v3260
        %v3262 = vpop.f32.mrb[0].mxu0
        %v3263 = vpop.f32.mrb[0].mxu0
        %v3264 = vadd.f32 0.0, %v3263
        %v3265 = vpop.f32.mrb[0].mxu0
        %3266 = vmatprep.mubr.bf16.mxu0 0
        %3267 = vmatmul.mubr.bf16.gmra.mrb[0].mxu0 %v3133
        %v3268 = vpop.f32.mrb[0].mxu0
        %v3269 = vadd.f32 0.0, %v3268
        %v3270 = vpop.f32.mrb[0].mxu0
        %v3271 = vpop.f32.mrb[0].mxu0
        %v3272 = vadd.f32 0.0, %v3271
        %v3273 = vpop.f32.mrb[0].mxu0
        %3274 = vmatprep.mubr.bf16.mxu0 0
        %3275 = vmatmul.mubr.bf16.gmra.mrb[0].mxu0 %v3136
        %v3276 = vpop.f32.mrb[0].mxu0
        %v3277 = vadd.f32 0.0, %v3276
        %v3278 = vpop.f32.mrb[0].mxu0
        %v3279 = vpop.f32.mrb[0].mxu0
        %v3280 = vadd.f32 0.0, %v3279
        %v3281 = vpop.f32.mrb[0].mxu0
        %3282 = vmatprep.mubr.bf16.mxu0 0
        %3283 = vmatmul.mubr.bf16.gmra.mrb[0].mxu0 %v3139
        %v3284 = vpop.f32.mrb[0].mxu0
        %v3285 = vadd.f32 0.0, %v3284
        %v3286 = vpop.f32.mrb[0].mxu0
        %v3287 = vpop.f32.mrb[0].mxu0
        %v3288 = vadd.f32 0.0, %v3287
        %v3289 = vpop.f32.mrb[0].mxu0
        %3290 = vmatprep.mubr.bf16.mxu0 0
        %3291 = vmatmul.mubr.bf16.gmra.mrb[0].mxu0 %v3142
        %v3292 = vpop.f32.mrb[0].mxu0
        %v3293 = vadd.f32 0.0, %v3292
        %v3294 = vpop.f32.mrb[0].mxu0
        %v3295 = vpop.f32.mrb[0].mxu0
        %v3296 = vadd.f32 0.0, %v3295
        %v3297 = vpop.f32.mrb[0].mxu0
        %3298 = vmatprep.mubr.bf16.mxu0 0
        %3299 = vmatmul.mubr.bf16.gmra.mrb[0].mxu0 %v3145
        %v3300 = vpop.f32.mrb[0].mxu0
        %v3301 = vadd.f32 0.0, %v3300
        %v3302 = vpop.f32.mrb[0].mxu0
        %v3303 = vpop.f32.mrb[0].mxu0
        %v3304 = vadd.f32 0.0, %v3303
        %v3305 = vpop.f32.mrb[0].mxu0
        %3306 = vmatprep.mubr.bf16.mxu0 0
        %3307 = vmatmul.mubr.bf16.gmra.mrb[0].mxu0 %v3148
        %v3308 = vpop.f32.mrb[0].mxu0
        %v3309 = vadd.f32 0.0, %v3308
        %v3310 = vpop.f32.mrb[0].mxu0
        %v3311 = vpop.f32.mrb[0].mxu0
        %v3312 = vadd.f32 0.0, %v3311
        %v3313 = vpop.f32.mrb[0].mxu0
        %3314 = vdwg.mxu0
        %3315 = vrot.lane.b32.xlu0 %v3002, 116
        %v3316 = vpop.permute.xlu0 %3315
        %3317 = vrot.lane.b32.xlu0 %v3003, 116
        %v3318 = vpop.permute.xlu0 %3317
        %3319 = vrot.lane.b32.xlu0 %v3004, 116
        %v3320 = vpop.permute.xlu0 %3319
        %3321 = vrot.lane.b32.xlu0 %v3005, 116
        %v3322 = vpop.permute.xlu0 %3321
        %3323 = vrot.lane.b32.xlu0 %v3006, 116
        %v3324 = vpop.permute.xlu0 %3323
        %3325 = vrot.lane.b32.xlu0 %v3007, 116
        %v3326 = vpop.permute.xlu0 %3325
        %3327 = vrot.lane.b32.xlu0 %v3008, 116
        %v3328 = vpop.permute.xlu0 %3327
        %3329 = vrot.lane.b32.xlu0 %v3009, 116
        %v3330 = vpop.permute.xlu0 %3329
        %3331 = vrot.lane.b32.xlu0 %v3010, 116
        %v3332 = vpop.permute.xlu0 %3331
        %3333 = vrot.lane.b32.xlu0 %v3011, 116
        %v3334 = vpop.permute.xlu0 %3333
        %3335 = vrot.lane.b32.xlu0 %v3012, 116
        %v3336 = vpop.permute.xlu0 %3335
        %3337 = vrot.lane.b32.xlu0 %v3013, 116
        %v3338 = vpop.permute.xlu0 %3337
        %3339 = vrot.lane.b32.xlu0 %v3014, 116
        %v3340 = vpop.permute.xlu0 %3339
        %3341 = vrot.lane.b32.xlu0 %v3015, 116
        %v3342 = vpop.permute.xlu0 %3341
        %3343 = vrot.lane.b32.xlu0 %v3016, 116
        %v3344 = vpop.permute.xlu0 %3343
        %3345 = vrot.lane.b32.xlu0 %v3017, 116
        %v3346 = vpop.permute.xlu0 %3345
        %v3348 = vsel %vm985, %v3316, 0
        %v3351 = vsel %vm985, %v3318, 0
        %v3354 = vsel %vm985, %v3320, 0
        %v3357 = vsel %vm985, %v3322, 0
        %v3360 = vsel %vm985, %v3324, 0
        %v3363 = vsel %vm985, %v3326, 0
        %v3366 = vsel %vm985, %v3328, 0
        %v3369 = vsel %vm985, %v3330, 0
        %v3372 = vsel %vm985, %v3332, 0
        %v3375 = vsel %vm985, %v3334, 0
        %v3378 = vsel %vm985, %v3336, 0
        %v3381 = vsel %vm985, %v3338, 0
        %v3384 = vsel %vm985, %v3340, 0
        %v3387 = vsel %vm985, %v3342, 0
        %v3390 = vsel %vm985, %v3344, 0
        %v3393 = vsel %vm985, %v3346, 0
        %v3396 = vsel %vm3150, %v2965, 0
        %3398 = vmatprep.subr.bf16.mxu0 0
        %3399 = vmatpush1.bf16.msra.mxu0 %v3396
        %3400 = vmatprep.subr.bf16.mxu0 0
        %3401 = vmatpush1.bf16.msra.mxu0 0
        %3402 = vmatprep.subr.bf16.mxu0 0
        %3403 = vmatpush1.bf16.msra.mxu0 0
        %3404 = vmatprep.subr.bf16.mxu0 0
        %3405 = vmatpush1.bf16.msra.mxu0 0
        %3406 = vmatprep.subr.bf16.mxu0 0
        %3407 = vmatpush1.bf16.msra.mxu0 0
        %3408 = vmatprep.subr.bf16.mxu0 0
        %3409 = vmatpush1.bf16.msra.mxu0 0
        %3410 = vmatprep.subr.bf16.mxu0 0
        %3411 = vmatpush1.bf16.msra.mxu0 0
        %3412 = vmatprep.subr.bf16.mxu0 0
        %3413 = vmatpush1.bf16.msra.mxu0 0
        %3414 = vmatprep.subr.bf16.mxu0 0
        %3415 = vmatpush1.bf16.msra.mxu0 0
        %3416 = vmatprep.subr.bf16.mxu0 0
        %3417 = vmatpush1.bf16.msra.mxu0 0
        %3418 = vmatprep.subr.bf16.mxu0 0
        %3419 = vmatpush1.bf16.msra.mxu0 0
        %3420 = vmatprep.subr.bf16.mxu0 0
        %3421 = vmatpush1.bf16.msra.mxu0 0
        %3422 = vmatprep.subr.bf16.mxu0 0
        %3423 = vmatpush1.bf16.msra.mxu0 0
        %3424 = vmatprep.subr.bf16.mxu0 0
        %3425 = vmatpush1.bf16.msra.mxu0 0
        %3426 = vmatprep.subr.bf16.mxu0 0
        %3427 = vmatpush1.bf16.msra.mxu0 0
        %3428 = vmatprep.subr.bf16.mxu0 0
        %3429 = vmatpush1.bf16.msra.mxu0 0
        %3430 = vmatprep.mubr.bf16.mxu0 0
        %3431 = vmatmul.mubr.bf16.gmra.mrb[0].mxu0 %v3348
        %v3432 = vpop.f32.mrb[0].mxu0
        %v3433 = vadd.f32 %v3189, %v3432
        %v3434 = vpop.f32.mrb[0].mxu0
        %v3435 = vpop.f32.mrb[0].mxu0
        %v3436 = vadd.f32 %v3192, %v3435
        %v3437 = vpop.f32.mrb[0].mxu0
        %3438 = vmatprep.mubr.bf16.mxu0 0
        %3439 = vmatmul.mubr.bf16.gmra.mrb[0].mxu0 %v3351
        %v3440 = vpop.f32.mrb[0].mxu0
        %v3441 = vadd.f32 %v3197, %v3440
        %v3442 = vpop.f32.mrb[0].mxu0
        %v3443 = vpop.f32.mrb[0].mxu0
        %v3444 = vadd.f32 %v3200, %v3443
        %v3445 = vpop.f32.mrb[0].mxu0
        %3446 = vmatprep.mubr.bf16.mxu0 0
        %3447 = vmatmul.mubr.bf16.gmra.mrb[0].mxu0 %v3354
        %v3448 = vpop.f32.mrb[0].mxu0
        %v3449 = vadd.f32 %v3205, %v3448
        %v3450 = vpop.f32.mrb[0].mxu0
        %v3451 = vpop.f32.mrb[0].mxu0
        %v3452 = vadd.f32 %v3208, %v3451
        %v3453 = vpop.f32.mrb[0].mxu0
        %3454 = vmatprep.mubr.bf16.mxu0 0
        %3455 = vmatmul.mubr.bf16.gmra.mrb[0].mxu0 %v3357
        %v3456 = vpop.f32.mrb[0].mxu0
        %v3457 = vadd.f32 %v3213, %v3456
        %v3458 = vpop.f32.mrb[0].mxu0
        %v3459 = vpop.f32.mrb[0].mxu0
        %v3460 = vadd.f32 %v3216, %v3459
        %v3461 = vpop.f32.mrb[0].mxu0
        %3462 = vmatprep.mubr.bf16.mxu0 0
        %3463 = vmatmul.mubr.bf16.gmra.mrb[0].mxu0 %v3360
        %v3464 = vpop.f32.mrb[0].mxu0
        %v3465 = vadd.f32 %v3221, %v3464
        %v3466 = vpop.f32.mrb[0].mxu0
        %v3467 = vpop.f32.mrb[0].mxu0
        %v3468 = vadd.f32 %v3224, %v3467
        %v3469 = vpop.f32.mrb[0].mxu0
        %3470 = vmatprep.mubr.bf16.mxu0 0
        %3471 = vmatmul.mubr.bf16.gmra.mrb[0].mxu0 %v3363
        %v3472 = vpop.f32.mrb[0].mxu0
        %v3473 = vadd.f32 %v3229, %v3472
        %v3474 = vpop.f32.mrb[0].mxu0
        %v3475 = vpop.f32.mrb[0].mxu0
        %v3476 = vadd.f32 %v3232, %v3475
        %v3477 = vpop.f32.mrb[0].mxu0
        %3478 = vmatprep.mubr.bf16.mxu0 0
        %3479 = vmatmul.mubr.bf16.gmra.mrb[0].mxu0 %v3366
        %v3480 = vpop.f32.mrb[0].mxu0
        %v3481 = vadd.f32 %v3237, %v3480
        %v3482 = vpop.f32.mrb[0].mxu0
        %v3483 = vpop.f32.mrb[0].mxu0
        %v3484 = vadd.f32 %v3240, %v3483
        %v3485 = vpop.f32.mrb[0].mxu0
        %3486 = vmatprep.mubr.bf16.mxu0 0
        %3487 = vmatmul.mubr.bf16.gmra.mrb[0].mxu0 %v3369
        %v3488 = vpop.f32.mrb[0].mxu0
        %v3489 = vadd.f32 %v3245, %v3488
        %v3490 = vpop.f32.mrb[0].mxu0
        %v3491 = vpop.f32.mrb[0].mxu0
        %v3492 = vadd.f32 %v3248, %v3491
        %v3493 = vpop.f32.mrb[0].mxu0
        %3494 = vmatprep.mubr.bf16.mxu0 0
        %3495 = vmatmul.mubr.bf16.gmra.mrb[0].mxu0 %v3372
        %v3496 = vpop.f32.mrb[0].mxu0
        %v3497 = vadd.f32 %v3253, %v3496
        %v3498 = vpop.f32.mrb[0].mxu0
        %v3499 = vpop.f32.mrb[0].mxu0
        %v3500 = vadd.f32 %v3256, %v3499
        %v3501 = vpop.f32.mrb[0].mxu0
        %3502 = vmatprep.mubr.bf16.mxu0 0
        %3503 = vmatmul.mubr.bf16.gmra.mrb[0].mxu0 %v3375
        %v3504 = vpop.f32.mrb[0].mxu0
        %v3505 = vadd.f32 %v3261, %v3504
        %v3506 = vpop.f32.mrb[0].mxu0
        %v3507 = vpop.f32.mrb[0].mxu0
        %v3508 = vadd.f32 %v3264, %v3507
        %v3509 = vpop.f32.mrb[0].mxu0
        %3510 = vmatprep.mubr.bf16.mxu0 0
        %3511 = vmatmul.mubr.bf16.gmra.mrb[0].mxu0 %v3378
        %v3512 = vpop.f32.mrb[0].mxu0
        %v3513 = vadd.f32 %v3269, %v3512
        %v3514 = vpop.f32.mrb[0].mxu0
        %v3515 = vpop.f32.mrb[0].mxu0
        %v3516 = vadd.f32 %v3272, %v3515
        %v3517 = vpop.f32.mrb[0].mxu0
        %3518 = vmatprep.mubr.bf16.mxu0 0
        %3519 = vmatmul.mubr.bf16.gmra.mrb[0].mxu0 %v3381
        %v3520 = vpop.f32.mrb[0].mxu0
        %v3521 = vadd.f32 %v3277, %v3520
        %v3522 = vpop.f32.mrb[0].mxu0
        %v3523 = vpop.f32.mrb[0].mxu0
        %v3524 = vadd.f32 %v3280, %v3523
        %v3525 = vpop.f32.mrb[0].mxu0
        %3526 = vmatprep.mubr.bf16.mxu0 0
        %3527 = vmatmul.mubr.bf16.gmra.mrb[0].mxu0 %v3384
        %v3528 = vpop.f32.mrb[0].mxu0
        %v3529 = vadd.f32 %v3285, %v3528
        %v3530 = vpop.f32.mrb[0].mxu0
        %v3531 = vpop.f32.mrb[0].mxu0
        %v3532 = vadd.f32 %v3288, %v3531
        %v3533 = vpop.f32.mrb[0].mxu0
        %3534 = vmatprep.mubr.bf16.mxu0 0
        %3535 = vmatmul.mubr.bf16.gmra.mrb[0].mxu0 %v3387
        %v3536 = vpop.f32.mrb[0].mxu0
        %v3537 = vadd.f32 %v3293, %v3536
        %v3538 = vpop.f32.mrb[0].mxu0
        %v3539 = vpop.f32.mrb[0].mxu0
        %v3540 = vadd.f32 %v3296, %v3539
        %v3541 = vpop.f32.mrb[0].mxu0
        %3542 = vmatprep.mubr.bf16.mxu0 0
        %3543 = vmatmul.mubr.bf16.gmra.mrb[0].mxu0 %v3390
        %v3544 = vpop.f32.mrb[0].mxu0
        %v3545 = vadd.f32 %v3301, %v3544
        %v3546 = vpop.f32.mrb[0].mxu0
        %v3547 = vpop.f32.mrb[0].mxu0
        %v3548 = vadd.f32 %v3304, %v3547
        %v3549 = vpop.f32.mrb[0].mxu0
        %3550 = vmatprep.mubr.bf16.mxu0 0
        %3551 = vmatmul.mubr.bf16.gmra.mrb[0].mxu0 %v3393
        %v3552 = vpop.f32.mrb[0].mxu0
        %v3553 = vadd.f32 %v3309, %v3552
        %v3554 = vpop.f32.mrb[0].mxu0
        %v3555 = vpop.f32.mrb[0].mxu0
        %v3556 = vadd.f32 %v3312, %v3555
        %v3557 = vpop.f32.mrb[0].mxu0
        %3558 = vdwg.mxu0
        %3591 = vrot.lane.b32.xlu0 %v3018, 4
        %v3592 = vpop.permute.xlu0 %3591
        %3593 = vrot.lane.b32.xlu0 %v3019, 4
        %v3594 = vpop.permute.xlu0 %3593
        %3595 = vrot.lane.b32.xlu0 %v3020, 4
        %v3596 = vpop.permute.xlu0 %3595
        %3597 = vrot.lane.b32.xlu0 %v3021, 4
        %v3598 = vpop.permute.xlu0 %3597
        %3599 = vrot.lane.b32.xlu0 %v3022, 4
        %v3600 = vpop.permute.xlu0 %3599
        %3601 = vrot.lane.b32.xlu0 %v3023, 4
        %v3602 = vpop.permute.xlu0 %3601
        %3603 = vrot.lane.b32.xlu0 %v3024, 4
        %v3604 = vpop.permute.xlu0 %3603
        %3605 = vrot.lane.b32.xlu0 %v3025, 4
        %v3606 = vpop.permute.xlu0 %3605
        %3607 = vrot.lane.b32.xlu0 %v3026, 4
        %v3608 = vpop.permute.xlu0 %3607
        %3609 = vrot.lane.b32.xlu0 %v3027, 4
        %v3610 = vpop.permute.xlu0 %3609
        %3611 = vrot.lane.b32.xlu0 %v3028, 4
        %v3612 = vpop.permute.xlu0 %3611
        %3613 = vrot.lane.b32.xlu0 %v3029, 4
        %v3614 = vpop.permute.xlu0 %3613
        %3615 = vrot.lane.b32.xlu0 %v3030, 4
        %v3616 = vpop.permute.xlu0 %3615
        %3617 = vrot.lane.b32.xlu0 %v3031, 4
        %v3618 = vpop.permute.xlu0 %3617
        %3619 = vrot.lane.b32.xlu0 %v3032, 4
        %v3620 = vpop.permute.xlu0 %3619
        %3621 = vrot.lane.b32.xlu0 %v3033, 4
        %v3622 = vpop.permute.xlu0 %3621
        %3623 = vrot.lane.b32.xlu0 %v3034, 4
        %v3624 = vpop.permute.xlu0 %3623
        %3625 = vrot.lane.b32.xlu0 %v3035, 4
        %v3626 = vpop.permute.xlu0 %3625
        %3627 = vrot.lane.b32.xlu0 %v3036, 4
        %v3628 = vpop.permute.xlu0 %3627
        %3629 = vrot.lane.b32.xlu0 %v3037, 4
        %v3630 = vpop.permute.xlu0 %3629
        %3631 = vrot.lane.b32.xlu0 %v3038, 4
        %v3632 = vpop.permute.xlu0 %3631
        %3633 = vrot.lane.b32.xlu0 %v3039, 4
        %v3634 = vpop.permute.xlu0 %3633
        %3635 = vrot.lane.b32.xlu0 %v3040, 4
        %v3636 = vpop.permute.xlu0 %3635
        %3637 = vrot.lane.b32.xlu0 %v3041, 4
        %v3638 = vpop.permute.xlu0 %3637
        %3639 = vrot.lane.b32.xlu0 %v3042, 4
        %v3640 = vpop.permute.xlu0 %3639
        %3641 = vrot.lane.b32.xlu0 %v3043, 4
        %v3642 = vpop.permute.xlu0 %3641
        %3643 = vrot.lane.b32.xlu0 %v3044, 4
        %v3644 = vpop.permute.xlu0 %3643
        %3645 = vrot.lane.b32.xlu0 %v3045, 4
        %v3646 = vpop.permute.xlu0 %3645
        %3647 = vrot.lane.b32.xlu0 %v3046, 4
        %v3648 = vpop.permute.xlu0 %3647
        %3649 = vrot.lane.b32.xlu0 %v3047, 4
        %v3650 = vpop.permute.xlu0 %3649
        %3651 = vrot.lane.b32.xlu0 %v3048, 4
        %v3652 = vpop.permute.xlu0 %3651
        %3653 = vrot.lane.b32.xlu0 %v3049, 4
        %v3654 = vpop.permute.xlu0 %3653
        %v3687 = vmax.f32 %v3018, %v3592
        %v3688 = vmax.f32 %v3019, %v3594
        %v3689 = vmax.f32 %v3020, %v3596
        %v3690 = vmax.f32 %v3021, %v3598
        %v3691 = vmax.f32 %v3022, %v3600
        %v3692 = vmax.f32 %v3023, %v3602
        %v3693 = vmax.f32 %v3024, %v3604
        %v3694 = vmax.f32 %v3025, %v3606
        %v3695 = vmax.f32 %v3026, %v3608
        %v3696 = vmax.f32 %v3027, %v3610
        %v3697 = vmax.f32 %v3028, %v3612
        %v3698 = vmax.f32 %v3029, %v3614
        %v3699 = vmax.f32 %v3030, %v3616
        %v3700 = vmax.f32 %v3031, %v3618
        %v3701 = vmax.f32 %v3032, %v3620
        %v3702 = vmax.f32 %v3033, %v3622
        %v3703 = vmax.f32 %v3034, %v3624
        %v3704 = vmax.f32 %v3035, %v3626
        %v3705 = vmax.f32 %v3036, %v3628
        %v3706 = vmax.f32 %v3037, %v3630
        %v3707 = vmax.f32 %v3038, %v3632
        %v3708 = vmax.f32 %v3039, %v3634
        %v3709 = vmax.f32 %v3040, %v3636
        %v3710 = vmax.f32 %v3041, %v3638
        %v3711 = vmax.f32 %v3042, %v3640
        %v3712 = vmax.f32 %v3043, %v3642
        %v3713 = vmax.f32 %v3044, %v3644
        %v3714 = vmax.f32 %v3045, %v3646
        %v3715 = vmax.f32 %v3046, %v3648
        %v3716 = vmax.f32 %v3047, %v3650
        %v3717 = vmax.f32 %v3048, %v3652
        %v3718 = vmax.f32 %v3049, %v3654
        %v3719 = vld [vmem:[#allocation2 + $0x1] sm:$0xff]
        %v3720 = vld [vmem:[#allocation2 + $0x9] sm:$0xff]
        %v3721 = vld [vmem:[#allocation2 + $0x19] sm:$0xff]
        %v3722 = vld [vmem:[#allocation2 + $0x21] sm:$0xff]
        %v3723 = vld [vmem:[#allocation2 + $0x31] sm:$0xff]
        %v3724 = vld [vmem:[#allocation2 + $0x39] sm:$0xff]
        %v3725 = vld [vmem:[#allocation2 + $0x49] sm:$0xff]
        %v3726 = vld [vmem:[#allocation2 + $0x51] sm:$0xff]
        %v3727 = vld [vmem:[#allocation2 + $0x61] sm:$0xff]
        %v3728 = vld [vmem:[#allocation2 + $0x69] sm:$0xff]
        %v3729 = vld [vmem:[#allocation2 + $0x79] sm:$0xff]
        %v3730 = vld [vmem:[#allocation2 + $0x81] sm:$0xff]
        %v3731 = vld [vmem:[#allocation2 + $0x91] sm:$0xff]
        %v3732 = vld [vmem:[#allocation2 + $0x99] sm:$0xff]
        %v3733 = vld [vmem:[#allocation2 + $0xa9] sm:$0xff]
        %v3734 = vld [vmem:[#allocation2 + $0xb1] sm:$0xff]
        %v3735 = vld [vmem:[#allocation2 + $0xc1] sm:$0xff]
        %v3736 = vld [vmem:[#allocation2 + $0xc9] sm:$0xff]
        %v3737 = vld [vmem:[#allocation2 + $0xd9] sm:$0xff]
        %v3738 = vld [vmem:[#allocation2 + $0xe1] sm:$0xff]
        %v3739 = vld [vmem:[#allocation2 + $0xf1] sm:$0xff]
        %v3740 = vld [vmem:[#allocation2 + $0xf9] sm:$0xff]
        %v3741 = vld [vmem:[#allocation2 + $0x109] sm:$0xff]
        %v3742 = vld [vmem:[#allocation2 + $0x111] sm:$0xff]
        %v3743 = vld [vmem:[#allocation2 + $0x121] sm:$0xff]
        %v3744 = vld [vmem:[#allocation2 + $0x129] sm:$0xff]
        %v3745 = vld [vmem:[#allocation2 + $0x139] sm:$0xff]
        %v3746 = vld [vmem:[#allocation2 + $0x141] sm:$0xff]
        %v3747 = vld [vmem:[#allocation2 + $0x151] sm:$0xff]
        %v3748 = vld [vmem:[#allocation2 + $0x159] sm:$0xff]
        %v3749 = vld [vmem:[#allocation2 + $0x169] sm:$0xff]
        %v3750 = vld [vmem:[#allocation2 + $0x171] sm:$0xff]
        %v3751 = vpack.c.bf16 %v3720, %v3719
        %v3752 = vpack.c.bf16 %v3722, %v3721
        %v3753 = vpack.c.bf16 %v3724, %v3723
        %v3754 = vpack.c.bf16 %v3726, %v3725
        %v3755 = vpack.c.bf16 %v3728, %v3727
        %v3756 = vpack.c.bf16 %v3730, %v3729
        %v3757 = vpack.c.bf16 %v3732, %v3731
        %v3758 = vpack.c.bf16 %v3734, %v3733
        %v3759 = vpack.c.bf16 %v3736, %v3735
        %v3760 = vpack.c.bf16 %v3738, %v3737
        %v3761 = vpack.c.bf16 %v3740, %v3739
        %v3762 = vpack.c.bf16 %v3742, %v3741
        %v3763 = vpack.c.bf16 %v3744, %v3743
        %v3764 = vpack.c.bf16 %v3746, %v3745
        %v3765 = vpack.c.bf16 %v3748, %v3747
        %v3766 = vpack.c.bf16 %v3750, %v3749
        %3783 = vrot.lane.b32.xlu0 %v3751, 116
        %v3784 = vpop.permute.xlu0 %3783
        %3785 = vrot.lane.b32.xlu0 %v3752, 116
        %v3786 = vpop.permute.xlu0 %3785
        %3787 = vrot.lane.b32.xlu0 %v3753, 116
        %v3788 = vpop.permute.xlu0 %3787
        %3789 = vrot.lane.b32.xlu0 %v3754, 116
        %v3790 = vpop.permute.xlu0 %3789
        %3791 = vrot.lane.b32.xlu0 %v3755, 116
        %v3792 = vpop.permute.xlu0 %3791
        %3793 = vrot.lane.b32.xlu0 %v3756, 116
        %v3794 = vpop.permute.xlu0 %3793
        %3795 = vrot.lane.b32.xlu0 %v3757, 116
        %v3796 = vpop.permute.xlu0 %3795
        %3797 = vrot.lane.b32.xlu0 %v3758, 116
        %v3798 = vpop.permute.xlu0 %3797
        %3799 = vrot.lane.b32.xlu0 %v3759, 116
        %v3800 = vpop.permute.xlu0 %3799
        %3801 = vrot.lane.b32.xlu0 %v3760, 116
        %v3802 = vpop.permute.xlu0 %3801
        %3803 = vrot.lane.b32.xlu0 %v3761, 116
        %v3804 = vpop.permute.xlu0 %3803
        %3805 = vrot.lane.b32.xlu0 %v3762, 116
        %v3806 = vpop.permute.xlu0 %3805
        %3807 = vrot.lane.b32.xlu0 %v3763, 116
        %v3808 = vpop.permute.xlu0 %3807
        %3809 = vrot.lane.b32.xlu0 %v3764, 116
        %v3810 = vpop.permute.xlu0 %3809
        %3811 = vrot.lane.b32.xlu0 %v3765, 116
        %v3812 = vpop.permute.xlu0 %3811
        %3813 = vrot.lane.b32.xlu0 %v3766, 116
        %v3814 = vpop.permute.xlu0 %3813
        %v3816 = vsel %vm985, %v3784, 0
        %v3819 = vsel %vm985, %v3786, 0
        %v3822 = vsel %vm985, %v3788, 0
        %v3825 = vsel %vm985, %v3790, 0
        %v3828 = vsel %vm985, %v3792, 0
        %v3831 = vsel %vm985, %v3794, 0
        %v3834 = vsel %vm985, %v3796, 0
        %v3837 = vsel %vm985, %v3798, 0
        %v3840 = vsel %vm985, %v3800, 0
        %v3843 = vsel %vm985, %v3802, 0
        %v3846 = vsel %vm985, %v3804, 0
        %v3849 = vsel %vm985, %v3806, 0
        %v3852 = vsel %vm985, %v3808, 0
        %v3855 = vsel %vm985, %v3810, 0
        %v3858 = vsel %vm985, %v3812, 0
        %v3861 = vsel %vm985, %v3814, 0
        %v3864 = vsel %vm3150, %v2966, 0
        %3866 = vmatprep.subr.bf16.mxu0 0
        %3867 = vmatpush1.bf16.msra.mxu0 %v3864
        %3868 = vmatprep.subr.bf16.mxu0 0
        %3869 = vmatpush1.bf16.msra.mxu0 0
        %3870 = vmatprep.subr.bf16.mxu0 0
        %3871 = vmatpush1.bf16.msra.mxu0 0
        %3872 = vmatprep.subr.bf16.mxu0 0
        %3873 = vmatpush1.bf16.msra.mxu0 0
        %3874 = vmatprep.subr.bf16.mxu0 0
        %3875 = vmatpush1.bf16.msra.mxu0 0
        %3876 = vmatprep.subr.bf16.mxu0 0
        %3877 = vmatpush1.bf16.msra.mxu0 0
        %3878 = vmatprep.subr.bf16.mxu0 0
        %3879 = vmatpush1.bf16.msra.mxu0 0
        %3880 = vmatprep.subr.bf16.mxu0 0
        %3881 = vmatpush1.bf16.msra.mxu0 0
        %3882 = vmatprep.subr.bf16.mxu0 0
        %3883 = vmatpush1.bf16.msra.mxu0 0
        %3884 = vmatprep.subr.bf16.mxu0 0
        %3885 = vmatpush1.bf16.msra.mxu0 0
        %3886 = vmatprep.subr.bf16.mxu0 0
        %3887 = vmatpush1.bf16.msra.mxu0 0
        %3888 = vmatprep.subr.bf16.mxu0 0
        %3889 = vmatpush1.bf16.msra.mxu0 0
        %3890 = vmatprep.subr.bf16.mxu0 0
        %3891 = vmatpush1.bf16.msra.mxu0 0
        %3892 = vmatprep.subr.bf16.mxu0 0
        %3893 = vmatpush1.bf16.msra.mxu0 0
        %3894 = vmatprep.subr.bf16.mxu0 0
        %3895 = vmatpush1.bf16.msra.mxu0 0
        %3896 = vmatprep.subr.bf16.mxu0 0
        %3897 = vmatpush1.bf16.msra.mxu0 0
        %3898 = vmatprep.mubr.bf16.mxu0 0
        %3899 = vmatmul.mubr.bf16.gmra.mrb[0].mxu0 %v3816
        %v3900 = vpop.f32.mrb[0].mxu0
        %v3901 = vadd.f32 0.0, %v3900
        %v3902 = vpop.f32.mrb[0].mxu0
        %v3903 = vpop.f32.mrb[0].mxu0
        %v3904 = vadd.f32 0.0, %v3903
        %v3905 = vpop.f32.mrb[0].mxu0
        %3906 = vmatprep.mubr.bf16.mxu0 0
        %3907 = vmatmul.mubr.bf16.gmra.mrb[0].mxu0 %v3819
        %v3908 = vpop.f32.mrb[0].mxu0
        %v3909 = vadd.f32 0.0, %v3908
        %v3910 = vpop.f32.mrb[0].mxu0
        %v3911 = vpop.f32.mrb[0].mxu0
        %v3912 = vadd.f32 0.0, %v3911
        %v3913 = vpop.f32.mrb[0].mxu0
        %3914 = vmatprep.mubr.bf16.mxu0 0
        %3915 = vmatmul.mubr.bf16.gmra.mrb[0].mxu0 %v3822
        %v3916 = vpop.f32.mrb[0].mxu0
        %v3917 = vadd.f32 0.0, %v3916
        %v3918 = vpop.f32.mrb[0].mxu0
        %v3919 = vpop.f32.mrb[0].mxu0
        %v3920 = vadd.f32 0.0, %v3919
        %v3921 = vpop.f32.mrb[0].mxu0
        %3922 = vmatprep.mubr.bf16.mxu0 0
        %3923 = vmatmul.mubr.bf16.gmra.mrb[0].mxu0 %v3825
        %v3924 = vpop.f32.mrb[0].mxu0
        %v3925 = vadd.f32 0.0, %v3924
        %v3926 = vpop.f32.mrb[0].mxu0
        %v3927 = vpop.f32.mrb[0].mxu0
        %v3928 = vadd.f32 0.0, %v3927
        %v3929 = vpop.f32.mrb[0].mxu0
        %3930 = vmatprep.mubr.bf16.mxu0 0
        %3931 = vmatmul.mubr.bf16.gmra.mrb[0].mxu0 %v3828
        %v3932 = vpop.f32.mrb[0].mxu0
        %v3933 = vadd.f32 0.0, %v3932
        %v3934 = vpop.f32.mrb[0].mxu0
        %v3935 = vpop.f32.mrb[0].mxu0
        %v3936 = vadd.f32 0.0, %v3935
        %v3937 = vpop.f32.mrb[0].mxu0
        %3938 = vmatprep.mubr.bf16.mxu0 0
        %3939 = vmatmul.mubr.bf16.gmra.mrb[0].mxu0 %v3831
        %v3940 = vpop.f32.mrb[0].mxu0
        %v3941 = vadd.f32 0.0, %v3940
        %v3942 = vpop.f32.mrb[0].mxu0
        %v3943 = vpop.f32.mrb[0].mxu0
        %v3944 = vadd.f32 0.0, %v3943
        %v3945 = vpop.f32.mrb[0].mxu0
        %3946 = vmatprep.mubr.bf16.mxu0 0
        %3947 = vmatmul.mubr.bf16.gmra.mrb[0].mxu0 %v3834
        %v3948 = vpop.f32.mrb[0].mxu0
        %v3949 = vadd.f32 0.0, %v3948
        %v3950 = vpop.f32.mrb[0].mxu0
        %v3951 = vpop.f32.mrb[0].mxu0
        %v3952 = vadd.f32 0.0, %v3951
        %v3953 = vpop.f32.mrb[0].mxu0
        %3954 = vmatprep.mubr.bf16.mxu0 0
        %3955 = vmatmul.mubr.bf16.gmra.mrb[0].mxu0 %v3837
        %v3956 = vpop.f32.mrb[0].mxu0
        %v3957 = vadd.f32 0.0, %v3956
        %v3958 = vpop.f32.mrb[0].mxu0
        %v3959 = vpop.f32.mrb[0].mxu0
        %v3960 = vadd.f32 0.0, %v3959
        %v3961 = vpop.f32.mrb[0].mxu0
        %3962 = vmatprep.mubr.bf16.mxu0 0
        %3963 = vmatmul.mubr.bf16.gmra.mrb[0].mxu0 %v3840
        %v3964 = vpop.f32.mrb[0].mxu0
        %v3965 = vadd.f32 0.0, %v3964
        %v3966 = vpop.f32.mrb[0].mxu0
        %v3967 = vpop.f32.mrb[0].mxu0
        %v3968 = vadd.f32 0.0, %v3967
        %v3969 = vpop.f32.mrb[0].mxu0
        %3970 = vmatprep.mubr.bf16.mxu0 0
        %3971 = vmatmul.mubr.bf16.gmra.mrb[0].mxu0 %v3843
        %v3972 = vpop.f32.mrb[0].mxu0
        %v3973 = vadd.f32 0.0, %v3972
        %v3974 = vpop.f32.mrb[0].mxu0
        %v3975 = vpop.f32.mrb[0].mxu0
        %v3976 = vadd.f32 0.0, %v3975
        %v3977 = vpop.f32.mrb[0].mxu0
        %3978 = vmatprep.mubr.bf16.mxu0 0
        %3979 = vmatmul.mubr.bf16.gmra.mrb[0].mxu0 %v3846
        %v3980 = vpop.f32.mrb[0].mxu0
        %v3981 = vadd.f32 0.0, %v3980
        %v3982 = vpop.f32.mrb[0].mxu0
        %v3983 = vpop.f32.mrb[0].mxu0
        %v3984 = vadd.f32 0.0, %v3983
        %v3985 = vpop.f32.mrb[0].mxu0
        %3986 = vmatprep.mubr.bf16.mxu0 0
        %3987 = vmatmul.mubr.bf16.gmra.mrb[0].mxu0 %v3849
        %v3988 = vpop.f32.mrb[0].mxu0
        %v3989 = vadd.f32 0.0, %v3988
        %v3990 = vpop.f32.mrb[0].mxu0
        %v3991 = vpop.f32.mrb[0].mxu0
        %v3992 = vadd.f32 0.0, %v3991
        %v3993 = vpop.f32.mrb[0].mxu0
        %3994 = vmatprep.mubr.bf16.mxu0 0
        %3995 = vmatmul.mubr.bf16.gmra.mrb[0].mxu0 %v3852
        %v3996 = vpop.f32.mrb[0].mxu0
        %v3997 = vadd.f32 0.0, %v3996
        %v3998 = vpop.f32.mrb[0].mxu0
        %v3999 = vpop.f32.mrb[0].mxu0
        %v4000 = vadd.f32 0.0, %v3999
        %v4001 = vpop.f32.mrb[0].mxu0
        %4002 = vmatprep.mubr.bf16.mxu0 0
        %4003 = vmatmul.mubr.bf16.gmra.mrb[0].mxu0 %v3855
        %v4004 = vpop.f32.mrb[0].mxu0
        %v4005 = vadd.f32 0.0, %v4004
        %v4006 = vpop.f32.mrb[0].mxu0
        %v4007 = vpop.f32.mrb[0].mxu0
        %v4008 = vadd.f32 0.0, %v4007
        %v4009 = vpop.f32.mrb[0].mxu0
        %4010 = vmatprep.mubr.bf16.mxu0 0
        %4011 = vmatmul.mubr.bf16.gmra.mrb[0].mxu0 %v3858
        %v4012 = vpop.f32.mrb[0].mxu0
        %v4013 = vadd.f32 0.0, %v4012
        %v4014 = vpop.f32.mrb[0].mxu0
        %v4015 = vpop.f32.mrb[0].mxu0
        %v4016 = vadd.f32 0.0, %v4015
        %v4017 = vpop.f32.mrb[0].mxu0
        %4018 = vmatprep.mubr.bf16.mxu0 0
        %4019 = vmatmul.mubr.bf16.gmra.mrb[0].mxu0 %v3861
        %v4020 = vpop.f32.mrb[0].mxu0
        %v4021 = vadd.f32 0.0, %v4020
        %v4022 = vpop.f32.mrb[0].mxu0
        %v4023 = vpop.f32.mrb[0].mxu0
        %v4024 = vadd.f32 0.0, %v4023
        %v4025 = vpop.f32.mrb[0].mxu0
        %4026 = vdwg.mxu0
        %v4027 = vadd.f32 %v3433, %v3901
        %v4028 = vadd.f32 %v3436, %v3904
        %v4029 = vadd.f32 %v3441, %v3909
        %v4030 = vadd.f32 %v3444, %v3912
        %v4031 = vadd.f32 %v3449, %v3917
        %v4032 = vadd.f32 %v3452, %v3920
        %v4033 = vadd.f32 %v3457, %v3925
        %v4034 = vadd.f32 %v3460, %v3928
        %v4035 = vadd.f32 %v3465, %v3933
        %v4036 = vadd.f32 %v3468, %v3936
        %v4037 = vadd.f32 %v3473, %v3941
        %v4038 = vadd.f32 %v3476, %v3944
        %v4039 = vadd.f32 %v3481, %v3949
        %v4040 = vadd.f32 %v3484, %v3952
        %v4041 = vadd.f32 %v3489, %v3957
        %v4042 = vadd.f32 %v3492, %v3960
        %v4043 = vadd.f32 %v3497, %v3965
        %v4044 = vadd.f32 %v3500, %v3968
        %v4045 = vadd.f32 %v3505, %v3973
        %v4046 = vadd.f32 %v3508, %v3976
        %v4047 = vadd.f32 %v3513, %v3981
        %v4048 = vadd.f32 %v3516, %v3984
        %v4049 = vadd.f32 %v3521, %v3989
        %v4050 = vadd.f32 %v3524, %v3992
        %v4051 = vadd.f32 %v3529, %v3997
        %v4052 = vadd.f32 %v3532, %v4000
        %v4053 = vadd.f32 %v3537, %v4005
        %v4054 = vadd.f32 %v3540, %v4008
        %v4055 = vadd.f32 %v3545, %v4013
        %v4056 = vadd.f32 %v3548, %v4016
        %v4057 = vadd.f32 %v3553, %v4021
        %v4058 = vadd.f32 %v3556, %v4024
        %v4059 = vld [vmem:[#allocation3 + $0x1] sm:$0xff]
        %v4060 = vld [vmem:[#allocation3 + $0x9] sm:$0xff]
        %v4061 = vld [vmem:[#allocation3 + $0x19] sm:$0xff]
        %v4062 = vld [vmem:[#allocation3 + $0x21] sm:$0xff]
        %v4063 = vld [vmem:[#allocation3 + $0x31] sm:$0xff]
        %v4064 = vld [vmem:[#allocation3 + $0x39] sm:$0xff]
        %v4065 = vld [vmem:[#allocation3 + $0x49] sm:$0xff]
        %v4066 = vld [vmem:[#allocation3 + $0x51] sm:$0xff]
        %v4067 = vld [vmem:[#allocation3 + $0x61] sm:$0xff]
        %v4068 = vld [vmem:[#allocation3 + $0x69] sm:$0xff]
        %v4069 = vld [vmem:[#allocation3 + $0x79] sm:$0xff]
        %v4070 = vld [vmem:[#allocation3 + $0x81] sm:$0xff]
        %v4071 = vld [vmem:[#allocation3 + $0x91] sm:$0xff]
        %v4072 = vld [vmem:[#allocation3 + $0x99] sm:$0xff]
        %v4073 = vld [vmem:[#allocation3 + $0xa9] sm:$0xff]
        %v4074 = vld [vmem:[#allocation3 + $0xb1] sm:$0xff]
        %v4075 = vld [vmem:[#allocation3 + $0xc1] sm:$0xff]
        %v4076 = vld [vmem:[#allocation3 + $0xc9] sm:$0xff]
        %v4077 = vld [vmem:[#allocation3 + $0xd9] sm:$0xff]
        %v4078 = vld [vmem:[#allocation3 + $0xe1] sm:$0xff]
        %v4079 = vld [vmem:[#allocation3 + $0xf1] sm:$0xff]
        %v4080 = vld [vmem:[#allocation3 + $0xf9] sm:$0xff]
        %v4081 = vld [vmem:[#allocation3 + $0x109] sm:$0xff]
        %v4082 = vld [vmem:[#allocation3 + $0x111] sm:$0xff]
        %v4083 = vld [vmem:[#allocation3 + $0x121] sm:$0xff]
        %v4084 = vld [vmem:[#allocation3 + $0x129] sm:$0xff]
        %v4085 = vld [vmem:[#allocation3 + $0x139] sm:$0xff]
        %v4086 = vld [vmem:[#allocation3 + $0x141] sm:$0xff]
        %v4087 = vld [vmem:[#allocation3 + $0x151] sm:$0xff]
        %v4088 = vld [vmem:[#allocation3 + $0x159] sm:$0xff]
        %v4089 = vld [vmem:[#allocation3 + $0x169] sm:$0xff]
        %v4090 = vld [vmem:[#allocation3 + $0x171] sm:$0xff]
        %v4091 = vmax.f32 %v3687, %v4059
        %v4092 = vmax.f32 %v3688, %v4060
        %v4093 = vmax.f32 %v3689, %v4061
        %v4094 = vmax.f32 %v3690, %v4062
        %v4095 = vmax.f32 %v3691, %v4063
        %v4096 = vmax.f32 %v3692, %v4064
        %v4097 = vmax.f32 %v3693, %v4065
        %v4098 = vmax.f32 %v3694, %v4066
        %v4099 = vmax.f32 %v3695, %v4067
        %v4100 = vmax.f32 %v3696, %v4068
        %v4101 = vmax.f32 %v3697, %v4069
        %v4102 = vmax.f32 %v3698, %v4070
        %v4103 = vmax.f32 %v3699, %v4071
        %v4104 = vmax.f32 %v3700, %v4072
        %v4105 = vmax.f32 %v3701, %v4073
        %v4106 = vmax.f32 %v3702, %v4074
        %v4107 = vmax.f32 %v3703, %v4075
        %v4108 = vmax.f32 %v3704, %v4076
        %v4109 = vmax.f32 %v3705, %v4077
        %v4110 = vmax.f32 %v3706, %v4078
        %v4111 = vmax.f32 %v3707, %v4079
        %v4112 = vmax.f32 %v3708, %v4080
        %v4113 = vmax.f32 %v3709, %v4081
        %v4114 = vmax.f32 %v3710, %v4082
        %v4115 = vmax.f32 %v3711, %v4083
        %v4116 = vmax.f32 %v3712, %v4084
        %v4117 = vmax.f32 %v3713, %v4085
        %v4118 = vmax.f32 %v3714, %v4086
        %v4119 = vmax.f32 %v3715, %v4087
        %v4120 = vmax.f32 %v3716, %v4088
        %v4121 = vmax.f32 %v3717, %v4089
        %v4122 = vmax.f32 %v3718, %v4090
        %4123 = vrot.lane.b32.xlu0 %v3002, 124
        %v4124 = vpop.permute.xlu0 %4123
        %4125 = vrot.lane.b32.xlu0 %v3003, 124
        %v4126 = vpop.permute.xlu0 %4125
        %4127 = vrot.lane.b32.xlu0 %v3004, 124
        %v4128 = vpop.permute.xlu0 %4127
        %4129 = vrot.lane.b32.xlu0 %v3005, 124
        %v4130 = vpop.permute.xlu0 %4129
        %4131 = vrot.lane.b32.xlu0 %v3006, 124
        %v4132 = vpop.permute.xlu0 %4131
        %4133 = vrot.lane.b32.xlu0 %v3007, 124
        %v4134 = vpop.permute.xlu0 %4133
        %4135 = vrot.lane.b32.xlu0 %v3008, 124
        %v4136 = vpop.permute.xlu0 %4135
        %4137 = vrot.lane.b32.xlu0 %v3009, 124
        %v4138 = vpop.permute.xlu0 %4137
        %4139 = vrot.lane.b32.xlu0 %v3010, 124
        %v4140 = vpop.permute.xlu0 %4139
        %4141 = vrot.lane.b32.xlu0 %v3011, 124
        %v4142 = vpop.permute.xlu0 %4141
        %4143 = vrot.lane.b32.xlu0 %v3012, 124
        %v4144 = vpop.permute.xlu0 %4143
        %4145 = vrot.lane.b32.xlu0 %v3013, 124
        %v4146 = vpop.permute.xlu0 %4145
        %4147 = vrot.lane.b32.xlu0 %v3014, 124
        %v4148 = vpop.permute.xlu0 %4147
        %4149 = vrot.lane.b32.xlu0 %v3015, 124
        %v4150 = vpop.permute.xlu0 %4149
        %4151 = vrot.lane.b32.xlu0 %v3016, 124
        %v4152 = vpop.permute.xlu0 %4151
        %4153 = vrot.lane.b32.xlu0 %v3017, 124
        %v4154 = vpop.permute.xlu0 %4153
        %v4156 = vunpack.c.l.b16 %v2966
        %v4157 = vpack.c.b16 %v4156, %v4156
        %v4158 = vrot.slane %v4157, 2
        %v4160 = vsel %vm985, %v4124, 0
        %v4163 = vsel %vm985, %v4126, 0
        %v4166 = vsel %vm985, %v4128, 0
        %v4169 = vsel %vm985, %v4130, 0
        %v4172 = vsel %vm985, %v4132, 0
        %v4175 = vsel %vm985, %v4134, 0
        %v4178 = vsel %vm985, %v4136, 0
        %v4181 = vsel %vm985, %v4138, 0
        %v4184 = vsel %vm985, %v4140, 0
        %v4187 = vsel %vm985, %v4142, 0
        %v4190 = vsel %vm985, %v4144, 0
        %v4193 = vsel %vm985, %v4146, 0
        %v4196 = vsel %vm985, %v4148, 0
        %v4199 = vsel %vm985, %v4150, 0
        %v4202 = vsel %vm985, %v4152, 0
        %v4205 = vsel %vm985, %v4154, 0
        %v4208 = vsel %vm3150, %v4158, 0
        %4210 = vmatprep.subr.bf16.mxu0 0
        %4211 = vmatpush1.bf16.msra.mxu0 %v4208
        %4212 = vmatprep.subr.bf16.mxu0 0
        %4213 = vmatpush1.bf16.msra.mxu0 0
        %4214 = vmatprep.subr.bf16.mxu0 0
        %4215 = vmatpush1.bf16.msra.mxu0 0
        %4216 = vmatprep.subr.bf16.mxu0 0
        %4217 = vmatpush1.bf16.msra.mxu0 0
        %4218 = vmatprep.subr.bf16.mxu0 0
        %4219 = vmatpush1.bf16.msra.mxu0 0
        %4220 = vmatprep.subr.bf16.mxu0 0
        %4221 = vmatpush1.bf16.msra.mxu0 0
        %4222 = vmatprep.subr.bf16.mxu0 0
        %4223 = vmatpush1.bf16.msra.mxu0 0
        %4224 = vmatprep.subr.bf16.mxu0 0
        %4225 = vmatpush1.bf16.msra.mxu0 0
        %4226 = vmatprep.subr.bf16.mxu0 0
        %4227 = vmatpush1.bf16.msra.mxu0 0
        %4228 = vmatprep.subr.bf16.mxu0 0
        %4229 = vmatpush1.bf16.msra.mxu0 0
        %4230 = vmatprep.subr.bf16.mxu0 0
        %4231 = vmatpush1.bf16.msra.mxu0 0
        %4232 = vmatprep.subr.bf16.mxu0 0
        %4233 = vmatpush1.bf16.msra.mxu0 0
        %4234 = vmatprep.subr.bf16.mxu0 0
        %4235 = vmatpush1.bf16.msra.mxu0 0
        %4236 = vmatprep.subr.bf16.mxu0 0
        %4237 = vmatpush1.bf16.msra.mxu0 0
        %4238 = vmatprep.subr.bf16.mxu0 0
        %4239 = vmatpush1.bf16.msra.mxu0 0
        %4240 = vmatprep.subr.bf16.mxu0 0
        %4241 = vmatpush1.bf16.msra.mxu0 0
        %4242 = vmatprep.mubr.bf16.mxu0 0
        %4243 = vmatmul.mubr.bf16.gmra.mrb[0].mxu0 %v4160
        %v4244 = vpop.f32.mrb[0].mxu0
        %v4245 = vadd.f32 0.0, %v4244
        %v4246 = vpop.f32.mrb[0].mxu0
        %v4247 = vpop.f32.mrb[0].mxu0
        %v4248 = vadd.f32 0.0, %v4247
        %v4249 = vpop.f32.mrb[0].mxu0
        %4250 = vmatprep.mubr.bf16.mxu0 0
        %4251 = vmatmul.mubr.bf16.gmra.mrb[0].mxu0 %v4163
        %v4252 = vpop.f32.mrb[0].mxu0
        %v4253 = vadd.f32 0.0, %v4252
        %v4254 = vpop.f32.mrb[0].mxu0
        %v4255 = vpop.f32.mrb[0].mxu0
        %v4256 = vadd.f32 0.0, %v4255
        %v4257 = vpop.f32.mrb[0].mxu0
        %4258 = vmatprep.mubr.bf16.mxu0 0
        %4259 = vmatmul.mubr.bf16.gmra.mrb[0].mxu0 %v4166
        %v4260 = vpop.f32.mrb[0].mxu0
        %v4261 = vadd.f32 0.0, %v4260
        %v4262 = vpop.f32.mrb[0].mxu0
        %v4263 = vpop.f32.mrb[0].mxu0
        %v4264 = vadd.f32 0.0, %v4263
        %v4265 = vpop.f32.mrb[0].mxu0
        %4266 = vmatprep.mubr.bf16.mxu0 0
        %4267 = vmatmul.mubr.bf16.gmra.mrb[0].mxu0 %v4169
        %v4268 = vpop.f32.mrb[0].mxu0
        %v4269 = vadd.f32 0.0, %v4268
        %v4270 = vpop.f32.mrb[0].mxu0
        %v4271 = vpop.f32.mrb[0].mxu0
        %v4272 = vadd.f32 0.0, %v4271
        %v4273 = vpop.f32.mrb[0].mxu0
        %4274 = vmatprep.mubr.bf16.mxu0 0
        %4275 = vmatmul.mubr.bf16.gmra.mrb[0].mxu0 %v4172
        %v4276 = vpop.f32.mrb[0].mxu0
        %v4277 = vadd.f32 0.0, %v4276
        %v4278 = vpop.f32.mrb[0].mxu0
        %v4279 = vpop.f32.mrb[0].mxu0
        %v4280 = vadd.f32 0.0, %v4279
        %v4281 = vpop.f32.mrb[0].mxu0
        %4282 = vmatprep.mubr.bf16.mxu0 0
        %4283 = vmatmul.mubr.bf16.gmra.mrb[0].mxu0 %v4175
        %v4284 = vpop.f32.mrb[0].mxu0
        %v4285 = vadd.f32 0.0, %v4284
        %v4286 = vpop.f32.mrb[0].mxu0
        %v4287 = vpop.f32.mrb[0].mxu0
        %v4288 = vadd.f32 0.0, %v4287
        %v4289 = vpop.f32.mrb[0].mxu0
        %4290 = vmatprep.mubr.bf16.mxu0 0
        %4291 = vmatmul.mubr.bf16.gmra.mrb[0].mxu0 %v4178
        %v4292 = vpop.f32.mrb[0].mxu0
        %v4293 = vadd.f32 0.0, %v4292
        %v4294 = vpop.f32.mrb[0].mxu0
        %v4295 = vpop.f32.mrb[0].mxu0
        %v4296 = vadd.f32 0.0, %v4295
        %v4297 = vpop.f32.mrb[0].mxu0
        %4298 = vmatprep.mubr.bf16.mxu0 0
        %4299 = vmatmul.mubr.bf16.gmra.mrb[0].mxu0 %v4181
        %v4300 = vpop.f32.mrb[0].mxu0
        %v4301 = vadd.f32 0.0, %v4300
        %v4302 = vpop.f32.mrb[0].mxu0
        %v4303 = vpop.f32.mrb[0].mxu0
        %v4304 = vadd.f32 0.0, %v4303
        %v4305 = vpop.f32.mrb[0].mxu0
        %4306 = vmatprep.mubr.bf16.mxu0 0
        %4307 = vmatmul.mubr.bf16.gmra.mrb[0].mxu0 %v4184
        %v4308 = vpop.f32.mrb[0].mxu0
        %v4309 = vadd.f32 0.0, %v4308
        %v4310 = vpop.f32.mrb[0].mxu0
        %v4311 = vpop.f32.mrb[0].mxu0
        %v4312 = vadd.f32 0.0, %v4311
        %v4313 = vpop.f32.mrb[0].mxu0
        %4314 = vmatprep.mubr.bf16.mxu0 0
        %4315 = vmatmul.mubr.bf16.gmra.mrb[0].mxu0 %v4187
        %v4316 = vpop.f32.mrb[0].mxu0
        %v4317 = vadd.f32 0.0, %v4316
        %v4318 = vpop.f32.mrb[0].mxu0
        %v4319 = vpop.f32.mrb[0].mxu0
        %v4320 = vadd.f32 0.0, %v4319
        %v4321 = vpop.f32.mrb[0].mxu0
        %4322 = vmatprep.mubr.bf16.mxu0 0
        %4323 = vmatmul.mubr.bf16.gmra.mrb[0].mxu0 %v4190
        %v4324 = vpop.f32.mrb[0].mxu0
        %v4325 = vadd.f32 0.0, %v4324
        %v4326 = vpop.f32.mrb[0].mxu0
        %v4327 = vpop.f32.mrb[0].mxu0
        %v4328 = vadd.f32 0.0, %v4327
        %v4329 = vpop.f32.mrb[0].mxu0
        %4330 = vmatprep.mubr.bf16.mxu0 0
        %4331 = vmatmul.mubr.bf16.gmra.mrb[0].mxu0 %v4193
        %v4332 = vpop.f32.mrb[0].mxu0
        %v4333 = vadd.f32 0.0, %v4332
        %v4334 = vpop.f32.mrb[0].mxu0
        %v4335 = vpop.f32.mrb[0].mxu0
        %v4336 = vadd.f32 0.0, %v4335
        %v4337 = vpop.f32.mrb[0].mxu0
        %4338 = vmatprep.mubr.bf16.mxu0 0
        %4339 = vmatmul.mubr.bf16.gmra.mrb[0].mxu0 %v4196
        %v4340 = vpop.f32.mrb[0].mxu0
        %v4341 = vadd.f32 0.0, %v4340
        %v4342 = vpop.f32.mrb[0].mxu0
        %v4343 = vpop.f32.mrb[0].mxu0
        %v4344 = vadd.f32 0.0, %v4343
        %v4345 = vpop.f32.mrb[0].mxu0
        %4346 = vmatprep.mubr.bf16.mxu0 0
        %4347 = vmatmul.mubr.bf16.gmra.mrb[0].mxu0 %v4199
        %v4348 = vpop.f32.mrb[0].mxu0
        %v4349 = vadd.f32 0.0, %v4348
        %v4350 = vpop.f32.mrb[0].mxu0
        %v4351 = vpop.f32.mrb[0].mxu0
        %v4352 = vadd.f32 0.0, %v4351
        %v4353 = vpop.f32.mrb[0].mxu0
        %4354 = vmatprep.mubr.bf16.mxu0 0
        %4355 = vmatmul.mubr.bf16.gmra.mrb[0].mxu0 %v4202
        %v4356 = vpop.f32.mrb[0].mxu0
        %v4357 = vadd.f32 0.0, %v4356
        %v4358 = vpop.f32.mrb[0].mxu0
        %v4359 = vpop.f32.mrb[0].mxu0
        %v4360 = vadd.f32 0.0, %v4359
        %v4361 = vpop.f32.mrb[0].mxu0
        %4362 = vmatprep.mubr.bf16.mxu0 0
        %4363 = vmatmul.mubr.bf16.gmra.mrb[0].mxu0 %v4205
        %v4364 = vpop.f32.mrb[0].mxu0
        %v4365 = vadd.f32 0.0, %v4364
        %v4366 = vpop.f32.mrb[0].mxu0
        %v4367 = vpop.f32.mrb[0].mxu0
        %v4368 = vadd.f32 0.0, %v4367
        %v4369 = vpop.f32.mrb[0].mxu0
        %4370 = vdwg.mxu0
        %v4371 = vadd.f32 %v4027, %v4245
        %v4372 = vadd.f32 %v4028, %v4248
        %v4373 = vadd.f32 %v4029, %v4253
        %v4374 = vadd.f32 %v4030, %v4256
        %v4375 = vadd.f32 %v4031, %v4261
        %v4376 = vadd.f32 %v4032, %v4264
        %v4377 = vadd.f32 %v4033, %v4269
        %v4378 = vadd.f32 %v4034, %v4272
        %v4379 = vadd.f32 %v4035, %v4277
        %v4380 = vadd.f32 %v4036, %v4280
        %v4381 = vadd.f32 %v4037, %v4285
        %v4382 = vadd.f32 %v4038, %v4288
        %v4383 = vadd.f32 %v4039, %v4293
        %v4384 = vadd.f32 %v4040, %v4296
        %v4385 = vadd.f32 %v4041, %v4301
        %v4386 = vadd.f32 %v4042, %v4304
        %v4387 = vadd.f32 %v4043, %v4309
        %v4388 = vadd.f32 %v4044, %v4312
        %v4389 = vadd.f32 %v4045, %v4317
        %v4390 = vadd.f32 %v4046, %v4320
        %v4391 = vadd.f32 %v4047, %v4325
        %v4392 = vadd.f32 %v4048, %v4328
        %v4393 = vadd.f32 %v4049, %v4333
        %v4394 = vadd.f32 %v4050, %v4336
        %v4395 = vadd.f32 %v4051, %v4341
        %v4396 = vadd.f32 %v4052, %v4344
        %v4397 = vadd.f32 %v4053, %v4349
        %v4398 = vadd.f32 %v4054, %v4352
        %v4399 = vadd.f32 %v4055, %v4357
        %v4400 = vadd.f32 %v4056, %v4360
        %v4401 = vadd.f32 %v4057, %v4365
        %v4402 = vadd.f32 %v4058, %v4368
        %4403 = vrot.lane.b32.xlu0 %v3018, 8
        %v4404 = vpop.permute.xlu0 %4403
        %4405 = vrot.lane.b32.xlu0 %v3019, 8
        %v4406 = vpop.permute.xlu0 %4405
        %4407 = vrot.lane.b32.xlu0 %v3020, 8
        %v4408 = vpop.permute.xlu0 %4407
        %4409 = vrot.lane.b32.xlu0 %v3021, 8
        %v4410 = vpop.permute.xlu0 %4409
        %4411 = vrot.lane.b32.xlu0 %v3022, 8
        %v4412 = vpop.permute.xlu0 %4411
        %4413 = vrot.lane.b32.xlu0 %v3023, 8
        %v4414 = vpop.permute.xlu0 %4413
        %4415 = vrot.lane.b32.xlu0 %v3024, 8
        %v4416 = vpop.permute.xlu0 %4415
        %4417 = vrot.lane.b32.xlu0 %v3025, 8
        %v4418 = vpop.permute.xlu0 %4417
        %4419 = vrot.lane.b32.xlu0 %v3026, 8
        %v4420 = vpop.permute.xlu0 %4419
        %4421 = vrot.lane.b32.xlu0 %v3027, 8
        %v4422 = vpop.permute.xlu0 %4421
        %4423 = vrot.lane.b32.xlu0 %v3028, 8
        %v4424 = vpop.permute.xlu0 %4423
        %4425 = vrot.lane.b32.xlu0 %v3029, 8
        %v4426 = vpop.permute.xlu0 %4425
        %4427 = vrot.lane.b32.xlu0 %v3030, 8
        %v4428 = vpop.permute.xlu0 %4427
        %4429 = vrot.lane.b32.xlu0 %v3031, 8
        %v4430 = vpop.permute.xlu0 %4429
        %4431 = vrot.lane.b32.xlu0 %v3032, 8
        %v4432 = vpop.permute.xlu0 %4431
        %4433 = vrot.lane.b32.xlu0 %v3033, 8
        %v4434 = vpop.permute.xlu0 %4433
        %4435 = vrot.lane.b32.xlu0 %v3034, 8
        %v4436 = vpop.permute.xlu0 %4435
        %4437 = vrot.lane.b32.xlu0 %v3035, 8
        %v4438 = vpop.permute.xlu0 %4437
        %4439 = vrot.lane.b32.xlu0 %v3036, 8
        %v4440 = vpop.permute.xlu0 %4439
        %4441 = vrot.lane.b32.xlu0 %v3037, 8
        %v4442 = vpop.permute.xlu0 %4441
        %4443 = vrot.lane.b32.xlu0 %v3038, 8
        %v4444 = vpop.permute.xlu0 %4443
        %4445 = vrot.lane.b32.xlu0 %v3039, 8
        %v4446 = vpop.permute.xlu0 %4445
        %4447 = vrot.lane.b32.xlu0 %v3040, 8
        %v4448 = vpop.permute.xlu0 %4447
        %4449 = vrot.lane.b32.xlu0 %v3041, 8
        %v4450 = vpop.permute.xlu0 %4449
        %4451 = vrot.lane.b32.xlu0 %v3042, 8
        %v4452 = vpop.permute.xlu0 %4451
        %4453 = vrot.lane.b32.xlu0 %v3043, 8
        %v4454 = vpop.permute.xlu0 %4453
        %4455 = vrot.lane.b32.xlu0 %v3044, 8
        %v4456 = vpop.permute.xlu0 %4455
        %4457 = vrot.lane.b32.xlu0 %v3045, 8
        %v4458 = vpop.permute.xlu0 %4457
        %4459 = vrot.lane.b32.xlu0 %v3046, 8
        %v4460 = vpop.permute.xlu0 %4459
        %4461 = vrot.lane.b32.xlu0 %v3047, 8
        %v4462 = vpop.permute.xlu0 %4461
        %4463 = vrot.lane.b32.xlu0 %v3048, 8
        %v4464 = vpop.permute.xlu0 %4463
        %4465 = vrot.lane.b32.xlu0 %v3049, 8
        %v4466 = vpop.permute.xlu0 %4465
        %v4499 = vmax.f32 %v4091, %v4404
        %v4500 = vmax.f32 %v4092, %v4406
        %v4501 = vmax.f32 %v4093, %v4408
        %v4502 = vmax.f32 %v4094, %v4410
        %v4503 = vmax.f32 %v4095, %v4412
        %v4504 = vmax.f32 %v4096, %v4414
        %v4505 = vmax.f32 %v4097, %v4416
        %v4506 = vmax.f32 %v4098, %v4418
        %v4507 = vmax.f32 %v4099, %v4420
        %v4508 = vmax.f32 %v4100, %v4422
        %v4509 = vmax.f32 %v4101, %v4424
        %v4510 = vmax.f32 %v4102, %v4426
        %v4511 = vmax.f32 %v4103, %v4428
        %v4512 = vmax.f32 %v4104, %v4430
        %v4513 = vmax.f32 %v4105, %v4432
        %v4514 = vmax.f32 %v4106, %v4434
        %v4515 = vmax.f32 %v4107, %v4436
        %v4516 = vmax.f32 %v4108, %v4438
        %v4517 = vmax.f32 %v4109, %v4440
        %v4518 = vmax.f32 %v4110, %v4442
        %v4519 = vmax.f32 %v4111, %v4444
        %v4520 = vmax.f32 %v4112, %v4446
        %v4521 = vmax.f32 %v4113, %v4448
        %v4522 = vmax.f32 %v4114, %v4450
        %v4523 = vmax.f32 %v4115, %v4452
        %v4524 = vmax.f32 %v4116, %v4454
        %v4525 = vmax.f32 %v4117, %v4456
        %v4526 = vmax.f32 %v4118, %v4458
        %v4527 = vmax.f32 %v4119, %v4460
        %v4528 = vmax.f32 %v4120, %v4462
        %v4529 = vmax.f32 %v4121, %v4464
        %v4530 = vmax.f32 %v4122, %v4466
        %v4532 = vsel %vm985, %v3002, 0
        %v4535 = vsel %vm985, %v3003, 0
        %v4538 = vsel %vm985, %v3004, 0
        %v4541 = vsel %vm985, %v3005, 0
        %v4544 = vsel %vm985, %v3006, 0
        %v4547 = vsel %vm985, %v3007, 0
        %v4550 = vsel %vm985, %v3008, 0
        %v4553 = vsel %vm985, %v3009, 0
        %v4556 = vsel %vm985, %v3010, 0
        %v4559 = vsel %vm985, %v3011, 0
        %v4562 = vsel %vm985, %v3012, 0
        %v4565 = vsel %vm985, %v3013, 0
        %v4568 = vsel %vm985, %v3014, 0
        %v4571 = vsel %vm985, %v3015, 0
        %v4574 = vsel %vm985, %v3016, 0
        %v4577 = vsel %vm985, %v3017, 0
        %v4580 = vsel %vm3150, %v2967, 0
        %4582 = vmatprep.subr.bf16.mxu0 0
        %4583 = vmatpush1.bf16.msra.mxu0 %v4580
        %4584 = vmatprep.subr.bf16.mxu0 0
        %4585 = vmatpush1.bf16.msra.mxu0 0
        %4586 = vmatprep.subr.bf16.mxu0 0
        %4587 = vmatpush1.bf16.msra.mxu0 0
        %4588 = vmatprep.subr.bf16.mxu0 0
        %4589 = vmatpush1.bf16.msra.mxu0 0
        %4590 = vmatprep.subr.bf16.mxu0 0
        %4591 = vmatpush1.bf16.msra.mxu0 0
        %4592 = vmatprep.subr.bf16.mxu0 0
        %4593 = vmatpush1.bf16.msra.mxu0 0
        %4594 = vmatprep.subr.bf16.mxu0 0
        %4595 = vmatpush1.bf16.msra.mxu0 0
        %4596 = vmatprep.subr.bf16.mxu0 0
        %4597 = vmatpush1.bf16.msra.mxu0 0
        %4598 = vmatprep.subr.bf16.mxu0 0
        %4599 = vmatpush1.bf16.msra.mxu0 0
        %4600 = vmatprep.subr.bf16.mxu0 0
        %4601 = vmatpush1.bf16.msra.mxu0 0
        %4602 = vmatprep.subr.bf16.mxu0 0
        %4603 = vmatpush1.bf16.msra.mxu0 0
        %4604 = vmatprep.subr.bf16.mxu0 0
        %4605 = vmatpush1.bf16.msra.mxu0 0
        %4606 = vmatprep.subr.bf16.mxu0 0
        %4607 = vmatpush1.bf16.msra.mxu0 0
        %4608 = vmatprep.subr.bf16.mxu0 0
        %4609 = vmatpush1.bf16.msra.mxu0 0
        %4610 = vmatprep.subr.bf16.mxu0 0
        %4611 = vmatpush1.bf16.msra.mxu0 0
        %4612 = vmatprep.subr.bf16.mxu0 0
        %4613 = vmatpush1.bf16.msra.mxu0 0
        %4614 = vmatprep.mubr.bf16.mxu0 0
        %4615 = vmatmul.mubr.bf16.gmra.mrb[0].mxu0 %v4532
        %v4616 = vpop.f32.mrb[0].mxu0
        %v4617 = vadd.f32 0.0, %v4616
        %v4618 = vpop.f32.mrb[0].mxu0
        %v4619 = vpop.f32.mrb[0].mxu0
        %v4620 = vadd.f32 0.0, %v4619
        %v4621 = vpop.f32.mrb[0].mxu0
        %4622 = vmatprep.mubr.bf16.mxu0 0
        %4623 = vmatmul.mubr.bf16.gmra.mrb[0].mxu0 %v4535
        %v4624 = vpop.f32.mrb[0].mxu0
        %v4625 = vadd.f32 0.0, %v4624
        %v4626 = vpop.f32.mrb[0].mxu0
        %v4627 = vpop.f32.mrb[0].mxu0
        %v4628 = vadd.f32 0.0, %v4627
        %v4629 = vpop.f32.mrb[0].mxu0
        %4630 = vmatprep.mubr.bf16.mxu0 0
        %4631 = vmatmul.mubr.bf16.gmra.mrb[0].mxu0 %v4538
        %v4632 = vpop.f32.mrb[0].mxu0
        %v4633 = vadd.f32 0.0, %v4632
        %v4634 = vpop.f32.mrb[0].mxu0
        %v4635 = vpop.f32.mrb[0].mxu0
        %v4636 = vadd.f32 0.0, %v4635
        %v4637 = vpop.f32.mrb[0].mxu0
        %4638 = vmatprep.mubr.bf16.mxu0 0
        %4639 = vmatmul.mubr.bf16.gmra.mrb[0].mxu0 %v4541
        %v4640 = vpop.f32.mrb[0].mxu0
        %v4641 = vadd.f32 0.0, %v4640
        %v4642 = vpop.f32.mrb[0].mxu0
        %v4643 = vpop.f32.mrb[0].mxu0
        %v4644 = vadd.f32 0.0, %v4643
        %v4645 = vpop.f32.mrb[0].mxu0
        %4646 = vmatprep.mubr.bf16.mxu0 0
        %4647 = vmatmul.mubr.bf16.gmra.mrb[0].mxu0 %v4544
        %v4648 = vpop.f32.mrb[0].mxu0
        %v4649 = vadd.f32 0.0, %v4648
        %v4650 = vpop.f32.mrb[0].mxu0
        %v4651 = vpop.f32.mrb[0].mxu0
        %v4652 = vadd.f32 0.0, %v4651
        %v4653 = vpop.f32.mrb[0].mxu0
        %4654 = vmatprep.mubr.bf16.mxu0 0
        %4655 = vmatmul.mubr.bf16.gmra.mrb[0].mxu0 %v4547
        %v4656 = vpop.f32.mrb[0].mxu0
        %v4657 = vadd.f32 0.0, %v4656
        %v4658 = vpop.f32.mrb[0].mxu0
        %v4659 = vpop.f32.mrb[0].mxu0
        %v4660 = vadd.f32 0.0, %v4659
        %v4661 = vpop.f32.mrb[0].mxu0
        %4662 = vmatprep.mubr.bf16.mxu0 0
        %4663 = vmatmul.mubr.bf16.gmra.mrb[0].mxu0 %v4550
        %v4664 = vpop.f32.mrb[0].mxu0
        %v4665 = vadd.f32 0.0, %v4664
        %v4666 = vpop.f32.mrb[0].mxu0
        %v4667 = vpop.f32.mrb[0].mxu0
        %v4668 = vadd.f32 0.0, %v4667
        %v4669 = vpop.f32.mrb[0].mxu0
        %4670 = vmatprep.mubr.bf16.mxu0 0
        %4671 = vmatmul.mubr.bf16.gmra.mrb[0].mxu0 %v4553
        %v4672 = vpop.f32.mrb[0].mxu0
        %v4673 = vadd.f32 0.0, %v4672
        %v4674 = vpop.f32.mrb[0].mxu0
        %v4675 = vpop.f32.mrb[0].mxu0
        %v4676 = vadd.f32 0.0, %v4675
        %v4677 = vpop.f32.mrb[0].mxu0
        %4678 = vmatprep.mubr.bf16.mxu0 0
        %4679 = vmatmul.mubr.bf16.gmra.mrb[0].mxu0 %v4556
        %v4680 = vpop.f32.mrb[0].mxu0
        %v4681 = vadd.f32 0.0, %v4680
        %v4682 = vpop.f32.mrb[0].mxu0
        %v4683 = vpop.f32.mrb[0].mxu0
        %v4684 = vadd.f32 0.0, %v4683
        %v4685 = vpop.f32.mrb[0].mxu0
        %4686 = vmatprep.mubr.bf16.mxu0 0
        %4687 = vmatmul.mubr.bf16.gmra.mrb[0].mxu0 %v4559
        %v4688 = vpop.f32.mrb[0].mxu0
        %v4689 = vadd.f32 0.0, %v4688
        %v4690 = vpop.f32.mrb[0].mxu0
        %v4691 = vpop.f32.mrb[0].mxu0
        %v4692 = vadd.f32 0.0, %v4691
        %v4693 = vpop.f32.mrb[0].mxu0
        %4694 = vmatprep.mubr.bf16.mxu0 0
        %4695 = vmatmul.mubr.bf16.gmra.mrb[0].mxu0 %v4562
        %v4696 = vpop.f32.mrb[0].mxu0
        %v4697 = vadd.f32 0.0, %v4696
        %v4698 = vpop.f32.mrb[0].mxu0
        %v4699 = vpop.f32.mrb[0].mxu0
        %v4700 = vadd.f32 0.0, %v4699
        %v4701 = vpop.f32.mrb[0].mxu0
        %4702 = vmatprep.mubr.bf16.mxu0 0
        %4703 = vmatmul.mubr.bf16.gmra.mrb[0].mxu0 %v4565
        %v4704 = vpop.f32.mrb[0].mxu0
        %v4705 = vadd.f32 0.0, %v4704
        %v4706 = vpop.f32.mrb[0].mxu0
        %v4707 = vpop.f32.mrb[0].mxu0
        %v4708 = vadd.f32 0.0, %v4707
        %v4709 = vpop.f32.mrb[0].mxu0
        %4710 = vmatprep.mubr.bf16.mxu0 0
        %4711 = vmatmul.mubr.bf16.gmra.mrb[0].mxu0 %v4568
        %v4712 = vpop.f32.mrb[0].mxu0
        %v4713 = vadd.f32 0.0, %v4712
        %v4714 = vpop.f32.mrb[0].mxu0
        %v4715 = vpop.f32.mrb[0].mxu0
        %v4716 = vadd.f32 0.0, %v4715
        %v4717 = vpop.f32.mrb[0].mxu0
        %4718 = vmatprep.mubr.bf16.mxu0 0
        %4719 = vmatmul.mubr.bf16.gmra.mrb[0].mxu0 %v4571
        %v4720 = vpop.f32.mrb[0].mxu0
        %v4721 = vadd.f32 0.0, %v4720
        %v4722 = vpop.f32.mrb[0].mxu0
        %v4723 = vpop.f32.mrb[0].mxu0
        %v4724 = vadd.f32 0.0, %v4723
        %v4725 = vpop.f32.mrb[0].mxu0
        %4726 = vmatprep.mubr.bf16.mxu0 0
        %4727 = vmatmul.mubr.bf16.gmra.mrb[0].mxu0 %v4574
        %v4728 = vpop.f32.mrb[0].mxu0
        %v4729 = vadd.f32 0.0, %v4728
        %v4730 = vpop.f32.mrb[0].mxu0
        %v4731 = vpop.f32.mrb[0].mxu0
        %v4732 = vadd.f32 0.0, %v4731
        %v4733 = vpop.f32.mrb[0].mxu0
        %4734 = vmatprep.mubr.bf16.mxu0 0
        %4735 = vmatmul.mubr.bf16.gmra.mrb[0].mxu0 %v4577
        %v4736 = vpop.f32.mrb[0].mxu0
        %v4737 = vadd.f32 0.0, %v4736
        %v4738 = vpop.f32.mrb[0].mxu0
        %v4739 = vpop.f32.mrb[0].mxu0
        %v4740 = vadd.f32 0.0, %v4739
        %v4741 = vpop.f32.mrb[0].mxu0
        %4742 = vdwg.mxu0
        %v4743 = vadd.f32 %v4371, %v4617
        %v4744 = vadd.f32 %v4372, %v4620
        %v4745 = vadd.f32 %v4373, %v4625
        %v4746 = vadd.f32 %v4374, %v4628
        %v4747 = vadd.f32 %v4375, %v4633
        %v4748 = vadd.f32 %v4376, %v4636
        %v4749 = vadd.f32 %v4377, %v4641
        %v4750 = vadd.f32 %v4378, %v4644
        %v4751 = vadd.f32 %v4379, %v4649
        %v4752 = vadd.f32 %v4380, %v4652
        %v4753 = vadd.f32 %v4381, %v4657
        %v4754 = vadd.f32 %v4382, %v4660
        %v4755 = vadd.f32 %v4383, %v4665
        %v4756 = vadd.f32 %v4384, %v4668
        %v4757 = vadd.f32 %v4385, %v4673
        %v4758 = vadd.f32 %v4386, %v4676
        %v4759 = vadd.f32 %v4387, %v4681
        %v4760 = vadd.f32 %v4388, %v4684
        %v4761 = vadd.f32 %v4389, %v4689
        %v4762 = vadd.f32 %v4390, %v4692
        %v4763 = vadd.f32 %v4391, %v4697
        %v4764 = vadd.f32 %v4392, %v4700
        %v4765 = vadd.f32 %v4393, %v4705
        %v4766 = vadd.f32 %v4394, %v4708
        %v4767 = vadd.f32 %v4395, %v4713
        %v4768 = vadd.f32 %v4396, %v4716
        %v4769 = vadd.f32 %v4397, %v4721
        %v4770 = vadd.f32 %v4398, %v4724
        %v4771 = vadd.f32 %v4399, %v4729
        %v4772 = vadd.f32 %v4400, %v4732
        %v4773 = vadd.f32 %v4401, %v4737
        %v4774 = vadd.f32 %v4402, %v4740
        %4775 = vrot.lane.b32.xlu0 %v3018, 12
        %v4776 = vpop.permute.xlu0 %4775
        %4777 = vrot.lane.b32.xlu0 %v3019, 12
        %v4778 = vpop.permute.xlu0 %4777
        %4779 = vrot.lane.b32.xlu0 %v3020, 12
        %v4780 = vpop.permute.xlu0 %4779
        %4781 = vrot.lane.b32.xlu0 %v3021, 12
        %v4782 = vpop.permute.xlu0 %4781
        %4783 = vrot.lane.b32.xlu0 %v3022, 12
        %v4784 = vpop.permute.xlu0 %4783
        %4785 = vrot.lane.b32.xlu0 %v3023, 12
        %v4786 = vpop.permute.xlu0 %4785
        %4787 = vrot.lane.b32.xlu0 %v3024, 12
        %v4788 = vpop.permute.xlu0 %4787
        %4789 = vrot.lane.b32.xlu0 %v3025, 12
        %v4790 = vpop.permute.xlu0 %4789
        %4791 = vrot.lane.b32.xlu0 %v3026, 12
        %v4792 = vpop.permute.xlu0 %4791
        %4793 = vrot.lane.b32.xlu0 %v3027, 12
        %v4794 = vpop.permute.xlu0 %4793
        %4795 = vrot.lane.b32.xlu0 %v3028, 12
        %v4796 = vpop.permute.xlu0 %4795
        %4797 = vrot.lane.b32.xlu0 %v3029, 12
        %v4798 = vpop.permute.xlu0 %4797
        %4799 = vrot.lane.b32.xlu0 %v3030, 12
        %v4800 = vpop.permute.xlu0 %4799
        %4801 = vrot.lane.b32.xlu0 %v3031, 12
        %v4802 = vpop.permute.xlu0 %4801
        %4803 = vrot.lane.b32.xlu0 %v3032, 12
        %v4804 = vpop.permute.xlu0 %4803
        %4805 = vrot.lane.b32.xlu0 %v3033, 12
        %v4806 = vpop.permute.xlu0 %4805
        %4807 = vrot.lane.b32.xlu0 %v3034, 12
        %v4808 = vpop.permute.xlu0 %4807
        %4809 = vrot.lane.b32.xlu0 %v3035, 12
        %v4810 = vpop.permute.xlu0 %4809
        %4811 = vrot.lane.b32.xlu0 %v3036, 12
        %v4812 = vpop.permute.xlu0 %4811
        %4813 = vrot.lane.b32.xlu0 %v3037, 12
        %v4814 = vpop.permute.xlu0 %4813
        %4815 = vrot.lane.b32.xlu0 %v3038, 12
        %v4816 = vpop.permute.xlu0 %4815
        %4817 = vrot.lane.b32.xlu0 %v3039, 12
        %v4818 = vpop.permute.xlu0 %4817
        %4819 = vrot.lane.b32.xlu0 %v3040, 12
        %v4820 = vpop.permute.xlu0 %4819
        %4821 = vrot.lane.b32.xlu0 %v3041, 12
        %v4822 = vpop.permute.xlu0 %4821
        %4823 = vrot.lane.b32.xlu0 %v3042, 12
        %v4824 = vpop.permute.xlu0 %4823
        %4825 = vrot.lane.b32.xlu0 %v3043, 12
        %v4826 = vpop.permute.xlu0 %4825
        %4827 = vrot.lane.b32.xlu0 %v3044, 12
        %v4828 = vpop.permute.xlu0 %4827
        %4829 = vrot.lane.b32.xlu0 %v3045, 12
        %v4830 = vpop.permute.xlu0 %4829
        %4831 = vrot.lane.b32.xlu0 %v3046, 12
        %v4832 = vpop.permute.xlu0 %4831
        %4833 = vrot.lane.b32.xlu0 %v3047, 12
        %v4834 = vpop.permute.xlu0 %4833
        %4835 = vrot.lane.b32.xlu0 %v3048, 12
        %v4836 = vpop.permute.xlu0 %4835
        %4837 = vrot.lane.b32.xlu0 %v3049, 12
        %v4838 = vpop.permute.xlu0 %4837
        %v4871 = vmax.f32 %v4499, %v4776
        %v4872 = vmax.f32 %v4500, %v4778
        %v4873 = vmax.f32 %v4501, %v4780
        %v4874 = vmax.f32 %v4502, %v4782
        %v4875 = vmax.f32 %v4503, %v4784
        %v4876 = vmax.f32 %v4504, %v4786
        %v4877 = vmax.f32 %v4505, %v4788
        %v4878 = vmax.f32 %v4506, %v4790
        %v4879 = vmax.f32 %v4507, %v4792
        %v4880 = vmax.f32 %v4508, %v4794
        %v4881 = vmax.f32 %v4509, %v4796
        %v4882 = vmax.f32 %v4510, %v4798
        %v4883 = vmax.f32 %v4511, %v4800
        %v4884 = vmax.f32 %v4512, %v4802
        %v4885 = vmax.f32 %v4513, %v4804
        %v4886 = vmax.f32 %v4514, %v4806
        %v4887 = vmax.f32 %v4515, %v4808
        %v4888 = vmax.f32 %v4516, %v4810
        %v4889 = vmax.f32 %v4517, %v4812
        %v4890 = vmax.f32 %v4518, %v4814
        %v4891 = vmax.f32 %v4519, %v4816
        %v4892 = vmax.f32 %v4520, %v4818
        %v4893 = vmax.f32 %v4521, %v4820
        %v4894 = vmax.f32 %v4522, %v4822
        %v4895 = vmax.f32 %v4523, %v4824
        %v4896 = vmax.f32 %v4524, %v4826
        %v4897 = vmax.f32 %v4525, %v4828
        %v4898 = vmax.f32 %v4526, %v4830
        %v4899 = vmax.f32 %v4527, %v4832
        %v4900 = vmax.f32 %v4528, %v4834
        %v4901 = vmax.f32 %v4529, %v4836
        %v4902 = vmax.f32 %v4530, %v4838
        %4903 = vrot.lane.b32.xlu0 %v3751, 124
        %v4904 = vpop.permute.xlu0 %4903
        %4905 = vrot.lane.b32.xlu0 %v3752, 124
        %v4906 = vpop.permute.xlu0 %4905
        %4907 = vrot.lane.b32.xlu0 %v3753, 124
        %v4908 = vpop.permute.xlu0 %4907
        %4909 = vrot.lane.b32.xlu0 %v3754, 124
        %v4910 = vpop.permute.xlu0 %4909
        %4911 = vrot.lane.b32.xlu0 %v3755, 124
        %v4912 = vpop.permute.xlu0 %4911
        %4913 = vrot.lane.b32.xlu0 %v3756, 124
        %v4914 = vpop.permute.xlu0 %4913
        %4915 = vrot.lane.b32.xlu0 %v3757, 124
        %v4916 = vpop.permute.xlu0 %4915
        %4917 = vrot.lane.b32.xlu0 %v3758, 124
        %v4918 = vpop.permute.xlu0 %4917
        %4919 = vrot.lane.b32.xlu0 %v3759, 124
        %v4920 = vpop.permute.xlu0 %4919
        %4921 = vrot.lane.b32.xlu0 %v3760, 124
        %v4922 = vpop.permute.xlu0 %4921
        %4923 = vrot.lane.b32.xlu0 %v3761, 124
        %v4924 = vpop.permute.xlu0 %4923
        %4925 = vrot.lane.b32.xlu0 %v3762, 124
        %v4926 = vpop.permute.xlu0 %4925
        %4927 = vrot.lane.b32.xlu0 %v3763, 124
        %v4928 = vpop.permute.xlu0 %4927
        %4929 = vrot.lane.b32.xlu0 %v3764, 124
        %v4930 = vpop.permute.xlu0 %4929
        %4931 = vrot.lane.b32.xlu0 %v3765, 124
        %v4932 = vpop.permute.xlu0 %4931
        %4933 = vrot.lane.b32.xlu0 %v3766, 124
        %v4934 = vpop.permute.xlu0 %4933
        %v4936 = vunpack.c.l.b16 %v2967
        %v4937 = vpack.c.b16 %v4936, %v4936
        %v4938 = vrot.slane %v4937, 2
        %v4940 = vsel %vm985, %v4904, 0
        %v4943 = vsel %vm985, %v4906, 0
        %v4946 = vsel %vm985, %v4908, 0
        %v4949 = vsel %vm985, %v4910, 0
        %v4952 = vsel %vm985, %v4912, 0
        %v4955 = vsel %vm985, %v4914, 0
        %v4958 = vsel %vm985, %v4916, 0
        %v4961 = vsel %vm985, %v4918, 0
        %v4964 = vsel %vm985, %v4920, 0
        %v4967 = vsel %vm985, %v4922, 0
        %v4970 = vsel %vm985, %v4924, 0
        %v4973 = vsel %vm985, %v4926, 0
        %v4976 = vsel %vm985, %v4928, 0
        %v4979 = vsel %vm985, %v4930, 0
        %v4982 = vsel %vm985, %v4932, 0
        %v4985 = vsel %vm985, %v4934, 0
        %v4988 = vsel %vm3150, %v4938, 0
        %4990 = vmatprep.subr.bf16.mxu0 0
        %4991 = vmatpush1.bf16.msra.mxu0 %v4988
        %4992 = vmatprep.subr.bf16.mxu0 0
        %4993 = vmatpush1.bf16.msra.mxu0 0
        %4994 = vmatprep.subr.bf16.mxu0 0
        %4995 = vmatpush1.bf16.msra.mxu0 0
        %4996 = vmatprep.subr.bf16.mxu0 0
        %4997 = vmatpush1.bf16.msra.mxu0 0
        %4998 = vmatprep.subr.bf16.mxu0 0
        %4999 = vmatpush1.bf16.msra.mxu0 0
        %5000 = vmatprep.subr.bf16.mxu0 0
        %5001 = vmatpush1.bf16.msra.mxu0 0
        %5002 = vmatprep.subr.bf16.mxu0 0
        %5003 = vmatpush1.bf16.msra.mxu0 0
        %5004 = vmatprep.subr.bf16.mxu0 0
        %5005 = vmatpush1.bf16.msra.mxu0 0
        %5006 = vmatprep.subr.bf16.mxu0 0
        %5007 = vmatpush1.bf16.msra.mxu0 0
        %5008 = vmatprep.subr.bf16.mxu0 0
        %5009 = vmatpush1.bf16.msra.mxu0 0
        %5010 = vmatprep.subr.bf16.mxu0 0
        %5011 = vmatpush1.bf16.msra.mxu0 0
        %5012 = vmatprep.subr.bf16.mxu0 0
        %5013 = vmatpush1.bf16.msra.mxu0 0
        %5014 = vmatprep.subr.bf16.mxu0 0
        %5015 = vmatpush1.bf16.msra.mxu0 0
        %5016 = vmatprep.subr.bf16.mxu0 0
        %5017 = vmatpush1.bf16.msra.mxu0 0
        %5018 = vmatprep.subr.bf16.mxu0 0
        %5019 = vmatpush1.bf16.msra.mxu0 0
        %5020 = vmatprep.subr.bf16.mxu0 0
        %5021 = vmatpush1.bf16.msra.mxu0 0
        %5022 = vmatprep.mubr.bf16.mxu0 0
        %5023 = vmatmul.mubr.bf16.gmra.mrb[0].mxu0 %v4940
        %v5024 = vpop.f32.mrb[0].mxu0
        %v5025 = vadd.f32 0.0, %v5024
        %v5026 = vpop.f32.mrb[0].mxu0
        %v5027 = vpop.f32.mrb[0].mxu0
        %v5028 = vadd.f32 0.0, %v5027
        %v5029 = vpop.f32.mrb[0].mxu0
        %5030 = vmatprep.mubr.bf16.mxu0 0
        %5031 = vmatmul.mubr.bf16.gmra.mrb[0].mxu0 %v4943
        %v5032 = vpop.f32.mrb[0].mxu0
        %v5033 = vadd.f32 0.0, %v5032
        %v5034 = vpop.f32.mrb[0].mxu0
        %v5035 = vpop.f32.mrb[0].mxu0
        %v5036 = vadd.f32 0.0, %v5035
        %v5037 = vpop.f32.mrb[0].mxu0
        %5038 = vmatprep.mubr.bf16.mxu0 0
        %5039 = vmatmul.mubr.bf16.gmra.mrb[0].mxu0 %v4946
        %v5040 = vpop.f32.mrb[0].mxu0
        %v5041 = vadd.f32 0.0, %v5040
        %v5042 = vpop.f32.mrb[0].mxu0
        %v5043 = vpop.f32.mrb[0].mxu0
        %v5044 = vadd.f32 0.0, %v5043
        %v5045 = vpop.f32.mrb[0].mxu0
        %5046 = vmatprep.mubr.bf16.mxu0 0
        %5047 = vmatmul.mubr.bf16.gmra.mrb[0].mxu0 %v4949
        %v5048 = vpop.f32.mrb[0].mxu0
        %v5049 = vadd.f32 0.0, %v5048
        %v5050 = vpop.f32.mrb[0].mxu0
        %v5051 = vpop.f32.mrb[0].mxu0
        %v5052 = vadd.f32 0.0, %v5051
        %v5053 = vpop.f32.mrb[0].mxu0
        %5054 = vmatprep.mubr.bf16.mxu0 0
        %5055 = vmatmul.mubr.bf16.gmra.mrb[0].mxu0 %v4952
        %v5056 = vpop.f32.mrb[0].mxu0
        %v5057 = vadd.f32 0.0, %v5056
        %v5058 = vpop.f32.mrb[0].mxu0
        %v5059 = vpop.f32.mrb[0].mxu0
        %v5060 = vadd.f32 0.0, %v5059
        %v5061 = vpop.f32.mrb[0].mxu0
        %5062 = vmatprep.mubr.bf16.mxu0 0
        %5063 = vmatmul.mubr.bf16.gmra.mrb[0].mxu0 %v4955
        %v5064 = vpop.f32.mrb[0].mxu0
        %v5065 = vadd.f32 0.0, %v5064
        %v5066 = vpop.f32.mrb[0].mxu0
        %v5067 = vpop.f32.mrb[0].mxu0
        %v5068 = vadd.f32 0.0, %v5067
        %v5069 = vpop.f32.mrb[0].mxu0
        %5070 = vmatprep.mubr.bf16.mxu0 0
        %5071 = vmatmul.mubr.bf16.gmra.mrb[0].mxu0 %v4958
        %v5072 = vpop.f32.mrb[0].mxu0
        %v5073 = vadd.f32 0.0, %v5072
        %v5074 = vpop.f32.mrb[0].mxu0
        %v5075 = vpop.f32.mrb[0].mxu0
        %v5076 = vadd.f32 0.0, %v5075
        %v5077 = vpop.f32.mrb[0].mxu0
        %5078 = vmatprep.mubr.bf16.mxu0 0
        %5079 = vmatmul.mubr.bf16.gmra.mrb[0].mxu0 %v4961
        %v5080 = vpop.f32.mrb[0].mxu0
        %v5081 = vadd.f32 0.0, %v5080
        %v5082 = vpop.f32.mrb[0].mxu0
        %v5083 = vpop.f32.mrb[0].mxu0
        %v5084 = vadd.f32 0.0, %v5083
        %v5085 = vpop.f32.mrb[0].mxu0
        %5086 = vmatprep.mubr.bf16.mxu0 0
        %5087 = vmatmul.mubr.bf16.gmra.mrb[0].mxu0 %v4964
        %v5088 = vpop.f32.mrb[0].mxu0
        %v5089 = vadd.f32 0.0, %v5088
        %v5090 = vpop.f32.mrb[0].mxu0
        %v5091 = vpop.f32.mrb[0].mxu0
        %v5092 = vadd.f32 0.0, %v5091
        %v5093 = vpop.f32.mrb[0].mxu0
        %5094 = vmatprep.mubr.bf16.mxu0 0
        %5095 = vmatmul.mubr.bf16.gmra.mrb[0].mxu0 %v4967
        %v5096 = vpop.f32.mrb[0].mxu0
        %v5097 = vadd.f32 0.0, %v5096
        %v5098 = vpop.f32.mrb[0].mxu0
        %v5099 = vpop.f32.mrb[0].mxu0
        %v5100 = vadd.f32 0.0, %v5099
        %v5101 = vpop.f32.mrb[0].mxu0
        %5102 = vmatprep.mubr.bf16.mxu0 0
        %5103 = vmatmul.mubr.bf16.gmra.mrb[0].mxu0 %v4970
        %v5104 = vpop.f32.mrb[0].mxu0
        %v5105 = vadd.f32 0.0, %v5104
        %v5106 = vpop.f32.mrb[0].mxu0
        %v5107 = vpop.f32.mrb[0].mxu0
        %v5108 = vadd.f32 0.0, %v5107
        %v5109 = vpop.f32.mrb[0].mxu0
        %5110 = vmatprep.mubr.bf16.mxu0 0
        %5111 = vmatmul.mubr.bf16.gmra.mrb[0].mxu0 %v4973
        %v5112 = vpop.f32.mrb[0].mxu0
        %v5113 = vadd.f32 0.0, %v5112
        %v5114 = vpop.f32.mrb[0].mxu0
        %v5115 = vpop.f32.mrb[0].mxu0
        %v5116 = vadd.f32 0.0, %v5115
        %v5117 = vpop.f32.mrb[0].mxu0
        %5118 = vmatprep.mubr.bf16.mxu0 0
        %5119 = vmatmul.mubr.bf16.gmra.mrb[0].mxu0 %v4976
        %v5120 = vpop.f32.mrb[0].mxu0
        %v5121 = vadd.f32 0.0, %v5120
        %v5122 = vpop.f32.mrb[0].mxu0
        %v5123 = vpop.f32.mrb[0].mxu0
        %v5124 = vadd.f32 0.0, %v5123
        %v5125 = vpop.f32.mrb[0].mxu0
        %5126 = vmatprep.mubr.bf16.mxu0 0
        %5127 = vmatmul.mubr.bf16.gmra.mrb[0].mxu0 %v4979
        %v5128 = vpop.f32.mrb[0].mxu0
        %v5129 = vadd.f32 0.0, %v5128
        %v5130 = vpop.f32.mrb[0].mxu0
        %v5131 = vpop.f32.mrb[0].mxu0
        %v5132 = vadd.f32 0.0, %v5131
        %v5133 = vpop.f32.mrb[0].mxu0
        %5134 = vmatprep.mubr.bf16.mxu0 0
        %5135 = vmatmul.mubr.bf16.gmra.mrb[0].mxu0 %v4982
        %v5136 = vpop.f32.mrb[0].mxu0
        %v5137 = vadd.f32 0.0, %v5136
        %v5138 = vpop.f32.mrb[0].mxu0
        %v5139 = vpop.f32.mrb[0].mxu0
        %v5140 = vadd.f32 0.0, %v5139
        %v5141 = vpop.f32.mrb[0].mxu0
        %5142 = vmatprep.mubr.bf16.mxu0 0
        %5143 = vmatmul.mubr.bf16.gmra.mrb[0].mxu0 %v4985
        %v5144 = vpop.f32.mrb[0].mxu0
        %v5145 = vadd.f32 0.0, %v5144
        %v5146 = vpop.f32.mrb[0].mxu0
        %v5147 = vpop.f32.mrb[0].mxu0
        %v5148 = vadd.f32 0.0, %v5147
        %v5149 = vpop.f32.mrb[0].mxu0
        %5150 = vdwg.mxu0
        %v5151 = vadd.f32 %v4743, %v5025
        %v5152 = vadd.f32 %v4744, %v5028
        %v5153 = vadd.f32 %v4745, %v5033
        %v5154 = vadd.f32 %v4746, %v5036
        %v5155 = vadd.f32 %v4747, %v5041
        %v5156 = vadd.f32 %v4748, %v5044
        %v5157 = vadd.f32 %v4749, %v5049
        %v5158 = vadd.f32 %v4750, %v5052
        %v5159 = vadd.f32 %v4751, %v5057
        %v5160 = vadd.f32 %v4752, %v5060
        %v5161 = vadd.f32 %v4753, %v5065
        %v5162 = vadd.f32 %v4754, %v5068
        %v5163 = vadd.f32 %v4755, %v5073
        %v5164 = vadd.f32 %v4756, %v5076
        %v5165 = vadd.f32 %v4757, %v5081
        %v5166 = vadd.f32 %v4758, %v5084
        %v5167 = vadd.f32 %v4759, %v5089
        %v5168 = vadd.f32 %v4760, %v5092
        %v5169 = vadd.f32 %v4761, %v5097
        %v5170 = vadd.f32 %v4762, %v5100
        %v5171 = vadd.f32 %v4763, %v5105
        %v5172 = vadd.f32 %v4764, %v5108
        %v5173 = vadd.f32 %v4765, %v5113
        %v5174 = vadd.f32 %v4766, %v5116
        %v5175 = vadd.f32 %v4767, %v5121
        %v5176 = vadd.f32 %v4768, %v5124
        %v5177 = vadd.f32 %v4769, %v5129
        %v5178 = vadd.f32 %v4770, %v5132
        %v5179 = vadd.f32 %v4771, %v5137
        %v5180 = vadd.f32 %v4772, %v5140
        %v5181 = vadd.f32 %v4773, %v5145
        %v5182 = vadd.f32 %v4774, %v5148
        %5215 = vrot.lane.b32.xlu0 %v4059, 8
        %v5216 = vpop.permute.xlu0 %5215
        %5217 = vrot.lane.b32.xlu0 %v4060, 8
        %v5218 = vpop.permute.xlu0 %5217
        %5219 = vrot.lane.b32.xlu0 %v4061, 8
        %v5220 = vpop.permute.xlu0 %5219
        %5221 = vrot.lane.b32.xlu0 %v4062, 8
        %v5222 = vpop.permute.xlu0 %5221
        %5223 = vrot.lane.b32.xlu0 %v4063, 8
        %v5224 = vpop.permute.xlu0 %5223
        %5225 = vrot.lane.b32.xlu0 %v4064, 8
        %v5226 = vpop.permute.xlu0 %5225
        %5227 = vrot.lane.b32.xlu0 %v4065, 8
        %v5228 = vpop.permute.xlu0 %5227
        %5229 = vrot.lane.b32.xlu0 %v4066, 8
        %v5230 = vpop.permute.xlu0 %5229
        %5231 = vrot.lane.b32.xlu0 %v4067, 8
        %v5232 = vpop.permute.xlu0 %5231
        %5233 = vrot.lane.b32.xlu0 %v4068, 8
        %v5234 = vpop.permute.xlu0 %5233
        %5235 = vrot.lane.b32.xlu0 %v4069, 8
        %v5236 = vpop.permute.xlu0 %5235
        %5237 = vrot.lane.b32.xlu0 %v4070, 8
        %v5238 = vpop.permute.xlu0 %5237
        %5239 = vrot.lane.b32.xlu0 %v4071, 8
        %v5240 = vpop.permute.xlu0 %5239
        %5241 = vrot.lane.b32.xlu0 %v4072, 8
        %v5242 = vpop.permute.xlu0 %5241
        %5243 = vrot.lane.b32.xlu0 %v4073, 8
        %v5244 = vpop.permute.xlu0 %5243
        %5245 = vrot.lane.b32.xlu0 %v4074, 8
        %v5246 = vpop.permute.xlu0 %5245
        %5247 = vrot.lane.b32.xlu0 %v4075, 8
        %v5248 = vpop.permute.xlu0 %5247
        %5249 = vrot.lane.b32.xlu0 %v4076, 8
        %v5250 = vpop.permute.xlu0 %5249
        %5251 = vrot.lane.b32.xlu0 %v4077, 8
        %v5252 = vpop.permute.xlu0 %5251
        %5253 = vrot.lane.b32.xlu0 %v4078, 8
        %v5254 = vpop.permute.xlu0 %5253
        %5255 = vrot.lane.b32.xlu0 %v4079, 8
        %v5256 = vpop.permute.xlu0 %5255
        %5257 = vrot.lane.b32.xlu0 %v4080, 8
        %v5258 = vpop.permute.xlu0 %5257
        %5259 = vrot.lane.b32.xlu0 %v4081, 8
        %v5260 = vpop.permute.xlu0 %5259
        %5261 = vrot.lane.b32.xlu0 %v4082, 8
        %v5262 = vpop.permute.xlu0 %5261
        %5263 = vrot.lane.b32.xlu0 %v4083, 8
        %v5264 = vpop.permute.xlu0 %5263
        %5265 = vrot.lane.b32.xlu0 %v4084, 8
        %v5266 = vpop.permute.xlu0 %5265
        %5267 = vrot.lane.b32.xlu0 %v4085, 8
        %v5268 = vpop.permute.xlu0 %5267
        %5269 = vrot.lane.b32.xlu0 %v4086, 8
        %v5270 = vpop.permute.xlu0 %5269
        %5271 = vrot.lane.b32.xlu0 %v4087, 8
        %v5272 = vpop.permute.xlu0 %5271
        %5273 = vrot.lane.b32.xlu0 %v4088, 8
        %v5274 = vpop.permute.xlu0 %5273
        %5275 = vrot.lane.b32.xlu0 %v4089, 8
        %v5276 = vpop.permute.xlu0 %5275
        %5277 = vrot.lane.b32.xlu0 %v4090, 8
        %v5278 = vpop.permute.xlu0 %5277
        %v5311 = vmax.f32 %v4871, %v5216
        %v5312 = vmax.f32 %v4872, %v5218
        %v5313 = vmax.f32 %v4873, %v5220
        %v5314 = vmax.f32 %v4874, %v5222
        %v5315 = vmax.f32 %v4875, %v5224
        %v5316 = vmax.f32 %v4876, %v5226
        %v5317 = vmax.f32 %v4877, %v5228
        %v5318 = vmax.f32 %v4878, %v5230
        %v5319 = vmax.f32 %v4879, %v5232
        %v5320 = vmax.f32 %v4880, %v5234
        %v5321 = vmax.f32 %v4881, %v5236
        %v5322 = vmax.f32 %v4882, %v5238
        %v5323 = vmax.f32 %v4883, %v5240
        %v5324 = vmax.f32 %v4884, %v5242
        %v5325 = vmax.f32 %v4885, %v5244
        %v5326 = vmax.f32 %v4886, %v5246
        %v5327 = vmax.f32 %v4887, %v5248
        %v5328 = vmax.f32 %v4888, %v5250
        %v5329 = vmax.f32 %v4889, %v5252
        %v5330 = vmax.f32 %v4890, %v5254
        %v5331 = vmax.f32 %v4891, %v5256
        %v5332 = vmax.f32 %v4892, %v5258
        %v5333 = vmax.f32 %v4893, %v5260
        %v5334 = vmax.f32 %v4894, %v5262
        %v5335 = vmax.f32 %v4895, %v5264
        %v5336 = vmax.f32 %v4896, %v5266
        %v5337 = vmax.f32 %v4897, %v5268
        %v5338 = vmax.f32 %v4898, %v5270
        %v5339 = vmax.f32 %v4899, %v5272
        %v5340 = vmax.f32 %v4900, %v5274
        %v5341 = vmax.f32 %v4901, %v5276
        %v5342 = vmax.f32 %v4902, %v5278
        %v5343 = vld [vmem:[%s2165] sm:$0xff]
        %v5344 = vld [vmem:[%s2165 + $0x8] sm:$0xff]
        %v5345 = vld [vmem:[%s2165 + $0x18] sm:$0xff]
        %v5346 = vld [vmem:[%s2165 + $0x20] sm:$0xff]
        %v5347 = vld [vmem:[%s2165 + $0x30] sm:$0xff]
        %v5348 = vld [vmem:[%s2165 + $0x38] sm:$0xff]
        %v5349 = vld [vmem:[%s2165 + $0x48] sm:$0xff]
        %v5350 = vld [vmem:[%s2165 + $0x50] sm:$0xff]
        %v5351 = vld [vmem:[%s2165 + $0x60] sm:$0xff]
        %v5352 = vld [vmem:[%s2165 + $0x68] sm:$0xff]
        %v5353 = vld [vmem:[%s2165 + $0x78] sm:$0xff]
        %v5354 = vld [vmem:[%s2165 + $0x80] sm:$0xff]
        %v5355 = vld [vmem:[%s2165 + $0x90] sm:$0xff]
        %v5356 = vld [vmem:[%s2165 + $0x98] sm:$0xff]
        %v5357 = vld [vmem:[%s2165 + $0xa8] sm:$0xff]
        %v5358 = vld [vmem:[%s2165 + $0xb0] sm:$0xff]
        %v5359 = vld [vmem:[%s2165 + $0xc0] sm:$0xff]
        %v5360 = vld [vmem:[%s2165 + $0xc8] sm:$0xff]
        %v5361 = vld [vmem:[%s2165 + $0xd8] sm:$0xff]
        %v5362 = vld [vmem:[%s2165 + $0xe0] sm:$0xff]
        %v5363 = vld [vmem:[%s2165 + $0xf0] sm:$0xff]
        %v5364 = vld [vmem:[%s2165 + $0xf8] sm:$0xff]
        %v5365 = vld [vmem:[%s2165 + $0x108] sm:$0xff]
        %v5366 = vld [vmem:[%s2165 + $0x110] sm:$0xff]
        %v5367 = vld [vmem:[%s2165 + $0x120] sm:$0xff]
        %v5368 = vld [vmem:[%s2165 + $0x128] sm:$0xff]
        %v5369 = vld [vmem:[%s2165 + $0x138] sm:$0xff]
        %v5370 = vld [vmem:[%s2165 + $0x140] sm:$0xff]
        %v5371 = vld [vmem:[%s2165 + $0x150] sm:$0xff]
        %v5372 = vld [vmem:[%s2165 + $0x158] sm:$0xff]
        %v5373 = vld [vmem:[%s2165 + $0x168] sm:$0xff]
        %v5374 = vld [vmem:[%s2165 + $0x170] sm:$0xff]
        %v5375 = vpack.c.bf16 %v5344, %v5343
        %v5376 = vpack.c.bf16 %v5346, %v5345
        %v5377 = vpack.c.bf16 %v5348, %v5347
        %v5378 = vpack.c.bf16 %v5350, %v5349
        %v5379 = vpack.c.bf16 %v5352, %v5351
        %v5380 = vpack.c.bf16 %v5354, %v5353
        %v5381 = vpack.c.bf16 %v5356, %v5355
        %v5382 = vpack.c.bf16 %v5358, %v5357
        %v5383 = vpack.c.bf16 %v5360, %v5359
        %v5384 = vpack.c.bf16 %v5362, %v5361
        %v5385 = vpack.c.bf16 %v5364, %v5363
        %v5386 = vpack.c.bf16 %v5366, %v5365
        %v5387 = vpack.c.bf16 %v5368, %v5367
        %v5388 = vpack.c.bf16 %v5370, %v5369
        %v5389 = vpack.c.bf16 %v5372, %v5371
        %v5390 = vpack.c.bf16 %v5374, %v5373
        %5407 = vrot.lane.b32.xlu0 %v5375, 116
        %v5408 = vpop.permute.xlu0 %5407
        %5409 = vrot.lane.b32.xlu0 %v5376, 116
        %v5410 = vpop.permute.xlu0 %5409
        %5411 = vrot.lane.b32.xlu0 %v5377, 116
        %v5412 = vpop.permute.xlu0 %5411
        %5413 = vrot.lane.b32.xlu0 %v5378, 116
        %v5414 = vpop.permute.xlu0 %5413
        %5415 = vrot.lane.b32.xlu0 %v5379, 116
        %v5416 = vpop.permute.xlu0 %5415
        %5417 = vrot.lane.b32.xlu0 %v5380, 116
        %v5418 = vpop.permute.xlu0 %5417
        %5419 = vrot.lane.b32.xlu0 %v5381, 116
        %v5420 = vpop.permute.xlu0 %5419
        %5421 = vrot.lane.b32.xlu0 %v5382, 116
        %v5422 = vpop.permute.xlu0 %5421
        %5423 = vrot.lane.b32.xlu0 %v5383, 116
        %v5424 = vpop.permute.xlu0 %5423
        %5425 = vrot.lane.b32.xlu0 %v5384, 116
        %v5426 = vpop.permute.xlu0 %5425
        %5427 = vrot.lane.b32.xlu0 %v5385, 116
        %v5428 = vpop.permute.xlu0 %5427
        %5429 = vrot.lane.b32.xlu0 %v5386, 116
        %v5430 = vpop.permute.xlu0 %5429
        %5431 = vrot.lane.b32.xlu0 %v5387, 116
        %v5432 = vpop.permute.xlu0 %5431
        %5433 = vrot.lane.b32.xlu0 %v5388, 116
        %v5434 = vpop.permute.xlu0 %5433
        %5435 = vrot.lane.b32.xlu0 %v5389, 116
        %v5436 = vpop.permute.xlu0 %5435
        %5437 = vrot.lane.b32.xlu0 %v5390, 116
        %v5438 = vpop.permute.xlu0 %5437
        %v5440 = vsel %vm985, %v5408, 0
        %v5443 = vsel %vm985, %v5410, 0
        %v5446 = vsel %vm985, %v5412, 0
        %v5449 = vsel %vm985, %v5414, 0
        %v5452 = vsel %vm985, %v5416, 0
        %v5455 = vsel %vm985, %v5418, 0
        %v5458 = vsel %vm985, %v5420, 0
        %v5461 = vsel %vm985, %v5422, 0
        %v5464 = vsel %vm985, %v5424, 0
        %v5467 = vsel %vm985, %v5426, 0
        %v5470 = vsel %vm985, %v5428, 0
        %v5473 = vsel %vm985, %v5430, 0
        %v5476 = vsel %vm985, %v5432, 0
        %v5479 = vsel %vm985, %v5434, 0
        %v5482 = vsel %vm985, %v5436, 0
        %v5485 = vsel %vm985, %v5438, 0
        %v5488 = vsel %vm3150, %v2968, 0
        %5490 = vmatprep.subr.bf16.mxu0 0
        %5491 = vmatpush1.bf16.msra.mxu0 %v5488
        %5492 = vmatprep.subr.bf16.mxu0 0
        %5493 = vmatpush1.bf16.msra.mxu0 0
        %5494 = vmatprep.subr.bf16.mxu0 0
        %5495 = vmatpush1.bf16.msra.mxu0 0
        %5496 = vmatprep.subr.bf16.mxu0 0
        %5497 = vmatpush1.bf16.msra.mxu0 0
        %5498 = vmatprep.subr.bf16.mxu0 0
        %5499 = vmatpush1.bf16.msra.mxu0 0
        %5500 = vmatprep.subr.bf16.mxu0 0
        %5501 = vmatpush1.bf16.msra.mxu0 0
        %5502 = vmatprep.subr.bf16.mxu0 0
        %5503 = vmatpush1.bf16.msra.mxu0 0
        %5504 = vmatprep.subr.bf16.mxu0 0
        %5505 = vmatpush1.bf16.msra.mxu0 0
        %5506 = vmatprep.subr.bf16.mxu0 0
        %5507 = vmatpush1.bf16.msra.mxu0 0
        %5508 = vmatprep.subr.bf16.mxu0 0
        %5509 = vmatpush1.bf16.msra.mxu0 0
        %5510 = vmatprep.subr.bf16.mxu0 0
        %5511 = vmatpush1.bf16.msra.mxu0 0
        %5512 = vmatprep.subr.bf16.mxu0 0
        %5513 = vmatpush1.bf16.msra.mxu0 0
        %5514 = vmatprep.subr.bf16.mxu0 0
        %5515 = vmatpush1.bf16.msra.mxu0 0
        %5516 = vmatprep.subr.bf16.mxu0 0
        %5517 = vmatpush1.bf16.msra.mxu0 0
        %5518 = vmatprep.subr.bf16.mxu0 0
        %5519 = vmatpush1.bf16.msra.mxu0 0
        %5520 = vmatprep.subr.bf16.mxu0 0
        %5521 = vmatpush1.bf16.msra.mxu0 0
        %5522 = vmatprep.mubr.bf16.mxu0 0
        %5523 = vmatmul.mubr.bf16.gmra.mrb[0].mxu0 %v5440
        %v5524 = vpop.f32.mrb[0].mxu0
        %v5525 = vadd.f32 0.0, %v5524
        %v5526 = vpop.f32.mrb[0].mxu0
        %v5527 = vpop.f32.mrb[0].mxu0
        %v5528 = vadd.f32 0.0, %v5527
        %v5529 = vpop.f32.mrb[0].mxu0
        %5530 = vmatprep.mubr.bf16.mxu0 0
        %5531 = vmatmul.mubr.bf16.gmra.mrb[0].mxu0 %v5443
        %v5532 = vpop.f32.mrb[0].mxu0
        %v5533 = vadd.f32 0.0, %v5532
        %v5534 = vpop.f32.mrb[0].mxu0
        %v5535 = vpop.f32.mrb[0].mxu0
        %v5536 = vadd.f32 0.0, %v5535
        %v5537 = vpop.f32.mrb[0].mxu0
        %5538 = vmatprep.mubr.bf16.mxu0 0
        %5539 = vmatmul.mubr.bf16.gmra.mrb[0].mxu0 %v5446
        %v5540 = vpop.f32.mrb[0].mxu0
        %v5541 = vadd.f32 0.0, %v5540
        %v5542 = vpop.f32.mrb[0].mxu0
        %v5543 = vpop.f32.mrb[0].mxu0
        %v5544 = vadd.f32 0.0, %v5543
        %v5545 = vpop.f32.mrb[0].mxu0
        %5546 = vmatprep.mubr.bf16.mxu0 0
        %5547 = vmatmul.mubr.bf16.gmra.mrb[0].mxu0 %v5449
        %v5548 = vpop.f32.mrb[0].mxu0
        %v5549 = vadd.f32 0.0, %v5548
        %v5550 = vpop.f32.mrb[0].mxu0
        %v5551 = vpop.f32.mrb[0].mxu0
        %v5552 = vadd.f32 0.0, %v5551
        %v5553 = vpop.f32.mrb[0].mxu0
        %5554 = vmatprep.mubr.bf16.mxu0 0
        %5555 = vmatmul.mubr.bf16.gmra.mrb[0].mxu0 %v5452
        %v5556 = vpop.f32.mrb[0].mxu0
        %v5557 = vadd.f32 0.0, %v5556
        %v5558 = vpop.f32.mrb[0].mxu0
        %v5559 = vpop.f32.mrb[0].mxu0
        %v5560 = vadd.f32 0.0, %v5559
        %v5561 = vpop.f32.mrb[0].mxu0
        %5562 = vmatprep.mubr.bf16.mxu0 0
        %5563 = vmatmul.mubr.bf16.gmra.mrb[0].mxu0 %v5455
        %v5564 = vpop.f32.mrb[0].mxu0
        %v5565 = vadd.f32 0.0, %v5564
        %v5566 = vpop.f32.mrb[0].mxu0
        %v5567 = vpop.f32.mrb[0].mxu0
        %v5568 = vadd.f32 0.0, %v5567
        %v5569 = vpop.f32.mrb[0].mxu0
        %5570 = vmatprep.mubr.bf16.mxu0 0
        %5571 = vmatmul.mubr.bf16.gmra.mrb[0].mxu0 %v5458
        %v5572 = vpop.f32.mrb[0].mxu0
        %v5573 = vadd.f32 0.0, %v5572
        %v5574 = vpop.f32.mrb[0].mxu0
        %v5575 = vpop.f32.mrb[0].mxu0
        %v5576 = vadd.f32 0.0, %v5575
        %v5577 = vpop.f32.mrb[0].mxu0
        %5578 = vmatprep.mubr.bf16.mxu0 0
        %5579 = vmatmul.mubr.bf16.gmra.mrb[0].mxu0 %v5461
        %v5580 = vpop.f32.mrb[0].mxu0
        %v5581 = vadd.f32 0.0, %v5580
        %v5582 = vpop.f32.mrb[0].mxu0
        %v5583 = vpop.f32.mrb[0].mxu0
        %v5584 = vadd.f32 0.0, %v5583
        %v5585 = vpop.f32.mrb[0].mxu0
        %5586 = vmatprep.mubr.bf16.mxu0 0
        %5587 = vmatmul.mubr.bf16.gmra.mrb[0].mxu0 %v5464
        %v5588 = vpop.f32.mrb[0].mxu0
        %v5589 = vadd.f32 0.0, %v5588
        %v5590 = vpop.f32.mrb[0].mxu0
        %v5591 = vpop.f32.mrb[0].mxu0
        %v5592 = vadd.f32 0.0, %v5591
        %v5593 = vpop.f32.mrb[0].mxu0
        %5594 = vmatprep.mubr.bf16.mxu0 0
        %5595 = vmatmul.mubr.bf16.gmra.mrb[0].mxu0 %v5467
        %v5596 = vpop.f32.mrb[0].mxu0
        %v5597 = vadd.f32 0.0, %v5596
        %v5598 = vpop.f32.mrb[0].mxu0
        %v5599 = vpop.f32.mrb[0].mxu0
        %v5600 = vadd.f32 0.0, %v5599
        %v5601 = vpop.f32.mrb[0].mxu0
        %5602 = vmatprep.mubr.bf16.mxu0 0
        %5603 = vmatmul.mubr.bf16.gmra.mrb[0].mxu0 %v5470
        %v5604 = vpop.f32.mrb[0].mxu0
        %v5605 = vadd.f32 0.0, %v5604
        %v5606 = vpop.f32.mrb[0].mxu0
        %v5607 = vpop.f32.mrb[0].mxu0
        %v5608 = vadd.f32 0.0, %v5607
        %v5609 = vpop.f32.mrb[0].mxu0
        %5610 = vmatprep.mubr.bf16.mxu0 0
        %5611 = vmatmul.mubr.bf16.gmra.mrb[0].mxu0 %v5473
        %v5612 = vpop.f32.mrb[0].mxu0
        %v5613 = vadd.f32 0.0, %v5612
        %v5614 = vpop.f32.mrb[0].mxu0
        %v5615 = vpop.f32.mrb[0].mxu0
        %v5616 = vadd.f32 0.0, %v5615
        %v5617 = vpop.f32.mrb[0].mxu0
        %5618 = vmatprep.mubr.bf16.mxu0 0
        %5619 = vmatmul.mubr.bf16.gmra.mrb[0].mxu0 %v5476
        %v5620 = vpop.f32.mrb[0].mxu0
        %v5621 = vadd.f32 0.0, %v5620
        %v5622 = vpop.f32.mrb[0].mxu0
        %v5623 = vpop.f32.mrb[0].mxu0
        %v5624 = vadd.f32 0.0, %v5623
        %v5625 = vpop.f32.mrb[0].mxu0
        %5626 = vmatprep.mubr.bf16.mxu0 0
        %5627 = vmatmul.mubr.bf16.gmra.mrb[0].mxu0 %v5479
        %v5628 = vpop.f32.mrb[0].mxu0
        %v5629 = vadd.f32 0.0, %v5628
        %v5630 = vpop.f32.mrb[0].mxu0
        %v5631 = vpop.f32.mrb[0].mxu0
        %v5632 = vadd.f32 0.0, %v5631
        %v5633 = vpop.f32.mrb[0].mxu0
        %5634 = vmatprep.mubr.bf16.mxu0 0
        %5635 = vmatmul.mubr.bf16.gmra.mrb[0].mxu0 %v5482
        %v5636 = vpop.f32.mrb[0].mxu0
        %v5637 = vadd.f32 0.0, %v5636
        %v5638 = vpop.f32.mrb[0].mxu0
        %v5639 = vpop.f32.mrb[0].mxu0
        %v5640 = vadd.f32 0.0, %v5639
        %v5641 = vpop.f32.mrb[0].mxu0
        %5642 = vmatprep.mubr.bf16.mxu0 0
        %5643 = vmatmul.mubr.bf16.gmra.mrb[0].mxu0 %v5485
        %v5644 = vpop.f32.mrb[0].mxu0
        %v5645 = vadd.f32 0.0, %v5644
        %v5646 = vpop.f32.mrb[0].mxu0
        %v5647 = vpop.f32.mrb[0].mxu0
        %v5648 = vadd.f32 0.0, %v5647
        %v5649 = vpop.f32.mrb[0].mxu0
        %5650 = vdwg.mxu0
        %v5651 = vadd.f32 %v5151, %v5525
        %v5652 = vadd.f32 %v5152, %v5528
        %v5653 = vadd.f32 %v5153, %v5533
        %v5654 = vadd.f32 %v5154, %v5536
        %v5655 = vadd.f32 %v5155, %v5541
        %v5656 = vadd.f32 %v5156, %v5544
        %v5657 = vadd.f32 %v5157, %v5549
        %v5658 = vadd.f32 %v5158, %v5552
        %v5659 = vadd.f32 %v5159, %v5557
        %v5660 = vadd.f32 %v5160, %v5560
        %v5661 = vadd.f32 %v5161, %v5565
        %v5662 = vadd.f32 %v5162, %v5568
        %v5663 = vadd.f32 %v5163, %v5573
        %v5664 = vadd.f32 %v5164, %v5576
        %v5665 = vadd.f32 %v5165, %v5581
        %v5666 = vadd.f32 %v5166, %v5584
        %v5667 = vadd.f32 %v5167, %v5589
        %v5668 = vadd.f32 %v5168, %v5592
        %v5669 = vadd.f32 %v5169, %v5597
        %v5670 = vadd.f32 %v5170, %v5600
        %v5671 = vadd.f32 %v5171, %v5605
        %v5672 = vadd.f32 %v5172, %v5608
        %v5673 = vadd.f32 %v5173, %v5613
        %v5674 = vadd.f32 %v5174, %v5616
        %v5675 = vadd.f32 %v5175, %v5621
        %v5676 = vadd.f32 %v5176, %v5624
        %v5677 = vadd.f32 %v5177, %v5629
        %v5678 = vadd.f32 %v5178, %v5632
        %v5679 = vadd.f32 %v5179, %v5637
        %v5680 = vadd.f32 %v5180, %v5640
        %v5681 = vadd.f32 %v5181, %v5645
        %v5682 = vadd.f32 %v5182, %v5648
        %v5683 = vld [vmem:[%s2287] sm:$0xff]
        %v5684 = vld [vmem:[%s2287 + $0x8] sm:$0xff]
        %v5685 = vld [vmem:[%s2287 + $0x18] sm:$0xff]
        %v5686 = vld [vmem:[%s2287 + $0x20] sm:$0xff]
        %v5687 = vld [vmem:[%s2287 + $0x30] sm:$0xff]
        %v5688 = vld [vmem:[%s2287 + $0x38] sm:$0xff]
        %v5689 = vld [vmem:[%s2287 + $0x48] sm:$0xff]
        %v5690 = vld [vmem:[%s2287 + $0x50] sm:$0xff]
        %v5691 = vld [vmem:[%s2287 + $0x60] sm:$0xff]
        %v5692 = vld [vmem:[%s2287 + $0x68] sm:$0xff]
        %v5693 = vld [vmem:[%s2287 + $0x78] sm:$0xff]
        %v5694 = vld [vmem:[%s2287 + $0x80] sm:$0xff]
        %v5695 = vld [vmem:[%s2287 + $0x90] sm:$0xff]
        %v5696 = vld [vmem:[%s2287 + $0x98] sm:$0xff]
        %v5697 = vld [vmem:[%s2287 + $0xa8] sm:$0xff]
        %v5698 = vld [vmem:[%s2287 + $0xb0] sm:$0xff]
        %v5699 = vld [vmem:[%s2287 + $0xc0] sm:$0xff]
        %v5700 = vld [vmem:[%s2287 + $0xc8] sm:$0xff]
        %v5701 = vld [vmem:[%s2287 + $0xd8] sm:$0xff]
        %v5702 = vld [vmem:[%s2287 + $0xe0] sm:$0xff]
        %v5703 = vld [vmem:[%s2287 + $0xf0] sm:$0xff]
        %v5704 = vld [vmem:[%s2287 + $0xf8] sm:$0xff]
        %v5705 = vld [vmem:[%s2287 + $0x108] sm:$0xff]
        %v5706 = vld [vmem:[%s2287 + $0x110] sm:$0xff]
        %v5707 = vld [vmem:[%s2287 + $0x120] sm:$0xff]
        %v5708 = vld [vmem:[%s2287 + $0x128] sm:$0xff]
        %v5709 = vld [vmem:[%s2287 + $0x138] sm:$0xff]
        %v5710 = vld [vmem:[%s2287 + $0x140] sm:$0xff]
        %v5711 = vld [vmem:[%s2287 + $0x150] sm:$0xff]
        %v5712 = vld [vmem:[%s2287 + $0x158] sm:$0xff]
        %v5713 = vld [vmem:[%s2287 + $0x168] sm:$0xff]
        %v5714 = vld [vmem:[%s2287 + $0x170] sm:$0xff]
        %v5715 = vmax.f32 %v5311, %v5683
        %v5716 = vmax.f32 %v5312, %v5684
        %v5717 = vmax.f32 %v5313, %v5685
        %v5718 = vmax.f32 %v5314, %v5686
        %v5719 = vmax.f32 %v5315, %v5687
        %v5720 = vmax.f32 %v5316, %v5688
        %v5721 = vmax.f32 %v5317, %v5689
        %v5722 = vmax.f32 %v5318, %v5690
        %v5723 = vmax.f32 %v5319, %v5691
        %v5724 = vmax.f32 %v5320, %v5692
        %v5725 = vmax.f32 %v5321, %v5693
        %v5726 = vmax.f32 %v5322, %v5694
        %v5727 = vmax.f32 %v5323, %v5695
        %v5728 = vmax.f32 %v5324, %v5696
        %v5729 = vmax.f32 %v5325, %v5697
        %v5730 = vmax.f32 %v5326, %v5698
        %v5731 = vmax.f32 %v5327, %v5699
        %v5732 = vmax.f32 %v5328, %v5700
        %v5733 = vmax.f32 %v5329, %v5701
        %v5734 = vmax.f32 %v5330, %v5702
        %v5735 = vmax.f32 %v5331, %v5703
        %v5736 = vmax.f32 %v5332, %v5704
        %v5737 = vmax.f32 %v5333, %v5705
        %v5738 = vmax.f32 %v5334, %v5706
        %v5739 = vmax.f32 %v5335, %v5707
        %v5740 = vmax.f32 %v5336, %v5708
        %v5741 = vmax.f32 %v5337, %v5709
        %v5742 = vmax.f32 %v5338, %v5710
        %v5743 = vmax.f32 %v5339, %v5711
        %v5744 = vmax.f32 %v5340, %v5712
        %v5745 = vmax.f32 %v5341, %v5713
        %v5746 = vmax.f32 %v5342, %v5714
        %5747 = vrot.lane.b32.xlu0 %v5375, 120
        %v5748 = vpop.permute.xlu0 %5747
        %5749 = vrot.lane.b32.xlu0 %v5376, 120
        %v5750 = vpop.permute.xlu0 %5749
        %5751 = vrot.lane.b32.xlu0 %v5377, 120
        %v5752 = vpop.permute.xlu0 %5751
        %5753 = vrot.lane.b32.xlu0 %v5378, 120
        %v5754 = vpop.permute.xlu0 %5753
        %5755 = vrot.lane.b32.xlu0 %v5379, 120
        %v5756 = vpop.permute.xlu0 %5755
        %5757 = vrot.lane.b32.xlu0 %v5380, 120
        %v5758 = vpop.permute.xlu0 %5757
        %5759 = vrot.lane.b32.xlu0 %v5381, 120
        %v5760 = vpop.permute.xlu0 %5759
        %5761 = vrot.lane.b32.xlu0 %v5382, 120
        %v5762 = vpop.permute.xlu0 %5761
        %5763 = vrot.lane.b32.xlu0 %v5383, 120
        %v5764 = vpop.permute.xlu0 %5763
        %5765 = vrot.lane.b32.xlu0 %v5384, 120
        %v5766 = vpop.permute.xlu0 %5765
        %5767 = vrot.lane.b32.xlu0 %v5385, 120
        %v5768 = vpop.permute.xlu0 %5767
        %5769 = vrot.lane.b32.xlu0 %v5386, 120
        %v5770 = vpop.permute.xlu0 %5769
        %5771 = vrot.lane.b32.xlu0 %v5387, 120
        %v5772 = vpop.permute.xlu0 %5771
        %5773 = vrot.lane.b32.xlu0 %v5388, 120
        %v5774 = vpop.permute.xlu0 %5773
        %5775 = vrot.lane.b32.xlu0 %v5389, 120
        %v5776 = vpop.permute.xlu0 %5775
        %5777 = vrot.lane.b32.xlu0 %v5390, 120
        %v5778 = vpop.permute.xlu0 %5777
        %v5780 = vunpack.c.l.b16 %v2968
        %v5781 = vpack.c.b16 %v5780, %v5780
        %v5782 = vrot.slane %v5781, 2
        %v5784 = vsel %vm985, %v5748, 0
        %v5787 = vsel %vm985, %v5750, 0
        %v5790 = vsel %vm985, %v5752, 0
        %v5793 = vsel %vm985, %v5754, 0
        %v5796 = vsel %vm985, %v5756, 0
        %v5799 = vsel %vm985, %v5758, 0
        %v5802 = vsel %vm985, %v5760, 0
        %v5805 = vsel %vm985, %v5762, 0
        %v5808 = vsel %vm985, %v5764, 0
        %v5811 = vsel %vm985, %v5766, 0
        %v5814 = vsel %vm985, %v5768, 0
        %v5817 = vsel %vm985, %v5770, 0
        %v5820 = vsel %vm985, %v5772, 0
        %v5823 = vsel %vm985, %v5774, 0
        %v5826 = vsel %vm985, %v5776, 0
        %v5829 = vsel %vm985, %v5778, 0
        %v5832 = vsel %vm3150, %v5782, 0
        %5834 = vmatprep.subr.bf16.mxu0 0
        %5835 = vmatpush1.bf16.msra.mxu0 %v5832
        %5836 = vmatprep.subr.bf16.mxu0 0
        %5837 = vmatpush1.bf16.msra.mxu0 0
        %5838 = vmatprep.subr.bf16.mxu0 0
        %5839 = vmatpush1.bf16.msra.mxu0 0
        %5840 = vmatprep.subr.bf16.mxu0 0
        %5841 = vmatpush1.bf16.msra.mxu0 0
        %5842 = vmatprep.subr.bf16.mxu0 0
        %5843 = vmatpush1.bf16.msra.mxu0 0
        %5844 = vmatprep.subr.bf16.mxu0 0
        %5845 = vmatpush1.bf16.msra.mxu0 0
        %5846 = vmatprep.subr.bf16.mxu0 0
        %5847 = vmatpush1.bf16.msra.mxu0 0
        %5848 = vmatprep.subr.bf16.mxu0 0
        %5849 = vmatpush1.bf16.msra.mxu0 0
        %5850 = vmatprep.subr.bf16.mxu0 0
        %5851 = vmatpush1.bf16.msra.mxu0 0
        %5852 = vmatprep.subr.bf16.mxu0 0
        %5853 = vmatpush1.bf16.msra.mxu0 0
        %5854 = vmatprep.subr.bf16.mxu0 0
        %5855 = vmatpush1.bf16.msra.mxu0 0
        %5856 = vmatprep.subr.bf16.mxu0 0
        %5857 = vmatpush1.bf16.msra.mxu0 0
        %5858 = vmatprep.subr.bf16.mxu0 0
        %5859 = vmatpush1.bf16.msra.mxu0 0
        %5860 = vmatprep.subr.bf16.mxu0 0
        %5861 = vmatpush1.bf16.msra.mxu0 0
        %5862 = vmatprep.subr.bf16.mxu0 0
        %5863 = vmatpush1.bf16.msra.mxu0 0
        %5864 = vmatprep.subr.bf16.mxu0 0
        %5865 = vmatpush1.bf16.msra.mxu0 0
        %5866 = vmatprep.mubr.bf16.mxu0 0
        %5867 = vmatmul.mubr.bf16.gmra.mrb[0].mxu0 %v5784
        %v5868 = vpop.f32.mrb[0].mxu0
        %v5869 = vadd.f32 0.0, %v5868
        %v5870 = vpop.f32.mrb[0].mxu0
        %v5871 = vpop.f32.mrb[0].mxu0
        %v5872 = vadd.f32 0.0, %v5871
        %v5873 = vpop.f32.mrb[0].mxu0
        %5874 = vmatprep.mubr.bf16.mxu0 0
        %5875 = vmatmul.mubr.bf16.gmra.mrb[0].mxu0 %v5787
        %v5876 = vpop.f32.mrb[0].mxu0
        %v5877 = vadd.f32 0.0, %v5876
        %v5878 = vpop.f32.mrb[0].mxu0
        %v5879 = vpop.f32.mrb[0].mxu0
        %v5880 = vadd.f32 0.0, %v5879
        %v5881 = vpop.f32.mrb[0].mxu0
        %5882 = vmatprep.mubr.bf16.mxu0 0
        %5883 = vmatmul.mubr.bf16.gmra.mrb[0].mxu0 %v5790
        %v5884 = vpop.f32.mrb[0].mxu0
        %v5885 = vadd.f32 0.0, %v5884
        %v5886 = vpop.f32.mrb[0].mxu0
        %v5887 = vpop.f32.mrb[0].mxu0
        %v5888 = vadd.f32 0.0, %v5887
        %v5889 = vpop.f32.mrb[0].mxu0
        %5890 = vmatprep.mubr.bf16.mxu0 0
        %5891 = vmatmul.mubr.bf16.gmra.mrb[0].mxu0 %v5793
        %v5892 = vpop.f32.mrb[0].mxu0
        %v5893 = vadd.f32 0.0, %v5892
        %v5894 = vpop.f32.mrb[0].mxu0
        %v5895 = vpop.f32.mrb[0].mxu0
        %v5896 = vadd.f32 0.0, %v5895
        %v5897 = vpop.f32.mrb[0].mxu0
        %5898 = vmatprep.mubr.bf16.mxu0 0
        %5899 = vmatmul.mubr.bf16.gmra.mrb[0].mxu0 %v5796
        %v5900 = vpop.f32.mrb[0].mxu0
        %v5901 = vadd.f32 0.0, %v5900
        %v5902 = vpop.f32.mrb[0].mxu0
        %v5903 = vpop.f32.mrb[0].mxu0
        %v5904 = vadd.f32 0.0, %v5903
        %v5905 = vpop.f32.mrb[0].mxu0
        %5906 = vmatprep.mubr.bf16.mxu0 0
        %5907 = vmatmul.mubr.bf16.gmra.mrb[0].mxu0 %v5799
        %v5908 = vpop.f32.mrb[0].mxu0
        %v5909 = vadd.f32 0.0, %v5908
        %v5910 = vpop.f32.mrb[0].mxu0
        %v5911 = vpop.f32.mrb[0].mxu0
        %v5912 = vadd.f32 0.0, %v5911
        %v5913 = vpop.f32.mrb[0].mxu0
        %5914 = vmatprep.mubr.bf16.mxu0 0
        %5915 = vmatmul.mubr.bf16.gmra.mrb[0].mxu0 %v5802
        %v5916 = vpop.f32.mrb[0].mxu0
        %v5917 = vadd.f32 0.0, %v5916
        %v5918 = vpop.f32.mrb[0].mxu0
        %v5919 = vpop.f32.mrb[0].mxu0
        %v5920 = vadd.f32 0.0, %v5919
        %v5921 = vpop.f32.mrb[0].mxu0
        %5922 = vmatprep.mubr.bf16.mxu0 0
        %5923 = vmatmul.mubr.bf16.gmra.mrb[0].mxu0 %v5805
        %v5924 = vpop.f32.mrb[0].mxu0
        %v5925 = vadd.f32 0.0, %v5924
        %v5926 = vpop.f32.mrb[0].mxu0
        %v5927 = vpop.f32.mrb[0].mxu0
        %v5928 = vadd.f32 0.0, %v5927
        %v5929 = vpop.f32.mrb[0].mxu0
        %5930 = vmatprep.mubr.bf16.mxu0 0
        %5931 = vmatmul.mubr.bf16.gmra.mrb[0].mxu0 %v5808
        %v5932 = vpop.f32.mrb[0].mxu0
        %v5933 = vadd.f32 0.0, %v5932
        %v5934 = vpop.f32.mrb[0].mxu0
        %v5935 = vpop.f32.mrb[0].mxu0
        %v5936 = vadd.f32 0.0, %v5935
        %v5937 = vpop.f32.mrb[0].mxu0
        %5938 = vmatprep.mubr.bf16.mxu0 0
        %5939 = vmatmul.mubr.bf16.gmra.mrb[0].mxu0 %v5811
        %v5940 = vpop.f32.mrb[0].mxu0
        %v5941 = vadd.f32 0.0, %v5940
        %v5942 = vpop.f32.mrb[0].mxu0
        %v5943 = vpop.f32.mrb[0].mxu0
        %v5944 = vadd.f32 0.0, %v5943
        %v5945 = vpop.f32.mrb[0].mxu0
        %5946 = vmatprep.mubr.bf16.mxu0 0
        %5947 = vmatmul.mubr.bf16.gmra.mrb[0].mxu0 %v5814
        %v5948 = vpop.f32.mrb[0].mxu0
        %v5949 = vadd.f32 0.0, %v5948
        %v5950 = vpop.f32.mrb[0].mxu0
        %v5951 = vpop.f32.mrb[0].mxu0
        %v5952 = vadd.f32 0.0, %v5951
        %v5953 = vpop.f32.mrb[0].mxu0
        %5954 = vmatprep.mubr.bf16.mxu0 0
        %5955 = vmatmul.mubr.bf16.gmra.mrb[0].mxu0 %v5817
        %v5956 = vpop.f32.mrb[0].mxu0
        %v5957 = vadd.f32 0.0, %v5956
        %v5958 = vpop.f32.mrb[0].mxu0
        %v5959 = vpop.f32.mrb[0].mxu0
        %v5960 = vadd.f32 0.0, %v5959
        %v5961 = vpop.f32.mrb[0].mxu0
        %5962 = vmatprep.mubr.bf16.mxu0 0
        %5963 = vmatmul.mubr.bf16.gmra.mrb[0].mxu0 %v5820
        %v5964 = vpop.f32.mrb[0].mxu0
        %v5965 = vadd.f32 0.0, %v5964
        %v5966 = vpop.f32.mrb[0].mxu0
        %v5967 = vpop.f32.mrb[0].mxu0
        %v5968 = vadd.f32 0.0, %v5967
        %v5969 = vpop.f32.mrb[0].mxu0
        %5970 = vmatprep.mubr.bf16.mxu0 0
        %5971 = vmatmul.mubr.bf16.gmra.mrb[0].mxu0 %v5823
        %v5972 = vpop.f32.mrb[0].mxu0
        %v5973 = vadd.f32 0.0, %v5972
        %v5974 = vpop.f32.mrb[0].mxu0
        %v5975 = vpop.f32.mrb[0].mxu0
        %v5976 = vadd.f32 0.0, %v5975
        %v5977 = vpop.f32.mrb[0].mxu0
        %5978 = vmatprep.mubr.bf16.mxu0 0
        %5979 = vmatmul.mubr.bf16.gmra.mrb[0].mxu0 %v5826
        %v5980 = vpop.f32.mrb[0].mxu0
        %v5981 = vadd.f32 0.0, %v5980
        %v5982 = vpop.f32.mrb[0].mxu0
        %v5983 = vpop.f32.mrb[0].mxu0
        %v5984 = vadd.f32 0.0, %v5983
        %v5985 = vpop.f32.mrb[0].mxu0
        %5986 = vmatprep.mubr.bf16.mxu0 0
        %5987 = vmatmul.mubr.bf16.gmra.mrb[0].mxu0 %v5829
        %v5988 = vpop.f32.mrb[0].mxu0
        %v5989 = vadd.f32 0.0, %v5988
        %v5990 = vpop.f32.mrb[0].mxu0
        %v5991 = vpop.f32.mrb[0].mxu0
        %v5992 = vadd.f32 0.0, %v5991
        %v5993 = vpop.f32.mrb[0].mxu0
        %5994 = vdwg.mxu0
        %v5995 = vadd.f32 %v5651, %v5869
        %v5996 = vadd.f32 %v5652, %v5872
        %v5997 = vadd.f32 %v5653, %v5877
        %v5998 = vadd.f32 %v5654, %v5880
        %v5999 = vadd.f32 %v5655, %v5885
        %v6000 = vadd.f32 %v5656, %v5888
        %v6001 = vadd.f32 %v5657, %v5893
        %v6002 = vadd.f32 %v5658, %v5896
        %v6003 = vadd.f32 %v5659, %v5901
        %v6004 = vadd.f32 %v5660, %v5904
        %v6005 = vadd.f32 %v5661, %v5909
        %v6006 = vadd.f32 %v5662, %v5912
        %v6007 = vadd.f32 %v5663, %v5917
        %v6008 = vadd.f32 %v5664, %v5920
        %v6009 = vadd.f32 %v5665, %v5925
        %v6010 = vadd.f32 %v5666, %v5928
        %v6011 = vadd.f32 %v5667, %v5933
        %v6012 = vadd.f32 %v5668, %v5936
        %v6013 = vadd.f32 %v5669, %v5941
        %v6014 = vadd.f32 %v5670, %v5944
        %v6015 = vadd.f32 %v5671, %v5949
        %v6016 = vadd.f32 %v5672, %v5952
        %v6017 = vadd.f32 %v5673, %v5957
        %v6018 = vadd.f32 %v5674, %v5960
        %v6019 = vadd.f32 %v5675, %v5965
        %v6020 = vadd.f32 %v5676, %v5968
        %v6021 = vadd.f32 %v5677, %v5973
        %v6022 = vadd.f32 %v5678, %v5976
        %v6023 = vadd.f32 %v5679, %v5981
        %v6024 = vadd.f32 %v5680, %v5984
        %v6025 = vadd.f32 %v5681, %v5989
        %v6026 = vadd.f32 %v5682, %v5992
        %6059 = vrot.lane.b32.xlu0 %v5683, 4
        %v6060 = vpop.permute.xlu0 %6059
        %6061 = vrot.lane.b32.xlu0 %v5684, 4
        %v6062 = vpop.permute.xlu0 %6061
        %6063 = vrot.lane.b32.xlu0 %v5685, 4
        %v6064 = vpop.permute.xlu0 %6063
        %6065 = vrot.lane.b32.xlu0 %v5686, 4
        %v6066 = vpop.permute.xlu0 %6065
        %6067 = vrot.lane.b32.xlu0 %v5687, 4
        %v6068 = vpop.permute.xlu0 %6067
        %6069 = vrot.lane.b32.xlu0 %v5688, 4
        %v6070 = vpop.permute.xlu0 %6069
        %6071 = vrot.lane.b32.xlu0 %v5689, 4
        %v6072 = vpop.permute.xlu0 %6071
        %6073 = vrot.lane.b32.xlu0 %v5690, 4
        %v6074 = vpop.permute.xlu0 %6073
        %6075 = vrot.lane.b32.xlu0 %v5691, 4
        %v6076 = vpop.permute.xlu0 %6075
        %6077 = vrot.lane.b32.xlu0 %v5692, 4
        %v6078 = vpop.permute.xlu0 %6077
        %6079 = vrot.lane.b32.xlu0 %v5693, 4
        %v6080 = vpop.permute.xlu0 %6079
        %6081 = vrot.lane.b32.xlu0 %v5694, 4
        %v6082 = vpop.permute.xlu0 %6081
        %6083 = vrot.lane.b32.xlu0 %v5695, 4
        %v6084 = vpop.permute.xlu0 %6083
        %6085 = vrot.lane.b32.xlu0 %v5696, 4
        %v6086 = vpop.permute.xlu0 %6085
        %6087 = vrot.lane.b32.xlu0 %v5697, 4
        %v6088 = vpop.permute.xlu0 %6087
        %6089 = vrot.lane.b32.xlu0 %v5698, 4
        %v6090 = vpop.permute.xlu0 %6089
        %6091 = vrot.lane.b32.xlu0 %v5699, 4
        %v6092 = vpop.permute.xlu0 %6091
        %6093 = vrot.lane.b32.xlu0 %v5700, 4
        %v6094 = vpop.permute.xlu0 %6093
        %6095 = vrot.lane.b32.xlu0 %v5701, 4
        %v6096 = vpop.permute.xlu0 %6095
        %6097 = vrot.lane.b32.xlu0 %v5702, 4
        %v6098 = vpop.permute.xlu0 %6097
        %6099 = vrot.lane.b32.xlu0 %v5703, 4
        %v6100 = vpop.permute.xlu0 %6099
        %6101 = vrot.lane.b32.xlu0 %v5704, 4
        %v6102 = vpop.permute.xlu0 %6101
        %6103 = vrot.lane.b32.xlu0 %v5705, 4
        %v6104 = vpop.permute.xlu0 %6103
        %6105 = vrot.lane.b32.xlu0 %v5706, 4
        %v6106 = vpop.permute.xlu0 %6105
        %6107 = vrot.lane.b32.xlu0 %v5707, 4
        %v6108 = vpop.permute.xlu0 %6107
        %6109 = vrot.lane.b32.xlu0 %v5708, 4
        %v6110 = vpop.permute.xlu0 %6109
        %6111 = vrot.lane.b32.xlu0 %v5709, 4
        %v6112 = vpop.permute.xlu0 %6111
        %6113 = vrot.lane.b32.xlu0 %v5710, 4
        %v6114 = vpop.permute.xlu0 %6113
        %6115 = vrot.lane.b32.xlu0 %v5711, 4
        %v6116 = vpop.permute.xlu0 %6115
        %6117 = vrot.lane.b32.xlu0 %v5712, 4
        %v6118 = vpop.permute.xlu0 %6117
        %6119 = vrot.lane.b32.xlu0 %v5713, 4
        %v6120 = vpop.permute.xlu0 %6119
        %6121 = vrot.lane.b32.xlu0 %v5714, 4
        %v6122 = vpop.permute.xlu0 %6121
        %v6155 = vmax.f32 %v5715, %v6060
        %v6156 = vmax.f32 %v5716, %v6062
        %v6157 = vmax.f32 %v5717, %v6064
        %v6158 = vmax.f32 %v5718, %v6066
        %v6159 = vmax.f32 %v5719, %v6068
        %v6160 = vmax.f32 %v5720, %v6070
        %v6161 = vmax.f32 %v5721, %v6072
        %v6162 = vmax.f32 %v5722, %v6074
        %v6163 = vmax.f32 %v5723, %v6076
        %v6164 = vmax.f32 %v5724, %v6078
        %v6165 = vmax.f32 %v5725, %v6080
        %v6166 = vmax.f32 %v5726, %v6082
        %v6167 = vmax.f32 %v5727, %v6084
        %v6168 = vmax.f32 %v5728, %v6086
        %v6169 = vmax.f32 %v5729, %v6088
        %v6170 = vmax.f32 %v5730, %v6090
        %v6171 = vmax.f32 %v5731, %v6092
        %v6172 = vmax.f32 %v5732, %v6094
        %v6173 = vmax.f32 %v5733, %v6096
        %v6174 = vmax.f32 %v5734, %v6098
        %v6175 = vmax.f32 %v5735, %v6100
        %v6176 = vmax.f32 %v5736, %v6102
        %v6177 = vmax.f32 %v5737, %v6104
        %v6178 = vmax.f32 %v5738, %v6106
        %v6179 = vmax.f32 %v5739, %v6108
        %v6180 = vmax.f32 %v5740, %v6110
        %v6181 = vmax.f32 %v5741, %v6112
        %v6182 = vmax.f32 %v5742, %v6114
        %v6183 = vmax.f32 %v5743, %v6116
        %v6184 = vmax.f32 %v5744, %v6118
        %v6185 = vmax.f32 %v5745, %v6120
        %v6186 = vmax.f32 %v5746, %v6122
        %v6187 = vld [vmem:[%s2165 + $0x1] sm:$0xff]
        %v6188 = vld [vmem:[%s2165 + $0x9] sm:$0xff]
        %v6189 = vld [vmem:[%s2165 + $0x19] sm:$0xff]
        %v6190 = vld [vmem:[%s2165 + $0x21] sm:$0xff]
        %v6191 = vld [vmem:[%s2165 + $0x31] sm:$0xff]
        %v6192 = vld [vmem:[%s2165 + $0x39] sm:$0xff]
        %v6193 = vld [vmem:[%s2165 + $0x49] sm:$0xff]
        %v6194 = vld [vmem:[%s2165 + $0x51] sm:$0xff]
        %v6195 = vld [vmem:[%s2165 + $0x61] sm:$0xff]
        %v6196 = vld [vmem:[%s2165 + $0x69] sm:$0xff]
        %v6197 = vld [vmem:[%s2165 + $0x79] sm:$0xff]
        %v6198 = vld [vmem:[%s2165 + $0x81] sm:$0xff]
        %v6199 = vld [vmem:[%s2165 + $0x91] sm:$0xff]
        %v6200 = vld [vmem:[%s2165 + $0x99] sm:$0xff]
        %v6201 = vld [vmem:[%s2165 + $0xa9] sm:$0xff]
        %v6202 = vld [vmem:[%s2165 + $0xb1] sm:$0xff]
        %v6203 = vld [vmem:[%s2165 + $0xc1] sm:$0xff]
        %v6204 = vld [vmem:[%s2165 + $0xc9] sm:$0xff]
        %v6205 = vld [vmem:[%s2165 + $0xd9] sm:$0xff]
        %v6206 = vld [vmem:[%s2165 + $0xe1] sm:$0xff]
        %v6207 = vld [vmem:[%s2165 + $0xf1] sm:$0xff]
        %v6208 = vld [vmem:[%s2165 + $0xf9] sm:$0xff]
        %v6209 = vld [vmem:[%s2165 + $0x109] sm:$0xff]
        %v6210 = vld [vmem:[%s2165 + $0x111] sm:$0xff]
        %v6211 = vld [vmem:[%s2165 + $0x121] sm:$0xff]
        %v6212 = vld [vmem:[%s2165 + $0x129] sm:$0xff]
        %v6213 = vld [vmem:[%s2165 + $0x139] sm:$0xff]
        %v6214 = vld [vmem:[%s2165 + $0x141] sm:$0xff]
        %v6215 = vld [vmem:[%s2165 + $0x151] sm:$0xff]
        %v6216 = vld [vmem:[%s2165 + $0x159] sm:$0xff]
        %v6217 = vld [vmem:[%s2165 + $0x169] sm:$0xff]
        %v6218 = vld [vmem:[%s2165 + $0x171] sm:$0xff]
        %v6219 = vpack.c.bf16 %v6188, %v6187
        %v6220 = vpack.c.bf16 %v6190, %v6189
        %v6221 = vpack.c.bf16 %v6192, %v6191
        %v6222 = vpack.c.bf16 %v6194, %v6193
        %v6223 = vpack.c.bf16 %v6196, %v6195
        %v6224 = vpack.c.bf16 %v6198, %v6197
        %v6225 = vpack.c.bf16 %v6200, %v6199
        %v6226 = vpack.c.bf16 %v6202, %v6201
        %v6227 = vpack.c.bf16 %v6204, %v6203
        %v6228 = vpack.c.bf16 %v6206, %v6205
        %v6229 = vpack.c.bf16 %v6208, %v6207
        %v6230 = vpack.c.bf16 %v6210, %v6209
        %v6231 = vpack.c.bf16 %v6212, %v6211
        %v6232 = vpack.c.bf16 %v6214, %v6213
        %v6233 = vpack.c.bf16 %v6216, %v6215
        %v6234 = vpack.c.bf16 %v6218, %v6217
        %6251 = vrot.lane.b32.xlu0 %v6219, 116
        %v6252 = vpop.permute.xlu0 %6251
        %6253 = vrot.lane.b32.xlu0 %v6220, 116
        %v6254 = vpop.permute.xlu0 %6253
        %6255 = vrot.lane.b32.xlu0 %v6221, 116
        %v6256 = vpop.permute.xlu0 %6255
        %6257 = vrot.lane.b32.xlu0 %v6222, 116
        %v6258 = vpop.permute.xlu0 %6257
        %6259 = vrot.lane.b32.xlu0 %v6223, 116
        %v6260 = vpop.permute.xlu0 %6259
        %6261 = vrot.lane.b32.xlu0 %v6224, 116
        %v6262 = vpop.permute.xlu0 %6261
        %6263 = vrot.lane.b32.xlu0 %v6225, 116
        %v6264 = vpop.permute.xlu0 %6263
        %6265 = vrot.lane.b32.xlu0 %v6226, 116
        %v6266 = vpop.permute.xlu0 %6265
        %6267 = vrot.lane.b32.xlu0 %v6227, 116
        %v6268 = vpop.permute.xlu0 %6267
        %6269 = vrot.lane.b32.xlu0 %v6228, 116
        %v6270 = vpop.permute.xlu0 %6269
        %6271 = vrot.lane.b32.xlu0 %v6229, 116
        %v6272 = vpop.permute.xlu0 %6271
        %6273 = vrot.lane.b32.xlu0 %v6230, 116
        %v6274 = vpop.permute.xlu0 %6273
        %6275 = vrot.lane.b32.xlu0 %v6231, 116
        %v6276 = vpop.permute.xlu0 %6275
        %6277 = vrot.lane.b32.xlu0 %v6232, 116
        %v6278 = vpop.permute.xlu0 %6277
        %6279 = vrot.lane.b32.xlu0 %v6233, 116
        %v6280 = vpop.permute.xlu0 %6279
        %6281 = vrot.lane.b32.xlu0 %v6234, 116
        %v6282 = vpop.permute.xlu0 %6281
        %v6284 = vsel %vm985, %v6252, 0
        %v6287 = vsel %vm985, %v6254, 0
        %v6290 = vsel %vm985, %v6256, 0
        %v6293 = vsel %vm985, %v6258, 0
        %v6296 = vsel %vm985, %v6260, 0
        %v6299 = vsel %vm985, %v6262, 0
        %v6302 = vsel %vm985, %v6264, 0
        %v6305 = vsel %vm985, %v6266, 0
        %v6308 = vsel %vm985, %v6268, 0
        %v6311 = vsel %vm985, %v6270, 0
        %v6314 = vsel %vm985, %v6272, 0
        %v6317 = vsel %vm985, %v6274, 0
        %v6320 = vsel %vm985, %v6276, 0
        %v6323 = vsel %vm985, %v6278, 0
        %v6326 = vsel %vm985, %v6280, 0
        %v6329 = vsel %vm985, %v6282, 0
        %v6332 = vsel %vm3150, %v2969, 0
        %6334 = vmatprep.subr.bf16.mxu0 0
        %6335 = vmatpush1.bf16.msra.mxu0 %v6332
        %6336 = vmatprep.subr.bf16.mxu0 0
        %6337 = vmatpush1.bf16.msra.mxu0 0
        %6338 = vmatprep.subr.bf16.mxu0 0
        %6339 = vmatpush1.bf16.msra.mxu0 0
        %6340 = vmatprep.subr.bf16.mxu0 0
        %6341 = vmatpush1.bf16.msra.mxu0 0
        %6342 = vmatprep.subr.bf16.mxu0 0
        %6343 = vmatpush1.bf16.msra.mxu0 0
        %6344 = vmatprep.subr.bf16.mxu0 0
        %6345 = vmatpush1.bf16.msra.mxu0 0
        %6346 = vmatprep.subr.bf16.mxu0 0
        %6347 = vmatpush1.bf16.msra.mxu0 0
        %6348 = vmatprep.subr.bf16.mxu0 0
        %6349 = vmatpush1.bf16.msra.mxu0 0
        %6350 = vmatprep.subr.bf16.mxu0 0
        %6351 = vmatpush1.bf16.msra.mxu0 0
        %6352 = vmatprep.subr.bf16.mxu0 0
        %6353 = vmatpush1.bf16.msra.mxu0 0
        %6354 = vmatprep.subr.bf16.mxu0 0
        %6355 = vmatpush1.bf16.msra.mxu0 0
        %6356 = vmatprep.subr.bf16.mxu0 0
        %6357 = vmatpush1.bf16.msra.mxu0 0
        %6358 = vmatprep.subr.bf16.mxu0 0
        %6359 = vmatpush1.bf16.msra.mxu0 0
        %6360 = vmatprep.subr.bf16.mxu0 0
        %6361 = vmatpush1.bf16.msra.mxu0 0
        %6362 = vmatprep.subr.bf16.mxu0 0
        %6363 = vmatpush1.bf16.msra.mxu0 0
        %6364 = vmatprep.subr.bf16.mxu0 0
        %6365 = vmatpush1.bf16.msra.mxu0 0
        %6366 = vmatprep.mubr.bf16.mxu0 0
        %6367 = vmatmul.mubr.bf16.gmra.mrb[0].mxu0 %v6284
        %v6368 = vpop.f32.mrb[0].mxu0
        %v6369 = vadd.f32 0.0, %v6368
        %v6370 = vpop.f32.mrb[0].mxu0
        %v6371 = vpop.f32.mrb[0].mxu0
        %v6372 = vadd.f32 0.0, %v6371
        %v6373 = vpop.f32.mrb[0].mxu0
        %6374 = vmatprep.mubr.bf16.mxu0 0
        %6375 = vmatmul.mubr.bf16.gmra.mrb[0].mxu0 %v6287
        %v6376 = vpop.f32.mrb[0].mxu0
        %v6377 = vadd.f32 0.0, %v6376
        %v6378 = vpop.f32.mrb[0].mxu0
        %v6379 = vpop.f32.mrb[0].mxu0
        %v6380 = vadd.f32 0.0, %v6379
        %v6381 = vpop.f32.mrb[0].mxu0
        %6382 = vmatprep.mubr.bf16.mxu0 0
        %6383 = vmatmul.mubr.bf16.gmra.mrb[0].mxu0 %v6290
        %v6384 = vpop.f32.mrb[0].mxu0
        %v6385 = vadd.f32 0.0, %v6384
        %v6386 = vpop.f32.mrb[0].mxu0
        %v6387 = vpop.f32.mrb[0].mxu0
        %v6388 = vadd.f32 0.0, %v6387
        %v6389 = vpop.f32.mrb[0].mxu0
        %6390 = vmatprep.mubr.bf16.mxu0 0
        %6391 = vmatmul.mubr.bf16.gmra.mrb[0].mxu0 %v6293
        %v6392 = vpop.f32.mrb[0].mxu0
        %v6393 = vadd.f32 0.0, %v6392
        %v6394 = vpop.f32.mrb[0].mxu0
        %v6395 = vpop.f32.mrb[0].mxu0
        %v6396 = vadd.f32 0.0, %v6395
        %v6397 = vpop.f32.mrb[0].mxu0
        %6398 = vmatprep.mubr.bf16.mxu0 0
        %6399 = vmatmul.mubr.bf16.gmra.mrb[0].mxu0 %v6296
        %v6400 = vpop.f32.mrb[0].mxu0
        %v6401 = vadd.f32 0.0, %v6400
        %v6402 = vpop.f32.mrb[0].mxu0
        %v6403 = vpop.f32.mrb[0].mxu0
        %v6404 = vadd.f32 0.0, %v6403
        %v6405 = vpop.f32.mrb[0].mxu0
        %6406 = vmatprep.mubr.bf16.mxu0 0
        %6407 = vmatmul.mubr.bf16.gmra.mrb[0].mxu0 %v6299
        %v6408 = vpop.f32.mrb[0].mxu0
        %v6409 = vadd.f32 0.0, %v6408
        %v6410 = vpop.f32.mrb[0].mxu0
        %v6411 = vpop.f32.mrb[0].mxu0
        %v6412 = vadd.f32 0.0, %v6411
        %v6413 = vpop.f32.mrb[0].mxu0
        %6414 = vmatprep.mubr.bf16.mxu0 0
        %6415 = vmatmul.mubr.bf16.gmra.mrb[0].mxu0 %v6302
        %v6416 = vpop.f32.mrb[0].mxu0
        %v6417 = vadd.f32 0.0, %v6416
        %v6418 = vpop.f32.mrb[0].mxu0
        %v6419 = vpop.f32.mrb[0].mxu0
        %v6420 = vadd.f32 0.0, %v6419
        %v6421 = vpop.f32.mrb[0].mxu0
        %6422 = vmatprep.mubr.bf16.mxu0 0
        %6423 = vmatmul.mubr.bf16.gmra.mrb[0].mxu0 %v6305
        %v6424 = vpop.f32.mrb[0].mxu0
        %v6425 = vadd.f32 0.0, %v6424
        %v6426 = vpop.f32.mrb[0].mxu0
        %v6427 = vpop.f32.mrb[0].mxu0
        %v6428 = vadd.f32 0.0, %v6427
        %v6429 = vpop.f32.mrb[0].mxu0
        %6430 = vmatprep.mubr.bf16.mxu0 0
        %6431 = vmatmul.mubr.bf16.gmra.mrb[0].mxu0 %v6308
        %v6432 = vpop.f32.mrb[0].mxu0
        %v6433 = vadd.f32 0.0, %v6432
        %v6434 = vpop.f32.mrb[0].mxu0
        %v6435 = vpop.f32.mrb[0].mxu0
        %v6436 = vadd.f32 0.0, %v6435
        %v6437 = vpop.f32.mrb[0].mxu0
        %6438 = vmatprep.mubr.bf16.mxu0 0
        %6439 = vmatmul.mubr.bf16.gmra.mrb[0].mxu0 %v6311
        %v6440 = vpop.f32.mrb[0].mxu0
        %v6441 = vadd.f32 0.0, %v6440
        %v6442 = vpop.f32.mrb[0].mxu0
        %v6443 = vpop.f32.mrb[0].mxu0
        %v6444 = vadd.f32 0.0, %v6443
        %v6445 = vpop.f32.mrb[0].mxu0
        %6446 = vmatprep.mubr.bf16.mxu0 0
        %6447 = vmatmul.mubr.bf16.gmra.mrb[0].mxu0 %v6314
        %v6448 = vpop.f32.mrb[0].mxu0
        %v6449 = vadd.f32 0.0, %v6448
        %v6450 = vpop.f32.mrb[0].mxu0
        %v6451 = vpop.f32.mrb[0].mxu0
        %v6452 = vadd.f32 0.0, %v6451
        %v6453 = vpop.f32.mrb[0].mxu0
        %6454 = vmatprep.mubr.bf16.mxu0 0
        %6455 = vmatmul.mubr.bf16.gmra.mrb[0].mxu0 %v6317
        %v6456 = vpop.f32.mrb[0].mxu0
        %v6457 = vadd.f32 0.0, %v6456
        %v6458 = vpop.f32.mrb[0].mxu0
        %v6459 = vpop.f32.mrb[0].mxu0
        %v6460 = vadd.f32 0.0, %v6459
        %v6461 = vpop.f32.mrb[0].mxu0
        %6462 = vmatprep.mubr.bf16.mxu0 0
        %6463 = vmatmul.mubr.bf16.gmra.mrb[0].mxu0 %v6320
        %v6464 = vpop.f32.mrb[0].mxu0
        %v6465 = vadd.f32 0.0, %v6464
        %v6466 = vpop.f32.mrb[0].mxu0
        %v6467 = vpop.f32.mrb[0].mxu0
        %v6468 = vadd.f32 0.0, %v6467
        %v6469 = vpop.f32.mrb[0].mxu0
        %6470 = vmatprep.mubr.bf16.mxu0 0
        %6471 = vmatmul.mubr.bf16.gmra.mrb[0].mxu0 %v6323
        %v6472 = vpop.f32.mrb[0].mxu0
        %v6473 = vadd.f32 0.0, %v6472
        %v6474 = vpop.f32.mrb[0].mxu0
        %v6475 = vpop.f32.mrb[0].mxu0
        %v6476 = vadd.f32 0.0, %v6475
        %v6477 = vpop.f32.mrb[0].mxu0
        %6478 = vmatprep.mubr.bf16.mxu0 0
        %6479 = vmatmul.mubr.bf16.gmra.mrb[0].mxu0 %v6326
        %v6480 = vpop.f32.mrb[0].mxu0
        %v6481 = vadd.f32 0.0, %v6480
        %v6482 = vpop.f32.mrb[0].mxu0
        %v6483 = vpop.f32.mrb[0].mxu0
        %v6484 = vadd.f32 0.0, %v6483
        %v6485 = vpop.f32.mrb[0].mxu0
        %6486 = vmatprep.mubr.bf16.mxu0 0
        %6487 = vmatmul.mubr.bf16.gmra.mrb[0].mxu0 %v6329
        %v6488 = vpop.f32.mrb[0].mxu0
        %v6489 = vadd.f32 0.0, %v6488
        %v6490 = vpop.f32.mrb[0].mxu0
        %v6491 = vpop.f32.mrb[0].mxu0
        %v6492 = vadd.f32 0.0, %v6491
        %v6493 = vpop.f32.mrb[0].mxu0
        %6494 = vdwg.mxu0
        %v6495 = vadd.f32 %v5995, %v6369
        %v6496 = vadd.f32 %v5996, %v6372
        %v6497 = vadd.f32 %v5997, %v6377
        %v6498 = vadd.f32 %v5998, %v6380
        %v6499 = vadd.f32 %v5999, %v6385
        %v6500 = vadd.f32 %v6000, %v6388
        %v6501 = vadd.f32 %v6001, %v6393
        %v6502 = vadd.f32 %v6002, %v6396
        %v6503 = vadd.f32 %v6003, %v6401
        %v6504 = vadd.f32 %v6004, %v6404
        %v6505 = vadd.f32 %v6005, %v6409
        %v6506 = vadd.f32 %v6006, %v6412
        %v6507 = vadd.f32 %v6007, %v6417
        %v6508 = vadd.f32 %v6008, %v6420
        %v6509 = vadd.f32 %v6009, %v6425
        %v6510 = vadd.f32 %v6010, %v6428
        %v6511 = vadd.f32 %v6011, %v6433
        %v6512 = vadd.f32 %v6012, %v6436
        %v6513 = vadd.f32 %v6013, %v6441
        %v6514 = vadd.f32 %v6014, %v6444
        %v6515 = vadd.f32 %v6015, %v6449
        %v6516 = vadd.f32 %v6016, %v6452
        %v6517 = vadd.f32 %v6017, %v6457
        %v6518 = vadd.f32 %v6018, %v6460
        %v6519 = vadd.f32 %v6019, %v6465
        %v6520 = vadd.f32 %v6020, %v6468
        %v6521 = vadd.f32 %v6021, %v6473
        %v6522 = vadd.f32 %v6022, %v6476
        %v6523 = vadd.f32 %v6023, %v6481
        %v6524 = vadd.f32 %v6024, %v6484
        %v6525 = vadd.f32 %v6025, %v6489
        %v6526 = vadd.f32 %v6026, %v6492
        %v6527 = vld [vmem:[%s2287 + $0x1] sm:$0xff]
        %v6528 = vld [vmem:[%s2287 + $0x9] sm:$0xff]
        %v6529 = vld [vmem:[%s2287 + $0x19] sm:$0xff]
        %v6530 = vld [vmem:[%s2287 + $0x21] sm:$0xff]
        %v6531 = vld [vmem:[%s2287 + $0x31] sm:$0xff]
        %v6532 = vld [vmem:[%s2287 + $0x39] sm:$0xff]
        %v6533 = vld [vmem:[%s2287 + $0x49] sm:$0xff]
        %v6534 = vld [vmem:[%s2287 + $0x51] sm:$0xff]
        %v6535 = vld [vmem:[%s2287 + $0x61] sm:$0xff]
        %v6536 = vld [vmem:[%s2287 + $0x69] sm:$0xff]
        %v6537 = vld [vmem:[%s2287 + $0x79] sm:$0xff]
        %v6538 = vld [vmem:[%s2287 + $0x81] sm:$0xff]
        %v6539 = vld [vmem:[%s2287 + $0x91] sm:$0xff]
        %v6540 = vld [vmem:[%s2287 + $0x99] sm:$0xff]
        %v6541 = vld [vmem:[%s2287 + $0xa9] sm:$0xff]
        %v6542 = vld [vmem:[%s2287 + $0xb1] sm:$0xff]
        %v6543 = vld [vmem:[%s2287 + $0xc1] sm:$0xff]
        %v6544 = vld [vmem:[%s2287 + $0xc9] sm:$0xff]
        %v6545 = vld [vmem:[%s2287 + $0xd9] sm:$0xff]
        %v6546 = vld [vmem:[%s2287 + $0xe1] sm:$0xff]
        %v6547 = vld [vmem:[%s2287 + $0xf1] sm:$0xff]
        %v6548 = vld [vmem:[%s2287 + $0xf9] sm:$0xff]
        %v6549 = vld [vmem:[%s2287 + $0x109] sm:$0xff]
        %v6550 = vld [vmem:[%s2287 + $0x111] sm:$0xff]
        %v6551 = vld [vmem:[%s2287 + $0x121] sm:$0xff]
        %v6552 = vld [vmem:[%s2287 + $0x129] sm:$0xff]
        %v6553 = vld [vmem:[%s2287 + $0x139] sm:$0xff]
        %v6554 = vld [vmem:[%s2287 + $0x141] sm:$0xff]
        %v6555 = vld [vmem:[%s2287 + $0x151] sm:$0xff]
        %v6556 = vld [vmem:[%s2287 + $0x159] sm:$0xff]
        %v6557 = vld [vmem:[%s2287 + $0x169] sm:$0xff]
        %v6558 = vld [vmem:[%s2287 + $0x171] sm:$0xff]
        %v6559 = vmax.f32 %v6155, %v6527
        %v6560 = vmax.f32 %v6156, %v6528
        %v6561 = vmax.f32 %v6157, %v6529
        %v6562 = vmax.f32 %v6158, %v6530
        %v6563 = vmax.f32 %v6159, %v6531
        %v6564 = vmax.f32 %v6160, %v6532
        %v6565 = vmax.f32 %v6161, %v6533
        %v6566 = vmax.f32 %v6162, %v6534
        %v6567 = vmax.f32 %v6163, %v6535
        %v6568 = vmax.f32 %v6164, %v6536
        %v6569 = vmax.f32 %v6165, %v6537
        %v6570 = vmax.f32 %v6166, %v6538
        %v6571 = vmax.f32 %v6167, %v6539
        %v6572 = vmax.f32 %v6168, %v6540
        %v6573 = vmax.f32 %v6169, %v6541
        %v6574 = vmax.f32 %v6170, %v6542
        %v6575 = vmax.f32 %v6171, %v6543
        %v6576 = vmax.f32 %v6172, %v6544
        %v6577 = vmax.f32 %v6173, %v6545
        %v6578 = vmax.f32 %v6174, %v6546
        %v6579 = vmax.f32 %v6175, %v6547
        %v6580 = vmax.f32 %v6176, %v6548
        %v6581 = vmax.f32 %v6177, %v6549
        %v6582 = vmax.f32 %v6178, %v6550
        %v6583 = vmax.f32 %v6179, %v6551
        %v6584 = vmax.f32 %v6180, %v6552
        %v6585 = vmax.f32 %v6181, %v6553
        %v6586 = vmax.f32 %v6182, %v6554
        %v6587 = vmax.f32 %v6183, %v6555
        %v6588 = vmax.f32 %v6184, %v6556
        %v6589 = vmax.f32 %v6185, %v6557
        %v6590 = vmax.f32 %v6186, %v6558
        %v6591 = vld [vmem:[%s4] sm:$0x1]
        %v6593 = vlaneseq
        %v6594 = vshrl.u32 %v6593, 7
        %v6595 = vsub.s32 0, %v6594
        %v6596 = vrot.slane %v6591, %v6595
        %v6598 = vadd.f32 %v6495, %v6596
        %v6599 = vadd.f32 %v6496, %v6596
        %v6600 = vadd.f32 %v6497, %v6596
        %v6601 = vadd.f32 %v6498, %v6596
        %v6602 = vadd.f32 %v6499, %v6596
        %v6603 = vadd.f32 %v6500, %v6596
        %v6604 = vadd.f32 %v6501, %v6596
        %v6605 = vadd.f32 %v6502, %v6596
        %v6606 = vadd.f32 %v6503, %v6596
        %v6607 = vadd.f32 %v6504, %v6596
        %v6608 = vadd.f32 %v6505, %v6596
        %v6609 = vadd.f32 %v6506, %v6596
        %v6610 = vadd.f32 %v6507, %v6596
        %v6611 = vadd.f32 %v6508, %v6596
        %v6612 = vadd.f32 %v6509, %v6596
        %v6613 = vadd.f32 %v6510, %v6596
        %v6614 = vadd.f32 %v6511, %v6596
        %v6615 = vadd.f32 %v6512, %v6596
        %v6616 = vadd.f32 %v6513, %v6596
        %v6617 = vadd.f32 %v6514, %v6596
        %v6618 = vadd.f32 %v6515, %v6596
        %v6619 = vadd.f32 %v6516, %v6596
        %v6620 = vadd.f32 %v6517, %v6596
        %v6621 = vadd.f32 %v6518, %v6596
        %v6622 = vadd.f32 %v6519, %v6596
        %v6623 = vadd.f32 %v6520, %v6596
        %v6624 = vadd.f32 %v6521, %v6596
        %v6625 = vadd.f32 %v6522, %v6596
        %v6626 = vadd.f32 %v6523, %v6596
        %v6627 = vadd.f32 %v6524, %v6596
        %v6628 = vadd.f32 %v6525, %v6596
        %v6629 = vadd.f32 %v6526, %v6596
        %v6630 = vsub.f32 0.0, %v6598
        %v6631 = vsub.f32 0.0, %v6599
        %v6632 = vsub.f32 0.0, %v6600
        %v6633 = vsub.f32 0.0, %v6601
        %v6634 = vsub.f32 0.0, %v6602
        %v6635 = vsub.f32 0.0, %v6603
        %v6636 = vsub.f32 0.0, %v6604
        %v6637 = vsub.f32 0.0, %v6605
        %v6638 = vsub.f32 0.0, %v6606
        %v6639 = vsub.f32 0.0, %v6607
        %v6640 = vsub.f32 0.0, %v6608
        %v6641 = vsub.f32 0.0, %v6609
        %v6642 = vsub.f32 0.0, %v6610
        %v6643 = vsub.f32 0.0, %v6611
        %v6644 = vsub.f32 0.0, %v6612
        %v6645 = vsub.f32 0.0, %v6613
        %v6646 = vsub.f32 0.0, %v6614
        %v6647 = vsub.f32 0.0, %v6615
        %v6648 = vsub.f32 0.0, %v6616
        %v6649 = vsub.f32 0.0, %v6617
        %v6650 = vsub.f32 0.0, %v6618
        %v6651 = vsub.f32 0.0, %v6619
        %v6652 = vsub.f32 0.0, %v6620
        %v6653 = vsub.f32 0.0, %v6621
        %v6654 = vsub.f32 0.0, %v6622
        %v6655 = vsub.f32 0.0, %v6623
        %v6656 = vsub.f32 0.0, %v6624
        %v6657 = vsub.f32 0.0, %v6625
        %v6658 = vsub.f32 0.0, %v6626
        %v6659 = vsub.f32 0.0, %v6627
        %v6660 = vsub.f32 0.0, %v6628
        %v6661 = vsub.f32 0.0, %v6629
        %v6662 = vmul.f32 %v6630, 1.442695
        %v6663 = vpow.pop %v6662
        %v6664 = vmul.f32 %v6631, 1.442695
        %v6665 = vpow.pop %v6664
        %v6666 = vmul.f32 %v6632, 1.442695
        %v6667 = vpow.pop %v6666
        %v6668 = vmul.f32 %v6633, 1.442695
        %v6669 = vpow.pop %v6668
        %v6670 = vmul.f32 %v6634, 1.442695
        %v6671 = vpow.pop %v6670
        %v6672 = vmul.f32 %v6635, 1.442695
        %v6673 = vpow.pop %v6672
        %v6674 = vmul.f32 %v6636, 1.442695
        %v6675 = vpow.pop %v6674
        %v6676 = vmul.f32 %v6637, 1.442695
        %v6677 = vpow.pop %v6676
        %v6678 = vmul.f32 %v6638, 1.442695
        %v6679 = vpow.pop %v6678
        %v6680 = vmul.f32 %v6639, 1.442695
        %v6681 = vpow.pop %v6680
        %v6682 = vmul.f32 %v6640, 1.442695
        %v6683 = vpow.pop %v6682
        %v6684 = vmul.f32 %v6641, 1.442695
        %v6685 = vpow.pop %v6684
        %v6686 = vmul.f32 %v6642, 1.442695
        %v6687 = vpow.pop %v6686
        %v6688 = vmul.f32 %v6643, 1.442695
        %v6689 = vpow.pop %v6688
        %v6690 = vmul.f32 %v6644, 1.442695
        %v6691 = vpow.pop %v6690
        %v6692 = vmul.f32 %v6645, 1.442695
        %v6693 = vpow.pop %v6692
        %v6694 = vmul.f32 %v6646, 1.442695
        %v6695 = vpow.pop %v6694
        %v6696 = vmul.f32 %v6647, 1.442695
        %v6697 = vpow.pop %v6696
        %v6698 = vmul.f32 %v6648, 1.442695
        %v6699 = vpow.pop %v6698
        %v6700 = vmul.f32 %v6649, 1.442695
        %v6701 = vpow.pop %v6700
        %v6702 = vmul.f32 %v6650, 1.442695
        %v6703 = vpow.pop %v6702
        %v6704 = vmul.f32 %v6651, 1.442695
        %v6705 = vpow.pop %v6704
        %v6706 = vmul.f32 %v6652, 1.442695
        %v6707 = vpow.pop %v6706
        %v6708 = vmul.f32 %v6653, 1.442695
        %v6709 = vpow.pop %v6708
        %v6710 = vmul.f32 %v6654, 1.442695
        %v6711 = vpow.pop %v6710
        %v6712 = vmul.f32 %v6655, 1.442695
        %v6713 = vpow.pop %v6712
        %v6714 = vmul.f32 %v6656, 1.442695
        %v6715 = vpow.pop %v6714
        %v6716 = vmul.f32 %v6657, 1.442695
        %v6717 = vpow.pop %v6716
        %v6718 = vmul.f32 %v6658, 1.442695
        %v6719 = vpow.pop %v6718
        %v6720 = vmul.f32 %v6659, 1.442695
        %v6721 = vpow.pop %v6720
        %v6722 = vmul.f32 %v6660, 1.442695
        %v6723 = vpow.pop %v6722
        %v6724 = vmul.f32 %v6661, 1.442695
        %v6725 = vpow.pop %v6724
        %v6726 = vadd.f32 %v6663, 1.0
        %v6727 = vadd.f32 %v6665, 1.0
        %v6728 = vadd.f32 %v6667, 1.0
        %v6729 = vadd.f32 %v6669, 1.0
        %v6730 = vadd.f32 %v6671, 1.0
        %v6731 = vadd.f32 %v6673, 1.0
        %v6732 = vadd.f32 %v6675, 1.0
        %v6733 = vadd.f32 %v6677, 1.0
        %v6734 = vadd.f32 %v6679, 1.0
        %v6735 = vadd.f32 %v6681, 1.0
        %v6736 = vadd.f32 %v6683, 1.0
        %v6737 = vadd.f32 %v6685, 1.0
        %v6738 = vadd.f32 %v6687, 1.0
        %v6739 = vadd.f32 %v6689, 1.0
        %v6740 = vadd.f32 %v6691, 1.0
        %v6741 = vadd.f32 %v6693, 1.0
        %v6742 = vadd.f32 %v6695, 1.0
        %v6743 = vadd.f32 %v6697, 1.0
        %v6744 = vadd.f32 %v6699, 1.0
        %v6745 = vadd.f32 %v6701, 1.0
        %v6746 = vadd.f32 %v6703, 1.0
        %v6747 = vadd.f32 %v6705, 1.0
        %v6748 = vadd.f32 %v6707, 1.0
        %v6749 = vadd.f32 %v6709, 1.0
        %v6750 = vadd.f32 %v6711, 1.0
        %v6751 = vadd.f32 %v6713, 1.0
        %v6752 = vadd.f32 %v6715, 1.0
        %v6753 = vadd.f32 %v6717, 1.0
        %v6754 = vadd.f32 %v6719, 1.0
        %v6755 = vadd.f32 %v6721, 1.0
        %v6756 = vadd.f32 %v6723, 1.0
        %v6757 = vadd.f32 %v6725, 1.0
        %v6758 = vrcp.pop %v6726
        %v6759 = vrcp.pop %v6727
        %v6760 = vrcp.pop %v6728
        %v6761 = vrcp.pop %v6729
        %v6762 = vrcp.pop %v6730
        %v6763 = vrcp.pop %v6731
        %v6764 = vrcp.pop %v6732
        %v6765 = vrcp.pop %v6733
        %v6766 = vrcp.pop %v6734
        %v6767 = vrcp.pop %v6735
        %v6768 = vrcp.pop %v6736
        %v6769 = vrcp.pop %v6737
        %v6770 = vrcp.pop %v6738
        %v6771 = vrcp.pop %v6739
        %v6772 = vrcp.pop %v6740
        %v6773 = vrcp.pop %v6741
        %v6774 = vrcp.pop %v6742
        %v6775 = vrcp.pop %v6743
        %v6776 = vrcp.pop %v6744
        %v6777 = vrcp.pop %v6745
        %v6778 = vrcp.pop %v6746
        %v6779 = vrcp.pop %v6747
        %v6780 = vrcp.pop %v6748
        %v6781 = vrcp.pop %v6749
        %v6782 = vrcp.pop %v6750
        %v6783 = vrcp.pop %v6751
        %v6784 = vrcp.pop %v6752
        %v6785 = vrcp.pop %v6753
        %v6786 = vrcp.pop %v6754
        %v6787 = vrcp.pop %v6755
        %v6788 = vrcp.pop %v6756
        %v6789 = vrcp.pop %v6757
        %v6790 = vmul.f32 %v6598, %v6758
        %v6791 = vmul.f32 %v6599, %v6759
        %v6792 = vmul.f32 %v6600, %v6760
        %v6793 = vmul.f32 %v6601, %v6761
        %v6794 = vmul.f32 %v6602, %v6762
        %v6795 = vmul.f32 %v6603, %v6763
        %v6796 = vmul.f32 %v6604, %v6764
        %v6797 = vmul.f32 %v6605, %v6765
        %v6798 = vmul.f32 %v6606, %v6766
        %v6799 = vmul.f32 %v6607, %v6767
        %v6800 = vmul.f32 %v6608, %v6768
        %v6801 = vmul.f32 %v6609, %v6769
        %v6802 = vmul.f32 %v6610, %v6770
        %v6803 = vmul.f32 %v6611, %v6771
        %v6804 = vmul.f32 %v6612, %v6772
        %v6805 = vmul.f32 %v6613, %v6773
        %v6806 = vmul.f32 %v6614, %v6774
        %v6807 = vmul.f32 %v6615, %v6775
        %v6808 = vmul.f32 %v6616, %v6776
        %v6809 = vmul.f32 %v6617, %v6777
        %v6810 = vmul.f32 %v6618, %v6778
        %v6811 = vmul.f32 %v6619, %v6779
        %v6812 = vmul.f32 %v6620, %v6780
        %v6813 = vmul.f32 %v6621, %v6781
        %v6814 = vmul.f32 %v6622, %v6782
        %v6815 = vmul.f32 %v6623, %v6783
        %v6816 = vmul.f32 %v6624, %v6784
        %v6817 = vmul.f32 %v6625, %v6785
        %v6818 = vmul.f32 %v6626, %v6786
        %v6819 = vmul.f32 %v6627, %v6787
        %v6820 = vmul.f32 %v6628, %v6788
        %v6821 = vmul.f32 %v6629, %v6789
        %v6822 = vpack.c.bf16 %v6560, %v6559
        %v6823 = vpack.c.bf16 %v6562, %v6561
        %v6824 = vpack.c.bf16 %v6564, %v6563
        %v6825 = vpack.c.bf16 %v6566, %v6565
        %v6826 = vpack.c.bf16 %v6568, %v6567
        %v6827 = vpack.c.bf16 %v6570, %v6569
        %v6828 = vpack.c.bf16 %v6572, %v6571
        %v6829 = vpack.c.bf16 %v6574, %v6573
        %v6830 = vpack.c.bf16 %v6576, %v6575
        %v6831 = vpack.c.bf16 %v6578, %v6577
        %v6832 = vpack.c.bf16 %v6580, %v6579
        %v6833 = vpack.c.bf16 %v6582, %v6581
        %v6834 = vpack.c.bf16 %v6584, %v6583
        %v6835 = vpack.c.bf16 %v6586, %v6585
        %v6836 = vpack.c.bf16 %v6588, %v6587
        %v6837 = vpack.c.bf16 %v6590, %v6589
        %v6838 = vld [vmem:[%s5] sm:$0x3]
        %v6839 = vld [vmem:[%s6] sm:$0x1]
        %v6841 = vlaneseq
        %v6842 = vshrl.u32 %v6841, 7
        %v6843 = vsub.s32 0, %v6842
        %v6844 = vrot.slane %v6839, %v6843
        %6862 = vrot.lane.b32.xlu0 %v6822, 116
        %v6863 = vpop.permute.xlu0 %6862
        %6864 = vrot.lane.b32.xlu0 %v6823, 116
        %v6865 = vpop.permute.xlu0 %6864
        %6866 = vrot.lane.b32.xlu0 %v6824, 116
        %v6867 = vpop.permute.xlu0 %6866
        %6868 = vrot.lane.b32.xlu0 %v6825, 116
        %v6869 = vpop.permute.xlu0 %6868
        %6870 = vrot.lane.b32.xlu0 %v6826, 116
        %v6871 = vpop.permute.xlu0 %6870
        %6872 = vrot.lane.b32.xlu0 %v6827, 116
        %v6873 = vpop.permute.xlu0 %6872
        %6874 = vrot.lane.b32.xlu0 %v6828, 116
        %v6875 = vpop.permute.xlu0 %6874
        %6876 = vrot.lane.b32.xlu0 %v6829, 116
        %v6877 = vpop.permute.xlu0 %6876
        %6878 = vrot.lane.b32.xlu0 %v6830, 116
        %v6879 = vpop.permute.xlu0 %6878
        %6880 = vrot.lane.b32.xlu0 %v6831, 116
        %v6881 = vpop.permute.xlu0 %6880
        %6882 = vrot.lane.b32.xlu0 %v6832, 116
        %v6883 = vpop.permute.xlu0 %6882
        %6884 = vrot.lane.b32.xlu0 %v6833, 116
        %v6885 = vpop.permute.xlu0 %6884
        %6886 = vrot.lane.b32.xlu0 %v6834, 116
        %v6887 = vpop.permute.xlu0 %6886
        %6888 = vrot.lane.b32.xlu0 %v6835, 116
        %v6889 = vpop.permute.xlu0 %6888
        %6890 = vrot.lane.b32.xlu0 %v6836, 116
        %v6891 = vpop.permute.xlu0 %6890
        %6892 = vrot.lane.b32.xlu0 %v6837, 116
        %v6893 = vpop.permute.xlu0 %6892
        %v6895 = vsel %vm985, %v6863, 0
        %v6898 = vsel %vm985, %v6865, 0
        %v6901 = vsel %vm985, %v6867, 0
        %v6904 = vsel %vm985, %v6869, 0
        %v6907 = vsel %vm985, %v6871, 0
        %v6910 = vsel %vm985, %v6873, 0
        %v6913 = vsel %vm985, %v6875, 0
        %v6916 = vsel %vm985, %v6877, 0
        %v6919 = vsel %vm985, %v6879, 0
        %v6922 = vsel %vm985, %v6881, 0
        %v6925 = vsel %vm985, %v6883, 0
        %v6928 = vsel %vm985, %v6885, 0
        %v6931 = vsel %vm985, %v6887, 0
        %v6934 = vsel %vm985, %v6889, 0
        %v6937 = vsel %vm985, %v6891, 0
        %v6940 = vsel %vm985, %v6893, 0
        %v6943 = vsel %vm3150, %v6838, 0
        %6945 = vmatprep.subr.bf16.mxu0 0
        %6946 = vmatpush1.bf16.msra.mxu0 %v6943
        %6947 = vmatprep.subr.bf16.mxu0 0
        %6948 = vmatpush1.bf16.msra.mxu0 0
        %6949 = vmatprep.subr.bf16.mxu0 0
        %6950 = vmatpush1.bf16.msra.mxu0 0
        %6951 = vmatprep.subr.bf16.mxu0 0
        %6952 = vmatpush1.bf16.msra.mxu0 0
        %6953 = vmatprep.subr.bf16.mxu0 0
        %6954 = vmatpush1.bf16.msra.mxu0 0
        %6955 = vmatprep.subr.bf16.mxu0 0
        %6956 = vmatpush1.bf16.msra.mxu0 0
        %6957 = vmatprep.subr.bf16.mxu0 0
        %6958 = vmatpush1.bf16.msra.mxu0 0
        %6959 = vmatprep.subr.bf16.mxu0 0
        %6960 = vmatpush1.bf16.msra.mxu0 0
        %6961 = vmatprep.subr.bf16.mxu0 0
        %6962 = vmatpush1.bf16.msra.mxu0 0
        %6963 = vmatprep.subr.bf16.mxu0 0
        %6964 = vmatpush1.bf16.msra.mxu0 0
        %6965 = vmatprep.subr.bf16.mxu0 0
        %6966 = vmatpush1.bf16.msra.mxu0 0
        %6967 = vmatprep.subr.bf16.mxu0 0
        %6968 = vmatpush1.bf16.msra.mxu0 0
        %6969 = vmatprep.subr.bf16.mxu0 0
        %6970 = vmatpush1.bf16.msra.mxu0 0
        %6971 = vmatprep.subr.bf16.mxu0 0
        %6972 = vmatpush1.bf16.msra.mxu0 0
        %6973 = vmatprep.subr.bf16.mxu0 0
        %6974 = vmatpush1.bf16.msra.mxu0 0
        %6975 = vmatprep.subr.bf16.mxu0 0
        %6976 = vmatpush1.bf16.msra.mxu0 0
        %6977 = vmatprep.mubr.bf16.mxu0 0
        %6978 = vmatmul.mubr.bf16.gmra.mrb[0].mxu0 %v6895
        %v6979 = vpop.f32.mrb[0].mxu0
        %v6980 = vadd.f32 %v6844, %v6979
        %v6981 = vpop.f32.mrb[0].mxu0
        %v6982 = vpop.f32.mrb[0].mxu0
        %v6983 = vadd.f32 %v6844, %v6982
        %v6984 = vpop.f32.mrb[0].mxu0
        %6985 = vmatprep.mubr.bf16.mxu0 0
        %6986 = vmatmul.mubr.bf16.gmra.mrb[0].mxu0 %v6898
        %v6987 = vpop.f32.mrb[0].mxu0
        %v6988 = vadd.f32 %v6844, %v6987
        %v6989 = vpop.f32.mrb[0].mxu0
        %v6990 = vpop.f32.mrb[0].mxu0
        %v6991 = vadd.f32 %v6844, %v6990
        %v6992 = vpop.f32.mrb[0].mxu0
        %6993 = vmatprep.mubr.bf16.mxu0 0
        %6994 = vmatmul.mubr.bf16.gmra.mrb[0].mxu0 %v6901
        %v6995 = vpop.f32.mrb[0].mxu0
        %v6996 = vadd.f32 %v6844, %v6995
        %v6997 = vpop.f32.mrb[0].mxu0
        %v6998 = vpop.f32.mrb[0].mxu0
        %v6999 = vadd.f32 %v6844, %v6998
        %v7000 = vpop.f32.mrb[0].mxu0
        %7001 = vmatprep.mubr.bf16.mxu0 0
        %7002 = vmatmul.mubr.bf16.gmra.mrb[0].mxu0 %v6904
        %v7003 = vpop.f32.mrb[0].mxu0
        %v7004 = vadd.f32 %v6844, %v7003
        %v7005 = vpop.f32.mrb[0].mxu0
        %v7006 = vpop.f32.mrb[0].mxu0
        %v7007 = vadd.f32 %v6844, %v7006
        %v7008 = vpop.f32.mrb[0].mxu0
        %7009 = vmatprep.mubr.bf16.mxu0 0
        %7010 = vmatmul.mubr.bf16.gmra.mrb[0].mxu0 %v6907
        %v7011 = vpop.f32.mrb[0].mxu0
        %v7012 = vadd.f32 %v6844, %v7011
        %v7013 = vpop.f32.mrb[0].mxu0
        %v7014 = vpop.f32.mrb[0].mxu0
        %v7015 = vadd.f32 %v6844, %v7014
        %v7016 = vpop.f32.mrb[0].mxu0
        %7017 = vmatprep.mubr.bf16.mxu0 0
        %7018 = vmatmul.mubr.bf16.gmra.mrb[0].mxu0 %v6910
        %v7019 = vpop.f32.mrb[0].mxu0
        %v7020 = vadd.f32 %v6844, %v7019
        %v7021 = vpop.f32.mrb[0].mxu0
        %v7022 = vpop.f32.mrb[0].mxu0
        %v7023 = vadd.f32 %v6844, %v7022
        %v7024 = vpop.f32.mrb[0].mxu0
        %7025 = vmatprep.mubr.bf16.mxu0 0
        %7026 = vmatmul.mubr.bf16.gmra.mrb[0].mxu0 %v6913
        %v7027 = vpop.f32.mrb[0].mxu0
        %v7028 = vadd.f32 %v6844, %v7027
        %v7029 = vpop.f32.mrb[0].mxu0
        %v7030 = vpop.f32.mrb[0].mxu0
        %v7031 = vadd.f32 %v6844, %v7030
        %v7032 = vpop.f32.mrb[0].mxu0
        %7033 = vmatprep.mubr.bf16.mxu0 0
        %7034 = vmatmul.mubr.bf16.gmra.mrb[0].mxu0 %v6916
        %v7035 = vpop.f32.mrb[0].mxu0
        %v7036 = vadd.f32 %v6844, %v7035
        %v7037 = vpop.f32.mrb[0].mxu0
        %v7038 = vpop.f32.mrb[0].mxu0
        %v7039 = vadd.f32 %v6844, %v7038
        %v7040 = vpop.f32.mrb[0].mxu0
        %7041 = vmatprep.mubr.bf16.mxu0 0
        %7042 = vmatmul.mubr.bf16.gmra.mrb[0].mxu0 %v6919
        %v7043 = vpop.f32.mrb[0].mxu0
        %v7044 = vadd.f32 %v6844, %v7043
        %v7045 = vpop.f32.mrb[0].mxu0
        %v7046 = vpop.f32.mrb[0].mxu0
        %v7047 = vadd.f32 %v6844, %v7046
        %v7048 = vpop.f32.mrb[0].mxu0
        %7049 = vmatprep.mubr.bf16.mxu0 0
        %7050 = vmatmul.mubr.bf16.gmra.mrb[0].mxu0 %v6922
        %v7051 = vpop.f32.mrb[0].mxu0
        %v7052 = vadd.f32 %v6844, %v7051
        %v7053 = vpop.f32.mrb[0].mxu0
        %v7054 = vpop.f32.mrb[0].mxu0
        %v7055 = vadd.f32 %v6844, %v7054
        %v7056 = vpop.f32.mrb[0].mxu0
        %7057 = vmatprep.mubr.bf16.mxu0 0
        %7058 = vmatmul.mubr.bf16.gmra.mrb[0].mxu0 %v6925
        %v7059 = vpop.f32.mrb[0].mxu0
        %v7060 = vadd.f32 %v6844, %v7059
        %v7061 = vpop.f32.mrb[0].mxu0
        %v7062 = vpop.f32.mrb[0].mxu0
        %v7063 = vadd.f32 %v6844, %v7062
        %v7064 = vpop.f32.mrb[0].mxu0
        %7065 = vmatprep.mubr.bf16.mxu0 0
        %7066 = vmatmul.mubr.bf16.gmra.mrb[0].mxu0 %v6928
        %v7067 = vpop.f32.mrb[0].mxu0
        %v7068 = vadd.f32 %v6844, %v7067
        %v7069 = vpop.f32.mrb[0].mxu0
        %v7070 = vpop.f32.mrb[0].mxu0
        %v7071 = vadd.f32 %v6844, %v7070
        %v7072 = vpop.f32.mrb[0].mxu0
        %7073 = vmatprep.mubr.bf16.mxu0 0
        %7074 = vmatmul.mubr.bf16.gmra.mrb[0].mxu0 %v6931
        %v7075 = vpop.f32.mrb[0].mxu0
        %v7076 = vadd.f32 %v6844, %v7075
        %v7077 = vpop.f32.mrb[0].mxu0
        %v7078 = vpop.f32.mrb[0].mxu0
        %v7079 = vadd.f32 %v6844, %v7078
        %v7080 = vpop.f32.mrb[0].mxu0
        %7081 = vmatprep.mubr.bf16.mxu0 0
        %7082 = vmatmul.mubr.bf16.gmra.mrb[0].mxu0 %v6934
        %v7083 = vpop.f32.mrb[0].mxu0
        %v7084 = vadd.f32 %v6844, %v7083
        %v7085 = vpop.f32.mrb[0].mxu0
        %v7086 = vpop.f32.mrb[0].mxu0
        %v7087 = vadd.f32 %v6844, %v7086
        %v7088 = vpop.f32.mrb[0].mxu0
        %7089 = vmatprep.mubr.bf16.mxu0 0
        %7090 = vmatmul.mubr.bf16.gmra.mrb[0].mxu0 %v6937
        %v7091 = vpop.f32.mrb[0].mxu0
        %v7092 = vadd.f32 %v6844, %v7091
        %v7093 = vpop.f32.mrb[0].mxu0
        %v7094 = vpop.f32.mrb[0].mxu0
        %v7095 = vadd.f32 %v6844, %v7094
        %v7096 = vpop.f32.mrb[0].mxu0
        %7097 = vmatprep.mubr.bf16.mxu0 0
        %7098 = vmatmul.mubr.bf16.gmra.mrb[0].mxu0 %v6940
        %v7099 = vpop.f32.mrb[0].mxu0
        %v7100 = vadd.f32 %v6844, %v7099
        %v7101 = vpop.f32.mrb[0].mxu0
        %v7102 = vpop.f32.mrb[0].mxu0
        %v7103 = vadd.f32 %v6844, %v7102
        %v7104 = vpop.f32.mrb[0].mxu0
        %7105 = vdwg.mxu0
        %v7106 = vsub.f32 0.0, %v6980
        %v7107 = vsub.f32 0.0, %v6983
        %v7108 = vsub.f32 0.0, %v6988
        %v7109 = vsub.f32 0.0, %v6991
        %v7110 = vsub.f32 0.0, %v6996
        %v7111 = vsub.f32 0.0, %v6999
        %v7112 = vsub.f32 0.0, %v7004
        %v7113 = vsub.f32 0.0, %v7007
        %v7114 = vsub.f32 0.0, %v7012
        %v7115 = vsub.f32 0.0, %v7015
        %v7116 = vsub.f32 0.0, %v7020
        %v7117 = vsub.f32 0.0, %v7023
        %v7118 = vsub.f32 0.0, %v7028
        %v7119 = vsub.f32 0.0, %v7031
        %v7120 = vsub.f32 0.0, %v7036
        %v7121 = vsub.f32 0.0, %v7039
        %v7122 = vsub.f32 0.0, %v7044
        %v7123 = vsub.f32 0.0, %v7047
        %v7124 = vsub.f32 0.0, %v7052
        %v7125 = vsub.f32 0.0, %v7055
        %v7126 = vsub.f32 0.0, %v7060
        %v7127 = vsub.f32 0.0, %v7063
        %v7128 = vsub.f32 0.0, %v7068
        %v7129 = vsub.f32 0.0, %v7071
        %v7130 = vsub.f32 0.0, %v7076
        %v7131 = vsub.f32 0.0, %v7079
        %v7132 = vsub.f32 0.0, %v7084
        %v7133 = vsub.f32 0.0, %v7087
        %v7134 = vsub.f32 0.0, %v7092
        %v7135 = vsub.f32 0.0, %v7095
        %v7136 = vsub.f32 0.0, %v7100
        %v7137 = vsub.f32 0.0, %v7103
        %v7138 = vmul.f32 %v7106, 1.442695
        %v7139 = vpow.pop %v7138
        %v7140 = vmul.f32 %v7107, 1.442695
        %v7141 = vpow.pop %v7140
        %v7142 = vmul.f32 %v7108, 1.442695
        %v7143 = vpow.pop %v7142
        %v7144 = vmul.f32 %v7109, 1.442695
        %v7145 = vpow.pop %v7144
        %v7146 = vmul.f32 %v7110, 1.442695
        %v7147 = vpow.pop %v7146
        %v7148 = vmul.f32 %v7111, 1.442695
        %v7149 = vpow.pop %v7148
        %v7150 = vmul.f32 %v7112, 1.442695
        %v7151 = vpow.pop %v7150
        %v7152 = vmul.f32 %v7113, 1.442695
        %v7153 = vpow.pop %v7152
        %v7154 = vmul.f32 %v7114, 1.442695
        %v7155 = vpow.pop %v7154
        %v7156 = vmul.f32 %v7115, 1.442695
        %v7157 = vpow.pop %v7156
        %v7158 = vmul.f32 %v7116, 1.442695
        %v7159 = vpow.pop %v7158
        %v7160 = vmul.f32 %v7117, 1.442695
        %v7161 = vpow.pop %v7160
        %v7162 = vmul.f32 %v7118, 1.442695
        %v7163 = vpow.pop %v7162
        %v7164 = vmul.f32 %v7119, 1.442695
        %v7165 = vpow.pop %v7164
        %v7166 = vmul.f32 %v7120, 1.442695
        %v7167 = vpow.pop %v7166
        %v7168 = vmul.f32 %v7121, 1.442695
        %v7169 = vpow.pop %v7168
        %v7170 = vmul.f32 %v7122, 1.442695
        %v7171 = vpow.pop %v7170
        %v7172 = vmul.f32 %v7123, 1.442695
        %v7173 = vpow.pop %v7172
        %v7174 = vmul.f32 %v7124, 1.442695
        %v7175 = vpow.pop %v7174
        %v7176 = vmul.f32 %v7125, 1.442695
        %v7177 = vpow.pop %v7176
        %v7178 = vmul.f32 %v7126, 1.442695
        %v7179 = vpow.pop %v7178
        %v7180 = vmul.f32 %v7127, 1.442695
        %v7181 = vpow.pop %v7180
        %v7182 = vmul.f32 %v7128, 1.442695
        %v7183 = vpow.pop %v7182
        %v7184 = vmul.f32 %v7129, 1.442695
        %v7185 = vpow.pop %v7184
        %v7186 = vmul.f32 %v7130, 1.442695
        %v7187 = vpow.pop %v7186
        %v7188 = vmul.f32 %v7131, 1.442695
        %v7189 = vpow.pop %v7188
        %v7190 = vmul.f32 %v7132, 1.442695
        %v7191 = vpow.pop %v7190
        %v7192 = vmul.f32 %v7133, 1.442695
        %v7193 = vpow.pop %v7192
        %v7194 = vmul.f32 %v7134, 1.442695
        %v7195 = vpow.pop %v7194
        %v7196 = vmul.f32 %v7135, 1.442695
        %v7197 = vpow.pop %v7196
        %v7198 = vmul.f32 %v7136, 1.442695
        %v7199 = vpow.pop %v7198
        %v7200 = vmul.f32 %v7137, 1.442695
        %v7201 = vpow.pop %v7200
        %v7202 = vadd.f32 %v7139, 1.0
        %v7203 = vadd.f32 %v7141, 1.0
        %v7204 = vadd.f32 %v7143, 1.0
        %v7205 = vadd.f32 %v7145, 1.0
        %v7206 = vadd.f32 %v7147, 1.0
        %v7207 = vadd.f32 %v7149, 1.0
        %v7208 = vadd.f32 %v7151, 1.0
        %v7209 = vadd.f32 %v7153, 1.0
        %v7210 = vadd.f32 %v7155, 1.0
        %v7211 = vadd.f32 %v7157, 1.0
        %v7212 = vadd.f32 %v7159, 1.0
        %v7213 = vadd.f32 %v7161, 1.0
        %v7214 = vadd.f32 %v7163, 1.0
        %v7215 = vadd.f32 %v7165, 1.0
        %v7216 = vadd.f32 %v7167, 1.0
        %v7217 = vadd.f32 %v7169, 1.0
        %v7218 = vadd.f32 %v7171, 1.0
        %v7219 = vadd.f32 %v7173, 1.0
        %v7220 = vadd.f32 %v7175, 1.0
        %v7221 = vadd.f32 %v7177, 1.0
        %v7222 = vadd.f32 %v7179, 1.0
        %v7223 = vadd.f32 %v7181, 1.0
        %v7224 = vadd.f32 %v7183, 1.0
        %v7225 = vadd.f32 %v7185, 1.0
        %v7226 = vadd.f32 %v7187, 1.0
        %v7227 = vadd.f32 %v7189, 1.0
        %v7228 = vadd.f32 %v7191, 1.0
        %v7229 = vadd.f32 %v7193, 1.0
        %v7230 = vadd.f32 %v7195, 1.0
        %v7231 = vadd.f32 %v7197, 1.0
        %v7232 = vadd.f32 %v7199, 1.0
        %v7233 = vadd.f32 %v7201, 1.0
        %v7234 = vrcp.pop %v7202
        %v7235 = vrcp.pop %v7203
        %v7236 = vrcp.pop %v7204
        %v7237 = vrcp.pop %v7205
        %v7238 = vrcp.pop %v7206
        %v7239 = vrcp.pop %v7207
        %v7240 = vrcp.pop %v7208
        %v7241 = vrcp.pop %v7209
        %v7242 = vrcp.pop %v7210
        %v7243 = vrcp.pop %v7211
        %v7244 = vrcp.pop %v7212
        %v7245 = vrcp.pop %v7213
        %v7246 = vrcp.pop %v7214
        %v7247 = vrcp.pop %v7215
        %v7248 = vrcp.pop %v7216
        %v7249 = vrcp.pop %v7217
        %v7250 = vrcp.pop %v7218
        %v7251 = vrcp.pop %v7219
        %v7252 = vrcp.pop %v7220
        %v7253 = vrcp.pop %v7221
        %v7254 = vrcp.pop %v7222
        %v7255 = vrcp.pop %v7223
        %v7256 = vrcp.pop %v7224
        %v7257 = vrcp.pop %v7225
        %v7258 = vrcp.pop %v7226
        %v7259 = vrcp.pop %v7227
        %v7260 = vrcp.pop %v7228
        %v7261 = vrcp.pop %v7229
        %v7262 = vrcp.pop %v7230
        %v7263 = vrcp.pop %v7231
        %v7264 = vrcp.pop %v7232
        %v7265 = vrcp.pop %v7233
        %v7266 = vmul.f32 %v6980, %v7234
        %v7267 = vmul.f32 %v6983, %v7235
        %v7268 = vmul.f32 %v6988, %v7236
        %v7269 = vmul.f32 %v6991, %v7237
        %v7270 = vmul.f32 %v6996, %v7238
        %v7271 = vmul.f32 %v6999, %v7239
        %v7272 = vmul.f32 %v7004, %v7240
        %v7273 = vmul.f32 %v7007, %v7241
        %v7274 = vmul.f32 %v7012, %v7242
        %v7275 = vmul.f32 %v7015, %v7243
        %v7276 = vmul.f32 %v7020, %v7244
        %v7277 = vmul.f32 %v7023, %v7245
        %v7278 = vmul.f32 %v7028, %v7246
        %v7279 = vmul.f32 %v7031, %v7247
        %v7280 = vmul.f32 %v7036, %v7248
        %v7281 = vmul.f32 %v7039, %v7249
        %v7282 = vmul.f32 %v7044, %v7250
        %v7283 = vmul.f32 %v7047, %v7251
        %v7284 = vmul.f32 %v7052, %v7252
        %v7285 = vmul.f32 %v7055, %v7253
        %v7286 = vmul.f32 %v7060, %v7254
        %v7287 = vmul.f32 %v7063, %v7255
        %v7288 = vmul.f32 %v7068, %v7256
        %v7289 = vmul.f32 %v7071, %v7257
        %v7290 = vmul.f32 %v7076, %v7258
        %v7291 = vmul.f32 %v7079, %v7259
        %v7292 = vmul.f32 %v7084, %v7260
        %v7293 = vmul.f32 %v7087, %v7261
        %v7294 = vmul.f32 %v7092, %v7262
        %v7295 = vmul.f32 %v7095, %v7263
        %v7296 = vmul.f32 %v7100, %v7264
        %v7297 = vmul.f32 %v7103, %v7265
        %7298 = vxpose.xlu0.b32.start [1/16] %v6790, 128
        %7299 = vxpose.xlu0.b32.cont [2/16] %v6791, 128
        %7300 = vxpose.xlu0.b32.cont [3/16] %v6792, 128
        %7301 = vxpose.xlu0.b32.cont [4/16] %v6793, 128
        %7302 = vxpose.xlu0.b32.cont [5/16] %v6794, 128
        %7303 = vxpose.xlu0.b32.cont [6/16] %v6795, 128
        %7304 = vxpose.xlu0.b32.cont [7/16] %v6796, 128
        %7305 = vxpose.xlu0.b32.cont [8/16] %v6797, 128
        %7306 = vxpose.xlu0.b32.cont [9/16] %v6798, 128
        %7307 = vxpose.xlu0.b32.cont [10/16] %v6799, 128
        %7308 = vxpose.xlu0.b32.cont [11/16] %v6800, 128
        %7309 = vxpose.xlu0.b32.cont [12/16] %v6801, 128
        %7310 = vxpose.xlu0.b32.cont [13/16] %v6802, 128
        %7311 = vxpose.xlu0.b32.cont [14/16] %v6803, 128
        %7312 = vxpose.xlu0.b32.cont [15/16] %v6804, 128
        %7313 = vxpose.xlu0.b32.end [16/16] %v6805, 128
        %v7314 = vpop.trf.xlu0
        %v7315 = vpop.trf.xlu0
        %v7316 = vpop.trf.xlu0
        %v7317 = vpop.trf.xlu0
        %v7318 = vpop.trf.xlu0
        %v7319 = vpop.trf.xlu0
        %v7320 = vpop.trf.xlu0
        %v7321 = vpop.trf.xlu0
        %v7322 = vpop.trf.xlu0
        %v7323 = vpop.trf.xlu0
        %v7324 = vpop.trf.xlu0
        %v7325 = vpop.trf.xlu0
        %v7326 = vpop.trf.xlu0
        %v7327 = vpop.trf.xlu0
        %v7328 = vpop.trf.xlu0
        %v7329 = vpop.trf.xlu0
        %7330 = vxpose.xlu0.b32.start [1/16] %v6806, 128
        %7331 = vxpose.xlu0.b32.cont [2/16] %v6807, 128
        %7332 = vxpose.xlu0.b32.cont [3/16] %v6808, 128
        %7333 = vxpose.xlu0.b32.cont [4/16] %v6809, 128
        %7334 = vxpose.xlu0.b32.cont [5/16] %v6810, 128
        %7335 = vxpose.xlu0.b32.cont [6/16] %v6811, 128
        %7336 = vxpose.xlu0.b32.cont [7/16] %v6812, 128
        %7337 = vxpose.xlu0.b32.cont [8/16] %v6813, 128
        %7338 = vxpose.xlu0.b32.cont [9/16] %v6814, 128
        %7339 = vxpose.xlu0.b32.cont [10/16] %v6815, 128
        %7340 = vxpose.xlu0.b32.cont [11/16] %v6816, 128
        %7341 = vxpose.xlu0.b32.cont [12/16] %v6817, 128
        %7342 = vxpose.xlu0.b32.cont [13/16] %v6818, 128
        %7343 = vxpose.xlu0.b32.cont [14/16] %v6819, 128
        %7344 = vxpose.xlu0.b32.cont [15/16] %v6820, 128
        %7345 = vxpose.xlu0.b32.end [16/16] %v6821, 128
        %v7346 = vpop.trf.xlu0
        %v7347 = vpop.trf.xlu0
        %v7348 = vpop.trf.xlu0
        %v7349 = vpop.trf.xlu0
        %v7350 = vpop.trf.xlu0
        %v7351 = vpop.trf.xlu0
        %v7352 = vpop.trf.xlu0
        %v7353 = vpop.trf.xlu0
        %v7354 = vpop.trf.xlu0
        %v7355 = vpop.trf.xlu0
        %v7356 = vpop.trf.xlu0
        %v7357 = vpop.trf.xlu0
        %v7358 = vpop.trf.xlu0
        %v7359 = vpop.trf.xlu0
        %v7360 = vpop.trf.xlu0
        %v7361 = vpop.trf.xlu0
        %7362 = vst [vmem:[%s424] sm:$0xff] %v7314
        %7363 = vst [vmem:[%s424 + $0x8] sm:$0xff] %v7346
        %7364 = vxpose.xlu0.b32.start [1/16] %v7266, 128
        %7365 = vxpose.xlu0.b32.cont [2/16] %v7267, 128
        %7366 = vxpose.xlu0.b32.cont [3/16] %v7268, 128
        %7367 = vxpose.xlu0.b32.cont [4/16] %v7269, 128
        %7368 = vxpose.xlu0.b32.cont [5/16] %v7270, 128
        %7369 = vxpose.xlu0.b32.cont [6/16] %v7271, 128
        %7370 = vxpose.xlu0.b32.cont [7/16] %v7272, 128
        %7371 = vxpose.xlu0.b32.cont [8/16] %v7273, 128
        %7372 = vxpose.xlu0.b32.cont [9/16] %v7274, 128
        %7373 = vxpose.xlu0.b32.cont [10/16] %v7275, 128
        %7374 = vxpose.xlu0.b32.cont [11/16] %v7276, 128
        %7375 = vxpose.xlu0.b32.cont [12/16] %v7277, 128
        %7376 = vxpose.xlu0.b32.cont [13/16] %v7278, 128
        %7377 = vxpose.xlu0.b32.cont [14/16] %v7279, 128
        %7378 = vxpose.xlu0.b32.cont [15/16] %v7280, 128
        %7379 = vxpose.xlu0.b32.end [16/16] %v7281, 128
        %v7380 = vpop.trf.xlu0
        %v7381 = vpop.trf.xlu0
        %v7382 = vpop.trf.xlu0
        %v7383 = vpop.trf.xlu0
        %v7384 = vpop.trf.xlu0
        %v7385 = vpop.trf.xlu0
        %v7386 = vpop.trf.xlu0
        %v7387 = vpop.trf.xlu0
        %v7388 = vpop.trf.xlu0
        %v7389 = vpop.trf.xlu0
        %v7390 = vpop.trf.xlu0
        %v7391 = vpop.trf.xlu0
        %v7392 = vpop.trf.xlu0
        %v7393 = vpop.trf.xlu0
        %v7394 = vpop.trf.xlu0
        %v7395 = vpop.trf.xlu0
        %7396 = vxpose.xlu0.b32.start [1/16] %v7282, 128
        %7397 = vxpose.xlu0.b32.cont [2/16] %v7283, 128
        %7398 = vxpose.xlu0.b32.cont [3/16] %v7284, 128
        %7399 = vxpose.xlu0.b32.cont [4/16] %v7285, 128
        %7400 = vxpose.xlu0.b32.cont [5/16] %v7286, 128
        %7401 = vxpose.xlu0.b32.cont [6/16] %v7287, 128
        %7402 = vxpose.xlu0.b32.cont [7/16] %v7288, 128
        %7403 = vxpose.xlu0.b32.cont [8/16] %v7289, 128
        %7404 = vxpose.xlu0.b32.cont [9/16] %v7290, 128
        %7405 = vxpose.xlu0.b32.cont [10/16] %v7291, 128
        %7406 = vxpose.xlu0.b32.cont [11/16] %v7292, 128
        %7407 = vxpose.xlu0.b32.cont [12/16] %v7293, 128
        %7408 = vxpose.xlu0.b32.cont [13/16] %v7294, 128
        %7409 = vxpose.xlu0.b32.cont [14/16] %v7295, 128
        %7410 = vxpose.xlu0.b32.cont [15/16] %v7296, 128
        %7411 = vxpose.xlu0.b32.end [16/16] %v7297, 128
        %v7412 = vpop.trf.xlu0
        %v7413 = vpop.trf.xlu0
        %v7414 = vpop.trf.xlu0
        %v7415 = vpop.trf.xlu0
        %v7416 = vpop.trf.xlu0
        %v7417 = vpop.trf.xlu0
        %v7418 = vpop.trf.xlu0
        %v7419 = vpop.trf.xlu0
        %v7420 = vpop.trf.xlu0
        %v7421 = vpop.trf.xlu0
        %v7422 = vpop.trf.xlu0
        %v7423 = vpop.trf.xlu0
        %v7424 = vpop.trf.xlu0
        %v7425 = vpop.trf.xlu0
        %v7426 = vpop.trf.xlu0
        %v7427 = vpop.trf.xlu0
        %7428 = vst [vmem:[%s424 + $0x10] sm:$0xff] %v7380
        %7429 = vst [vmem:[%s424 + $0x18] sm:$0xff] %v7412
        %s7430 = sand.u32 %s233, 1
        %s7431 = scalar_lea.sflag [#allocation6], %s7430
        %s7432 = sand.u32 %s233, 1
        %s7433 = smul.addr %s7432, 32
        %s7434 = scalar_lea.vmem [#allocation10], %s7433
        // Predicated region
        $region77: #{tpu_custom_call.1} parent=47 // pred_check
          %p7435 = pneg %p243
        $region78: #{tpu_custom_call.1} parent=47 // pred_check_branch
          %7437 = sbr.rel (%p7435) target = $region80
        $region79: #{tpu_custom_call.1} parent=47 // pred_region
          %s7438 = smul.u32 2, %s32
          %s7440 = ssub.s32 512, 512
          %7441 = vsyncadd %s7431, %s7440
          %s7442 = smul.addr %s31, 4
          %s7443 = sadd.s32 %s7438, %s7442
          %s7444 = smul.addr %s7443, 128
          %s7445 = scalar_lea.hbm %s7, %s7444
          %s7446 = sshll.u32 %s7434, 4
          %s7447 = int_to_ptr.vmem [resolvable:$true] %s7446
          %7452 = dma.vmem_to_hbm [thread:$0]  %s7447, 512, %s7445, %s7431, 256, 256, 16
        $region80: #{tpu_custom_call.1} parent=47 // pred_fallthru
          _
      $region48: #{tpu_custom_call.1} parent=5 // pred_fallthru
        _
      %p7453 = scmp.le.s32.totalorder 2, %s22
      // Predicated region
      $region81: #{tpu_custom_call.1} parent=5 // pred_check
        %p7454 = pneg %p7453
      $region82: #{tpu_custom_call.1} parent=5 // pred_check_branch
        %7456 = sbr.rel (%p7454) target = $region84
      $region83: #{tpu_custom_call.1} parent=5 // pred_region
        %s7457 = ssub.s32 %s22, 2
        // Predicated region
        $region85: #{tpu_custom_call.1} parent=83 // pred_check
          %p7458 = pneg %p249
        $region86: #{tpu_custom_call.1} parent=83 // pred_check_branch
          %7460 = sbr.rel (%p7458) target = $region88
        $region87: #{tpu_custom_call.1} parent=83 // pred_region
          %s7461 = sand.u32 %s234, 1
          %s7462 = scalar_lea.sflag [#allocation6], %s7461
          %s7463 = sand.u32 %s234, 1
          %s7464 = smul.addr %s7463, 32
          %s7465 = scalar_lea.vmem [#allocation10], %s7464
          %7466 = dma.done %s7462, 512
        $region88: #{tpu_custom_call.1} parent=83 // pred_fallthru
          _
      $region84: #{tpu_custom_call.1} parent=5 // pred_fallthru
        _
    $region6: #{tpu_custom_call.1} parent=1 // loop_footer
      %s26 = sadd.s32 1, %s22
    $region7: #{tpu_custom_call.1} parent=1 // loop_footer_branch
      %21 = sbr.rel target = $region3
    $region8: #{tpu_custom_call.1} parent=1 // loop_exit
      _
    %7467 = vsyncpa [#allocation5], 1
    %s7468 = scalar_lea.sflag [#allocation5], 1
    %7469 = vsyncpa %s7468, 1
    %7470 = vsyncpa [#allocation8], 1
    %s7471 = scalar_lea.sflag [#allocation8], 1
    %7472 = vsyncpa %s7471, 1
    %7473 = vsyncpa [#allocation6], 1
    %s7474 = scalar_lea.sflag [#allocation6], 1
    %7475 = vsyncpa %s7474, 1

</llo_original>
